<compile_context>
chip_gen: v6e
topology: v6e:2x2x1
jax: 0.10.0
libtpu: 0.0.40
codegen_flags: <defaults>
</compile_context>

<pallas_src>
import math
from functools import partial

import jax
import jax.numpy as jnp
from jax.experimental import pallas as pl
from jax.experimental.pallas import tpu as pltpu

jax.config.update("jax_default_matmul_precision", "highest")

K_NEIGH = 6
WEIGHT_STD2 = 2.0 * 0.1 ** 2                       # 2 * weight_std**2
# exp(-L1 / WEIGHT_STD2) > 0.9  <=>  L1 < -WEIGHT_STD2 * log(0.9)
CONF_L1_THRESH = -WEIGHT_STD2 * math.log(0.9)
BIG = 1e30
CHUNK = 128                                        # lanes processed per inner step


def _back_deform_kernel(cam_ref, xt_ref, verts_ref, gmat_ref, out_ref,
                        *, k_neigh, j_pad, tile_n):
    b = pl.program_id(0)

    # --- orthographic camera inverse projection params; cam = [scale, tx, ty] ---
    s = cam_ref[b, 0]
    tx = cam_ref[b, 1]
    ty = cam_ref[b, 2]

    v = verts_ref[0]                               # [NV, 3]  posed template verts
    gmat = gmat_ref[0]                             # [J_pad+16, NV]  (lbs_w ; 4x4 flat)^T
    vx = v[:, 0:1]
    vy = v[:, 1:2]
    vz = v[:, 2:3]

    num_chunks = tile_n // CHUNK

    @pl.loop(0, num_chunks)                        # real loop boundary -> bounded live set
    def _(c):
        off = pl.multiple_of(c * CHUNK, CHUNK)
        xt = xt_ref[0, :, pl.ds(off, CHUNK)]       # [3, CHUNK] lane-dense query points
        # division (not mul-by-1/s) so distances match the reference bit-for-bit
        px = xt[0:1, :] / s - tx
        py = xt[1:2, :] / s - ty
        pz = xt[2:3, :] / s

        # squared distances to every template vertex (== knn_points dists)
        d0 = vx - px
        d1 = vy - py
        d2 = vz - pz
        d_work = d0 * d0 + d1 * d1 + d2 * d2       # [NV, CHUNK]

        acc16 = jnp.zeros((16, CHUNK), jnp.float32)   # sum_k w_k * T_k (flattened 4x4)
        total = jnp.zeros((1, CHUNK), jnp.float32)    # sum_k w_k
        lbsw0 = None                                  # lbs weights of neighbor 0
        for k in range(k_neigh):
            min_d = jnp.min(d_work, axis=0, keepdims=True)      # [1, CHUNK]
            # NOTE: exact distance ties would consume one slot for several verts
            # (diverges from top_k); measure-zero for the data used here.
            is_min = d_work == min_d
            onehot = is_min.astype(jnp.float32)                  # [NV, CHUNK]
            # single gather of (lbs weights ; transform) for this neighbor; the
            # one-hot RHS + HIGHEST precision makes this an exact row selection.
            g_k = jnp.dot(gmat, onehot,
                          precision=jax.lax.Precision.HIGHEST,
                          preferred_element_type=jnp.float32)    # [J_pad+16, CHUNK]
            lbsw_k = g_k[0:j_pad, :]
            tfm_k = g_k[j_pad:j_pad + 16, :]
            if k == 0:
                lbsw0 = lbsw_k
                w_k = jnp.exp(-min_d)                            # gate is always 1 at k=0
            else:
                l1 = jnp.sum(jnp.abs(lbsw_k - lbsw0), axis=0, keepdims=True)
                conf = (l1 < CONF_L1_THRESH).astype(jnp.float32)  # == (exp(-l1/s2) > 0.9)
                w_k = jnp.exp(-min_d) * conf
            acc16 = acc16 + w_k * tfm_k
            total = total + w_k
            if k + 1 < k_neigh:
                d_work = jnp.where(is_min, BIG, d_work)

        xT = acc16 * (1.0 / total)                               # [16, CHUNK] blended 4x4

        # util.batch_transform: cano = R @ posed_x + t  (rows 0..2 of the 4x4),
        # stored row-by-row (lane-dense, no sublane repack).
        for r in range(3):
            row = (xT[4 * r + 0:4 * r + 1, :] * px
                   + xT[4 * r + 1:4 * r + 2, :] * py
                   + xT[4 * r + 2:4 * r + 3, :] * pz
                   + xT[4 * r + 3:4 * r + 4, :])
            out_ref[0, r:r + 1, pl.ds(off, CHUNK)] = row


def back_deform_field(x, cam, posed_verts, lbs_weights, verts_transform,
                      *, k_neigh=K_NEIGH, tile_n=256):
    """cano_x = BackDeformField.forward(x, condition)  (default return path)."""
    B, N, _ = x.shape
    NV, J = lbs_weights.shape
    tile_n = min(tile_n, N)
    assert N % tile_n == 0, "N must be divisible by tile_n"
    assert tile_n % CHUNK == 0, "tile_n must be a multiple of 128"

    j_pad = ((J + 7) // 8) * 8                                            # sublane-align

    # lane-dense layouts (points / verts on the lane axis where they are hot)
    x_t = jnp.transpose(x, (0, 2, 1)).astype(jnp.float32)                 # [B, 3, N]
    lbsw_t = jnp.transpose(lbs_weights, (1, 0)).astype(jnp.float32)       # [J, NV]
    lbsw_t = jnp.pad(lbsw_t, ((0, j_pad - J), (0, 0)))                    # [J_pad, NV]
    tfm_t = jnp.transpose(verts_transform.reshape(B, NV, 16),
                          (0, 2, 1)).astype(jnp.float32)                  # [B, 16, NV]
    # single combined gather matrix: (lbs weights ; flattened transforms)
    gmat = jnp.concatenate(
        [jnp.broadcast_to(lbsw_t[None], (B, j_pad, NV)), tfm_t], axis=1)  # [B, J_pad+16, NV]
    pv = posed_verts.astype(jnp.float32)                                  # [B, NV, 3]
    cam = cam.astype(jnp.float32)                                         # [B, 3]

    kernel = partial(_back_deform_kernel, k_neigh=k_neigh, j_pad=j_pad, tile_n=tile_n)
    out_t = pl.pallas_call(
        kernel,
        out_shape=jax.ShapeDtypeStruct((B, 3, N), jnp.float32),
        grid=(B, N // tile_n),
        in_specs=[
            pl.BlockSpec(memory_space=pltpu.MemorySpace.SMEM),            # cam [B,3]
            pl.BlockSpec((1, 3, tile_n), lambda b, n: (b, 0, n)),         # x^T
            pl.BlockSpec((1, NV, 3), lambda b, n: (b, 0, 0)),             # posed_verts
            pl.BlockSpec((1, j_pad + 16, NV), lambda b, n: (b, 0, 0)),    # (lbsw ; tfm)^T
        ],
        out_specs=pl.BlockSpec((1, 3, tile_n), lambda b, n: (b, 0, n)),
        compiler_params=pltpu.CompilerParams(
            dimension_semantics=("parallel", "parallel")),
    )(cam, x_t, pv, gmat)
    return jnp.transpose(out_t, (0, 2, 1))                                # [B, N, 3]


def reference(x, cam, posed_verts, lbs_weights, verts_transform, k_neigh):
    """Pure-JAX reference mirroring the PyTorch forward (orth inv + lbsmap_top_k)."""
    B, N, _ = x.shape
    NV = posed_verts.shape[1]
    scale = cam[:, 0][:, None, None]
    posed = x / scale
    posed = jnp.concatenate([posed[..., :2] - cam[:, None, 1:], posed[..., 2:]], -1)
    d = jnp.sum((posed[:, :, None, :] - posed_verts[:, None, :, :]) ** 2, -1)
    neg_d, idx = jax.lax.top_k(-d, k_neigh)
    dists = -neg_d                                                       # [B,N,K]
    w = lbs_weights[idx]                                                 # [B,N,K,J]
    conf = jnp.exp(-jnp.sum(jnp.abs(w - w[..., 0:1, :]), -1) / WEIGHT_STD2)
    conf = (conf > 0.9).astype(jnp.float32)
    wgt = jnp.exp(-dists) * conf
    wgt = wgt / jnp.sum(wgt, -1, keepdims=True)
    tfm_flat = verts_transform.reshape(B, NV, 16)
    neigh_tfm = jax.vmap(lambda t, i: t[i])(tfm_flat, idx)               # [B,N,K,16]
    T = jnp.sum(wgt[..., None] * neigh_tfm, axis=2).reshape(B, N, 4, 4)
    R, t = T[..., :3, :3], T[..., :3, 3]
    # elementwise transform application (full f32, no default-precision dot)
    cano = jnp.stack(
        [R[..., r, 0] * posed[..., 0] + R[..., r, 1] * posed[..., 1]
         + R[..., r, 2] * posed[..., 2] + t[..., r] for r in range(3)], axis=-1)
    return cano


if __name__ == "__main__":
    B, N, NV, J = 2, 512, 128, 24
    key = jax.random.PRNGKey(0)
    k1, k2, k3, k4, k5, k6 = jax.random.split(key, 6)

    # query points in observation space
    x = jax.random.normal(k1, (B, N, 3), dtype=jnp.float32)
    # camera [scale, tx, ty]
    cam_scale = 0.8 + 0.4 * jax.random.uniform(k2, (B, 1), dtype=jnp.float32)
    cam_t = 0.1 * jax.random.normal(k3, (B, 2), dtype=jnp.float32)
    cam = jnp.concatenate([cam_scale, cam_t], axis=-1)                   # [B, 3]

    # synthetic base-model outputs (stand-in for SMPL-X skinning)
    posed_verts = jax.random.normal(k4, (B, NV, 3), dtype=jnp.float32)
    joints = jax.random.normal(k5, (J, 3), dtype=jnp.float32)
    nearest_joint = jnp.argmin(
        jnp.sum((posed_verts[0][:, None, :] - joints[None]) ** 2, -1), axis=-1)
    lbs_weights = jax.nn.one_hot(nearest_joint, J, dtype=jnp.float32)    # [NV, J]
    verts_transform = 0.5 * jax.random.normal(k6, (B, NV, 4, 4), dtype=jnp.float32)

    out = back_deform_field(x, cam, posed_verts, lbs_weights, verts_transform)
    out = jax.block_until_ready(out)

    ref = reference(x, cam, posed_verts, lbs_weights, verts_transform, K_NEIGH)
    assert out.shape == (B, N, 3)
    err = float(jnp.max(jnp.abs(out - ref)))
    assert jnp.allclose(out, ref, atol=1e-3, rtol=1e-3), f"max err {err}"
    print("KERNEL_OK")
</pallas_src>

<mosaic_0001>
module attributes {stable_mosaic.version = 11 : i64} {
  func.func @_back_deform_kernel(%arg0: i32, %arg1: i32, %arg2: memref<2x3xf32, #tpu.memory_space<smem>>, %arg3: memref<1x3x256xf32, #tpu.memory_space<vmem>>, %arg4: memref<1x128x3xf32, #tpu.memory_space<vmem>>, %arg5: memref<1x40x128xf32, #tpu.memory_space<vmem>>, %arg6: memref<1x3x256xf32, #tpu.memory_space<vmem>>) attributes {dimension_semantics = [#tpu.dimension_semantics<parallel>, #tpu.dimension_semantics<parallel>], iteration_bounds = array<i64: 2, 2>, scalar_prefetch = 0 : i64, scratch_operands = 0 : i64, tpu.core_type = #tpu.core_type<tc>, window_params = [{transform_indices = @transform_0, window_bounds = array<i64: 2, 3>}, {transform_indices = @transform_1, window_bounds = array<i64: 1, 3, 256>}, {transform_indices = @transform_2, window_bounds = array<i64: 1, 128, 3>}, {transform_indices = @transform_3, window_bounds = array<i64: 1, 40, 128>}, {transform_indices = @transform_4, window_bounds = array<i64: 1, 3, 256>}]} {
    %0 = arith.index_cast %arg0 : i32 to index
    %c0 = arith.constant 0 : index
    %1 = memref.load %arg2[%0, %c0] : memref<2x3xf32, #tpu.memory_space<smem>>
    %2 = arith.index_cast %arg0 : i32 to index
    %c1 = arith.constant 1 : index
    %3 = memref.load %arg2[%2, %c1] : memref<2x3xf32, #tpu.memory_space<smem>>
    %4 = arith.index_cast %arg0 : i32 to index
    %c2 = arith.constant 2 : index
    %5 = memref.load %arg2[%4, %c2] : memref<2x3xf32, #tpu.memory_space<smem>>
    %c0_0 = arith.constant 0 : index
    %c0_1 = arith.constant 0 : index
    %c0_2 = arith.constant 0 : index
    %6 = vector.load %arg4[%c0_0, %c0_1, %c0_2] : memref<1x128x3xf32, #tpu.memory_space<vmem>>, vector<1x128x3xf32>
    %7 = vector.shape_cast %6 : vector<1x128x3xf32> to vector<128x3xf32>
    %c0_3 = arith.constant 0 : index
    %c0_4 = arith.constant 0 : index
    %c0_5 = arith.constant 0 : index
    %8 = vector.load %arg5[%c0_3, %c0_4, %c0_5] : memref<1x40x128xf32, #tpu.memory_space<vmem>>, vector<1x40x128xf32>
    %9 = vector.shape_cast %8 : vector<1x40x128xf32> to vector<40x128xf32>
    %10 = vector.extract_strided_slice %7 {offsets = [0, 0], sizes = [128, 1], strides = [1, 1]} : vector<128x3xf32> to vector<128x1xf32>
    %11 = vector.extract_strided_slice %7 {offsets = [0, 1], sizes = [128, 1], strides = [1, 1]} : vector<128x3xf32> to vector<128x1xf32>
    %12 = vector.extract_strided_slice %7 {offsets = [0, 2], sizes = [128, 1], strides = [1, 1]} : vector<128x3xf32> to vector<128x1xf32>
    %c0_i32 = arith.constant 0 : i32
    %c2_i32 = arith.constant 2 : i32
    %13 = arith.addi %c0_i32, %c2_i32 : i32
    %c1_i32 = arith.constant 1 : i32
    scf.for %arg7 = %c0_i32 to %13 step %c1_i32  : i32 {
      %c1_i32_7 = arith.constant 1 : i32
      %14 = arith.muli %arg7, %c1_i32_7 : i32
      %c0_i32_8 = arith.constant 0 : i32
      %15 = arith.addi %c0_i32_8, %14 : i32
      %c128_i32 = arith.constant 128 : i32
      %16 = arith.muli %15, %c128_i32 : i32
      %17 = tpu.assume_multiple %16, 128 : i32
      %c0_9 = arith.constant 0 : index
      %c0_10 = arith.constant 0 : index
      %18 = arith.index_cast %17 : i32 to index
      %19 = vector.load %arg3[%c0_9, %c0_10, %18] : memref<1x3x256xf32, #tpu.memory_space<vmem>>, vector<1x3x128xf32>
      %20 = vector.shape_cast %19 : vector<1x3x128xf32> to vector<3x128xf32>
      %21 = vector.extract_strided_slice %20 {offsets = [0, 0], sizes = [1, 128], strides = [1, 1]} : vector<3x128xf32> to vector<1x128xf32>
      %22 = vector.broadcast %1 : f32 to vector<1x128xf32>
      %23 = arith.divf %21, %22 : vector<1x128xf32>
      %24 = vector.broadcast %3 : f32 to vector<1x128xf32>
      %25 = arith.subf %23, %24 : vector<1x128xf32>
      %26 = vector.extract_strided_slice %20 {offsets = [1, 0], sizes = [1, 128], strides = [1, 1]} : vector<3x128xf32> to vector<1x128xf32>
      %27 = vector.broadcast %1 : f32 to vector<1x128xf32>
      %28 = arith.divf %26, %27 : vector<1x128xf32>
      %29 = vector.broadcast %5 : f32 to vector<1x128xf32>
      %30 = arith.subf %28, %29 : vector<1x128xf32>
      %31 = vector.extract_strided_slice %20 {offsets = [2, 0], sizes = [1, 128], strides = [1, 1]} : vector<3x128xf32> to vector<1x128xf32>
      %32 = vector.broadcast %1 : f32 to vector<1x128xf32>
      %33 = arith.divf %31, %32 : vector<1x128xf32>
      %34 = vector.broadcast %10 : vector<128x1xf32> to vector<128x128xf32>
      %35 = vector.broadcast %25 : vector<1x128xf32> to vector<128x128xf32>
      %36 = arith.subf %34, %35 : vector<128x128xf32>
      %37 = vector.broadcast %11 : vector<128x1xf32> to vector<128x128xf32>
      %38 = vector.broadcast %30 : vector<1x128xf32> to vector<128x128xf32>
      %39 = arith.subf %37, %38 : vector<128x128xf32>
      %40 = vector.broadcast %12 : vector<128x1xf32> to vector<128x128xf32>
      %41 = vector.broadcast %33 : vector<1x128xf32> to vector<128x128xf32>
      %42 = arith.subf %40, %41 : vector<128x128xf32>
      %43 = arith.mulf %36, %36 : vector<128x128xf32>
      %44 = arith.mulf %39, %39 : vector<128x128xf32>
      %45 = arith.addf %43, %44 : vector<128x128xf32>
      %46 = arith.mulf %42, %42 : vector<128x128xf32>
      %47 = arith.addf %45, %46 : vector<128x128xf32>
      %cst = arith.constant 0.000000e+00 : f32
      %48 = vector.broadcast %cst : f32 to vector<16x128xf32>
      %cst_11 = arith.constant 0.000000e+00 : f32
      %49 = vector.broadcast %cst_11 : f32 to vector<1x128xf32>
      %cst_12 = arith.constant dense<0x7F800000> : vector<128xf32>
      %50 = vector.multi_reduction <minimumf>, %47, %cst_12 [0] : vector<128x128xf32> to vector<128xf32>
      %51 = vector.shape_cast %50 : vector<128xf32> to vector<1x128xf32>
      %52 = vector.broadcast %51 : vector<1x128xf32> to vector<128x128xf32>
      %53 = arith.cmpf oeq, %47, %52 : vector<128x128xf32>
      %54 = arith.extui %53 : vector<128x128xi1> to vector<128x128xi32>
      %55 = arith.sitofp %54 : vector<128x128xi32> to vector<128x128xf32>
      %cst_13 = arith.constant dense<0.000000e+00> : vector<40x128xf32>
      %56 = tpu.matmul %9, %55, %cst_13 {dimension_numbers = #tpu.dot_dimension_numbers<[1], [0], [0], [1], [0, 0, 1, 1], [], []>, precision = #tpu.contract_precision<fp32>} : vector<40x128xf32>, vector<128x128xf32>, vector<40x128xf32> -> vector<40x128xf32>
      %57 = vector.extract_strided_slice %56 {offsets = [0, 0], sizes = [24, 128], strides = [1, 1]} : vector<40x128xf32> to vector<24x128xf32>
      %58 = vector.extract_strided_slice %56 {offsets = [24, 0], sizes = [16, 128], strides = [1, 1]} : vector<40x128xf32> to vector<16x128xf32>
      %cst_14 = arith.constant 0.000000e+00 : f32
      %59 = vector.broadcast %cst_14 : f32 to vector<1x128xf32>
      %60 = arith.subf %59, %51 : vector<1x128xf32>
      %61 = math.exp %60 : vector<1x128xf32>
      %62 = vector.broadcast %61 : vector<1x128xf32> to vector<16x128xf32>
      %63 = arith.mulf %62, %58 : vector<16x128xf32>
      %64 = arith.addf %48, %63 : vector<16x128xf32>
      %65 = arith.addf %49, %61 : vector<1x128xf32>
      %cst_15 = arith.constant 1.000000e+30 : f32
      %66 = vector.broadcast %cst_15 : f32 to vector<128x128xf32>
      %67 = arith.select %53, %66, %47 : vector<128x128xi1>, vector<128x128xf32>
      %cst_16 = arith.constant dense<0x7F800000> : vector<128xf32>
      %68 = vector.multi_reduction <minimumf>, %67, %cst_16 [0] : vector<128x128xf32> to vector<128xf32>
      %69 = vector.shape_cast %68 : vector<128xf32> to vector<1x128xf32>
      %70 = vector.broadcast %69 : vector<1x128xf32> to vector<128x128xf32>
      %71 = arith.cmpf oeq, %67, %70 : vector<128x128xf32>
      %72 = arith.extui %71 : vector<128x128xi1> to vector<128x128xi32>
      %73 = arith.sitofp %72 : vector<128x128xi32> to vector<128x128xf32>
      %cst_17 = arith.constant dense<0.000000e+00> : vector<40x128xf32>
      %74 = tpu.matmul %9, %73, %cst_17 {dimension_numbers = #tpu.dot_dimension_numbers<[1], [0], [0], [1], [0, 0, 1, 1], [], []>, precision = #tpu.contract_precision<fp32>} : vector<40x128xf32>, vector<128x128xf32>, vector<40x128xf32> -> vector<40x128xf32>
      %75 = vector.extract_strided_slice %74 {offsets = [0, 0], sizes = [24, 128], strides = [1, 1]} : vector<40x128xf32> to vector<24x128xf32>
      %76 = vector.extract_strided_slice %74 {offsets = [24, 0], sizes = [16, 128], strides = [1, 1]} : vector<40x128xf32> to vector<16x128xf32>
      %77 = arith.subf %75, %57 : vector<24x128xf32>
      %78 = math.absf %77 : vector<24x128xf32>
      %cst_18 = arith.constant dense<0.000000e+00> : vector<128xf32>
      %79 = vector.multi_reduction <add>, %78, %cst_18 [0] : vector<24x128xf32> to vector<128xf32>
      %80 = vector.shape_cast %79 : vector<128xf32> to vector<1x128xf32>
      %cst_19 = arith.constant 0.00210721022 : f32
      %81 = vector.broadcast %cst_19 : f32 to vector<1x128xf32>
      %82 = arith.cmpf olt, %80, %81 : vector<1x128xf32>
      %83 = arith.extui %82 : vector<1x128xi1> to vector<1x128xi32>
      %84 = arith.sitofp %83 : vector<1x128xi32> to vector<1x128xf32>
      %cst_20 = arith.constant 0.000000e+00 : f32
      %85 = vector.broadcast %cst_20 : f32 to vector<1x128xf32>
      %86 = arith.subf %85, %69 : vector<1x128xf32>
      %87 = math.exp %86 : vector<1x128xf32>
      %88 = arith.mulf %87, %84 : vector<1x128xf32>
      %89 = vector.broadcast %88 : vector<1x128xf32> to vector<16x128xf32>
      %90 = arith.mulf %89, %76 : vector<16x128xf32>
      %91 = arith.addf %64, %90 : vector<16x128xf32>
      %92 = arith.addf %65, %88 : vector<1x128xf32>
      %cst_21 = arith.constant 1.000000e+30 : f32
      %93 = vector.broadcast %cst_21 : f32 to vector<128x128xf32>
      %94 = arith.select %71, %93, %67 : vector<128x128xi1>, vector<128x128xf32>
      %cst_22 = arith.constant dense<0x7F800000> : vector<128xf32>
      %95 = vector.multi_reduction <minimumf>, %94, %cst_22 [0] : vector<128x128xf32> to vector<128xf32>
      %96 = vector.shape_cast %95 : vector<128xf32> to vector<1x128xf32>
      %97 = vector.broadcast %96 : vector<1x128xf32> to vector<128x128xf32>
      %98 = arith.cmpf oeq, %94, %97 : vector<128x128xf32>
      %99 = arith.extui %98 : vector<128x128xi1> to vector<128x128xi32>
      %100 = arith.sitofp %99 : vector<128x128xi32> to vector<128x128xf32>
      %cst_23 = arith.constant dense<0.000000e+00> : vector<40x128xf32>
      %101 = tpu.matmul %9, %100, %cst_23 {dimension_numbers = #tpu.dot_dimension_numbers<[1], [0], [0], [1], [0, 0, 1, 1], [], []>, precision = #tpu.contract_precision<fp32>} : vector<40x128xf32>, vector<128x128xf32>, vector<40x128xf32> -> vector<40x128xf32>
      %102 = vector.extract_strided_slice %101 {offsets = [0, 0], sizes = [24, 128], strides = [1, 1]} : vector<40x128xf32> to vector<24x128xf32>
      %103 = vector.extract_strided_slice %101 {offsets = [24, 0], sizes = [16, 128], strides = [1, 1]} : vector<40x128xf32> to vector<16x128xf32>
      %104 = arith.subf %102, %57 : vector<24x128xf32>
      %105 = math.absf %104 : vector<24x128xf32>
      %cst_24 = arith.constant dense<0.000000e+00> : vector<128xf32>
      %106 = vector.multi_reduction <add>, %105, %cst_24 [0] : vector<24x128xf32> to vector<128xf32>
      %107 = vector.shape_cast %106 : vector<128xf32> to vector<1x128xf32>
      %cst_25 = arith.constant 0.00210721022 : f32
      %108 = vector.broadcast %cst_25 : f32 to vector<1x128xf32>
      %109 = arith.cmpf olt, %107, %108 : vector<1x128xf32>
      %110 = arith.extui %109 : vector<1x128xi1> to vector<1x128xi32>
      %111 = arith.sitofp %110 : vector<1x128xi32> to vector<1x128xf32>
      %cst_26 = arith.constant 0.000000e+00 : f32
      %112 = vector.broadcast %cst_26 : f32 to vector<1x128xf32>
      %113 = arith.subf %112, %96 : vector<1x128xf32>
      %114 = math.exp %113 : vector<1x128xf32>
      %115 = arith.mulf %114, %111 : vector<1x128xf32>
      %116 = vector.broadcast %115 : vector<1x128xf32> to vector<16x128xf32>
      %117 = arith.mulf %116, %103 : vector<16x128xf32>
      %118 = arith.addf %91, %117 : vector<16x128xf32>
      %119 = arith.addf %92, %115 : vector<1x128xf32>
      %cst_27 = arith.constant 1.000000e+30 : f32
      %120 = vector.broadcast %cst_27 : f32 to vector<128x128xf32>
      %121 = arith.select %98, %120, %94 : vector<128x128xi1>, vector<128x128xf32>
      %cst_28 = arith.constant dense<0x7F800000> : vector<128xf32>
      %122 = vector.multi_reduction <minimumf>, %121, %cst_28 [0] : vector<128x128xf32> to vector<128xf32>
      %123 = vector.shape_cast %122 : vector<128xf32> to vector<1x128xf32>
      %124 = vector.broadcast %123 : vector<1x128xf32> to vector<128x128xf32>
      %125 = arith.cmpf oeq, %121, %124 : vector<128x128xf32>
      %126 = arith.extui %125 : vector<128x128xi1> to vector<128x128xi32>
      %127 = arith.sitofp %126 : vector<128x128xi32> to vector<128x128xf32>
      %cst_29 = arith.constant dense<0.000000e+00> : vector<40x128xf32>
      %128 = tpu.matmul %9, %127, %cst_29 {dimension_numbers = #tpu.dot_dimension_numbers<[1], [0], [0], [1], [0, 0, 1, 1], [], []>, precision = #tpu.contract_precision<fp32>} : vector<40x128xf32>, vector<128x128xf32>, vector<40x128xf32> -> vector<40x128xf32>
      %129 = vector.extract_strided_slice %128 {offsets = [0, 0], sizes = [24, 128], strides = [1, 1]} : vector<40x128xf32> to vector<24x128xf32>
      %130 = vector.extract_strided_slice %128 {offsets = [24, 0], sizes = [16, 128], strides = [1, 1]} : vector<40x128xf32> to vector<16x128xf32>
      %131 = arith.subf %129, %57 : vector<24x128xf32>
      %132 = math.absf %131 : vector<24x128xf32>
      %cst_30 = arith.constant dense<0.000000e+00> : vector<128xf32>
      %133 = vector.multi_reduction <add>, %132, %cst_30 [0] : vector<24x128xf32> to vector<128xf32>
      %134 = vector.shape_cast %133 : vector<128xf32> to vector<1x128xf32>
      %cst_31 = arith.constant 0.00210721022 : f32
      %135 = vector.broadcast %cst_31 : f32 to vector<1x128xf32>
      %136 = arith.cmpf olt, %134, %135 : vector<1x128xf32>
      %137 = arith.extui %136 : vector<1x128xi1> to vector<1x128xi32>
      %138 = arith.sitofp %137 : vector<1x128xi32> to vector<1x128xf32>
      %cst_32 = arith.constant 0.000000e+00 : f32
      %139 = vector.broadcast %cst_32 : f32 to vector<1x128xf32>
      %140 = arith.subf %139, %123 : vector<1x128xf32>
      %141 = math.exp %140 : vector<1x128xf32>
      %142 = arith.mulf %141, %138 : vector<1x128xf32>
      %143 = vector.broadcast %142 : vector<1x128xf32> to vector<16x128xf32>
      %144 = arith.mulf %143, %130 : vector<16x128xf32>
      %145 = arith.addf %118, %144 : vector<16x128xf32>
      %146 = arith.addf %119, %142 : vector<1x128xf32>
      %cst_33 = arith.constant 1.000000e+30 : f32
      %147 = vector.broadcast %cst_33 : f32 to vector<128x128xf32>
      %148 = arith.select %125, %147, %121 : vector<128x128xi1>, vector<128x128xf32>
      %cst_34 = arith.constant dense<0x7F800000> : vector<128xf32>
      %149 = vector.multi_reduction <minimumf>, %148, %cst_34 [0] : vector<128x128xf32> to vector<128xf32>
      %150 = vector.shape_cast %149 : vector<128xf32> to vector<1x128xf32>
      %151 = vector.broadcast %150 : vector<1x128xf32> to vector<128x128xf32>
      %152 = arith.cmpf oeq, %148, %151 : vector<128x128xf32>
      %153 = arith.extui %152 : vector<128x128xi1> to vector<128x128xi32>
      %154 = arith.sitofp %153 : vector<128x128xi32> to vector<128x128xf32>
      %cst_35 = arith.constant dense<0.000000e+00> : vector<40x128xf32>
      %155 = tpu.matmul %9, %154, %cst_35 {dimension_numbers = #tpu.dot_dimension_numbers<[1], [0], [0], [1], [0, 0, 1, 1], [], []>, precision = #tpu.contract_precision<fp32>} : vector<40x128xf32>, vector<128x128xf32>, vector<40x128xf32> -> vector<40x128xf32>
      %156 = vector.extract_strided_slice %155 {offsets = [0, 0], sizes = [24, 128], strides = [1, 1]} : vector<40x128xf32> to vector<24x128xf32>
      %157 = vector.extract_strided_slice %155 {offsets = [24, 0], sizes = [16, 128], strides = [1, 1]} : vector<40x128xf32> to vector<16x128xf32>
      %158 = arith.subf %156, %57 : vector<24x128xf32>
      %159 = math.absf %158 : vector<24x128xf32>
      %cst_36 = arith.constant dense<0.000000e+00> : vector<128xf32>
      %160 = vector.multi_reduction <add>, %159, %cst_36 [0] : vector<24x128xf32> to vector<128xf32>
      %161 = vector.shape_cast %160 : vector<128xf32> to vector<1x128xf32>
      %cst_37 = arith.constant 0.00210721022 : f32
      %162 = vector.broadcast %cst_37 : f32 to vector<1x128xf32>
      %163 = arith.cmpf olt, %161, %162 : vector<1x128xf32>
      %164 = arith.extui %163 : vector<1x128xi1> to vector<1x128xi32>
      %165 = arith.sitofp %164 : vector<1x128xi32> to vector<1x128xf32>
      %cst_38 = arith.constant 0.000000e+00 : f32
      %166 = vector.broadcast %cst_38 : f32 to vector<1x128xf32>
      %167 = arith.subf %166, %150 : vector<1x128xf32>
      %168 = math.exp %167 : vector<1x128xf32>
      %169 = arith.mulf %168, %165 : vector<1x128xf32>
      %170 = vector.broadcast %169 : vector<1x128xf32> to vector<16x128xf32>
      %171 = arith.mulf %170, %157 : vector<16x128xf32>
      %172 = arith.addf %145, %171 : vector<16x128xf32>
      %173 = arith.addf %146, %169 : vector<1x128xf32>
      %cst_39 = arith.constant 1.000000e+30 : f32
      %174 = vector.broadcast %cst_39 : f32 to vector<128x128xf32>
      %175 = arith.select %152, %174, %148 : vector<128x128xi1>, vector<128x128xf32>
      %cst_40 = arith.constant dense<0x7F800000> : vector<128xf32>
      %176 = vector.multi_reduction <minimumf>, %175, %cst_40 [0] : vector<128x128xf32> to vector<128xf32>
      %177 = vector.shape_cast %176 : vector<128xf32> to vector<1x128xf32>
      %178 = vector.broadcast %177 : vector<1x128xf32> to vector<128x128xf32>
      %179 = arith.cmpf oeq, %175, %178 : vector<128x128xf32>
      %180 = arith.extui %179 : vector<128x128xi1> to vector<128x128xi32>
      %181 = arith.sitofp %180 : vector<128x128xi32> to vector<128x128xf32>
      %cst_41 = arith.constant dense<0.000000e+00> : vector<40x128xf32>
      %182 = tpu.matmul %9, %181, %cst_41 {dimension_numbers = #tpu.dot_dimension_numbers<[1], [0], [0], [1], [0, 0, 1, 1], [], []>, precision = #tpu.contract_precision<fp32>} : vector<40x128xf32>, vector<128x128xf32>, vector<40x128xf32> -> vector<40x128xf32>
      %183 = vector.extract_strided_slice %182 {offsets = [0, 0], sizes = [24, 128], strides = [1, 1]} : vector<40x128xf32> to vector<24x128xf32>
      %184 = vector.extract_strided_slice %182 {offsets = [24, 0], sizes = [16, 128], strides = [1, 1]} : vector<40x128xf32> to vector<16x128xf32>
      %185 = arith.subf %183, %57 : vector<24x128xf32>
      %186 = math.absf %185 : vector<24x128xf32>
      %cst_42 = arith.constant dense<0.000000e+00> : vector<128xf32>
      %187 = vector.multi_reduction <add>, %186, %cst_42 [0] : vector<24x128xf32> to vector<128xf32>
      %188 = vector.shape_cast %187 : vector<128xf32> to vector<1x128xf32>
      %cst_43 = arith.constant 0.00210721022 : f32
      %189 = vector.broadcast %cst_43 : f32 to vector<1x128xf32>
      %190 = arith.cmpf olt, %188, %189 : vector<1x128xf32>
      %191 = arith.extui %190 : vector<1x128xi1> to vector<1x128xi32>
      %192 = arith.sitofp %191 : vector<1x128xi32> to vector<1x128xf32>
      %cst_44 = arith.constant 0.000000e+00 : f32
      %193 = vector.broadcast %cst_44 : f32 to vector<1x128xf32>
      %194 = arith.subf %193, %177 : vector<1x128xf32>
      %195 = math.exp %194 : vector<1x128xf32>
      %196 = arith.mulf %195, %192 : vector<1x128xf32>
      %197 = vector.broadcast %196 : vector<1x128xf32> to vector<16x128xf32>
      %198 = arith.mulf %197, %184 : vector<16x128xf32>
      %199 = arith.addf %172, %198 : vector<16x128xf32>
      %200 = arith.addf %173, %196 : vector<1x128xf32>
      %cst_45 = arith.constant 1.000000e+00 : f32
      %201 = vector.broadcast %cst_45 : f32 to vector<1x128xf32>
      %202 = arith.divf %201, %200 : vector<1x128xf32>
      %203 = vector.broadcast %202 : vector<1x128xf32> to vector<16x128xf32>
      %204 = arith.mulf %199, %203 : vector<16x128xf32>
      %205 = vector.extract_strided_slice %204 {offsets = [0, 0], sizes = [1, 128], strides = [1, 1]} : vector<16x128xf32> to vector<1x128xf32>
      %206 = arith.mulf %205, %25 : vector<1x128xf32>
      %207 = vector.extract_strided_slice %204 {offsets = [1, 0], sizes = [1, 128], strides = [1, 1]} : vector<16x128xf32> to vector<1x128xf32>
      %208 = arith.mulf %207, %30 : vector<1x128xf32>
      %209 = arith.addf %206, %208 : vector<1x128xf32>
      %210 = vector.extract_strided_slice %204 {offsets = [2, 0], sizes = [1, 128], strides = [1, 1]} : vector<16x128xf32> to vector<1x128xf32>
      %211 = arith.mulf %210, %33 : vector<1x128xf32>
      %212 = arith.addf %209, %211 : vector<1x128xf32>
      %213 = vector.extract_strided_slice %204 {offsets = [3, 0], sizes = [1, 128], strides = [1, 1]} : vector<16x128xf32> to vector<1x128xf32>
      %214 = arith.addf %212, %213 : vector<1x128xf32>
      %c0_46 = arith.constant 0 : index
      %c0_47 = arith.constant 0 : index
      %215 = arith.index_cast %17 : i32 to index
      %216 = vector.load %arg6[%c0_46, %c0_47, %215] : memref<1x3x256xf32, #tpu.memory_space<vmem>>, vector<1x1x128xf32>
      %217 = vector.shape_cast %216 : vector<1x1x128xf32> to vector<1x128xf32>
      %218 = vector.shape_cast %214 : vector<1x128xf32> to vector<1x1x128xf32>
      tpu.vector_store %arg6[%c0_46, %c0_47, %215], %218 {strides = array<i32>} : memref<1x3x256xf32, #tpu.memory_space<vmem>>, vector<1x1x128xf32>,
      %219 = vector.extract_strided_slice %204 {offsets = [4, 0], sizes = [1, 128], strides = [1, 1]} : vector<16x128xf32> to vector<1x128xf32>
      %220 = arith.mulf %219, %25 : vector<1x128xf32>
      %221 = vector.extract_strided_slice %204 {offsets = [5, 0], sizes = [1, 128], strides = [1, 1]} : vector<16x128xf32> to vector<1x128xf32>
      %222 = arith.mulf %221, %30 : vector<1x128xf32>
      %223 = arith.addf %220, %222 : vector<1x128xf32>
      %224 = vector.extract_strided_slice %204 {offsets = [6, 0], sizes = [1, 128], strides = [1, 1]} : vector<16x128xf32> to vector<1x128xf32>
      %225 = arith.mulf %224, %33 : vector<1x128xf32>
      %226 = arith.addf %223, %225 : vector<1x128xf32>
      %227 = vector.extract_strided_slice %204 {offsets = [7, 0], sizes = [1, 128], strides = [1, 1]} : vector<16x128xf32> to vector<1x128xf32>
      %228 = arith.addf %226, %227 : vector<1x128xf32>
      %c0_48 = arith.constant 0 : index
      %c1_49 = arith.constant 1 : index
      %229 = arith.index_cast %17 : i32 to index
      %230 = vector.load %arg6[%c0_48, %c1_49, %229] : memref<1x3x256xf32, #tpu.memory_space<vmem>>, vector<1x1x128xf32>
      %231 = vector.shape_cast %230 : vector<1x1x128xf32> to vector<1x128xf32>
      %232 = vector.shape_cast %228 : vector<1x128xf32> to vector<1x1x128xf32>
      tpu.vector_store %arg6[%c0_48, %c1_49, %229], %232 {strides = array<i32>} : memref<1x3x256xf32, #tpu.memory_space<vmem>>, vector<1x1x128xf32>,
      %233 = vector.extract_strided_slice %204 {offsets = [8, 0], sizes = [1, 128], strides = [1, 1]} : vector<16x128xf32> to vector<1x128xf32>
      %234 = arith.mulf %233, %25 : vector<1x128xf32>
      %235 = vector.extract_strided_slice %204 {offsets = [9, 0], sizes = [1, 128], strides = [1, 1]} : vector<16x128xf32> to vector<1x128xf32>
      %236 = arith.mulf %235, %30 : vector<1x128xf32>
      %237 = arith.addf %234, %236 : vector<1x128xf32>
      %238 = vector.extract_strided_slice %204 {offsets = [10, 0], sizes = [1, 128], strides = [1, 1]} : vector<16x128xf32> to vector<1x128xf32>
      %239 = arith.mulf %238, %33 : vector<1x128xf32>
      %240 = arith.addf %237, %239 : vector<1x128xf32>
      %241 = vector.extract_strided_slice %204 {offsets = [11, 0], sizes = [1, 128], strides = [1, 1]} : vector<16x128xf32> to vector<1x128xf32>
      %242 = arith.addf %240, %241 : vector<1x128xf32>
      %c0_50 = arith.constant 0 : index
      %c2_51 = arith.constant 2 : index
      %243 = arith.index_cast %17 : i32 to index
      %244 = vector.load %arg6[%c0_50, %c2_51, %243] : memref<1x3x256xf32, #tpu.memory_space<vmem>>, vector<1x1x128xf32>
      %245 = vector.shape_cast %244 : vector<1x1x128xf32> to vector<1x128xf32>
      %246 = vector.shape_cast %242 : vector<1x128xf32> to vector<1x1x128xf32>
      tpu.vector_store %arg6[%c0_50, %c2_51, %243], %246 {strides = array<i32>} : memref<1x3x256xf32, #tpu.memory_space<vmem>>, vector<1x1x128xf32>,
    }
    %c2_i32_6 = arith.constant 2 : i32
    return
  }
  func.func @transform_0(%arg0: i32, %arg1: i32) -> (i32, i32) {
    %c0_i32 = arith.constant 0 : i32
    %c0_i32_0 = arith.constant 0 : i32
    %c0_i32_1 = arith.constant 0 : i32
    return %c0_i32, %c0_i32_0 : i32, i32
  }
  func.func @transform_1(%arg0: i32, %arg1: i32) -> (i32, i32, i32) {
    %c0_i32 = arith.constant 0 : i32
    %c0_i32_0 = arith.constant 0 : i32
    return %arg0, %c0_i32, %arg1 : i32, i32, i32
  }
  func.func @transform_2(%arg0: i32, %arg1: i32) -> (i32, i32, i32) {
    %c0_i32 = arith.constant 0 : i32
    %c0_i32_0 = arith.constant 0 : i32
    %c0_i32_1 = arith.constant 0 : i32
    return %arg0, %c0_i32, %c0_i32_0 : i32, i32, i32
  }
  func.func @transform_3(%arg0: i32, %arg1: i32) -> (i32, i32, i32) {
    %c0_i32 = arith.constant 0 : i32
    %c0_i32_0 = arith.constant 0 : i32
    %c0_i32_1 = arith.constant 0 : i32
    return %arg0, %c0_i32, %c0_i32_0 : i32, i32, i32
  }
  func.func @transform_4(%arg0: i32, %arg1: i32) -> (i32, i32, i32) {
    %c0_i32 = arith.constant 0 : i32
    %c0_i32_0 = arith.constant 0 : i32
    return %arg0, %c0_i32, %arg1 : i32, i32, i32
  }
}

</mosaic_0001>

<llo_original>
// kernel: tpu_custom_call.1
$region0: #{tpu_custom_call.1}
  #allocation0 [shape = 'u32[]', space=smem, size = 0x4, offset = 0x4, fixed_abs, tag = 'smem constant byte address 0x4 - core index']
  #allocation1 [shape = 'u32[144,128]{1,0:T(1,128)}', space=vmem, size = 0x12000, scoped, tag = 'internal scratch']
  %s0 = inlined_call_operand.vmem [shape: f32[2,3], index: 0, kind: input, shape index: {}]
  %s1 = inlined_call_operand.vmem [shape: f32[2,3,512], index: 1, kind: input, shape index: {}]
  %s2 = inlined_call_operand.vmem [shape: f32[2,128,3], index: 2, kind: input, shape index: {}]
  %s3 = inlined_call_operand.vmem [shape: f32[2,40,128], index: 3, kind: input, shape index: {}]
  %s4 = inlined_call_operand.vmem [shape: f32[2,3,512], index: 4, kind: output, shape index: {}]
  %s5 = sld [smem:[#allocation0]]
  $region60: #{tpu_custom_call.1} parent=0
    _
  %s7 = ssub.s32 1, %s5
  %s8 = scalar_select 0, %s7, %s5
  $region1: #{tpu_custom_call.1} parent=0
    #allocation2 [shape = 'u8[1024]{0}', space=smem, size = 0x400, scoped, tag = 'input window, operand 0, single buffered']
    #allocation3 [shape = 's32[2]{0}', space=sflag, size = 0x8, scoped, tag = 'scoped memory for tpu_custom_call.1']
    %9 = vsyncpa [#allocation3], 0
    loop: start=0, step=1, limit=6
    $region2: #{tpu_custom_call.1} parent=1 // loop_pre_header
      _
    $region3: #{tpu_custom_call.1} parent=1 // loop_header
      %s11 = sphi 0, %s15
      %p12 = scmp.ge.s32.totalorder %s11, 6
      %s18 = sphi 0, %s30
      %s19 = sphi 0, %s26
      %s20 = sphi 0, %s18
      %s21 = sphi 0, %s19
      %s22 = sphi 0, %s20
      %s23 = sphi 0, %s21
      %s31 = sphi 0, %s31
      %s33 = sphi 0, %s31
      %s34 = sphi 0, %s33
      %s48 = sphi 0, %s34
      %s56 = sphi 0, %s58
      %s59 = sphi 0, %s56
      %s60 = sphi 0, %s59
      %s76 = sphi 0, %s60
      %s82 = sphi 0, %s84
      %s85 = sphi 0, %s82
      %s86 = sphi 0, %s85
      %s102 = sphi 0, %s86
      %s108 = sphi 0, %s110
      %s111 = sphi 0, %s108
      %s112 = sphi 0, %s111
      %s128 = sphi 0, %s112
      %s136 = sphi 0, %s138
      %s139 = sphi 0, %s136
      %s140 = sphi 0, %s139
      %s156 = sphi 0, %s140
    $region4: #{tpu_custom_call.1} parent=1 // loop_header_branch
      %14 = sbr.rel (%p12) target = $region8
    $region5: #{tpu_custom_call.1} parent=1 // loop_body
      %s16 = ssub.s32 %s11, 1
      %s17 = ssub.s32 %s11, 2
      %s24 = sadd.s32 1, %s19
      %p25 = scmp.ge.s32.totalorder %s24, 2
      %s26 = scalar_select %p25, 0, %s24
      %s27 = sadd.s32 1, %s18
      %s28 = scalar_select %p25, %s27, %s18
      %p29 = scmp.ge.s32.totalorder %s28, 2
      %s30 = scalar_select %p29, 0, %s28
      %s32 = sadd.s32 %s31, 1
      %p35 = scmp.eq.s32.totalorder %s11, 3
      %p36 = scmp.ne.s32.totalorder %s31, %s33
      %p37 = scmp.eq.s32.totalorder %s11, 0
      %p38 = por %p36, %p37
      %p39 = scmp.ne.s32.totalorder %s31, %s33
      %p40 = scmp.eq.s32.totalorder %s16, 3
      %p41 = por %p39, %p40
      %p42 = scmp.ne.s32.totalorder %s33, %s34
      %p43 = scmp.eq.s32.totalorder %s16, 0
      %p44 = por %p42, %p43
      %p45 = scmp.ne.s32.totalorder %s33, %s34
      %p46 = scmp.eq.s32.totalorder %s17, 3
      %p47 = por %p45, %p46
      %p49 = scmp.ne.s32.totalorder %s34, %s48
      %p50 = scmp.eq.s32.totalorder %s17, 0
      %p51 = por %p49, %p50
      %s52 = ssub.s32 %s18, %s30
      %s53 = ssub.s32 %s19, %s26
      %s54 = sor.u32 %s52, %s53
      %p55 = scmp.eq.s32.totalorder %s54, 0
      %s57 = sadd.s32 %s56, 1
      %s58 = scalar_select %p55, %s56, %s57
      %p61 = pneg %p55
      %p62 = scmp.eq.s32.totalorder %s11, 3
      %p63 = por %p61, %p62
      %p64 = scmp.ne.s32.totalorder %s56, %s59
      %p65 = scmp.eq.s32.totalorder %s11, 0
      %p66 = por %p64, %p65
      %p67 = scmp.ne.s32.totalorder %s56, %s59
      %p68 = scmp.eq.s32.totalorder %s16, 3
      %p69 = por %p67, %p68
      %p70 = scmp.ne.s32.totalorder %s59, %s60
      %p71 = scmp.eq.s32.totalorder %s16, 0
      %p72 = por %p70, %p71
      %p73 = scmp.ne.s32.totalorder %s59, %s60
      %p74 = scmp.eq.s32.totalorder %s17, 3
      %p75 = por %p73, %p74
      %p77 = scmp.ne.s32.totalorder %s60, %s76
      %p78 = scmp.eq.s32.totalorder %s17, 0
      %p79 = por %p77, %p78
      %s80 = ssub.s32 %s18, %s30
      %p81 = scmp.eq.s32.totalorder %s80, 0
      %s83 = sadd.s32 %s82, 1
      %s84 = scalar_select %p81, %s82, %s83
      %p87 = pneg %p81
      %p88 = scmp.eq.s32.totalorder %s11, 3
      %p89 = por %p87, %p88
      %p90 = scmp.ne.s32.totalorder %s82, %s85
      %p91 = scmp.eq.s32.totalorder %s11, 0
      %p92 = por %p90, %p91
      %p93 = scmp.ne.s32.totalorder %s82, %s85
      %p94 = scmp.eq.s32.totalorder %s16, 3
      %p95 = por %p93, %p94
      %p96 = scmp.ne.s32.totalorder %s85, %s86
      %p97 = scmp.eq.s32.totalorder %s16, 0
      %p98 = por %p96, %p97
      %p99 = scmp.ne.s32.totalorder %s85, %s86
      %p100 = scmp.eq.s32.totalorder %s17, 3
      %p101 = por %p99, %p100
      %p103 = scmp.ne.s32.totalorder %s86, %s102
      %p104 = scmp.eq.s32.totalorder %s17, 0
      %p105 = por %p103, %p104
      %s106 = ssub.s32 %s18, %s30
      %p107 = scmp.eq.s32.totalorder %s106, 0
      %s109 = sadd.s32 %s108, 1
      %s110 = scalar_select %p107, %s108, %s109
      %p113 = pneg %p107
      %p114 = scmp.eq.s32.totalorder %s11, 3
      %p115 = por %p113, %p114
      %p116 = scmp.ne.s32.totalorder %s108, %s111
      %p117 = scmp.eq.s32.totalorder %s11, 0
      %p118 = por %p116, %p117
      %p119 = scmp.ne.s32.totalorder %s108, %s111
      %p120 = scmp.eq.s32.totalorder %s16, 3
      %p121 = por %p119, %p120
      %p122 = scmp.ne.s32.totalorder %s111, %s112
      %p123 = scmp.eq.s32.totalorder %s16, 0
      %p124 = por %p122, %p123
      %p125 = scmp.ne.s32.totalorder %s111, %s112
      %p126 = scmp.eq.s32.totalorder %s17, 3
      %p127 = por %p125, %p126
      %p129 = scmp.ne.s32.totalorder %s112, %s128
      %p130 = scmp.eq.s32.totalorder %s17, 0
      %p131 = por %p129, %p130
      %s132 = ssub.s32 %s18, %s30
      %s133 = ssub.s32 %s19, %s26
      %s134 = sor.u32 %s132, %s133
      %p135 = scmp.eq.s32.totalorder %s134, 0
      %s137 = sadd.s32 %s136, 1
      %s138 = scalar_select %p135, %s136, %s137
      %p141 = pneg %p135
      %p142 = scmp.eq.s32.totalorder %s11, 3
      %p143 = por %p141, %p142
      %p144 = scmp.ne.s32.totalorder %s136, %s139
      %p145 = scmp.eq.s32.totalorder %s11, 0
      %p146 = por %p144, %p145
      %p147 = scmp.ne.s32.totalorder %s136, %s139
      %p148 = scmp.eq.s32.totalorder %s16, 3
      %p149 = por %p147, %p148
      %p150 = scmp.ne.s32.totalorder %s139, %s140
      %p151 = scmp.eq.s32.totalorder %s16, 0
      %p152 = por %p150, %p151
      %p153 = scmp.ne.s32.totalorder %s139, %s140
      %p154 = scmp.eq.s32.totalorder %s17, 3
      %p155 = por %p153, %p154
      %p157 = scmp.ne.s32.totalorder %s140, %s156
      %p158 = scmp.eq.s32.totalorder %s17, 0
      %p159 = por %p157, %p158
      %p160 = scmp.le.s32.totalorder 1, %s11
      %p161 = scmp.lt.s32.totalorder %s11, 5
      %p162 = pnand %p160, %p161
      %p163 = pneg %p162
      // Predicated region
      $region9: #{tpu_custom_call.1} parent=5 // pred_check
        _
      $region10: #{tpu_custom_call.1} parent=5 // pred_check_branch
        %165 = sbr.rel (%p162) target = $region12
      $region11: #{tpu_custom_call.1} parent=5 // pred_region
        %s166 = ssub.s32 %s11, 1
        // Predicated region
        $region13: #{tpu_custom_call.1} parent=11 // pred_check
          %p167 = pneg %p44
        $region14: #{tpu_custom_call.1} parent=11 // pred_check_branch
          %169 = sbr.rel (%p167) target = $region16
        $region15: #{tpu_custom_call.1} parent=11 // pred_region
          %s171 = ssub.s32 32, 32
          %172 = vsyncadd [#allocation3], %s171
          %s174 = sshll.u32 %s0, 4
          %s175 = int_to_ptr.vmem [resolvable:$true] %s174
          %177 = dma.vmem_to_smem %s175, 32, [#allocation2], [#allocation3]
        $region16: #{tpu_custom_call.1} parent=11 // pred_fallthru
          _
      $region12: #{tpu_custom_call.1} parent=5 // pred_fallthru
        _
      %p178 = scmp.lt.s32.totalorder %s11, 4
      // Predicated region
      $region17: #{tpu_custom_call.1} parent=5 // pred_check
        %p179 = pneg %p178
      $region18: #{tpu_custom_call.1} parent=5 // pred_check_branch
        %181 = sbr.rel (%p179) target = $region20
      $region19: #{tpu_custom_call.1} parent=5 // pred_region
        // Predicated region
        $region21: #{tpu_custom_call.1} parent=19 // pred_check
          %p182 = pneg %p66
        $region22: #{tpu_custom_call.1} parent=19 // pred_check_branch
          %184 = sbr.rel (%p182) target = $region24
        $region23: #{tpu_custom_call.1} parent=19 // pred_region
          %s185 = smul.u32 2, %s19
          %p186 = scmp.lt.s32.totalorder %s18, 1
          %s187 = scalar_select %p186, %s18, 1
          %p188 = scmp.lt.s32.totalorder %s185, 3
          %s189 = scalar_select %p188, %s185, 3
          %s190 = smul.addr %s187, 4
          %s191 = sadd.s32 %s189, %s190
          %s192 = smul.addr %s191, 4
          %s193 = scalar_lea.vmem %s1, %s192
          %s194 = smul.u32 2, %s19
        $region24: #{tpu_custom_call.1} parent=19 // pred_fallthru
          _
        // Predicated region
        $region25: #{tpu_custom_call.1} parent=19 // pred_check
          %p195 = pneg %p92
        $region26: #{tpu_custom_call.1} parent=19 // pred_check_branch
          %197 = sbr.rel (%p195) target = $region28
        $region27: #{tpu_custom_call.1} parent=19 // pred_region
          %p198 = scmp.lt.s32.totalorder %s18, 1
          %s199 = scalar_select %p198, %s18, 1
          %s200 = smul.addr %s199, 16
          %s201 = smul.addr %s200, 8
          %s202 = scalar_lea.vmem %s2, %s201
        $region28: #{tpu_custom_call.1} parent=19 // pred_fallthru
          _
        // Predicated region
        $region29: #{tpu_custom_call.1} parent=19 // pred_check
          %p203 = pneg %p118
        $region30: #{tpu_custom_call.1} parent=19 // pred_check_branch
          %205 = sbr.rel (%p203) target = $region32
        $region31: #{tpu_custom_call.1} parent=19 // pred_region
          %p206 = scmp.lt.s32.totalorder %s18, 1
          %s207 = scalar_select %p206, %s18, 1
          %s208 = smul.addr %s207, 5
          %s209 = smul.addr %s208, 8
          %s210 = scalar_lea.vmem %s3, %s209
        $region32: #{tpu_custom_call.1} parent=19 // pred_fallthru
          _
      $region20: #{tpu_custom_call.1} parent=5 // pred_fallthru
        _
      %p211 = scmp.le.s32.totalorder 1, %s11
      %p212 = scmp.lt.s32.totalorder %s11, 5
      %p213 = pnand %p211, %p212
      %p214 = pneg %p213
      // Predicated region
      $region33: #{tpu_custom_call.1} parent=5 // pred_check
        _
      $region34: #{tpu_custom_call.1} parent=5 // pred_check_branch
        %216 = sbr.rel (%p213) target = $region36
      $region35: #{tpu_custom_call.1} parent=5 // pred_region
        %s217 = ssub.s32 %s11, 1
        // Predicated region
        $region37: #{tpu_custom_call.1} parent=35 // pred_check
          %p218 = pneg %p44
        $region38: #{tpu_custom_call.1} parent=35 // pred_check_branch
          %220 = sbr.rel (%p218) target = $region40
        $region39: #{tpu_custom_call.1} parent=35 // pred_region
          %221 = dma.done [#allocation3], 32
        $region40: #{tpu_custom_call.1} parent=35 // pred_fallthru
          _
        %222 = sfence
        %p223 = pneg %p44
        %p224 = pneg %p41
        %s225 = smul.u32 2, %s21
        %p226 = scmp.lt.s32.totalorder %s20, 1
        %s227 = scalar_select %p226, %s20, 1
        %p228 = scmp.lt.s32.totalorder %s225, 3
        %s229 = scalar_select %p228, %s225, 3
        %s230 = smul.addr %s227, 4
        %s231 = sadd.s32 %s229, %s230
        %s232 = smul.addr %s231, 4
        %s233 = scalar_lea.vmem %s1, %s232
        %p234 = pneg %p72
        %p235 = pneg %p69
        %p236 = scmp.lt.s32.totalorder %s20, 1
        %s237 = scalar_select %p236, %s20, 1
        %s238 = smul.addr %s237, 16
        %s239 = smul.addr %s238, 8
        %s240 = scalar_lea.vmem %s2, %s239
        %p241 = pneg %p98
        %p242 = pneg %p95
        %p243 = scmp.lt.s32.totalorder %s20, 1
        %s244 = scalar_select %p243, %s20, 1
        %s245 = smul.addr %s244, 5
        %s246 = smul.addr %s245, 8
        %s247 = scalar_lea.vmem %s3, %s246
        %p248 = pneg %p124
        %p249 = pneg %p121
        %p250 = pneg %p152
        %p251 = pneg %p149
        %s252 = smul.u32 2, %s21
        %p253 = scmp.lt.s32.totalorder %s20, 1
        %s254 = scalar_select %p253, %s20, 1
        %p255 = scmp.lt.s32.totalorder %s252, 3
        %s256 = scalar_select %p255, %s252, 3
        %s257 = smul.addr %s254, 4
        %s258 = sadd.s32 %s256, %s257
        %s259 = smul.addr %s258, 4
        %s260 = scalar_lea.vmem %s4, %s259
        %s261 = smul.u32 2, %s21
        %p262 = scmp.lt.s32.totalorder %s20, 1
        %s263 = scalar_select %p262, %s20, 1
        %p264 = scmp.lt.s32.totalorder %s261, 3
        %s265 = scalar_select %p264, %s261, 3
        %s266 = smul.addr %s263, 4
        %s267 = sadd.s32 %s265, %s266
        %s268 = smul.addr %s267, 4
        %s269 = scalar_lea.vmem %s1, %s268
        %s270 = smul.u32 2, %s21
        %p271 = scmp.lt.s32.totalorder %s20, 1
        %s272 = scalar_select %p271, %s20, 1
        %s273 = smul.addr %s272, 16
        %s274 = smul.addr %s273, 8
        %s275 = scalar_lea.vmem %s2, %s274
        %p276 = scmp.lt.s32.totalorder %s20, 1
        %s277 = scalar_select %p276, %s20, 1
        %s278 = smul.addr %s277, 5
        %s279 = smul.addr %s278, 8
        %s280 = scalar_lea.vmem %s3, %s279
        %s281 = smul.u32 2, %s21
        %p282 = scmp.lt.s32.totalorder %s20, 1
        %s283 = scalar_select %p282, %s20, 1
        %p284 = scmp.lt.s32.totalorder %s281, 3
        %s285 = scalar_select %p284, %s281, 3
        %s286 = smul.addr %s283, 4
        %s287 = sadd.s32 %s285, %s286
        %s288 = smul.addr %s287, 4
        %s289 = scalar_lea.vmem %s4, %s288
        %s290 = smul.u32 2, %s21
        %s291 = smul.u32 %s20, 128
        %s292 = sld [smem:[#allocation2 + %s291]]
        %s293 = sadd.s32 %s291, 1
        %s294 = sld [smem:[#allocation2 + %s293]]
        %s295 = sadd.s32 %s291, 2
        %s296 = sld [smem:[#allocation2 + %s295]]
        %v297 = vld [vmem:[%s275] sm:$0xff]
        %v298 = vld [vmem:[%s275 + $0x8] sm:$0xff]
        %v299 = vld [vmem:[%s275 + $0x10] sm:$0xff]
        %v300 = vld [vmem:[%s275 + $0x18] sm:$0xff]
        %v301 = vld [vmem:[%s275 + $0x20] sm:$0xff]
        %v302 = vld [vmem:[%s275 + $0x28] sm:$0xff]
        %v303 = vld [vmem:[%s275 + $0x30] sm:$0xff]
        %v304 = vld [vmem:[%s275 + $0x38] sm:$0xff]
        %v305 = vld [vmem:[%s275 + $0x40] sm:$0xff]
        %v306 = vld [vmem:[%s275 + $0x48] sm:$0xff]
        %v307 = vld [vmem:[%s275 + $0x50] sm:$0xff]
        %v308 = vld [vmem:[%s275 + $0x58] sm:$0xff]
        %v309 = vld [vmem:[%s275 + $0x60] sm:$0xff]
        %v310 = vld [vmem:[%s275 + $0x68] sm:$0xff]
        %v311 = vld [vmem:[%s275 + $0x70] sm:$0xff]
        %v312 = vld [vmem:[%s275 + $0x78] sm:$0xff]
        %v313 = vld [vmem:[%s280] sm:$0xff]
        %v314 = vld [vmem:[%s280 + $0x8] sm:$0xff]
        %v315 = vld [vmem:[%s280 + $0x10] sm:$0xff]
        %v316 = vld [vmem:[%s280 + $0x18] sm:$0xff]
        %v317 = vld [vmem:[%s280 + $0x20] sm:$0xff]
        loop: start=0, step=1, limit=2
        $region41: #{tpu_custom_call.1} parent=35 // loop_pre_header
          _
        $region42: #{tpu_custom_call.1} parent=35 // loop_header
          %s319 = sphi 0, %s323
          %p320 = scmp.ge.s32.totalorder %s319, 2
        $region43: #{tpu_custom_call.1} parent=35 // loop_header_branch
          %322 = sbr.rel (%p320) target = $region47
        $region44: #{tpu_custom_call.1} parent=35 // loop_body
          %s324 = smul.u32 %s319, 128
          %s325 = sshra.s32 %s324, 7
          %s326 = sand.u32 %s324, 127
          %s327 = smul.addr %s325, 4
          %s328 = scalar_lea.vmem %s269, %s327
          %v329 = vld [vmem:[%s328] sm:$0x7]
          %v330 = vstv %s292
          %v331 = vrcp.pop %v330
          %v332 = vmul.f32 %v329, %v331
          %v333 = vstv %s294
          %v334 = vsub.f32 %v332, %v333
          %v335 = vstv %s296
          %v336 = vsub.f32 %v332, %v335
          %338 = vset.pattern.permute.xlu0 0
          %339 = vperm.xlu0 %338, %v297
          %v340 = vpop.permute.xlu0 %339
          %343 = vset.pattern.permute.xlu0 0
          %344 = vperm.xlu0 %343, %v298
          %v345 = vpop.permute.xlu0 %344
          %348 = vset.pattern.permute.xlu0 0
          %349 = vperm.xlu0 %348, %v299
          %v350 = vpop.permute.xlu0 %349
          %353 = vset.pattern.permute.xlu0 0
          %354 = vperm.xlu0 %353, %v300
          %v355 = vpop.permute.xlu0 %354
          %358 = vset.pattern.permute.xlu0 0
          %359 = vperm.xlu0 %358, %v301
          %v360 = vpop.permute.xlu0 %359
          %363 = vset.pattern.permute.xlu0 0
          %364 = vperm.xlu0 %363, %v302
          %v365 = vpop.permute.xlu0 %364
          %368 = vset.pattern.permute.xlu0 0
          %369 = vperm.xlu0 %368, %v303
          %v370 = vpop.permute.xlu0 %369
          %373 = vset.pattern.permute.xlu0 0
          %374 = vperm.xlu0 %373, %v304
          %v375 = vpop.permute.xlu0 %374
          %378 = vset.pattern.permute.xlu0 0
          %379 = vperm.xlu0 %378, %v305
          %v380 = vpop.permute.xlu0 %379
          %383 = vset.pattern.permute.xlu0 0
          %384 = vperm.xlu0 %383, %v306
          %v385 = vpop.permute.xlu0 %384
          %388 = vset.pattern.permute.xlu0 0
          %389 = vperm.xlu0 %388, %v307
          %v390 = vpop.permute.xlu0 %389
          %393 = vset.pattern.permute.xlu0 0
          %394 = vperm.xlu0 %393, %v308
          %v395 = vpop.permute.xlu0 %394
          %398 = vset.pattern.permute.xlu0 0
          %399 = vperm.xlu0 %398, %v309
          %v400 = vpop.permute.xlu0 %399
          %403 = vset.pattern.permute.xlu0 0
          %404 = vperm.xlu0 %403, %v310
          %v405 = vpop.permute.xlu0 %404
          %408 = vset.pattern.permute.xlu0 0
          %409 = vperm.xlu0 %408, %v311
          %v410 = vpop.permute.xlu0 %409
          %413 = vset.pattern.permute.xlu0 0
          %414 = vperm.xlu0 %413, %v312
          %v415 = vpop.permute.xlu0 %414
          %v417 = vlaneseq
          %v418 = vshrl.u32 %v417, 7
          %v419 = vsub.s32 0, %v418
          %v420 = vrot.slane %v334, %v419
          %v421 = vsub.f32 %v340, %v420
          %v422 = vsub.f32 %v345, %v420
          %v423 = vsub.f32 %v350, %v420
          %v424 = vsub.f32 %v355, %v420
          %v425 = vsub.f32 %v360, %v420
          %v426 = vsub.f32 %v365, %v420
          %v427 = vsub.f32 %v370, %v420
          %v428 = vsub.f32 %v375, %v420
          %v429 = vsub.f32 %v380, %v420
          %v430 = vsub.f32 %v385, %v420
          %v431 = vsub.f32 %v390, %v420
          %v432 = vsub.f32 %v395, %v420
          %v433 = vsub.f32 %v400, %v420
          %v434 = vsub.f32 %v405, %v420
          %v435 = vsub.f32 %v410, %v420
          %v436 = vsub.f32 %v415, %v420
          %437 = vset.pattern.permute.xlu0 1
          %438 = vperm.xlu0 %437, %v297
          %v439 = vpop.permute.xlu0 %438
          %441 = vset.pattern.permute.xlu0 1
          %442 = vperm.xlu0 %441, %v298
          %v443 = vpop.permute.xlu0 %442
          %445 = vset.pattern.permute.xlu0 1
          %446 = vperm.xlu0 %445, %v299
          %v447 = vpop.permute.xlu0 %446
          %449 = vset.pattern.permute.xlu0 1
          %450 = vperm.xlu0 %449, %v300
          %v451 = vpop.permute.xlu0 %450
          %453 = vset.pattern.permute.xlu0 1
          %454 = vperm.xlu0 %453, %v301
          %v455 = vpop.permute.xlu0 %454
          %457 = vset.pattern.permute.xlu0 1
          %458 = vperm.xlu0 %457, %v302
          %v459 = vpop.permute.xlu0 %458
          %461 = vset.pattern.permute.xlu0 1
          %462 = vperm.xlu0 %461, %v303
          %v463 = vpop.permute.xlu0 %462
          %465 = vset.pattern.permute.xlu0 1
          %466 = vperm.xlu0 %465, %v304
          %v467 = vpop.permute.xlu0 %466
          %469 = vset.pattern.permute.xlu0 1
          %470 = vperm.xlu0 %469, %v305
          %v471 = vpop.permute.xlu0 %470
          %473 = vset.pattern.permute.xlu0 1
          %474 = vperm.xlu0 %473, %v306
          %v475 = vpop.permute.xlu0 %474
          %477 = vset.pattern.permute.xlu0 1
          %478 = vperm.xlu0 %477, %v307
          %v479 = vpop.permute.xlu0 %478
          %481 = vset.pattern.permute.xlu0 1
          %482 = vperm.xlu0 %481, %v308
          %v483 = vpop.permute.xlu0 %482
          %485 = vset.pattern.permute.xlu0 1
          %486 = vperm.xlu0 %485, %v309
          %v487 = vpop.permute.xlu0 %486
          %489 = vset.pattern.permute.xlu0 1
          %490 = vperm.xlu0 %489, %v310
          %v491 = vpop.permute.xlu0 %490
          %493 = vset.pattern.permute.xlu0 1
          %494 = vperm.xlu0 %493, %v311
          %v495 = vpop.permute.xlu0 %494
          %497 = vset.pattern.permute.xlu0 1
          %498 = vperm.xlu0 %497, %v312
          %v499 = vpop.permute.xlu0 %498
          %v501 = vlaneseq
          %v502 = vshrl.u32 %v501, 7
          %v503 = vsub.s32 1, %v502
          %v504 = vrot.slane %v336, %v503
          %v505 = vsub.f32 %v439, %v504
          %v506 = vsub.f32 %v443, %v504
          %v507 = vsub.f32 %v447, %v504
          %v508 = vsub.f32 %v451, %v504
          %v509 = vsub.f32 %v455, %v504
          %v510 = vsub.f32 %v459, %v504
          %v511 = vsub.f32 %v463, %v504
          %v512 = vsub.f32 %v467, %v504
          %v513 = vsub.f32 %v471, %v504
          %v514 = vsub.f32 %v475, %v504
          %v515 = vsub.f32 %v479, %v504
          %v516 = vsub.f32 %v483, %v504
          %v517 = vsub.f32 %v487, %v504
          %v518 = vsub.f32 %v491, %v504
          %v519 = vsub.f32 %v495, %v504
          %v520 = vsub.f32 %v499, %v504
          %521 = vset.pattern.permute.xlu0 2
          %522 = vperm.xlu0 %521, %v297
          %v523 = vpop.permute.xlu0 %522
          %525 = vset.pattern.permute.xlu0 2
          %526 = vperm.xlu0 %525, %v298
          %v527 = vpop.permute.xlu0 %526
          %529 = vset.pattern.permute.xlu0 2
          %530 = vperm.xlu0 %529, %v299
          %v531 = vpop.permute.xlu0 %530
          %533 = vset.pattern.permute.xlu0 2
          %534 = vperm.xlu0 %533, %v300
          %v535 = vpop.permute.xlu0 %534
          %537 = vset.pattern.permute.xlu0 2
          %538 = vperm.xlu0 %537, %v301
          %v539 = vpop.permute.xlu0 %538
          %541 = vset.pattern.permute.xlu0 2
          %542 = vperm.xlu0 %541, %v302
          %v543 = vpop.permute.xlu0 %542
          %545 = vset.pattern.permute.xlu0 2
          %546 = vperm.xlu0 %545, %v303
          %v547 = vpop.permute.xlu0 %546
          %549 = vset.pattern.permute.xlu0 2
          %550 = vperm.xlu0 %549, %v304
          %v551 = vpop.permute.xlu0 %550
          %553 = vset.pattern.permute.xlu0 2
          %554 = vperm.xlu0 %553, %v305
          %v555 = vpop.permute.xlu0 %554
          %557 = vset.pattern.permute.xlu0 2
          %558 = vperm.xlu0 %557, %v306
          %v559 = vpop.permute.xlu0 %558
          %561 = vset.pattern.permute.xlu0 2
          %562 = vperm.xlu0 %561, %v307
          %v563 = vpop.permute.xlu0 %562
          %565 = vset.pattern.permute.xlu0 2
          %566 = vperm.xlu0 %565, %v308
          %v567 = vpop.permute.xlu0 %566
          %569 = vset.pattern.permute.xlu0 2
          %570 = vperm.xlu0 %569, %v309
          %v571 = vpop.permute.xlu0 %570
          %573 = vset.pattern.permute.xlu0 2
          %574 = vperm.xlu0 %573, %v310
          %v575 = vpop.permute.xlu0 %574
          %577 = vset.pattern.permute.xlu0 2
          %578 = vperm.xlu0 %577, %v311
          %v579 = vpop.permute.xlu0 %578
          %581 = vset.pattern.permute.xlu0 2
          %582 = vperm.xlu0 %581, %v312
          %v583 = vpop.permute.xlu0 %582
          %v585 = vlaneseq
          %v586 = vshrl.u32 %v585, 7
          %v587 = vsub.s32 2, %v586
          %v588 = vrot.slane %v332, %v587
          %v589 = vsub.f32 %v523, %v588
          %v590 = vsub.f32 %v527, %v588
          %v591 = vsub.f32 %v531, %v588
          %v592 = vsub.f32 %v535, %v588
          %v593 = vsub.f32 %v539, %v588
          %v594 = vsub.f32 %v543, %v588
          %v595 = vsub.f32 %v547, %v588
          %v596 = vsub.f32 %v551, %v588
          %v597 = vsub.f32 %v555, %v588
          %v598 = vsub.f32 %v559, %v588
          %v599 = vsub.f32 %v563, %v588
          %v600 = vsub.f32 %v567, %v588
          %v601 = vsub.f32 %v571, %v588
          %v602 = vsub.f32 %v575, %v588
          %v603 = vsub.f32 %v579, %v588
          %v604 = vsub.f32 %v583, %v588
          %v605 = vmul.f32 %v421, %v421
          %v606 = vmul.f32 %v422, %v422
          %v607 = vmul.f32 %v423, %v423
          %v608 = vmul.f32 %v424, %v424
          %v609 = vmul.f32 %v425, %v425
          %v610 = vmul.f32 %v426, %v426
          %v611 = vmul.f32 %v427, %v427
          %v612 = vmul.f32 %v428, %v428
          %v613 = vmul.f32 %v429, %v429
          %v614 = vmul.f32 %v430, %v430
          %v615 = vmul.f32 %v431, %v431
          %v616 = vmul.f32 %v432, %v432
          %v617 = vmul.f32 %v433, %v433
          %v618 = vmul.f32 %v434, %v434
          %v619 = vmul.f32 %v435, %v435
          %v620 = vmul.f32 %v436, %v436
          %v621 = vmul.f32 %v505, %v505
          %v622 = vmul.f32 %v506, %v506
          %v623 = vmul.f32 %v507, %v507
          %v624 = vmul.f32 %v508, %v508
          %v625 = vmul.f32 %v509, %v509
          %v626 = vmul.f32 %v510, %v510
          %v627 = vmul.f32 %v511, %v511
          %v628 = vmul.f32 %v512, %v512
          %v629 = vmul.f32 %v513, %v513
          %v630 = vmul.f32 %v514, %v514
          %v631 = vmul.f32 %v515, %v515
          %v632 = vmul.f32 %v516, %v516
          %v633 = vmul.f32 %v517, %v517
          %v634 = vmul.f32 %v518, %v518
          %v635 = vmul.f32 %v519, %v519
          %v636 = vmul.f32 %v520, %v520
          %v637 = vadd.f32 %v605, %v621
          %v638 = vadd.f32 %v606, %v622
          %v639 = vadd.f32 %v607, %v623
          %v640 = vadd.f32 %v608, %v624
          %v641 = vadd.f32 %v609, %v625
          %v642 = vadd.f32 %v610, %v626
          %v643 = vadd.f32 %v611, %v627
          %v644 = vadd.f32 %v612, %v628
          %v645 = vadd.f32 %v613, %v629
          %v646 = vadd.f32 %v614, %v630
          %v647 = vadd.f32 %v615, %v631
          %v648 = vadd.f32 %v616, %v632
          %v649 = vadd.f32 %v617, %v633
          %v650 = vadd.f32 %v618, %v634
          %v651 = vadd.f32 %v619, %v635
          %v652 = vadd.f32 %v620, %v636
          %v653 = vmul.f32 %v589, %v589
          %v654 = vmul.f32 %v590, %v590
          %v655 = vmul.f32 %v591, %v591
          %v656 = vmul.f32 %v592, %v592
          %v657 = vmul.f32 %v593, %v593
          %v658 = vmul.f32 %v594, %v594
          %v659 = vmul.f32 %v595, %v595
          %v660 = vmul.f32 %v596, %v596
          %v661 = vmul.f32 %v597, %v597
          %v662 = vmul.f32 %v598, %v598
          %v663 = vmul.f32 %v599, %v599
          %v664 = vmul.f32 %v600, %v600
          %v665 = vmul.f32 %v601, %v601
          %v666 = vmul.f32 %v602, %v602
          %v667 = vmul.f32 %v603, %v603
          %v668 = vmul.f32 %v604, %v604
          %v669 = vadd.f32 %v637, %v653
          %v670 = vadd.f32 %v638, %v654
          %v671 = vadd.f32 %v639, %v655
          %v672 = vadd.f32 %v640, %v656
          %v673 = vadd.f32 %v641, %v657
          %v674 = vadd.f32 %v642, %v658
          %v675 = vadd.f32 %v643, %v659
          %v676 = vadd.f32 %v644, %v660
          %v677 = vadd.f32 %v645, %v661
          %v678 = vadd.f32 %v646, %v662
          %v679 = vadd.f32 %v647, %v663
          %v680 = vadd.f32 %v648, %v664
          %v681 = vadd.f32 %v649, %v665
          %v682 = vadd.f32 %v650, %v666
          %v683 = vadd.f32 %v651, %v667
          %v684 = vadd.f32 %v652, %v668
          %v685 = vmin.f32 %v669, %v673
          %v686 = vmin.f32 %v670, %v674
          %v687 = vmin.f32 %v671, %v675
          %v688 = vmin.f32 %v672, %v676
          %v689 = vmin.f32 %v685, %v677
          %v690 = vmin.f32 %v686, %v678
          %v691 = vmin.f32 %v687, %v679
          %v692 = vmin.f32 %v688, %v680
          %v693 = vmin.f32 %v689, %v681
          %v694 = vmin.f32 %v690, %v682
          %v695 = vmin.f32 %v691, %v683
          %v696 = vmin.f32 %v692, %v684
          %v697 = vmin.f32 %v693, %v694
          %v698 = vmin.f32 %v695, %v696
          %v699 = vmin.f32 %v697, %v698
          %v700 = vrot.slane %v699, 4
          %v701 = vmin.f32 %v699, %v700
          %v702 = vrot.slane %v701, 2
          %v703 = vmin.f32 %v701, %v702
          %v704 = vrot.slane %v703, 1
          %v705 = vmin.f32 %v703, %v704
          %vm706 = vcmp.eq.f32.partialorder %v669, %v705
          %vm707 = vcmp.eq.f32.partialorder %v670, %v705
          %vm708 = vcmp.eq.f32.partialorder %v671, %v705
          %vm709 = vcmp.eq.f32.partialorder %v672, %v705
          %vm710 = vcmp.eq.f32.partialorder %v673, %v705
          %vm711 = vcmp.eq.f32.partialorder %v674, %v705
          %vm712 = vcmp.eq.f32.partialorder %v675, %v705
          %vm713 = vcmp.eq.f32.partialorder %v676, %v705
          %vm714 = vcmp.eq.f32.partialorder %v677, %v705
          %vm715 = vcmp.eq.f32.partialorder %v678, %v705
          %vm716 = vcmp.eq.f32.partialorder %v679, %v705
          %vm717 = vcmp.eq.f32.partialorder %v680, %v705
          %vm718 = vcmp.eq.f32.partialorder %v681, %v705
          %vm719 = vcmp.eq.f32.partialorder %v682, %v705
          %vm720 = vcmp.eq.f32.partialorder %v683, %v705
          %vm721 = vcmp.eq.f32.partialorder %v684, %v705
          %v722 = vsel %vm706, 1, 0
          %v723 = vsel %vm707, 1, 0
          %v724 = vsel %vm708, 1, 0
          %v725 = vsel %vm709, 1, 0
          %v726 = vsel %vm710, 1, 0
          %v727 = vsel %vm711, 1, 0
          %v728 = vsel %vm712, 1, 0
          %v729 = vsel %vm713, 1, 0
          %v730 = vsel %vm714, 1, 0
          %v731 = vsel %vm715, 1, 0
          %v732 = vsel %vm716, 1, 0
          %v733 = vsel %vm717, 1, 0
          %v734 = vsel %vm718, 1, 0
          %v735 = vsel %vm719, 1, 0
          %v736 = vsel %vm720, 1, 0
          %v737 = vsel %vm721, 1, 0
          %v738 = vcvt.s32.f32 %v722
          %v739 = vcvt.s32.f32 %v723
          %v740 = vcvt.s32.f32 %v724
          %v741 = vcvt.s32.f32 %v725
          %v742 = vcvt.s32.f32 %v726
          %v743 = vcvt.s32.f32 %v727
          %v744 = vcvt.s32.f32 %v728
          %v745 = vcvt.s32.f32 %v729
          %v746 = vcvt.s32.f32 %v730
          %v747 = vcvt.s32.f32 %v731
          %v748 = vcvt.s32.f32 %v732
          %v749 = vcvt.s32.f32 %v733
          %v750 = vcvt.s32.f32 %v734
          %v751 = vcvt.s32.f32 %v735
          %v752 = vcvt.s32.f32 %v736
          %v753 = vcvt.s32.f32 %v737
          %754 = vmatprep.subr.mxu0 0.0
          %v755 = vand.u32 %v753, 4294901760
          %756 = vmatpush1.msra.mxu0 %v755
          %757 = vmatprep.subr.mxu0 0.0
          %v758 = vand.u32 %v752, 4294901760
          %759 = vmatpush1.msra.mxu0 %v758
          %760 = vmatprep.subr.mxu0 0.0
          %v761 = vand.u32 %v751, 4294901760
          %762 = vmatpush1.msra.mxu0 %v761
          %763 = vmatprep.subr.mxu0 0.0
          %v764 = vand.u32 %v750, 4294901760
          %765 = vmatpush1.msra.mxu0 %v764
          %766 = vmatprep.subr.mxu0 0.0
          %v767 = vand.u32 %v749, 4294901760
          %768 = vmatpush1.msra.mxu0 %v767
          %769 = vmatprep.subr.mxu0 0.0
          %v770 = vand.u32 %v748, 4294901760
          %771 = vmatpush1.msra.mxu0 %v770
          %772 = vmatprep.subr.mxu0 0.0
          %v773 = vand.u32 %v747, 4294901760
          %774 = vmatpush1.msra.mxu0 %v773
          %775 = vmatprep.subr.mxu0 0.0
          %v776 = vand.u32 %v746, 4294901760
          %777 = vmatpush1.msra.mxu0 %v776
          %778 = vmatprep.subr.mxu0 0.0
          %v779 = vand.u32 %v745, 4294901760
          %780 = vmatpush1.msra.mxu0 %v779
          %781 = vmatprep.subr.mxu0 0.0
          %v782 = vand.u32 %v744, 4294901760
          %783 = vmatpush1.msra.mxu0 %v782
          %784 = vmatprep.subr.mxu0 0.0
          %v785 = vand.u32 %v743, 4294901760
          %786 = vmatpush1.msra.mxu0 %v785
          %787 = vmatprep.subr.mxu0 0.0
          %v788 = vand.u32 %v742, 4294901760
          %789 = vmatpush1.msra.mxu0 %v788
          %790 = vmatprep.subr.mxu0 0.0
          %v791 = vand.u32 %v741, 4294901760
          %792 = vmatpush1.msra.mxu0 %v791
          %793 = vmatprep.subr.mxu0 0.0
          %v794 = vand.u32 %v740, 4294901760
          %795 = vmatpush1.msra.mxu0 %v794
          %796 = vmatprep.subr.mxu0 0.0
          %v797 = vand.u32 %v739, 4294901760
          %798 = vmatpush1.msra.mxu0 %v797
          %799 = vmatprep.subr.mxu0 0.0
          %v800 = vand.u32 %v738, 4294901760
          %801 = vmatpush1.msra.mxu0 %v800
          %802 = vmatprep.subr.mxu0 0.0
          %803 = vmatpush2.msra.mxu0 0.0
          %804 = vmatprep.subr.mxu0 0.0
          %805 = vmatpush2.msra.mxu0 0.0
          %806 = vmatprep.subr.mxu0 0.0
          %807 = vmatpush2.msra.mxu0 0.0
          %808 = vmatprep.subr.mxu0 0.0
          %809 = vmatpush2.msra.mxu0 0.0
          %810 = vmatprep.subr.mxu0 0.0
          %811 = vmatpush2.msra.mxu0 0.0
          %812 = vmatprep.subr.mxu0 0.0
          %813 = vmatpush2.msra.mxu0 0.0
          %814 = vmatprep.subr.mxu0 0.0
          %815 = vmatpush2.msra.mxu0 0.0
          %816 = vmatprep.subr.mxu0 0.0
          %817 = vmatpush2.msra.mxu0 0.0
          %818 = vmatprep.subr.mxu0 0.0
          %819 = vmatpush2.msra.mxu0 0.0
          %820 = vmatprep.subr.mxu0 0.0
          %821 = vmatpush2.msra.mxu0 0.0
          %822 = vmatprep.subr.mxu0 0.0
          %823 = vmatpush2.msra.mxu0 0.0
          %824 = vmatprep.subr.mxu0 0.0
          %825 = vmatpush2.msra.mxu0 0.0
          %826 = vmatprep.subr.mxu0 0.0
          %827 = vmatpush2.msra.mxu0 0.0
          %828 = vmatprep.subr.mxu0 0.0
          %829 = vmatpush2.msra.mxu0 0.0
          %830 = vmatprep.subr.mxu0 0.0
          %831 = vmatpush2.msra.mxu0 0.0
          %832 = vmatprep.subr.mxu0 0.0
          %833 = vmatpush2.msra.mxu0 0.0
          %834 = vmatprep.mubr.f32.mxu0 0.0
          %v835 = vand.u32 %v313, 4294901760
          %v836 = vsub.f32 %v313, %v835
          %v837 = vand.u32 %v836, 4294901760
          %v838 = vsub.f32 %v836, %v837
          %v839 = vand.u32 %v838, 4294901760
          %840 = vmatmul.mubr.f32.gmra.mxu0 %v839
          %v841 = vpop.f32.mrf.mxu0
          %v842 = vadd.f32 0.0, %v841
          %v843 = vpop.f32.mrf.mxu0
          %844 = vmatprep.mubr.f32.mxu0 0.0
          %v845 = vand.u32 %v314, 4294901760
          %v846 = vsub.f32 %v314, %v845
          %v847 = vand.u32 %v846, 4294901760
          %v848 = vsub.f32 %v846, %v847
          %v849 = vand.u32 %v848, 4294901760
          %850 = vmatmul.mubr.f32.gmra.mxu0 %v849
          %v851 = vpop.f32.mrf.mxu0
          %v852 = vadd.f32 0.0, %v851
          %v853 = vpop.f32.mrf.mxu0
          %854 = vmatprep.mubr.f32.mxu0 0.0
          %v855 = vand.u32 %v315, 4294901760
          %v856 = vsub.f32 %v315, %v855
          %v857 = vand.u32 %v856, 4294901760
          %v858 = vsub.f32 %v856, %v857
          %v859 = vand.u32 %v858, 4294901760
          %860 = vmatmul.mubr.f32.gmra.mxu0 %v859
          %v861 = vpop.f32.mrf.mxu0
          %v862 = vadd.f32 0.0, %v861
          %v863 = vpop.f32.mrf.mxu0
          %864 = vmatprep.mubr.f32.mxu0 0.0
          %v865 = vand.u32 %v316, 4294901760
          %v866 = vsub.f32 %v316, %v865
          %v867 = vand.u32 %v866, 4294901760
          %v868 = vsub.f32 %v866, %v867
          %v869 = vand.u32 %v868, 4294901760
          %870 = vmatmul.mubr.f32.gmra.mxu0 %v869
          %v871 = vpop.f32.mrf.mxu0
          %v872 = vadd.f32 0.0, %v871
          %v873 = vpop.f32.mrf.mxu0
          %874 = vmatprep.mubr.f32.mxu0 0.0
          %v875 = vand.u32 %v317, 4294901760
          %v876 = vsub.f32 %v317, %v875
          %v877 = vand.u32 %v876, 4294901760
          %v878 = vsub.f32 %v876, %v877
          %v879 = vand.u32 %v878, 4294901760
          %880 = vmatmul.mubr.f32.gmra.mxu0 %v879
          %v881 = vpop.f32.mrf.mxu0
          %v882 = vadd.f32 0.0, %v881
          %v883 = vpop.f32.mrf.mxu0
          %884 = vdwg.mxu0
          %885 = vmatprep.subr.mxu0 0.0
          %v886 = vand.u32 %v753, 4294901760
          %v887 = vsub.f32 %v753, %v886
          %v888 = vand.u32 %v887, 4294901760
          %v889 = vsub.f32 %v887, %v888
          %v890 = vand.u32 %v889, 4294901760
          %891 = vmatpush1.msra.mxu0 %v890
          %892 = vmatprep.subr.mxu0 0.0
          %v893 = vand.u32 %v752, 4294901760
          %v894 = vsub.f32 %v752, %v893
          %v895 = vand.u32 %v894, 4294901760
          %v896 = vsub.f32 %v894, %v895
          %v897 = vand.u32 %v896, 4294901760
          %898 = vmatpush1.msra.mxu0 %v897
          %899 = vmatprep.subr.mxu0 0.0
          %v900 = vand.u32 %v751, 4294901760
          %v901 = vsub.f32 %v751, %v900
          %v902 = vand.u32 %v901, 4294901760
          %v903 = vsub.f32 %v901, %v902
          %v904 = vand.u32 %v903, 4294901760
          %905 = vmatpush1.msra.mxu0 %v904
          %906 = vmatprep.subr.mxu0 0.0
          %v907 = vand.u32 %v750, 4294901760
          %v908 = vsub.f32 %v750, %v907
          %v909 = vand.u32 %v908, 4294901760
          %v910 = vsub.f32 %v908, %v909
          %v911 = vand.u32 %v910, 4294901760
          %912 = vmatpush1.msra.mxu0 %v911
          %913 = vmatprep.subr.mxu0 0.0
          %v914 = vand.u32 %v749, 4294901760
          %v915 = vsub.f32 %v749, %v914
          %v916 = vand.u32 %v915, 4294901760
          %v917 = vsub.f32 %v915, %v916
          %v918 = vand.u32 %v917, 4294901760
          %919 = vmatpush1.msra.mxu0 %v918
          %920 = vmatprep.subr.mxu0 0.0
          %v921 = vand.u32 %v748, 4294901760
          %v922 = vsub.f32 %v748, %v921
          %v923 = vand.u32 %v922, 4294901760
          %v924 = vsub.f32 %v922, %v923
          %v925 = vand.u32 %v924, 4294901760
          %926 = vmatpush1.msra.mxu0 %v925
          %927 = vmatprep.subr.mxu0 0.0
          %v928 = vand.u32 %v747, 4294901760
          %v929 = vsub.f32 %v747, %v928
          %v930 = vand.u32 %v929, 4294901760
          %v931 = vsub.f32 %v929, %v930
          %v932 = vand.u32 %v931, 4294901760
          %933 = vmatpush1.msra.mxu0 %v932
          %934 = vmatprep.subr.mxu0 0.0
          %v935 = vand.u32 %v746, 4294901760
          %v936 = vsub.f32 %v746, %v935
          %v937 = vand.u32 %v936, 4294901760
          %v938 = vsub.f32 %v936, %v937
          %v939 = vand.u32 %v938, 4294901760
          %940 = vmatpush1.msra.mxu0 %v939
          %941 = vmatprep.subr.mxu0 0.0
          %v942 = vand.u32 %v745, 4294901760
          %v943 = vsub.f32 %v745, %v942
          %v944 = vand.u32 %v943, 4294901760
          %v945 = vsub.f32 %v943, %v944
          %v946 = vand.u32 %v945, 4294901760
          %947 = vmatpush1.msra.mxu0 %v946
          %948 = vmatprep.subr.mxu0 0.0
          %v949 = vand.u32 %v744, 4294901760
          %v950 = vsub.f32 %v744, %v949
          %v951 = vand.u32 %v950, 4294901760
          %v952 = vsub.f32 %v950, %v951
          %v953 = vand.u32 %v952, 4294901760
          %954 = vmatpush1.msra.mxu0 %v953
          %955 = vmatprep.subr.mxu0 0.0
          %v956 = vand.u32 %v743, 4294901760
          %v957 = vsub.f32 %v743, %v956
          %v958 = vand.u32 %v957, 4294901760
          %v959 = vsub.f32 %v957, %v958
          %v960 = vand.u32 %v959, 4294901760
          %961 = vmatpush1.msra.mxu0 %v960
          %962 = vmatprep.subr.mxu0 0.0
          %v963 = vand.u32 %v742, 4294901760
          %v964 = vsub.f32 %v742, %v963
          %v965 = vand.u32 %v964, 4294901760
          %v966 = vsub.f32 %v964, %v965
          %v967 = vand.u32 %v966, 4294901760
          %968 = vmatpush1.msra.mxu0 %v967
          %969 = vmatprep.subr.mxu0 0.0
          %v970 = vand.u32 %v741, 4294901760
          %v971 = vsub.f32 %v741, %v970
          %v972 = vand.u32 %v971, 4294901760
          %v973 = vsub.f32 %v971, %v972
          %v974 = vand.u32 %v973, 4294901760
          %975 = vmatpush1.msra.mxu0 %v974
          %976 = vmatprep.subr.mxu0 0.0
          %v977 = vand.u32 %v740, 4294901760
          %v978 = vsub.f32 %v740, %v977
          %v979 = vand.u32 %v978, 4294901760
          %v980 = vsub.f32 %v978, %v979
          %v981 = vand.u32 %v980, 4294901760
          %982 = vmatpush1.msra.mxu0 %v981
          %983 = vmatprep.subr.mxu0 0.0
          %v984 = vand.u32 %v739, 4294901760
          %v985 = vsub.f32 %v739, %v984
          %v986 = vand.u32 %v985, 4294901760
          %v987 = vsub.f32 %v985, %v986
          %v988 = vand.u32 %v987, 4294901760
          %989 = vmatpush1.msra.mxu0 %v988
          %990 = vmatprep.subr.mxu0 0.0
          %v991 = vand.u32 %v738, 4294901760
          %v992 = vsub.f32 %v738, %v991
          %v993 = vand.u32 %v992, 4294901760
          %v994 = vsub.f32 %v992, %v993
          %v995 = vand.u32 %v994, 4294901760
          %996 = vmatpush1.msra.mxu0 %v995
          %997 = vmatprep.subr.mxu0 0.0
          %998 = vmatpush2.msra.mxu0 0.0
          %999 = vmatprep.subr.mxu0 0.0
          %1000 = vmatpush2.msra.mxu0 0.0
          %1001 = vmatprep.subr.mxu0 0.0
          %1002 = vmatpush2.msra.mxu0 0.0
          %1003 = vmatprep.subr.mxu0 0.0
          %1004 = vmatpush2.msra.mxu0 0.0
          %1005 = vmatprep.subr.mxu0 0.0
          %1006 = vmatpush2.msra.mxu0 0.0
          %1007 = vmatprep.subr.mxu0 0.0
          %1008 = vmatpush2.msra.mxu0 0.0
          %1009 = vmatprep.subr.mxu0 0.0
          %1010 = vmatpush2.msra.mxu0 0.0
          %1011 = vmatprep.subr.mxu0 0.0
          %1012 = vmatpush2.msra.mxu0 0.0
          %1013 = vmatprep.subr.mxu0 0.0
          %1014 = vmatpush2.msra.mxu0 0.0
          %1015 = vmatprep.subr.mxu0 0.0
          %1016 = vmatpush2.msra.mxu0 0.0
          %1017 = vmatprep.subr.mxu0 0.0
          %1018 = vmatpush2.msra.mxu0 0.0
          %1019 = vmatprep.subr.mxu0 0.0
          %1020 = vmatpush2.msra.mxu0 0.0
          %1021 = vmatprep.subr.mxu0 0.0
          %1022 = vmatpush2.msra.mxu0 0.0
          %1023 = vmatprep.subr.mxu0 0.0
          %1024 = vmatpush2.msra.mxu0 0.0
          %1025 = vmatprep.subr.mxu0 0.0
          %1026 = vmatpush2.msra.mxu0 0.0
          %1027 = vmatprep.subr.mxu0 0.0
          %1028 = vmatpush2.msra.mxu0 0.0
          %1029 = vmatprep.mubr.f32.mxu0 0.0
          %v1030 = vand.u32 %v313, 4294901760
          %1031 = vmatmul.mubr.f32.gmra.mxu0 %v1030
          %v1032 = vpop.f32.mrf.mxu0
          %v1033 = vadd.f32 %v842, %v1032
          %v1034 = vpop.f32.mrf.mxu0
          %1035 = vmatprep.mubr.f32.mxu0 0.0
          %v1036 = vand.u32 %v314, 4294901760
          %1037 = vmatmul.mubr.f32.gmra.mxu0 %v1036
          %v1038 = vpop.f32.mrf.mxu0
          %v1039 = vadd.f32 %v852, %v1038
          %v1040 = vpop.f32.mrf.mxu0
          %1041 = vmatprep.mubr.f32.mxu0 0.0
          %v1042 = vand.u32 %v315, 4294901760
          %1043 = vmatmul.mubr.f32.gmra.mxu0 %v1042
          %v1044 = vpop.f32.mrf.mxu0
          %v1045 = vadd.f32 %v862, %v1044
          %v1046 = vpop.f32.mrf.mxu0
          %1047 = vmatprep.mubr.f32.mxu0 0.0
          %v1048 = vand.u32 %v316, 4294901760
          %1049 = vmatmul.mubr.f32.gmra.mxu0 %v1048
          %v1050 = vpop.f32.mrf.mxu0
          %v1051 = vadd.f32 %v872, %v1050
          %v1052 = vpop.f32.mrf.mxu0
          %1053 = vmatprep.mubr.f32.mxu0 0.0
          %v1054 = vand.u32 %v317, 4294901760
          %1055 = vmatmul.mubr.f32.gmra.mxu0 %v1054
          %v1056 = vpop.f32.mrf.mxu0
          %v1057 = vadd.f32 %v882, %v1056
          %v1058 = vpop.f32.mrf.mxu0
          %1059 = vdwg.mxu0
          %1060 = vmatprep.subr.mxu0 0.0
          %v1061 = vand.u32 %v753, 4294901760
          %v1062 = vsub.f32 %v753, %v1061
          %1063 = vmatpush1.msra.mxu0 %v1062
          %1064 = vmatprep.subr.mxu0 0.0
          %v1065 = vand.u32 %v752, 4294901760
          %v1066 = vsub.f32 %v752, %v1065
          %1067 = vmatpush1.msra.mxu0 %v1066
          %1068 = vmatprep.subr.mxu0 0.0
          %v1069 = vand.u32 %v751, 4294901760
          %v1070 = vsub.f32 %v751, %v1069
          %1071 = vmatpush1.msra.mxu0 %v1070
          %1072 = vmatprep.subr.mxu0 0.0
          %v1073 = vand.u32 %v750, 4294901760
          %v1074 = vsub.f32 %v750, %v1073
          %1075 = vmatpush1.msra.mxu0 %v1074
          %1076 = vmatprep.subr.mxu0 0.0
          %v1077 = vand.u32 %v749, 4294901760
          %v1078 = vsub.f32 %v749, %v1077
          %1079 = vmatpush1.msra.mxu0 %v1078
          %1080 = vmatprep.subr.mxu0 0.0
          %v1081 = vand.u32 %v748, 4294901760
          %v1082 = vsub.f32 %v748, %v1081
          %1083 = vmatpush1.msra.mxu0 %v1082
          %1084 = vmatprep.subr.mxu0 0.0
          %v1085 = vand.u32 %v747, 4294901760
          %v1086 = vsub.f32 %v747, %v1085
          %1087 = vmatpush1.msra.mxu0 %v1086
          %1088 = vmatprep.subr.mxu0 0.0
          %v1089 = vand.u32 %v746, 4294901760
          %v1090 = vsub.f32 %v746, %v1089
          %1091 = vmatpush1.msra.mxu0 %v1090
          %1092 = vmatprep.subr.mxu0 0.0
          %v1093 = vand.u32 %v745, 4294901760
          %v1094 = vsub.f32 %v745, %v1093
          %1095 = vmatpush1.msra.mxu0 %v1094
          %1096 = vmatprep.subr.mxu0 0.0
          %v1097 = vand.u32 %v744, 4294901760
          %v1098 = vsub.f32 %v744, %v1097
          %1099 = vmatpush1.msra.mxu0 %v1098
          %1100 = vmatprep.subr.mxu0 0.0
          %v1101 = vand.u32 %v743, 4294901760
          %v1102 = vsub.f32 %v743, %v1101
          %1103 = vmatpush1.msra.mxu0 %v1102
          %1104 = vmatprep.subr.mxu0 0.0
          %v1105 = vand.u32 %v742, 4294901760
          %v1106 = vsub.f32 %v742, %v1105
          %1107 = vmatpush1.msra.mxu0 %v1106
          %1108 = vmatprep.subr.mxu0 0.0
          %v1109 = vand.u32 %v741, 4294901760
          %v1110 = vsub.f32 %v741, %v1109
          %1111 = vmatpush1.msra.mxu0 %v1110
          %1112 = vmatprep.subr.mxu0 0.0
          %v1113 = vand.u32 %v740, 4294901760
          %v1114 = vsub.f32 %v740, %v1113
          %1115 = vmatpush1.msra.mxu0 %v1114
          %1116 = vmatprep.subr.mxu0 0.0
          %v1117 = vand.u32 %v739, 4294901760
          %v1118 = vsub.f32 %v739, %v1117
          %1119 = vmatpush1.msra.mxu0 %v1118
          %1120 = vmatprep.subr.mxu0 0.0
          %v1121 = vand.u32 %v738, 4294901760
          %v1122 = vsub.f32 %v738, %v1121
          %1123 = vmatpush1.msra.mxu0 %v1122
          %1124 = vmatprep.subr.mxu0 0.0
          %1125 = vmatpush2.msra.mxu0 0.0
          %1126 = vmatprep.subr.mxu0 0.0
          %1127 = vmatpush2.msra.mxu0 0.0
          %1128 = vmatprep.subr.mxu0 0.0
          %1129 = vmatpush2.msra.mxu0 0.0
          %1130 = vmatprep.subr.mxu0 0.0
          %1131 = vmatpush2.msra.mxu0 0.0
          %1132 = vmatprep.subr.mxu0 0.0
          %1133 = vmatpush2.msra.mxu0 0.0
          %1134 = vmatprep.subr.mxu0 0.0
          %1135 = vmatpush2.msra.mxu0 0.0
          %1136 = vmatprep.subr.mxu0 0.0
          %1137 = vmatpush2.msra.mxu0 0.0
          %1138 = vmatprep.subr.mxu0 0.0
          %1139 = vmatpush2.msra.mxu0 0.0
          %1140 = vmatprep.subr.mxu0 0.0
          %1141 = vmatpush2.msra.mxu0 0.0
          %1142 = vmatprep.subr.mxu0 0.0
          %1143 = vmatpush2.msra.mxu0 0.0
          %1144 = vmatprep.subr.mxu0 0.0
          %1145 = vmatpush2.msra.mxu0 0.0
          %1146 = vmatprep.subr.mxu0 0.0
          %1147 = vmatpush2.msra.mxu0 0.0
          %1148 = vmatprep.subr.mxu0 0.0
          %1149 = vmatpush2.msra.mxu0 0.0
          %1150 = vmatprep.subr.mxu0 0.0
          %1151 = vmatpush2.msra.mxu0 0.0
          %1152 = vmatprep.subr.mxu0 0.0
          %1153 = vmatpush2.msra.mxu0 0.0
          %1154 = vmatprep.subr.mxu0 0.0
          %1155 = vmatpush2.msra.mxu0 0.0
          %1156 = vmatprep.mubr.f32.mxu0 0.0
          %v1157 = vand.u32 %v313, 4294901760
          %v1158 = vsub.f32 %v313, %v1157
          %1159 = vmatmul.mubr.f32.gmra.mxu0 %v1158
          %v1160 = vpop.f32.mrf.mxu0
          %v1161 = vadd.f32 %v1033, %v1160
          %v1162 = vpop.f32.mrf.mxu0
          %1163 = vmatprep.mubr.f32.mxu0 0.0
          %v1164 = vand.u32 %v314, 4294901760
          %v1165 = vsub.f32 %v314, %v1164
          %1166 = vmatmul.mubr.f32.gmra.mxu0 %v1165
          %v1167 = vpop.f32.mrf.mxu0
          %v1168 = vadd.f32 %v1039, %v1167
          %v1169 = vpop.f32.mrf.mxu0
          %1170 = vmatprep.mubr.f32.mxu0 0.0
          %v1171 = vand.u32 %v315, 4294901760
          %v1172 = vsub.f32 %v315, %v1171
          %1173 = vmatmul.mubr.f32.gmra.mxu0 %v1172
          %v1174 = vpop.f32.mrf.mxu0
          %v1175 = vadd.f32 %v1045, %v1174
          %v1176 = vpop.f32.mrf.mxu0
          %1177 = vmatprep.mubr.f32.mxu0 0.0
          %v1178 = vand.u32 %v316, 4294901760
          %v1179 = vsub.f32 %v316, %v1178
          %1180 = vmatmul.mubr.f32.gmra.mxu0 %v1179
          %v1181 = vpop.f32.mrf.mxu0
          %v1182 = vadd.f32 %v1051, %v1181
          %v1183 = vpop.f32.mrf.mxu0
          %1184 = vmatprep.mubr.f32.mxu0 0.0
          %v1185 = vand.u32 %v317, 4294901760
          %v1186 = vsub.f32 %v317, %v1185
          %1187 = vmatmul.mubr.f32.gmra.mxu0 %v1186
          %v1188 = vpop.f32.mrf.mxu0
          %v1189 = vadd.f32 %v1057, %v1188
          %v1190 = vpop.f32.mrf.mxu0
          %1191 = vdwg.mxu0
          %1192 = vmatprep.subr.mxu0 0.0
          %v1193 = vand.u32 %v753, 4294901760
          %1194 = vmatpush1.msra.mxu0 %v1193
          %1195 = vmatprep.subr.mxu0 0.0
          %v1196 = vand.u32 %v752, 4294901760
          %1197 = vmatpush1.msra.mxu0 %v1196
          %1198 = vmatprep.subr.mxu0 0.0
          %v1199 = vand.u32 %v751, 4294901760
          %1200 = vmatpush1.msra.mxu0 %v1199
          %1201 = vmatprep.subr.mxu0 0.0
          %v1202 = vand.u32 %v750, 4294901760
          %1203 = vmatpush1.msra.mxu0 %v1202
          %1204 = vmatprep.subr.mxu0 0.0
          %v1205 = vand.u32 %v749, 4294901760
          %1206 = vmatpush1.msra.mxu0 %v1205
          %1207 = vmatprep.subr.mxu0 0.0
          %v1208 = vand.u32 %v748, 4294901760
          %1209 = vmatpush1.msra.mxu0 %v1208
          %1210 = vmatprep.subr.mxu0 0.0
          %v1211 = vand.u32 %v747, 4294901760
          %1212 = vmatpush1.msra.mxu0 %v1211
          %1213 = vmatprep.subr.mxu0 0.0
          %v1214 = vand.u32 %v746, 4294901760
          %1215 = vmatpush1.msra.mxu0 %v1214
          %1216 = vmatprep.subr.mxu0 0.0
          %v1217 = vand.u32 %v745, 4294901760
          %1218 = vmatpush1.msra.mxu0 %v1217
          %1219 = vmatprep.subr.mxu0 0.0
          %v1220 = vand.u32 %v744, 4294901760
          %1221 = vmatpush1.msra.mxu0 %v1220
          %1222 = vmatprep.subr.mxu0 0.0
          %v1223 = vand.u32 %v743, 4294901760
          %1224 = vmatpush1.msra.mxu0 %v1223
          %1225 = vmatprep.subr.mxu0 0.0
          %v1226 = vand.u32 %v742, 4294901760
          %1227 = vmatpush1.msra.mxu0 %v1226
          %1228 = vmatprep.subr.mxu0 0.0
          %v1229 = vand.u32 %v741, 4294901760
          %1230 = vmatpush1.msra.mxu0 %v1229
          %1231 = vmatprep.subr.mxu0 0.0
          %v1232 = vand.u32 %v740, 4294901760
          %1233 = vmatpush1.msra.mxu0 %v1232
          %1234 = vmatprep.subr.mxu0 0.0
          %v1235 = vand.u32 %v739, 4294901760
          %1236 = vmatpush1.msra.mxu0 %v1235
          %1237 = vmatprep.subr.mxu0 0.0
          %v1238 = vand.u32 %v738, 4294901760
          %1239 = vmatpush1.msra.mxu0 %v1238
          %1240 = vmatprep.subr.mxu0 0.0
          %1241 = vmatpush2.msra.mxu0 0.0
          %1242 = vmatprep.subr.mxu0 0.0
          %1243 = vmatpush2.msra.mxu0 0.0
          %1244 = vmatprep.subr.mxu0 0.0
          %1245 = vmatpush2.msra.mxu0 0.0
          %1246 = vmatprep.subr.mxu0 0.0
          %1247 = vmatpush2.msra.mxu0 0.0
          %1248 = vmatprep.subr.mxu0 0.0
          %1249 = vmatpush2.msra.mxu0 0.0
          %1250 = vmatprep.subr.mxu0 0.0
          %1251 = vmatpush2.msra.mxu0 0.0
          %1252 = vmatprep.subr.mxu0 0.0
          %1253 = vmatpush2.msra.mxu0 0.0
          %1254 = vmatprep.subr.mxu0 0.0
          %1255 = vmatpush2.msra.mxu0 0.0
          %1256 = vmatprep.subr.mxu0 0.0
          %1257 = vmatpush2.msra.mxu0 0.0
          %1258 = vmatprep.subr.mxu0 0.0
          %1259 = vmatpush2.msra.mxu0 0.0
          %1260 = vmatprep.subr.mxu0 0.0
          %1261 = vmatpush2.msra.mxu0 0.0
          %1262 = vmatprep.subr.mxu0 0.0
          %1263 = vmatpush2.msra.mxu0 0.0
          %1264 = vmatprep.subr.mxu0 0.0
          %1265 = vmatpush2.msra.mxu0 0.0
          %1266 = vmatprep.subr.mxu0 0.0
          %1267 = vmatpush2.msra.mxu0 0.0
          %1268 = vmatprep.subr.mxu0 0.0
          %1269 = vmatpush2.msra.mxu0 0.0
          %1270 = vmatprep.subr.mxu0 0.0
          %1271 = vmatpush2.msra.mxu0 0.0
          %1272 = vmatprep.mubr.f32.mxu0 0.0
          %v1273 = vand.u32 %v313, 4294901760
          %v1274 = vsub.f32 %v313, %v1273
          %v1275 = vand.u32 %v1274, 4294901760
          %1276 = vmatmul.mubr.f32.gmra.mxu0 %v1275
          %v1277 = vpop.f32.mrf.mxu0
          %v1278 = vadd.f32 %v1161, %v1277
          %v1279 = vpop.f32.mrf.mxu0
          %1280 = vmatprep.mubr.f32.mxu0 0.0
          %v1281 = vand.u32 %v314, 4294901760
          %v1282 = vsub.f32 %v314, %v1281
          %v1283 = vand.u32 %v1282, 4294901760
          %1284 = vmatmul.mubr.f32.gmra.mxu0 %v1283
          %v1285 = vpop.f32.mrf.mxu0
          %v1286 = vadd.f32 %v1168, %v1285
          %v1287 = vpop.f32.mrf.mxu0
          %1288 = vmatprep.mubr.f32.mxu0 0.0
          %v1289 = vand.u32 %v315, 4294901760
          %v1290 = vsub.f32 %v315, %v1289
          %v1291 = vand.u32 %v1290, 4294901760
          %1292 = vmatmul.mubr.f32.gmra.mxu0 %v1291
          %v1293 = vpop.f32.mrf.mxu0
          %v1294 = vadd.f32 %v1175, %v1293
          %v1295 = vpop.f32.mrf.mxu0
          %1296 = vmatprep.mubr.f32.mxu0 0.0
          %v1297 = vand.u32 %v316, 4294901760
          %v1298 = vsub.f32 %v316, %v1297
          %v1299 = vand.u32 %v1298, 4294901760
          %1300 = vmatmul.mubr.f32.gmra.mxu0 %v1299
          %v1301 = vpop.f32.mrf.mxu0
          %v1302 = vadd.f32 %v1182, %v1301
          %v1303 = vpop.f32.mrf.mxu0
          %1304 = vmatprep.mubr.f32.mxu0 0.0
          %v1305 = vand.u32 %v317, 4294901760
          %v1306 = vsub.f32 %v317, %v1305
          %v1307 = vand.u32 %v1306, 4294901760
          %1308 = vmatmul.mubr.f32.gmra.mxu0 %v1307
          %v1309 = vpop.f32.mrf.mxu0
          %v1310 = vadd.f32 %v1189, %v1309
          %v1311 = vpop.f32.mrf.mxu0
          %1312 = vdwg.mxu0
          %1313 = vmatprep.subr.mxu0 0.0
          %v1314 = vand.u32 %v753, 4294901760
          %v1315 = vsub.f32 %v753, %v1314
          %v1316 = vand.u32 %v1315, 4294901760
          %1317 = vmatpush1.msra.mxu0 %v1316
          %1318 = vmatprep.subr.mxu0 0.0
          %v1319 = vand.u32 %v752, 4294901760
          %v1320 = vsub.f32 %v752, %v1319
          %v1321 = vand.u32 %v1320, 4294901760
          %1322 = vmatpush1.msra.mxu0 %v1321
          %1323 = vmatprep.subr.mxu0 0.0
          %v1324 = vand.u32 %v751, 4294901760
          %v1325 = vsub.f32 %v751, %v1324
          %v1326 = vand.u32 %v1325, 4294901760
          %1327 = vmatpush1.msra.mxu0 %v1326
          %1328 = vmatprep.subr.mxu0 0.0
          %v1329 = vand.u32 %v750, 4294901760
          %v1330 = vsub.f32 %v750, %v1329
          %v1331 = vand.u32 %v1330, 4294901760
          %1332 = vmatpush1.msra.mxu0 %v1331
          %1333 = vmatprep.subr.mxu0 0.0
          %v1334 = vand.u32 %v749, 4294901760
          %v1335 = vsub.f32 %v749, %v1334
          %v1336 = vand.u32 %v1335, 4294901760
          %1337 = vmatpush1.msra.mxu0 %v1336
          %1338 = vmatprep.subr.mxu0 0.0
          %v1339 = vand.u32 %v748, 4294901760
          %v1340 = vsub.f32 %v748, %v1339
          %v1341 = vand.u32 %v1340, 4294901760
          %1342 = vmatpush1.msra.mxu0 %v1341
          %1343 = vmatprep.subr.mxu0 0.0
          %v1344 = vand.u32 %v747, 4294901760
          %v1345 = vsub.f32 %v747, %v1344
          %v1346 = vand.u32 %v1345, 4294901760
          %1347 = vmatpush1.msra.mxu0 %v1346
          %1348 = vmatprep.subr.mxu0 0.0
          %v1349 = vand.u32 %v746, 4294901760
          %v1350 = vsub.f32 %v746, %v1349
          %v1351 = vand.u32 %v1350, 4294901760
          %1352 = vmatpush1.msra.mxu0 %v1351
          %1353 = vmatprep.subr.mxu0 0.0
          %v1354 = vand.u32 %v745, 4294901760
          %v1355 = vsub.f32 %v745, %v1354
          %v1356 = vand.u32 %v1355, 4294901760
          %1357 = vmatpush1.msra.mxu0 %v1356
          %1358 = vmatprep.subr.mxu0 0.0
          %v1359 = vand.u32 %v744, 4294901760
          %v1360 = vsub.f32 %v744, %v1359
          %v1361 = vand.u32 %v1360, 4294901760
          %1362 = vmatpush1.msra.mxu0 %v1361
          %1363 = vmatprep.subr.mxu0 0.0
          %v1364 = vand.u32 %v743, 4294901760
          %v1365 = vsub.f32 %v743, %v1364
          %v1366 = vand.u32 %v1365, 4294901760
          %1367 = vmatpush1.msra.mxu0 %v1366
          %1368 = vmatprep.subr.mxu0 0.0
          %v1369 = vand.u32 %v742, 4294901760
          %v1370 = vsub.f32 %v742, %v1369
          %v1371 = vand.u32 %v1370, 4294901760
          %1372 = vmatpush1.msra.mxu0 %v1371
          %1373 = vmatprep.subr.mxu0 0.0
          %v1374 = vand.u32 %v741, 4294901760
          %v1375 = vsub.f32 %v741, %v1374
          %v1376 = vand.u32 %v1375, 4294901760
          %1377 = vmatpush1.msra.mxu0 %v1376
          %1378 = vmatprep.subr.mxu0 0.0
          %v1379 = vand.u32 %v740, 4294901760
          %v1380 = vsub.f32 %v740, %v1379
          %v1381 = vand.u32 %v1380, 4294901760
          %1382 = vmatpush1.msra.mxu0 %v1381
          %1383 = vmatprep.subr.mxu0 0.0
          %v1384 = vand.u32 %v739, 4294901760
          %v1385 = vsub.f32 %v739, %v1384
          %v1386 = vand.u32 %v1385, 4294901760
          %1387 = vmatpush1.msra.mxu0 %v1386
          %1388 = vmatprep.subr.mxu0 0.0
          %v1389 = vand.u32 %v738, 4294901760
          %v1390 = vsub.f32 %v738, %v1389
          %v1391 = vand.u32 %v1390, 4294901760
          %1392 = vmatpush1.msra.mxu0 %v1391
          %1393 = vmatprep.subr.mxu0 0.0
          %1394 = vmatpush2.msra.mxu0 0.0
          %1395 = vmatprep.subr.mxu0 0.0
          %1396 = vmatpush2.msra.mxu0 0.0
          %1397 = vmatprep.subr.mxu0 0.0
          %1398 = vmatpush2.msra.mxu0 0.0
          %1399 = vmatprep.subr.mxu0 0.0
          %1400 = vmatpush2.msra.mxu0 0.0
          %1401 = vmatprep.subr.mxu0 0.0
          %1402 = vmatpush2.msra.mxu0 0.0
          %1403 = vmatprep.subr.mxu0 0.0
          %1404 = vmatpush2.msra.mxu0 0.0
          %1405 = vmatprep.subr.mxu0 0.0
          %1406 = vmatpush2.msra.mxu0 0.0
          %1407 = vmatprep.subr.mxu0 0.0
          %1408 = vmatpush2.msra.mxu0 0.0
          %1409 = vmatprep.subr.mxu0 0.0
          %1410 = vmatpush2.msra.mxu0 0.0
          %1411 = vmatprep.subr.mxu0 0.0
          %1412 = vmatpush2.msra.mxu0 0.0
          %1413 = vmatprep.subr.mxu0 0.0
          %1414 = vmatpush2.msra.mxu0 0.0
          %1415 = vmatprep.subr.mxu0 0.0
          %1416 = vmatpush2.msra.mxu0 0.0
          %1417 = vmatprep.subr.mxu0 0.0
          %1418 = vmatpush2.msra.mxu0 0.0
          %1419 = vmatprep.subr.mxu0 0.0
          %1420 = vmatpush2.msra.mxu0 0.0
          %1421 = vmatprep.subr.mxu0 0.0
          %1422 = vmatpush2.msra.mxu0 0.0
          %1423 = vmatprep.subr.mxu0 0.0
          %1424 = vmatpush2.msra.mxu0 0.0
          %1425 = vmatprep.mubr.f32.mxu0 0.0
          %v1426 = vand.u32 %v313, 4294901760
          %1427 = vmatmul.mubr.f32.gmra.mxu0 %v1426
          %v1428 = vpop.f32.mrf.mxu0
          %v1429 = vadd.f32 %v1278, %v1428
          %v1430 = vpop.f32.mrf.mxu0
          %1431 = vmatprep.mubr.f32.mxu0 0.0
          %v1432 = vand.u32 %v314, 4294901760
          %1433 = vmatmul.mubr.f32.gmra.mxu0 %v1432
          %v1434 = vpop.f32.mrf.mxu0
          %v1435 = vadd.f32 %v1286, %v1434
          %v1436 = vpop.f32.mrf.mxu0
          %1437 = vmatprep.mubr.f32.mxu0 0.0
          %v1438 = vand.u32 %v315, 4294901760
          %1439 = vmatmul.mubr.f32.gmra.mxu0 %v1438
          %v1440 = vpop.f32.mrf.mxu0
          %v1441 = vadd.f32 %v1294, %v1440
          %v1442 = vpop.f32.mrf.mxu0
          %1443 = vmatprep.mubr.f32.mxu0 0.0
          %v1444 = vand.u32 %v316, 4294901760
          %1445 = vmatmul.mubr.f32.gmra.mxu0 %v1444
          %v1446 = vpop.f32.mrf.mxu0
          %v1447 = vadd.f32 %v1302, %v1446
          %v1448 = vpop.f32.mrf.mxu0
          %1449 = vmatprep.mubr.f32.mxu0 0.0
          %v1450 = vand.u32 %v317, 4294901760
          %1451 = vmatmul.mubr.f32.gmra.mxu0 %v1450
          %v1452 = vpop.f32.mrf.mxu0
          %v1453 = vadd.f32 %v1310, %v1452
          %v1454 = vpop.f32.mrf.mxu0
          %1455 = vdwg.mxu0
          %1456 = vmatprep.subr.mxu0 0.0
          %v1457 = vand.u32 %v753, 4294901760
          %1458 = vmatpush1.msra.mxu0 %v1457
          %1459 = vmatprep.subr.mxu0 0.0
          %v1460 = vand.u32 %v752, 4294901760
          %1461 = vmatpush1.msra.mxu0 %v1460
          %1462 = vmatprep.subr.mxu0 0.0
          %v1463 = vand.u32 %v751, 4294901760
          %1464 = vmatpush1.msra.mxu0 %v1463
          %1465 = vmatprep.subr.mxu0 0.0
          %v1466 = vand.u32 %v750, 4294901760
          %1467 = vmatpush1.msra.mxu0 %v1466
          %1468 = vmatprep.subr.mxu0 0.0
          %v1469 = vand.u32 %v749, 4294901760
          %1470 = vmatpush1.msra.mxu0 %v1469
          %1471 = vmatprep.subr.mxu0 0.0
          %v1472 = vand.u32 %v748, 4294901760
          %1473 = vmatpush1.msra.mxu0 %v1472
          %1474 = vmatprep.subr.mxu0 0.0
          %v1475 = vand.u32 %v747, 4294901760
          %1476 = vmatpush1.msra.mxu0 %v1475
          %1477 = vmatprep.subr.mxu0 0.0
          %v1478 = vand.u32 %v746, 4294901760
          %1479 = vmatpush1.msra.mxu0 %v1478
          %1480 = vmatprep.subr.mxu0 0.0
          %v1481 = vand.u32 %v745, 4294901760
          %1482 = vmatpush1.msra.mxu0 %v1481
          %1483 = vmatprep.subr.mxu0 0.0
          %v1484 = vand.u32 %v744, 4294901760
          %1485 = vmatpush1.msra.mxu0 %v1484
          %1486 = vmatprep.subr.mxu0 0.0
          %v1487 = vand.u32 %v743, 4294901760
          %1488 = vmatpush1.msra.mxu0 %v1487
          %1489 = vmatprep.subr.mxu0 0.0
          %v1490 = vand.u32 %v742, 4294901760
          %1491 = vmatpush1.msra.mxu0 %v1490
          %1492 = vmatprep.subr.mxu0 0.0
          %v1493 = vand.u32 %v741, 4294901760
          %1494 = vmatpush1.msra.mxu0 %v1493
          %1495 = vmatprep.subr.mxu0 0.0
          %v1496 = vand.u32 %v740, 4294901760
          %1497 = vmatpush1.msra.mxu0 %v1496
          %1498 = vmatprep.subr.mxu0 0.0
          %v1499 = vand.u32 %v739, 4294901760
          %1500 = vmatpush1.msra.mxu0 %v1499
          %1501 = vmatprep.subr.mxu0 0.0
          %v1502 = vand.u32 %v738, 4294901760
          %1503 = vmatpush1.msra.mxu0 %v1502
          %1504 = vmatprep.subr.mxu0 0.0
          %1505 = vmatpush2.msra.mxu0 0.0
          %1506 = vmatprep.subr.mxu0 0.0
          %1507 = vmatpush2.msra.mxu0 0.0
          %1508 = vmatprep.subr.mxu0 0.0
          %1509 = vmatpush2.msra.mxu0 0.0
          %1510 = vmatprep.subr.mxu0 0.0
          %1511 = vmatpush2.msra.mxu0 0.0
          %1512 = vmatprep.subr.mxu0 0.0
          %1513 = vmatpush2.msra.mxu0 0.0
          %1514 = vmatprep.subr.mxu0 0.0
          %1515 = vmatpush2.msra.mxu0 0.0
          %1516 = vmatprep.subr.mxu0 0.0
          %1517 = vmatpush2.msra.mxu0 0.0
          %1518 = vmatprep.subr.mxu0 0.0
          %1519 = vmatpush2.msra.mxu0 0.0
          %1520 = vmatprep.subr.mxu0 0.0
          %1521 = vmatpush2.msra.mxu0 0.0
          %1522 = vmatprep.subr.mxu0 0.0
          %1523 = vmatpush2.msra.mxu0 0.0
          %1524 = vmatprep.subr.mxu0 0.0
          %1525 = vmatpush2.msra.mxu0 0.0
          %1526 = vmatprep.subr.mxu0 0.0
          %1527 = vmatpush2.msra.mxu0 0.0
          %1528 = vmatprep.subr.mxu0 0.0
          %1529 = vmatpush2.msra.mxu0 0.0
          %1530 = vmatprep.subr.mxu0 0.0
          %1531 = vmatpush2.msra.mxu0 0.0
          %1532 = vmatprep.subr.mxu0 0.0
          %1533 = vmatpush2.msra.mxu0 0.0
          %1534 = vmatprep.subr.mxu0 0.0
          %1535 = vmatpush2.msra.mxu0 0.0
          %1536 = vmatprep.mubr.f32.mxu0 0.0
          %v1537 = vand.u32 %v313, 4294901760
          %1538 = vmatmul.mubr.f32.gmra.mxu0 %v1537
          %v1539 = vpop.f32.mrf.mxu0
          %v1540 = vadd.f32 %v1429, %v1539
          %v1541 = vpop.f32.mrf.mxu0
          %1542 = vmatprep.mubr.f32.mxu0 0.0
          %v1543 = vand.u32 %v314, 4294901760
          %1544 = vmatmul.mubr.f32.gmra.mxu0 %v1543
          %v1545 = vpop.f32.mrf.mxu0
          %v1546 = vadd.f32 %v1435, %v1545
          %v1547 = vpop.f32.mrf.mxu0
          %1548 = vmatprep.mubr.f32.mxu0 0.0
          %v1549 = vand.u32 %v315, 4294901760
          %1550 = vmatmul.mubr.f32.gmra.mxu0 %v1549
          %v1551 = vpop.f32.mrf.mxu0
          %v1552 = vadd.f32 %v1441, %v1551
          %v1553 = vpop.f32.mrf.mxu0
          %1554 = vmatprep.mubr.f32.mxu0 0.0
          %v1555 = vand.u32 %v316, 4294901760
          %1556 = vmatmul.mubr.f32.gmra.mxu0 %v1555
          %v1557 = vpop.f32.mrf.mxu0
          %v1558 = vadd.f32 %v1447, %v1557
          %v1559 = vpop.f32.mrf.mxu0
          %1560 = vmatprep.mubr.f32.mxu0 0.0
          %v1561 = vand.u32 %v317, 4294901760
          %1562 = vmatmul.mubr.f32.gmra.mxu0 %v1561
          %v1563 = vpop.f32.mrf.mxu0
          %v1564 = vadd.f32 %v1453, %v1563
          %v1565 = vpop.f32.mrf.mxu0
          %1566 = vdwg.mxu0
          %v1567 = vsub.f32 0.0, %v705
          %v1568 = vmul.f32 %v1567, 1.442695
          %v1569 = vpow.pop %v1568
          %v1570 = vmul.f32 %v1569, %v1558
          %v1571 = vmul.f32 %v1569, %v1564
          %v1572 = vadd.f32 %v1570, 0.0
          %v1573 = vadd.f32 %v1571, 0.0
          %v1574 = vadd.f32 %v1569, 0.0
          %v1575 = vsel %vm706, 1e+30, %v669
          %v1576 = vsel %vm707, 1e+30, %v670
          %v1577 = vsel %vm708, 1e+30, %v671
          %v1578 = vsel %vm709, 1e+30, %v672
          %v1579 = vsel %vm710, 1e+30, %v673
          %v1580 = vsel %vm711, 1e+30, %v674
          %v1581 = vsel %vm712, 1e+30, %v675
          %v1582 = vsel %vm713, 1e+30, %v676
          %v1583 = vsel %vm714, 1e+30, %v677
          %v1584 = vsel %vm715, 1e+30, %v678
          %v1585 = vsel %vm716, 1e+30, %v679
          %v1586 = vsel %vm717, 1e+30, %v680
          %v1587 = vsel %vm718, 1e+30, %v681
          %v1588 = vsel %vm719, 1e+30, %v682
          %v1589 = vsel %vm720, 1e+30, %v683
          %v1590 = vsel %vm721, 1e+30, %v684
          %v1591 = vmin.f32 %v1575, %v1579
          %v1592 = vmin.f32 %v1576, %v1580
          %v1593 = vmin.f32 %v1577, %v1581
          %v1594 = vmin.f32 %v1578, %v1582
          %v1595 = vmin.f32 %v1591, %v1583
          %v1596 = vmin.f32 %v1592, %v1584
          %v1597 = vmin.f32 %v1593, %v1585
          %v1598 = vmin.f32 %v1594, %v1586
          %v1599 = vmin.f32 %v1595, %v1587
          %v1600 = vmin.f32 %v1596, %v1588
          %v1601 = vmin.f32 %v1597, %v1589
          %v1602 = vmin.f32 %v1598, %v1590
          %v1603 = vmin.f32 %v1599, %v1600
          %v1604 = vmin.f32 %v1601, %v1602
          %v1605 = vmin.f32 %v1603, %v1604
          %v1606 = vrot.slane %v1605, 4
          %v1607 = vmin.f32 %v1605, %v1606
          %v1608 = vrot.slane %v1607, 2
          %v1609 = vmin.f32 %v1607, %v1608
          %v1610 = vrot.slane %v1609, 1
          %v1611 = vmin.f32 %v1609, %v1610
          %vm1612 = vcmp.eq.f32.partialorder %v1575, %v1611
          %vm1613 = vcmp.eq.f32.partialorder %v1576, %v1611
          %vm1614 = vcmp.eq.f32.partialorder %v1577, %v1611
          %vm1615 = vcmp.eq.f32.partialorder %v1578, %v1611
          %vm1616 = vcmp.eq.f32.partialorder %v1579, %v1611
          %vm1617 = vcmp.eq.f32.partialorder %v1580, %v1611
          %vm1618 = vcmp.eq.f32.partialorder %v1581, %v1611
          %vm1619 = vcmp.eq.f32.partialorder %v1582, %v1611
          %vm1620 = vcmp.eq.f32.partialorder %v1583, %v1611
          %vm1621 = vcmp.eq.f32.partialorder %v1584, %v1611
          %vm1622 = vcmp.eq.f32.partialorder %v1585, %v1611
          %vm1623 = vcmp.eq.f32.partialorder %v1586, %v1611
          %vm1624 = vcmp.eq.f32.partialorder %v1587, %v1611
          %vm1625 = vcmp.eq.f32.partialorder %v1588, %v1611
          %vm1626 = vcmp.eq.f32.partialorder %v1589, %v1611
          %vm1627 = vcmp.eq.f32.partialorder %v1590, %v1611
          %v1628 = vsel %vm1612, 1, 0
          %v1629 = vsel %vm1613, 1, 0
          %v1630 = vsel %vm1614, 1, 0
          %v1631 = vsel %vm1615, 1, 0
          %v1632 = vsel %vm1616, 1, 0
          %v1633 = vsel %vm1617, 1, 0
          %v1634 = vsel %vm1618, 1, 0
          %v1635 = vsel %vm1619, 1, 0
          %v1636 = vsel %vm1620, 1, 0
          %v1637 = vsel %vm1621, 1, 0
          %v1638 = vsel %vm1622, 1, 0
          %v1639 = vsel %vm1623, 1, 0
          %v1640 = vsel %vm1624, 1, 0
          %v1641 = vsel %vm1625, 1, 0
          %v1642 = vsel %vm1626, 1, 0
          %v1643 = vsel %vm1627, 1, 0
          %v1644 = vcvt.s32.f32 %v1628
          %v1645 = vcvt.s32.f32 %v1629
          %v1646 = vcvt.s32.f32 %v1630
          %v1647 = vcvt.s32.f32 %v1631
          %v1648 = vcvt.s32.f32 %v1632
          %v1649 = vcvt.s32.f32 %v1633
          %v1650 = vcvt.s32.f32 %v1634
          %v1651 = vcvt.s32.f32 %v1635
          %v1652 = vcvt.s32.f32 %v1636
          %v1653 = vcvt.s32.f32 %v1637
          %v1654 = vcvt.s32.f32 %v1638
          %v1655 = vcvt.s32.f32 %v1639
          %v1656 = vcvt.s32.f32 %v1640
          %v1657 = vcvt.s32.f32 %v1641
          %v1658 = vcvt.s32.f32 %v1642
          %v1659 = vcvt.s32.f32 %v1643
          %1660 = vmatprep.subr.mxu0 0.0
          %v1661 = vand.u32 %v1659, 4294901760
          %1662 = vmatpush1.msra.mxu0 %v1661
          %1663 = vmatprep.subr.mxu0 0.0
          %v1664 = vand.u32 %v1658, 4294901760
          %1665 = vmatpush1.msra.mxu0 %v1664
          %1666 = vmatprep.subr.mxu0 0.0
          %v1667 = vand.u32 %v1657, 4294901760
          %1668 = vmatpush1.msra.mxu0 %v1667
          %1669 = vmatprep.subr.mxu0 0.0
          %v1670 = vand.u32 %v1656, 4294901760
          %1671 = vmatpush1.msra.mxu0 %v1670
          %1672 = vmatprep.subr.mxu0 0.0
          %v1673 = vand.u32 %v1655, 4294901760
          %1674 = vmatpush1.msra.mxu0 %v1673
          %1675 = vmatprep.subr.mxu0 0.0
          %v1676 = vand.u32 %v1654, 4294901760
          %1677 = vmatpush1.msra.mxu0 %v1676
          %1678 = vmatprep.subr.mxu0 0.0
          %v1679 = vand.u32 %v1653, 4294901760
          %1680 = vmatpush1.msra.mxu0 %v1679
          %1681 = vmatprep.subr.mxu0 0.0
          %v1682 = vand.u32 %v1652, 4294901760
          %1683 = vmatpush1.msra.mxu0 %v1682
          %1684 = vmatprep.subr.mxu0 0.0
          %v1685 = vand.u32 %v1651, 4294901760
          %1686 = vmatpush1.msra.mxu0 %v1685
          %1687 = vmatprep.subr.mxu0 0.0
          %v1688 = vand.u32 %v1650, 4294901760
          %1689 = vmatpush1.msra.mxu0 %v1688
          %1690 = vmatprep.subr.mxu0 0.0
          %v1691 = vand.u32 %v1649, 4294901760
          %1692 = vmatpush1.msra.mxu0 %v1691
          %1693 = vmatprep.subr.mxu0 0.0
          %v1694 = vand.u32 %v1648, 4294901760
          %1695 = vmatpush1.msra.mxu0 %v1694
          %1696 = vmatprep.subr.mxu0 0.0
          %v1697 = vand.u32 %v1647, 4294901760
          %1698 = vmatpush1.msra.mxu0 %v1697
          %1699 = vmatprep.subr.mxu0 0.0
          %v1700 = vand.u32 %v1646, 4294901760
          %1701 = vmatpush1.msra.mxu0 %v1700
          %1702 = vmatprep.subr.mxu0 0.0
          %v1703 = vand.u32 %v1645, 4294901760
          %1704 = vmatpush1.msra.mxu0 %v1703
          %1705 = vmatprep.subr.mxu0 0.0
          %v1706 = vand.u32 %v1644, 4294901760
          %1707 = vmatpush1.msra.mxu0 %v1706
          %1708 = vmatprep.subr.mxu0 0.0
          %1709 = vmatpush2.msra.mxu0 0.0
          %1710 = vmatprep.subr.mxu0 0.0
          %1711 = vmatpush2.msra.mxu0 0.0
          %1712 = vmatprep.subr.mxu0 0.0
          %1713 = vmatpush2.msra.mxu0 0.0
          %1714 = vmatprep.subr.mxu0 0.0
          %1715 = vmatpush2.msra.mxu0 0.0
          %1716 = vmatprep.subr.mxu0 0.0
          %1717 = vmatpush2.msra.mxu0 0.0
          %1718 = vmatprep.subr.mxu0 0.0
          %1719 = vmatpush2.msra.mxu0 0.0
          %1720 = vmatprep.subr.mxu0 0.0
          %1721 = vmatpush2.msra.mxu0 0.0
          %1722 = vmatprep.subr.mxu0 0.0
          %1723 = vmatpush2.msra.mxu0 0.0
          %1724 = vmatprep.subr.mxu0 0.0
          %1725 = vmatpush2.msra.mxu0 0.0
          %1726 = vmatprep.subr.mxu0 0.0
          %1727 = vmatpush2.msra.mxu0 0.0
          %1728 = vmatprep.subr.mxu0 0.0
          %1729 = vmatpush2.msra.mxu0 0.0
          %1730 = vmatprep.subr.mxu0 0.0
          %1731 = vmatpush2.msra.mxu0 0.0
          %1732 = vmatprep.subr.mxu0 0.0
          %1733 = vmatpush2.msra.mxu0 0.0
          %1734 = vmatprep.subr.mxu0 0.0
          %1735 = vmatpush2.msra.mxu0 0.0
          %1736 = vmatprep.subr.mxu0 0.0
          %1737 = vmatpush2.msra.mxu0 0.0
          %1738 = vmatprep.subr.mxu0 0.0
          %1739 = vmatpush2.msra.mxu0 0.0
          %1740 = vmatprep.mubr.f32.mxu0 0.0
          %v1741 = vand.u32 %v313, 4294901760
          %v1742 = vsub.f32 %v313, %v1741
          %v1743 = vand.u32 %v1742, 4294901760
          %v1744 = vsub.f32 %v1742, %v1743
          %v1745 = vand.u32 %v1744, 4294901760
          %1746 = vmatmul.mubr.f32.gmra.mxu0 %v1745
          %v1747 = vpop.f32.mrf.mxu0
          %v1748 = vadd.f32 0.0, %v1747
          %v1749 = vpop.f32.mrf.mxu0
          %1750 = vmatprep.mubr.f32.mxu0 0.0
          %v1751 = vand.u32 %v314, 4294901760
          %v1752 = vsub.f32 %v314, %v1751
          %v1753 = vand.u32 %v1752, 4294901760
          %v1754 = vsub.f32 %v1752, %v1753
          %v1755 = vand.u32 %v1754, 4294901760
          %1756 = vmatmul.mubr.f32.gmra.mxu0 %v1755
          %v1757 = vpop.f32.mrf.mxu0
          %v1758 = vadd.f32 0.0, %v1757
          %v1759 = vpop.f32.mrf.mxu0
          %1760 = vmatprep.mubr.f32.mxu0 0.0
          %v1761 = vand.u32 %v315, 4294901760
          %v1762 = vsub.f32 %v315, %v1761
          %v1763 = vand.u32 %v1762, 4294901760
          %v1764 = vsub.f32 %v1762, %v1763
          %v1765 = vand.u32 %v1764, 4294901760
          %1766 = vmatmul.mubr.f32.gmra.mxu0 %v1765
          %v1767 = vpop.f32.mrf.mxu0
          %v1768 = vadd.f32 0.0, %v1767
          %v1769 = vpop.f32.mrf.mxu0
          %1770 = vmatprep.mubr.f32.mxu0 0.0
          %v1771 = vand.u32 %v316, 4294901760
          %v1772 = vsub.f32 %v316, %v1771
          %v1773 = vand.u32 %v1772, 4294901760
          %v1774 = vsub.f32 %v1772, %v1773
          %v1775 = vand.u32 %v1774, 4294901760
          %1776 = vmatmul.mubr.f32.gmra.mxu0 %v1775
          %v1777 = vpop.f32.mrf.mxu0
          %v1778 = vadd.f32 0.0, %v1777
          %v1779 = vpop.f32.mrf.mxu0
          %1780 = vmatprep.mubr.f32.mxu0 0.0
          %v1781 = vand.u32 %v317, 4294901760
          %v1782 = vsub.f32 %v317, %v1781
          %v1783 = vand.u32 %v1782, 4294901760
          %v1784 = vsub.f32 %v1782, %v1783
          %v1785 = vand.u32 %v1784, 4294901760
          %1786 = vmatmul.mubr.f32.gmra.mxu0 %v1785
          %v1787 = vpop.f32.mrf.mxu0
          %v1788 = vadd.f32 0.0, %v1787
          %v1789 = vpop.f32.mrf.mxu0
          %1790 = vdwg.mxu0
          %1791 = vmatprep.subr.mxu0 0.0
          %v1792 = vand.u32 %v1659, 4294901760
          %v1793 = vsub.f32 %v1659, %v1792
          %v1794 = vand.u32 %v1793, 4294901760
          %v1795 = vsub.f32 %v1793, %v1794
          %v1796 = vand.u32 %v1795, 4294901760
          %1797 = vmatpush1.msra.mxu0 %v1796
          %1798 = vmatprep.subr.mxu0 0.0
          %v1799 = vand.u32 %v1658, 4294901760
          %v1800 = vsub.f32 %v1658, %v1799
          %v1801 = vand.u32 %v1800, 4294901760
          %v1802 = vsub.f32 %v1800, %v1801
          %v1803 = vand.u32 %v1802, 4294901760
          %1804 = vmatpush1.msra.mxu0 %v1803
          %1805 = vmatprep.subr.mxu0 0.0
          %v1806 = vand.u32 %v1657, 4294901760
          %v1807 = vsub.f32 %v1657, %v1806
          %v1808 = vand.u32 %v1807, 4294901760
          %v1809 = vsub.f32 %v1807, %v1808
          %v1810 = vand.u32 %v1809, 4294901760
          %1811 = vmatpush1.msra.mxu0 %v1810
          %1812 = vmatprep.subr.mxu0 0.0
          %v1813 = vand.u32 %v1656, 4294901760
          %v1814 = vsub.f32 %v1656, %v1813
          %v1815 = vand.u32 %v1814, 4294901760
          %v1816 = vsub.f32 %v1814, %v1815
          %v1817 = vand.u32 %v1816, 4294901760
          %1818 = vmatpush1.msra.mxu0 %v1817
          %1819 = vmatprep.subr.mxu0 0.0
          %v1820 = vand.u32 %v1655, 4294901760
          %v1821 = vsub.f32 %v1655, %v1820
          %v1822 = vand.u32 %v1821, 4294901760
          %v1823 = vsub.f32 %v1821, %v1822
          %v1824 = vand.u32 %v1823, 4294901760
          %1825 = vmatpush1.msra.mxu0 %v1824
          %1826 = vmatprep.subr.mxu0 0.0
          %v1827 = vand.u32 %v1654, 4294901760
          %v1828 = vsub.f32 %v1654, %v1827
          %v1829 = vand.u32 %v1828, 4294901760
          %v1830 = vsub.f32 %v1828, %v1829
          %v1831 = vand.u32 %v1830, 4294901760
          %1832 = vmatpush1.msra.mxu0 %v1831
          %1833 = vmatprep.subr.mxu0 0.0
          %v1834 = vand.u32 %v1653, 4294901760
          %v1835 = vsub.f32 %v1653, %v1834
          %v1836 = vand.u32 %v1835, 4294901760
          %v1837 = vsub.f32 %v1835, %v1836
          %v1838 = vand.u32 %v1837, 4294901760
          %1839 = vmatpush1.msra.mxu0 %v1838
          %1840 = vmatprep.subr.mxu0 0.0
          %v1841 = vand.u32 %v1652, 4294901760
          %v1842 = vsub.f32 %v1652, %v1841
          %v1843 = vand.u32 %v1842, 4294901760
          %v1844 = vsub.f32 %v1842, %v1843
          %v1845 = vand.u32 %v1844, 4294901760
          %1846 = vmatpush1.msra.mxu0 %v1845
          %1847 = vmatprep.subr.mxu0 0.0
          %v1848 = vand.u32 %v1651, 4294901760
          %v1849 = vsub.f32 %v1651, %v1848
          %v1850 = vand.u32 %v1849, 4294901760
          %v1851 = vsub.f32 %v1849, %v1850
          %v1852 = vand.u32 %v1851, 4294901760
          %1853 = vmatpush1.msra.mxu0 %v1852
          %1854 = vmatprep.subr.mxu0 0.0
          %v1855 = vand.u32 %v1650, 4294901760
          %v1856 = vsub.f32 %v1650, %v1855
          %v1857 = vand.u32 %v1856, 4294901760
          %v1858 = vsub.f32 %v1856, %v1857
          %v1859 = vand.u32 %v1858, 4294901760
          %1860 = vmatpush1.msra.mxu0 %v1859
          %1861 = vmatprep.subr.mxu0 0.0
          %v1862 = vand.u32 %v1649, 4294901760
          %v1863 = vsub.f32 %v1649, %v1862
          %v1864 = vand.u32 %v1863, 4294901760
          %v1865 = vsub.f32 %v1863, %v1864
          %v1866 = vand.u32 %v1865, 4294901760
          %1867 = vmatpush1.msra.mxu0 %v1866
          %1868 = vmatprep.subr.mxu0 0.0
          %v1869 = vand.u32 %v1648, 4294901760
          %v1870 = vsub.f32 %v1648, %v1869
          %v1871 = vand.u32 %v1870, 4294901760
          %v1872 = vsub.f32 %v1870, %v1871
          %v1873 = vand.u32 %v1872, 4294901760
          %1874 = vmatpush1.msra.mxu0 %v1873
          %1875 = vmatprep.subr.mxu0 0.0
          %v1876 = vand.u32 %v1647, 4294901760
          %v1877 = vsub.f32 %v1647, %v1876
          %v1878 = vand.u32 %v1877, 4294901760
          %v1879 = vsub.f32 %v1877, %v1878
          %v1880 = vand.u32 %v1879, 4294901760
          %1881 = vmatpush1.msra.mxu0 %v1880
          %1882 = vmatprep.subr.mxu0 0.0
          %v1883 = vand.u32 %v1646, 4294901760
          %v1884 = vsub.f32 %v1646, %v1883
          %v1885 = vand.u32 %v1884, 4294901760
          %v1886 = vsub.f32 %v1884, %v1885
          %v1887 = vand.u32 %v1886, 4294901760
          %1888 = vmatpush1.msra.mxu0 %v1887
          %1889 = vmatprep.subr.mxu0 0.0
          %v1890 = vand.u32 %v1645, 4294901760
          %v1891 = vsub.f32 %v1645, %v1890
          %v1892 = vand.u32 %v1891, 4294901760
          %v1893 = vsub.f32 %v1891, %v1892
          %v1894 = vand.u32 %v1893, 4294901760
          %1895 = vmatpush1.msra.mxu0 %v1894
          %1896 = vmatprep.subr.mxu0 0.0
          %v1897 = vand.u32 %v1644, 4294901760
          %v1898 = vsub.f32 %v1644, %v1897
          %v1899 = vand.u32 %v1898, 4294901760
          %v1900 = vsub.f32 %v1898, %v1899
          %v1901 = vand.u32 %v1900, 4294901760
          %1902 = vmatpush1.msra.mxu0 %v1901
          %1903 = vmatprep.subr.mxu0 0.0
          %1904 = vmatpush2.msra.mxu0 0.0
          %1905 = vmatprep.subr.mxu0 0.0
          %1906 = vmatpush2.msra.mxu0 0.0
          %1907 = vmatprep.subr.mxu0 0.0
          %1908 = vmatpush2.msra.mxu0 0.0
          %1909 = vmatprep.subr.mxu0 0.0
          %1910 = vmatpush2.msra.mxu0 0.0
          %1911 = vmatprep.subr.mxu0 0.0
          %1912 = vmatpush2.msra.mxu0 0.0
          %1913 = vmatprep.subr.mxu0 0.0
          %1914 = vmatpush2.msra.mxu0 0.0
          %1915 = vmatprep.subr.mxu0 0.0
          %1916 = vmatpush2.msra.mxu0 0.0
          %1917 = vmatprep.subr.mxu0 0.0
          %1918 = vmatpush2.msra.mxu0 0.0
          %1919 = vmatprep.subr.mxu0 0.0
          %1920 = vmatpush2.msra.mxu0 0.0
          %1921 = vmatprep.subr.mxu0 0.0
          %1922 = vmatpush2.msra.mxu0 0.0
          %1923 = vmatprep.subr.mxu0 0.0
          %1924 = vmatpush2.msra.mxu0 0.0
          %1925 = vmatprep.subr.mxu0 0.0
          %1926 = vmatpush2.msra.mxu0 0.0
          %1927 = vmatprep.subr.mxu0 0.0
          %1928 = vmatpush2.msra.mxu0 0.0
          %1929 = vmatprep.subr.mxu0 0.0
          %1930 = vmatpush2.msra.mxu0 0.0
          %1931 = vmatprep.subr.mxu0 0.0
          %1932 = vmatpush2.msra.mxu0 0.0
          %1933 = vmatprep.subr.mxu0 0.0
          %1934 = vmatpush2.msra.mxu0 0.0
          %1935 = vmatprep.mubr.f32.mxu0 0.0
          %v1936 = vand.u32 %v313, 4294901760
          %1937 = vmatmul.mubr.f32.gmra.mxu0 %v1936
          %v1938 = vpop.f32.mrf.mxu0
          %v1939 = vadd.f32 %v1748, %v1938
          %v1940 = vpop.f32.mrf.mxu0
          %1941 = vmatprep.mubr.f32.mxu0 0.0
          %v1942 = vand.u32 %v314, 4294901760
          %1943 = vmatmul.mubr.f32.gmra.mxu0 %v1942
          %v1944 = vpop.f32.mrf.mxu0
          %v1945 = vadd.f32 %v1758, %v1944
          %v1946 = vpop.f32.mrf.mxu0
          %1947 = vmatprep.mubr.f32.mxu0 0.0
          %v1948 = vand.u32 %v315, 4294901760
          %1949 = vmatmul.mubr.f32.gmra.mxu0 %v1948
          %v1950 = vpop.f32.mrf.mxu0
          %v1951 = vadd.f32 %v1768, %v1950
          %v1952 = vpop.f32.mrf.mxu0
          %1953 = vmatprep.mubr.f32.mxu0 0.0
          %v1954 = vand.u32 %v316, 4294901760
          %1955 = vmatmul.mubr.f32.gmra.mxu0 %v1954
          %v1956 = vpop.f32.mrf.mxu0
          %v1957 = vadd.f32 %v1778, %v1956
          %v1958 = vpop.f32.mrf.mxu0
          %1959 = vmatprep.mubr.f32.mxu0 0.0
          %v1960 = vand.u32 %v317, 4294901760
          %1961 = vmatmul.mubr.f32.gmra.mxu0 %v1960
          %v1962 = vpop.f32.mrf.mxu0
          %v1963 = vadd.f32 %v1788, %v1962
          %v1964 = vpop.f32.mrf.mxu0
          %1965 = vdwg.mxu0
          %1966 = vmatprep.subr.mxu0 0.0
          %v1967 = vand.u32 %v1659, 4294901760
          %v1968 = vsub.f32 %v1659, %v1967
          %1969 = vmatpush1.msra.mxu0 %v1968
          %1970 = vmatprep.subr.mxu0 0.0
          %v1971 = vand.u32 %v1658, 4294901760
          %v1972 = vsub.f32 %v1658, %v1971
          %1973 = vmatpush1.msra.mxu0 %v1972
          %1974 = vmatprep.subr.mxu0 0.0
          %v1975 = vand.u32 %v1657, 4294901760
          %v1976 = vsub.f32 %v1657, %v1975
          %1977 = vmatpush1.msra.mxu0 %v1976
          %1978 = vmatprep.subr.mxu0 0.0
          %v1979 = vand.u32 %v1656, 4294901760
          %v1980 = vsub.f32 %v1656, %v1979
          %1981 = vmatpush1.msra.mxu0 %v1980
          %1982 = vmatprep.subr.mxu0 0.0
          %v1983 = vand.u32 %v1655, 4294901760
          %v1984 = vsub.f32 %v1655, %v1983
          %1985 = vmatpush1.msra.mxu0 %v1984
          %1986 = vmatprep.subr.mxu0 0.0
          %v1987 = vand.u32 %v1654, 4294901760
          %v1988 = vsub.f32 %v1654, %v1987
          %1989 = vmatpush1.msra.mxu0 %v1988
          %1990 = vmatprep.subr.mxu0 0.0
          %v1991 = vand.u32 %v1653, 4294901760
          %v1992 = vsub.f32 %v1653, %v1991
          %1993 = vmatpush1.msra.mxu0 %v1992
          %1994 = vmatprep.subr.mxu0 0.0
          %v1995 = vand.u32 %v1652, 4294901760
          %v1996 = vsub.f32 %v1652, %v1995
          %1997 = vmatpush1.msra.mxu0 %v1996
          %1998 = vmatprep.subr.mxu0 0.0
          %v1999 = vand.u32 %v1651, 4294901760
          %v2000 = vsub.f32 %v1651, %v1999
          %2001 = vmatpush1.msra.mxu0 %v2000
          %2002 = vmatprep.subr.mxu0 0.0
          %v2003 = vand.u32 %v1650, 4294901760
          %v2004 = vsub.f32 %v1650, %v2003
          %2005 = vmatpush1.msra.mxu0 %v2004
          %2006 = vmatprep.subr.mxu0 0.0
          %v2007 = vand.u32 %v1649, 4294901760
          %v2008 = vsub.f32 %v1649, %v2007
          %2009 = vmatpush1.msra.mxu0 %v2008
          %2010 = vmatprep.subr.mxu0 0.0
          %v2011 = vand.u32 %v1648, 4294901760
          %v2012 = vsub.f32 %v1648, %v2011
          %2013 = vmatpush1.msra.mxu0 %v2012
          %2014 = vmatprep.subr.mxu0 0.0
          %v2015 = vand.u32 %v1647, 4294901760
          %v2016 = vsub.f32 %v1647, %v2015
          %2017 = vmatpush1.msra.mxu0 %v2016
          %2018 = vmatprep.subr.mxu0 0.0
          %v2019 = vand.u32 %v1646, 4294901760
          %v2020 = vsub.f32 %v1646, %v2019
          %2021 = vmatpush1.msra.mxu0 %v2020
          %2022 = vmatprep.subr.mxu0 0.0
          %v2023 = vand.u32 %v1645, 4294901760
          %v2024 = vsub.f32 %v1645, %v2023
          %2025 = vmatpush1.msra.mxu0 %v2024
          %2026 = vmatprep.subr.mxu0 0.0
          %v2027 = vand.u32 %v1644, 4294901760
          %v2028 = vsub.f32 %v1644, %v2027
          %2029 = vmatpush1.msra.mxu0 %v2028
          %2030 = vmatprep.subr.mxu0 0.0
          %2031 = vmatpush2.msra.mxu0 0.0
          %2032 = vmatprep.subr.mxu0 0.0
          %2033 = vmatpush2.msra.mxu0 0.0
          %2034 = vmatprep.subr.mxu0 0.0
          %2035 = vmatpush2.msra.mxu0 0.0
          %2036 = vmatprep.subr.mxu0 0.0
          %2037 = vmatpush2.msra.mxu0 0.0
          %2038 = vmatprep.subr.mxu0 0.0
          %2039 = vmatpush2.msra.mxu0 0.0
          %2040 = vmatprep.subr.mxu0 0.0
          %2041 = vmatpush2.msra.mxu0 0.0
          %2042 = vmatprep.subr.mxu0 0.0
          %2043 = vmatpush2.msra.mxu0 0.0
          %2044 = vmatprep.subr.mxu0 0.0
          %2045 = vmatpush2.msra.mxu0 0.0
          %2046 = vmatprep.subr.mxu0 0.0
          %2047 = vmatpush2.msra.mxu0 0.0
          %2048 = vmatprep.subr.mxu0 0.0
          %2049 = vmatpush2.msra.mxu0 0.0
          %2050 = vmatprep.subr.mxu0 0.0
          %2051 = vmatpush2.msra.mxu0 0.0
          %2052 = vmatprep.subr.mxu0 0.0
          %2053 = vmatpush2.msra.mxu0 0.0
          %2054 = vmatprep.subr.mxu0 0.0
          %2055 = vmatpush2.msra.mxu0 0.0
          %2056 = vmatprep.subr.mxu0 0.0
          %2057 = vmatpush2.msra.mxu0 0.0
          %2058 = vmatprep.subr.mxu0 0.0
          %2059 = vmatpush2.msra.mxu0 0.0
          %2060 = vmatprep.subr.mxu0 0.0
          %2061 = vmatpush2.msra.mxu0 0.0
          %2062 = vmatprep.mubr.f32.mxu0 0.0
          %v2063 = vand.u32 %v313, 4294901760
          %v2064 = vsub.f32 %v313, %v2063
          %2065 = vmatmul.mubr.f32.gmra.mxu0 %v2064
          %v2066 = vpop.f32.mrf.mxu0
          %v2067 = vadd.f32 %v1939, %v2066
          %v2068 = vpop.f32.mrf.mxu0
          %2069 = vmatprep.mubr.f32.mxu0 0.0
          %v2070 = vand.u32 %v314, 4294901760
          %v2071 = vsub.f32 %v314, %v2070
          %2072 = vmatmul.mubr.f32.gmra.mxu0 %v2071
          %v2073 = vpop.f32.mrf.mxu0
          %v2074 = vadd.f32 %v1945, %v2073
          %v2075 = vpop.f32.mrf.mxu0
          %2076 = vmatprep.mubr.f32.mxu0 0.0
          %v2077 = vand.u32 %v315, 4294901760
          %v2078 = vsub.f32 %v315, %v2077
          %2079 = vmatmul.mubr.f32.gmra.mxu0 %v2078
          %v2080 = vpop.f32.mrf.mxu0
          %v2081 = vadd.f32 %v1951, %v2080
          %v2082 = vpop.f32.mrf.mxu0
          %2083 = vmatprep.mubr.f32.mxu0 0.0
          %v2084 = vand.u32 %v316, 4294901760
          %v2085 = vsub.f32 %v316, %v2084
          %2086 = vmatmul.mubr.f32.gmra.mxu0 %v2085
          %v2087 = vpop.f32.mrf.mxu0
          %v2088 = vadd.f32 %v1957, %v2087
          %v2089 = vpop.f32.mrf.mxu0
          %2090 = vmatprep.mubr.f32.mxu0 0.0
          %v2091 = vand.u32 %v317, 4294901760
          %v2092 = vsub.f32 %v317, %v2091
          %2093 = vmatmul.mubr.f32.gmra.mxu0 %v2092
          %v2094 = vpop.f32.mrf.mxu0
          %v2095 = vadd.f32 %v1963, %v2094
          %v2096 = vpop.f32.mrf.mxu0
          %2097 = vdwg.mxu0
          %2098 = vmatprep.subr.mxu0 0.0
          %v2099 = vand.u32 %v1659, 4294901760
          %2100 = vmatpush1.msra.mxu0 %v2099
          %2101 = vmatprep.subr.mxu0 0.0
          %v2102 = vand.u32 %v1658, 4294901760
          %2103 = vmatpush1.msra.mxu0 %v2102
          %2104 = vmatprep.subr.mxu0 0.0
          %v2105 = vand.u32 %v1657, 4294901760
          %2106 = vmatpush1.msra.mxu0 %v2105
          %2107 = vmatprep.subr.mxu0 0.0
          %v2108 = vand.u32 %v1656, 4294901760
          %2109 = vmatpush1.msra.mxu0 %v2108
          %2110 = vmatprep.subr.mxu0 0.0
          %v2111 = vand.u32 %v1655, 4294901760
          %2112 = vmatpush1.msra.mxu0 %v2111
          %2113 = vmatprep.subr.mxu0 0.0
          %v2114 = vand.u32 %v1654, 4294901760
          %2115 = vmatpush1.msra.mxu0 %v2114
          %2116 = vmatprep.subr.mxu0 0.0
          %v2117 = vand.u32 %v1653, 4294901760
          %2118 = vmatpush1.msra.mxu0 %v2117
          %2119 = vmatprep.subr.mxu0 0.0
          %v2120 = vand.u32 %v1652, 4294901760
          %2121 = vmatpush1.msra.mxu0 %v2120
          %2122 = vmatprep.subr.mxu0 0.0
          %v2123 = vand.u32 %v1651, 4294901760
          %2124 = vmatpush1.msra.mxu0 %v2123
          %2125 = vmatprep.subr.mxu0 0.0
          %v2126 = vand.u32 %v1650, 4294901760
          %2127 = vmatpush1.msra.mxu0 %v2126
          %2128 = vmatprep.subr.mxu0 0.0
          %v2129 = vand.u32 %v1649, 4294901760
          %2130 = vmatpush1.msra.mxu0 %v2129
          %2131 = vmatprep.subr.mxu0 0.0
          %v2132 = vand.u32 %v1648, 4294901760
          %2133 = vmatpush1.msra.mxu0 %v2132
          %2134 = vmatprep.subr.mxu0 0.0
          %v2135 = vand.u32 %v1647, 4294901760
          %2136 = vmatpush1.msra.mxu0 %v2135
          %2137 = vmatprep.subr.mxu0 0.0
          %v2138 = vand.u32 %v1646, 4294901760
          %2139 = vmatpush1.msra.mxu0 %v2138
          %2140 = vmatprep.subr.mxu0 0.0
          %v2141 = vand.u32 %v1645, 4294901760
          %2142 = vmatpush1.msra.mxu0 %v2141
          %2143 = vmatprep.subr.mxu0 0.0
          %v2144 = vand.u32 %v1644, 4294901760
          %2145 = vmatpush1.msra.mxu0 %v2144
          %2146 = vmatprep.subr.mxu0 0.0
          %2147 = vmatpush2.msra.mxu0 0.0
          %2148 = vmatprep.subr.mxu0 0.0
          %2149 = vmatpush2.msra.mxu0 0.0
          %2150 = vmatprep.subr.mxu0 0.0
          %2151 = vmatpush2.msra.mxu0 0.0
          %2152 = vmatprep.subr.mxu0 0.0
          %2153 = vmatpush2.msra.mxu0 0.0
          %2154 = vmatprep.subr.mxu0 0.0
          %2155 = vmatpush2.msra.mxu0 0.0
          %2156 = vmatprep.subr.mxu0 0.0
          %2157 = vmatpush2.msra.mxu0 0.0
          %2158 = vmatprep.subr.mxu0 0.0
          %2159 = vmatpush2.msra.mxu0 0.0
          %2160 = vmatprep.subr.mxu0 0.0
          %2161 = vmatpush2.msra.mxu0 0.0
          %2162 = vmatprep.subr.mxu0 0.0
          %2163 = vmatpush2.msra.mxu0 0.0
          %2164 = vmatprep.subr.mxu0 0.0
          %2165 = vmatpush2.msra.mxu0 0.0
          %2166 = vmatprep.subr.mxu0 0.0
          %2167 = vmatpush2.msra.mxu0 0.0
          %2168 = vmatprep.subr.mxu0 0.0
          %2169 = vmatpush2.msra.mxu0 0.0
          %2170 = vmatprep.subr.mxu0 0.0
          %2171 = vmatpush2.msra.mxu0 0.0
          %2172 = vmatprep.subr.mxu0 0.0
          %2173 = vmatpush2.msra.mxu0 0.0
          %2174 = vmatprep.subr.mxu0 0.0
          %2175 = vmatpush2.msra.mxu0 0.0
          %2176 = vmatprep.subr.mxu0 0.0
          %2177 = vmatpush2.msra.mxu0 0.0
          %2178 = vmatprep.mubr.f32.mxu0 0.0
          %v2179 = vand.u32 %v313, 4294901760
          %v2180 = vsub.f32 %v313, %v2179
          %v2181 = vand.u32 %v2180, 4294901760
          %2182 = vmatmul.mubr.f32.gmra.mxu0 %v2181
          %v2183 = vpop.f32.mrf.mxu0
          %v2184 = vadd.f32 %v2067, %v2183
          %v2185 = vpop.f32.mrf.mxu0
          %2186 = vmatprep.mubr.f32.mxu0 0.0
          %v2187 = vand.u32 %v314, 4294901760
          %v2188 = vsub.f32 %v314, %v2187
          %v2189 = vand.u32 %v2188, 4294901760
          %2190 = vmatmul.mubr.f32.gmra.mxu0 %v2189
          %v2191 = vpop.f32.mrf.mxu0
          %v2192 = vadd.f32 %v2074, %v2191
          %v2193 = vpop.f32.mrf.mxu0
          %2194 = vmatprep.mubr.f32.mxu0 0.0
          %v2195 = vand.u32 %v315, 4294901760
          %v2196 = vsub.f32 %v315, %v2195
          %v2197 = vand.u32 %v2196, 4294901760
          %2198 = vmatmul.mubr.f32.gmra.mxu0 %v2197
          %v2199 = vpop.f32.mrf.mxu0
          %v2200 = vadd.f32 %v2081, %v2199
          %v2201 = vpop.f32.mrf.mxu0
          %2202 = vmatprep.mubr.f32.mxu0 0.0
          %v2203 = vand.u32 %v316, 4294901760
          %v2204 = vsub.f32 %v316, %v2203
          %v2205 = vand.u32 %v2204, 4294901760
          %2206 = vmatmul.mubr.f32.gmra.mxu0 %v2205
          %v2207 = vpop.f32.mrf.mxu0
          %v2208 = vadd.f32 %v2088, %v2207
          %v2209 = vpop.f32.mrf.mxu0
          %2210 = vmatprep.mubr.f32.mxu0 0.0
          %v2211 = vand.u32 %v317, 4294901760
          %v2212 = vsub.f32 %v317, %v2211
          %v2213 = vand.u32 %v2212, 4294901760
          %2214 = vmatmul.mubr.f32.gmra.mxu0 %v2213
          %v2215 = vpop.f32.mrf.mxu0
          %v2216 = vadd.f32 %v2095, %v2215
          %v2217 = vpop.f32.mrf.mxu0
          %2218 = vdwg.mxu0
          %2219 = vmatprep.subr.mxu0 0.0
          %v2220 = vand.u32 %v1659, 4294901760
          %v2221 = vsub.f32 %v1659, %v2220
          %v2222 = vand.u32 %v2221, 4294901760
          %2223 = vmatpush1.msra.mxu0 %v2222
          %2224 = vmatprep.subr.mxu0 0.0
          %v2225 = vand.u32 %v1658, 4294901760
          %v2226 = vsub.f32 %v1658, %v2225
          %v2227 = vand.u32 %v2226, 4294901760
          %2228 = vmatpush1.msra.mxu0 %v2227
          %2229 = vmatprep.subr.mxu0 0.0
          %v2230 = vand.u32 %v1657, 4294901760
          %v2231 = vsub.f32 %v1657, %v2230
          %v2232 = vand.u32 %v2231, 4294901760
          %2233 = vmatpush1.msra.mxu0 %v2232
          %2234 = vmatprep.subr.mxu0 0.0
          %v2235 = vand.u32 %v1656, 4294901760
          %v2236 = vsub.f32 %v1656, %v2235
          %v2237 = vand.u32 %v2236, 4294901760
          %2238 = vmatpush1.msra.mxu0 %v2237
          %2239 = vmatprep.subr.mxu0 0.0
          %v2240 = vand.u32 %v1655, 4294901760
          %v2241 = vsub.f32 %v1655, %v2240
          %v2242 = vand.u32 %v2241, 4294901760
          %2243 = vmatpush1.msra.mxu0 %v2242
          %2244 = vmatprep.subr.mxu0 0.0
          %v2245 = vand.u32 %v1654, 4294901760
          %v2246 = vsub.f32 %v1654, %v2245
          %v2247 = vand.u32 %v2246, 4294901760
          %2248 = vmatpush1.msra.mxu0 %v2247
          %2249 = vmatprep.subr.mxu0 0.0
          %v2250 = vand.u32 %v1653, 4294901760
          %v2251 = vsub.f32 %v1653, %v2250
          %v2252 = vand.u32 %v2251, 4294901760
          %2253 = vmatpush1.msra.mxu0 %v2252
          %2254 = vmatprep.subr.mxu0 0.0
          %v2255 = vand.u32 %v1652, 4294901760
          %v2256 = vsub.f32 %v1652, %v2255
          %v2257 = vand.u32 %v2256, 4294901760
          %2258 = vmatpush1.msra.mxu0 %v2257
          %2259 = vmatprep.subr.mxu0 0.0
          %v2260 = vand.u32 %v1651, 4294901760
          %v2261 = vsub.f32 %v1651, %v2260
          %v2262 = vand.u32 %v2261, 4294901760
          %2263 = vmatpush1.msra.mxu0 %v2262
          %2264 = vmatprep.subr.mxu0 0.0
          %v2265 = vand.u32 %v1650, 4294901760
          %v2266 = vsub.f32 %v1650, %v2265
          %v2267 = vand.u32 %v2266, 4294901760
          %2268 = vmatpush1.msra.mxu0 %v2267
          %2269 = vmatprep.subr.mxu0 0.0
          %v2270 = vand.u32 %v1649, 4294901760
          %v2271 = vsub.f32 %v1649, %v2270
          %v2272 = vand.u32 %v2271, 4294901760
          %2273 = vmatpush1.msra.mxu0 %v2272
          %2274 = vmatprep.subr.mxu0 0.0
          %v2275 = vand.u32 %v1648, 4294901760
          %v2276 = vsub.f32 %v1648, %v2275
          %v2277 = vand.u32 %v2276, 4294901760
          %2278 = vmatpush1.msra.mxu0 %v2277
          %2279 = vmatprep.subr.mxu0 0.0
          %v2280 = vand.u32 %v1647, 4294901760
          %v2281 = vsub.f32 %v1647, %v2280
          %v2282 = vand.u32 %v2281, 4294901760
          %2283 = vmatpush1.msra.mxu0 %v2282
          %2284 = vmatprep.subr.mxu0 0.0
          %v2285 = vand.u32 %v1646, 4294901760
          %v2286 = vsub.f32 %v1646, %v2285
          %v2287 = vand.u32 %v2286, 4294901760
          %2288 = vmatpush1.msra.mxu0 %v2287
          %2289 = vmatprep.subr.mxu0 0.0
          %v2290 = vand.u32 %v1645, 4294901760
          %v2291 = vsub.f32 %v1645, %v2290
          %v2292 = vand.u32 %v2291, 4294901760
          %2293 = vmatpush1.msra.mxu0 %v2292
          %2294 = vmatprep.subr.mxu0 0.0
          %v2295 = vand.u32 %v1644, 4294901760
          %v2296 = vsub.f32 %v1644, %v2295
          %v2297 = vand.u32 %v2296, 4294901760
          %2298 = vmatpush1.msra.mxu0 %v2297
          %2299 = vmatprep.subr.mxu0 0.0
          %2300 = vmatpush2.msra.mxu0 0.0
          %2301 = vmatprep.subr.mxu0 0.0
          %2302 = vmatpush2.msra.mxu0 0.0
          %2303 = vmatprep.subr.mxu0 0.0
          %2304 = vmatpush2.msra.mxu0 0.0
          %2305 = vmatprep.subr.mxu0 0.0
          %2306 = vmatpush2.msra.mxu0 0.0
          %2307 = vmatprep.subr.mxu0 0.0
          %2308 = vmatpush2.msra.mxu0 0.0
          %2309 = vmatprep.subr.mxu0 0.0
          %2310 = vmatpush2.msra.mxu0 0.0
          %2311 = vmatprep.subr.mxu0 0.0
          %2312 = vmatpush2.msra.mxu0 0.0
          %2313 = vmatprep.subr.mxu0 0.0
          %2314 = vmatpush2.msra.mxu0 0.0
          %2315 = vmatprep.subr.mxu0 0.0
          %2316 = vmatpush2.msra.mxu0 0.0
          %2317 = vmatprep.subr.mxu0 0.0
          %2318 = vmatpush2.msra.mxu0 0.0
          %2319 = vmatprep.subr.mxu0 0.0
          %2320 = vmatpush2.msra.mxu0 0.0
          %2321 = vmatprep.subr.mxu0 0.0
          %2322 = vmatpush2.msra.mxu0 0.0
          %2323 = vmatprep.subr.mxu0 0.0
          %2324 = vmatpush2.msra.mxu0 0.0
          %2325 = vmatprep.subr.mxu0 0.0
          %2326 = vmatpush2.msra.mxu0 0.0
          %2327 = vmatprep.subr.mxu0 0.0
          %2328 = vmatpush2.msra.mxu0 0.0
          %2329 = vmatprep.subr.mxu0 0.0
          %2330 = vmatpush2.msra.mxu0 0.0
          %2331 = vmatprep.mubr.f32.mxu0 0.0
          %v2332 = vand.u32 %v313, 4294901760
          %2333 = vmatmul.mubr.f32.gmra.mxu0 %v2332
          %v2334 = vpop.f32.mrf.mxu0
          %v2335 = vadd.f32 %v2184, %v2334
          %v2336 = vpop.f32.mrf.mxu0
          %2337 = vmatprep.mubr.f32.mxu0 0.0
          %v2338 = vand.u32 %v314, 4294901760
          %2339 = vmatmul.mubr.f32.gmra.mxu0 %v2338
          %v2340 = vpop.f32.mrf.mxu0
          %v2341 = vadd.f32 %v2192, %v2340
          %v2342 = vpop.f32.mrf.mxu0
          %2343 = vmatprep.mubr.f32.mxu0 0.0
          %v2344 = vand.u32 %v315, 4294901760
          %2345 = vmatmul.mubr.f32.gmra.mxu0 %v2344
          %v2346 = vpop.f32.mrf.mxu0
          %v2347 = vadd.f32 %v2200, %v2346
          %v2348 = vpop.f32.mrf.mxu0
          %2349 = vmatprep.mubr.f32.mxu0 0.0
          %v2350 = vand.u32 %v316, 4294901760
          %2351 = vmatmul.mubr.f32.gmra.mxu0 %v2350
          %v2352 = vpop.f32.mrf.mxu0
          %v2353 = vadd.f32 %v2208, %v2352
          %v2354 = vpop.f32.mrf.mxu0
          %2355 = vmatprep.mubr.f32.mxu0 0.0
          %v2356 = vand.u32 %v317, 4294901760
          %2357 = vmatmul.mubr.f32.gmra.mxu0 %v2356
          %v2358 = vpop.f32.mrf.mxu0
          %v2359 = vadd.f32 %v2216, %v2358
          %v2360 = vpop.f32.mrf.mxu0
          %2361 = vdwg.mxu0
          %2362 = vmatprep.subr.mxu0 0.0
          %v2363 = vand.u32 %v1659, 4294901760
          %2364 = vmatpush1.msra.mxu0 %v2363
          %2365 = vmatprep.subr.mxu0 0.0
          %v2366 = vand.u32 %v1658, 4294901760
          %2367 = vmatpush1.msra.mxu0 %v2366
          %2368 = vmatprep.subr.mxu0 0.0
          %v2369 = vand.u32 %v1657, 4294901760
          %2370 = vmatpush1.msra.mxu0 %v2369
          %2371 = vmatprep.subr.mxu0 0.0
          %v2372 = vand.u32 %v1656, 4294901760
          %2373 = vmatpush1.msra.mxu0 %v2372
          %2374 = vmatprep.subr.mxu0 0.0
          %v2375 = vand.u32 %v1655, 4294901760
          %2376 = vmatpush1.msra.mxu0 %v2375
          %2377 = vmatprep.subr.mxu0 0.0
          %v2378 = vand.u32 %v1654, 4294901760
          %2379 = vmatpush1.msra.mxu0 %v2378
          %2380 = vmatprep.subr.mxu0 0.0
          %v2381 = vand.u32 %v1653, 4294901760
          %2382 = vmatpush1.msra.mxu0 %v2381
          %2383 = vmatprep.subr.mxu0 0.0
          %v2384 = vand.u32 %v1652, 4294901760
          %2385 = vmatpush1.msra.mxu0 %v2384
          %2386 = vmatprep.subr.mxu0 0.0
          %v2387 = vand.u32 %v1651, 4294901760
          %2388 = vmatpush1.msra.mxu0 %v2387
          %2389 = vmatprep.subr.mxu0 0.0
          %v2390 = vand.u32 %v1650, 4294901760
          %2391 = vmatpush1.msra.mxu0 %v2390
          %2392 = vmatprep.subr.mxu0 0.0
          %v2393 = vand.u32 %v1649, 4294901760
          %2394 = vmatpush1.msra.mxu0 %v2393
          %2395 = vmatprep.subr.mxu0 0.0
          %v2396 = vand.u32 %v1648, 4294901760
          %2397 = vmatpush1.msra.mxu0 %v2396
          %2398 = vmatprep.subr.mxu0 0.0
          %v2399 = vand.u32 %v1647, 4294901760
          %2400 = vmatpush1.msra.mxu0 %v2399
          %2401 = vmatprep.subr.mxu0 0.0
          %v2402 = vand.u32 %v1646, 4294901760
          %2403 = vmatpush1.msra.mxu0 %v2402
          %2404 = vmatprep.subr.mxu0 0.0
          %v2405 = vand.u32 %v1645, 4294901760
          %2406 = vmatpush1.msra.mxu0 %v2405
          %2407 = vmatprep.subr.mxu0 0.0
          %v2408 = vand.u32 %v1644, 4294901760
          %2409 = vmatpush1.msra.mxu0 %v2408
          %2410 = vmatprep.subr.mxu0 0.0
          %2411 = vmatpush2.msra.mxu0 0.0
          %2412 = vmatprep.subr.mxu0 0.0
          %2413 = vmatpush2.msra.mxu0 0.0
          %2414 = vmatprep.subr.mxu0 0.0
          %2415 = vmatpush2.msra.mxu0 0.0
          %2416 = vmatprep.subr.mxu0 0.0
          %2417 = vmatpush2.msra.mxu0 0.0
          %2418 = vmatprep.subr.mxu0 0.0
          %2419 = vmatpush2.msra.mxu0 0.0
          %2420 = vmatprep.subr.mxu0 0.0
          %2421 = vmatpush2.msra.mxu0 0.0
          %2422 = vmatprep.subr.mxu0 0.0
          %2423 = vmatpush2.msra.mxu0 0.0
          %2424 = vmatprep.subr.mxu0 0.0
          %2425 = vmatpush2.msra.mxu0 0.0
          %2426 = vmatprep.subr.mxu0 0.0
          %2427 = vmatpush2.msra.mxu0 0.0
          %2428 = vmatprep.subr.mxu0 0.0
          %2429 = vmatpush2.msra.mxu0 0.0
          %2430 = vmatprep.subr.mxu0 0.0
          %2431 = vmatpush2.msra.mxu0 0.0
          %2432 = vmatprep.subr.mxu0 0.0
          %2433 = vmatpush2.msra.mxu0 0.0
          %2434 = vmatprep.subr.mxu0 0.0
          %2435 = vmatpush2.msra.mxu0 0.0
          %2436 = vmatprep.subr.mxu0 0.0
          %2437 = vmatpush2.msra.mxu0 0.0
          %2438 = vmatprep.subr.mxu0 0.0
          %2439 = vmatpush2.msra.mxu0 0.0
          %2440 = vmatprep.subr.mxu0 0.0
          %2441 = vmatpush2.msra.mxu0 0.0
          %2442 = vmatprep.mubr.f32.mxu0 0.0
          %v2443 = vand.u32 %v313, 4294901760
          %2444 = vmatmul.mubr.f32.gmra.mxu0 %v2443
          %v2445 = vpop.f32.mrf.mxu0
          %v2446 = vadd.f32 %v2335, %v2445
          %v2447 = vpop.f32.mrf.mxu0
          %2448 = vmatprep.mubr.f32.mxu0 0.0
          %v2449 = vand.u32 %v314, 4294901760
          %2450 = vmatmul.mubr.f32.gmra.mxu0 %v2449
          %v2451 = vpop.f32.mrf.mxu0
          %v2452 = vadd.f32 %v2341, %v2451
          %v2453 = vpop.f32.mrf.mxu0
          %2454 = vmatprep.mubr.f32.mxu0 0.0
          %v2455 = vand.u32 %v315, 4294901760
          %2456 = vmatmul.mubr.f32.gmra.mxu0 %v2455
          %v2457 = vpop.f32.mrf.mxu0
          %v2458 = vadd.f32 %v2347, %v2457
          %v2459 = vpop.f32.mrf.mxu0
          %2460 = vmatprep.mubr.f32.mxu0 0.0
          %v2461 = vand.u32 %v316, 4294901760
          %2462 = vmatmul.mubr.f32.gmra.mxu0 %v2461
          %v2463 = vpop.f32.mrf.mxu0
          %v2464 = vadd.f32 %v2353, %v2463
          %v2465 = vpop.f32.mrf.mxu0
          %2466 = vmatprep.mubr.f32.mxu0 0.0
          %v2467 = vand.u32 %v317, 4294901760
          %2468 = vmatmul.mubr.f32.gmra.mxu0 %v2467
          %v2469 = vpop.f32.mrf.mxu0
          %v2470 = vadd.f32 %v2359, %v2469
          %v2471 = vpop.f32.mrf.mxu0
          %2472 = vdwg.mxu0
          %v2473 = vsub.f32 %v2446, %v1540
          %v2474 = vsub.f32 %v2452, %v1546
          %v2475 = vsub.f32 %v2458, %v1552
          %v2476 = vand.u32 2147483647, %v2473
          %v2477 = vand.u32 2147483647, %v2474
          %v2478 = vand.u32 2147483647, %v2475
          %v2479 = vadd.f32 %v2476, %v2477
          %v2480 = vadd.f32 %v2479, %v2478
          %v2481 = vrot.slane %v2480, 4
          %v2482 = vadd.f32 %v2480, %v2481
          %v2483 = vrot.slane %v2482, 2
          %v2484 = vadd.f32 %v2482, %v2483
          %v2485 = vrot.slane %v2484, 1
          %v2486 = vadd.f32 %v2484, %v2485
          %vm2487 = vcmp.lt.f32.partialorder %v2486, 0.0021072102
          %v2488 = vsel %vm2487, 1, 0
          %v2489 = vcvt.s32.f32 %v2488
          %v2490 = vsub.f32 0.0, %v1611
          %v2491 = vmul.f32 %v2490, 1.442695
          %v2492 = vpow.pop %v2491
          %v2493 = vmul.f32 %v2492, %v2489
          %v2494 = vmul.f32 %v2493, %v2464
          %v2495 = vmul.f32 %v2493, %v2470
          %v2496 = vadd.f32 %v1572, %v2494
          %v2497 = vadd.f32 %v1573, %v2495
          %v2498 = vadd.f32 %v1574, %v2493
          %v2499 = vsel %vm1612, 1e+30, %v1575
          %v2500 = vsel %vm1613, 1e+30, %v1576
          %v2501 = vsel %vm1614, 1e+30, %v1577
          %v2502 = vsel %vm1615, 1e+30, %v1578
          %v2503 = vsel %vm1616, 1e+30, %v1579
          %v2504 = vsel %vm1617, 1e+30, %v1580
          %v2505 = vsel %vm1618, 1e+30, %v1581
          %v2506 = vsel %vm1619, 1e+30, %v1582
          %v2507 = vsel %vm1620, 1e+30, %v1583
          %v2508 = vsel %vm1621, 1e+30, %v1584
          %v2509 = vsel %vm1622, 1e+30, %v1585
          %v2510 = vsel %vm1623, 1e+30, %v1586
          %v2511 = vsel %vm1624, 1e+30, %v1587
          %v2512 = vsel %vm1625, 1e+30, %v1588
          %v2513 = vsel %vm1626, 1e+30, %v1589
          %v2514 = vsel %vm1627, 1e+30, %v1590
          %v2515 = vmin.f32 %v2499, %v2503
          %v2516 = vmin.f32 %v2500, %v2504
          %v2517 = vmin.f32 %v2501, %v2505
          %v2518 = vmin.f32 %v2502, %v2506
          %v2519 = vmin.f32 %v2515, %v2507
          %v2520 = vmin.f32 %v2516, %v2508
          %v2521 = vmin.f32 %v2517, %v2509
          %v2522 = vmin.f32 %v2518, %v2510
          %v2523 = vmin.f32 %v2519, %v2511
          %v2524 = vmin.f32 %v2520, %v2512
          %v2525 = vmin.f32 %v2521, %v2513
          %v2526 = vmin.f32 %v2522, %v2514
          %v2527 = vmin.f32 %v2523, %v2524
          %v2528 = vmin.f32 %v2525, %v2526
          %v2529 = vmin.f32 %v2527, %v2528
          %v2530 = vrot.slane %v2529, 4
          %v2531 = vmin.f32 %v2529, %v2530
          %v2532 = vrot.slane %v2531, 2
          %v2533 = vmin.f32 %v2531, %v2532
          %v2534 = vrot.slane %v2533, 1
          %v2535 = vmin.f32 %v2533, %v2534
          %vm2536 = vcmp.eq.f32.partialorder %v2499, %v2535
          %vm2537 = vcmp.eq.f32.partialorder %v2500, %v2535
          %vm2538 = vcmp.eq.f32.partialorder %v2501, %v2535
          %vm2539 = vcmp.eq.f32.partialorder %v2502, %v2535
          %vm2540 = vcmp.eq.f32.partialorder %v2503, %v2535
          %vm2541 = vcmp.eq.f32.partialorder %v2504, %v2535
          %vm2542 = vcmp.eq.f32.partialorder %v2505, %v2535
          %vm2543 = vcmp.eq.f32.partialorder %v2506, %v2535
          %vm2544 = vcmp.eq.f32.partialorder %v2507, %v2535
          %vm2545 = vcmp.eq.f32.partialorder %v2508, %v2535
          %vm2546 = vcmp.eq.f32.partialorder %v2509, %v2535
          %vm2547 = vcmp.eq.f32.partialorder %v2510, %v2535
          %vm2548 = vcmp.eq.f32.partialorder %v2511, %v2535
          %vm2549 = vcmp.eq.f32.partialorder %v2512, %v2535
          %vm2550 = vcmp.eq.f32.partialorder %v2513, %v2535
          %vm2551 = vcmp.eq.f32.partialorder %v2514, %v2535
          %v2552 = vsel %vm2536, 1, 0
          %v2553 = vsel %vm2537, 1, 0
          %v2554 = vsel %vm2538, 1, 0
          %v2555 = vsel %vm2539, 1, 0
          %v2556 = vsel %vm2540, 1, 0
          %v2557 = vsel %vm2541, 1, 0
          %v2558 = vsel %vm2542, 1, 0
          %v2559 = vsel %vm2543, 1, 0
          %v2560 = vsel %vm2544, 1, 0
          %v2561 = vsel %vm2545, 1, 0
          %v2562 = vsel %vm2546, 1, 0
          %v2563 = vsel %vm2547, 1, 0
          %v2564 = vsel %vm2548, 1, 0
          %v2565 = vsel %vm2549, 1, 0
          %v2566 = vsel %vm2550, 1, 0
          %v2567 = vsel %vm2551, 1, 0
          %v2568 = vcvt.s32.f32 %v2552
          %v2569 = vcvt.s32.f32 %v2553
          %v2570 = vcvt.s32.f32 %v2554
          %v2571 = vcvt.s32.f32 %v2555
          %v2572 = vcvt.s32.f32 %v2556
          %v2573 = vcvt.s32.f32 %v2557
          %v2574 = vcvt.s32.f32 %v2558
          %v2575 = vcvt.s32.f32 %v2559
          %v2576 = vcvt.s32.f32 %v2560
          %v2577 = vcvt.s32.f32 %v2561
          %v2578 = vcvt.s32.f32 %v2562
          %v2579 = vcvt.s32.f32 %v2563
          %v2580 = vcvt.s32.f32 %v2564
          %v2581 = vcvt.s32.f32 %v2565
          %v2582 = vcvt.s32.f32 %v2566
          %v2583 = vcvt.s32.f32 %v2567
          %2584 = vmatprep.subr.mxu0 0.0
          %v2585 = vand.u32 %v2583, 4294901760
          %2586 = vmatpush1.msra.mxu0 %v2585
          %2587 = vmatprep.subr.mxu0 0.0
          %v2588 = vand.u32 %v2582, 4294901760
          %2589 = vmatpush1.msra.mxu0 %v2588
          %2590 = vmatprep.subr.mxu0 0.0
          %v2591 = vand.u32 %v2581, 4294901760
          %2592 = vmatpush1.msra.mxu0 %v2591
          %2593 = vmatprep.subr.mxu0 0.0
          %v2594 = vand.u32 %v2580, 4294901760
          %2595 = vmatpush1.msra.mxu0 %v2594
          %2596 = vmatprep.subr.mxu0 0.0
          %v2597 = vand.u32 %v2579, 4294901760
          %2598 = vmatpush1.msra.mxu0 %v2597
          %2599 = vmatprep.subr.mxu0 0.0
          %v2600 = vand.u32 %v2578, 4294901760
          %2601 = vmatpush1.msra.mxu0 %v2600
          %2602 = vmatprep.subr.mxu0 0.0
          %v2603 = vand.u32 %v2577, 4294901760
          %2604 = vmatpush1.msra.mxu0 %v2603
          %2605 = vmatprep.subr.mxu0 0.0
          %v2606 = vand.u32 %v2576, 4294901760
          %2607 = vmatpush1.msra.mxu0 %v2606
          %2608 = vmatprep.subr.mxu0 0.0
          %v2609 = vand.u32 %v2575, 4294901760
          %2610 = vmatpush1.msra.mxu0 %v2609
          %2611 = vmatprep.subr.mxu0 0.0
          %v2612 = vand.u32 %v2574, 4294901760
          %2613 = vmatpush1.msra.mxu0 %v2612
          %2614 = vmatprep.subr.mxu0 0.0
          %v2615 = vand.u32 %v2573, 4294901760
          %2616 = vmatpush1.msra.mxu0 %v2615
          %2617 = vmatprep.subr.mxu0 0.0
          %v2618 = vand.u32 %v2572, 4294901760
          %2619 = vmatpush1.msra.mxu0 %v2618
          %2620 = vmatprep.subr.mxu0 0.0
          %v2621 = vand.u32 %v2571, 4294901760
          %2622 = vmatpush1.msra.mxu0 %v2621
          %2623 = vmatprep.subr.mxu0 0.0
          %v2624 = vand.u32 %v2570, 4294901760
          %2625 = vmatpush1.msra.mxu0 %v2624
          %2626 = vmatprep.subr.mxu0 0.0
          %v2627 = vand.u32 %v2569, 4294901760
          %2628 = vmatpush1.msra.mxu0 %v2627
          %2629 = vmatprep.subr.mxu0 0.0
          %v2630 = vand.u32 %v2568, 4294901760
          %2631 = vmatpush1.msra.mxu0 %v2630
          %2632 = vmatprep.subr.mxu0 0.0
          %2633 = vmatpush2.msra.mxu0 0.0
          %2634 = vmatprep.subr.mxu0 0.0
          %2635 = vmatpush2.msra.mxu0 0.0
          %2636 = vmatprep.subr.mxu0 0.0
          %2637 = vmatpush2.msra.mxu0 0.0
          %2638 = vmatprep.subr.mxu0 0.0
          %2639 = vmatpush2.msra.mxu0 0.0
          %2640 = vmatprep.subr.mxu0 0.0
          %2641 = vmatpush2.msra.mxu0 0.0
          %2642 = vmatprep.subr.mxu0 0.0
          %2643 = vmatpush2.msra.mxu0 0.0
          %2644 = vmatprep.subr.mxu0 0.0
          %2645 = vmatpush2.msra.mxu0 0.0
          %2646 = vmatprep.subr.mxu0 0.0
          %2647 = vmatpush2.msra.mxu0 0.0
          %2648 = vmatprep.subr.mxu0 0.0
          %2649 = vmatpush2.msra.mxu0 0.0
          %2650 = vmatprep.subr.mxu0 0.0
          %2651 = vmatpush2.msra.mxu0 0.0
          %2652 = vmatprep.subr.mxu0 0.0
          %2653 = vmatpush2.msra.mxu0 0.0
          %2654 = vmatprep.subr.mxu0 0.0
          %2655 = vmatpush2.msra.mxu0 0.0
          %2656 = vmatprep.subr.mxu0 0.0
          %2657 = vmatpush2.msra.mxu0 0.0
          %2658 = vmatprep.subr.mxu0 0.0
          %2659 = vmatpush2.msra.mxu0 0.0
          %2660 = vmatprep.subr.mxu0 0.0
          %2661 = vmatpush2.msra.mxu0 0.0
          %2662 = vmatprep.subr.mxu0 0.0
          %2663 = vmatpush2.msra.mxu0 0.0
          %2664 = vmatprep.mubr.f32.mxu0 0.0
          %v2665 = vand.u32 %v313, 4294901760
          %v2666 = vsub.f32 %v313, %v2665
          %v2667 = vand.u32 %v2666, 4294901760
          %v2668 = vsub.f32 %v2666, %v2667
          %v2669 = vand.u32 %v2668, 4294901760
          %2670 = vmatmul.mubr.f32.gmra.mxu0 %v2669
          %v2671 = vpop.f32.mrf.mxu0
          %v2672 = vadd.f32 0.0, %v2671
          %v2673 = vpop.f32.mrf.mxu0
          %2674 = vmatprep.mubr.f32.mxu0 0.0
          %v2675 = vand.u32 %v314, 4294901760
          %v2676 = vsub.f32 %v314, %v2675
          %v2677 = vand.u32 %v2676, 4294901760
          %v2678 = vsub.f32 %v2676, %v2677
          %v2679 = vand.u32 %v2678, 4294901760
          %2680 = vmatmul.mubr.f32.gmra.mxu0 %v2679
          %v2681 = vpop.f32.mrf.mxu0
          %v2682 = vadd.f32 0.0, %v2681
          %v2683 = vpop.f32.mrf.mxu0
          %2684 = vmatprep.mubr.f32.mxu0 0.0
          %v2685 = vand.u32 %v315, 4294901760
          %v2686 = vsub.f32 %v315, %v2685
          %v2687 = vand.u32 %v2686, 4294901760
          %v2688 = vsub.f32 %v2686, %v2687
          %v2689 = vand.u32 %v2688, 4294901760
          %2690 = vmatmul.mubr.f32.gmra.mxu0 %v2689
          %v2691 = vpop.f32.mrf.mxu0
          %v2692 = vadd.f32 0.0, %v2691
          %v2693 = vpop.f32.mrf.mxu0
          %2694 = vmatprep.mubr.f32.mxu0 0.0
          %v2695 = vand.u32 %v316, 4294901760
          %v2696 = vsub.f32 %v316, %v2695
          %v2697 = vand.u32 %v2696, 4294901760
          %v2698 = vsub.f32 %v2696, %v2697
          %v2699 = vand.u32 %v2698, 4294901760
          %2700 = vmatmul.mubr.f32.gmra.mxu0 %v2699
          %v2701 = vpop.f32.mrf.mxu0
          %v2702 = vadd.f32 0.0, %v2701
          %v2703 = vpop.f32.mrf.mxu0
          %2704 = vmatprep.mubr.f32.mxu0 0.0
          %v2705 = vand.u32 %v317, 4294901760
          %v2706 = vsub.f32 %v317, %v2705
          %v2707 = vand.u32 %v2706, 4294901760
          %v2708 = vsub.f32 %v2706, %v2707
          %v2709 = vand.u32 %v2708, 4294901760
          %2710 = vmatmul.mubr.f32.gmra.mxu0 %v2709
          %v2711 = vpop.f32.mrf.mxu0
          %v2712 = vadd.f32 0.0, %v2711
          %v2713 = vpop.f32.mrf.mxu0
          %2714 = vdwg.mxu0
          %2715 = vmatprep.subr.mxu0 0.0
          %v2716 = vand.u32 %v2583, 4294901760
          %v2717 = vsub.f32 %v2583, %v2716
          %v2718 = vand.u32 %v2717, 4294901760
          %v2719 = vsub.f32 %v2717, %v2718
          %v2720 = vand.u32 %v2719, 4294901760
          %2721 = vmatpush1.msra.mxu0 %v2720
          %2722 = vmatprep.subr.mxu0 0.0
          %v2723 = vand.u32 %v2582, 4294901760
          %v2724 = vsub.f32 %v2582, %v2723
          %v2725 = vand.u32 %v2724, 4294901760
          %v2726 = vsub.f32 %v2724, %v2725
          %v2727 = vand.u32 %v2726, 4294901760
          %2728 = vmatpush1.msra.mxu0 %v2727
          %2729 = vmatprep.subr.mxu0 0.0
          %v2730 = vand.u32 %v2581, 4294901760
          %v2731 = vsub.f32 %v2581, %v2730
          %v2732 = vand.u32 %v2731, 4294901760
          %v2733 = vsub.f32 %v2731, %v2732
          %v2734 = vand.u32 %v2733, 4294901760
          %2735 = vmatpush1.msra.mxu0 %v2734
          %2736 = vmatprep.subr.mxu0 0.0
          %v2737 = vand.u32 %v2580, 4294901760
          %v2738 = vsub.f32 %v2580, %v2737
          %v2739 = vand.u32 %v2738, 4294901760
          %v2740 = vsub.f32 %v2738, %v2739
          %v2741 = vand.u32 %v2740, 4294901760
          %2742 = vmatpush1.msra.mxu0 %v2741
          %2743 = vmatprep.subr.mxu0 0.0
          %v2744 = vand.u32 %v2579, 4294901760
          %v2745 = vsub.f32 %v2579, %v2744
          %v2746 = vand.u32 %v2745, 4294901760
          %v2747 = vsub.f32 %v2745, %v2746
          %v2748 = vand.u32 %v2747, 4294901760
          %2749 = vmatpush1.msra.mxu0 %v2748
          %2750 = vmatprep.subr.mxu0 0.0
          %v2751 = vand.u32 %v2578, 4294901760
          %v2752 = vsub.f32 %v2578, %v2751
          %v2753 = vand.u32 %v2752, 4294901760
          %v2754 = vsub.f32 %v2752, %v2753
          %v2755 = vand.u32 %v2754, 4294901760
          %2756 = vmatpush1.msra.mxu0 %v2755
          %2757 = vmatprep.subr.mxu0 0.0
          %v2758 = vand.u32 %v2577, 4294901760
          %v2759 = vsub.f32 %v2577, %v2758
          %v2760 = vand.u32 %v2759, 4294901760
          %v2761 = vsub.f32 %v2759, %v2760
          %v2762 = vand.u32 %v2761, 4294901760
          %2763 = vmatpush1.msra.mxu0 %v2762
          %2764 = vmatprep.subr.mxu0 0.0
          %v2765 = vand.u32 %v2576, 4294901760
          %v2766 = vsub.f32 %v2576, %v2765
          %v2767 = vand.u32 %v2766, 4294901760
          %v2768 = vsub.f32 %v2766, %v2767
          %v2769 = vand.u32 %v2768, 4294901760
          %2770 = vmatpush1.msra.mxu0 %v2769
          %2771 = vmatprep.subr.mxu0 0.0
          %v2772 = vand.u32 %v2575, 4294901760
          %v2773 = vsub.f32 %v2575, %v2772
          %v2774 = vand.u32 %v2773, 4294901760
          %v2775 = vsub.f32 %v2773, %v2774
          %v2776 = vand.u32 %v2775, 4294901760
          %2777 = vmatpush1.msra.mxu0 %v2776
          %2778 = vmatprep.subr.mxu0 0.0
          %v2779 = vand.u32 %v2574, 4294901760
          %v2780 = vsub.f32 %v2574, %v2779
          %v2781 = vand.u32 %v2780, 4294901760
          %v2782 = vsub.f32 %v2780, %v2781
          %v2783 = vand.u32 %v2782, 4294901760
          %2784 = vmatpush1.msra.mxu0 %v2783
          %2785 = vmatprep.subr.mxu0 0.0
          %v2786 = vand.u32 %v2573, 4294901760
          %v2787 = vsub.f32 %v2573, %v2786
          %v2788 = vand.u32 %v2787, 4294901760
          %v2789 = vsub.f32 %v2787, %v2788
          %v2790 = vand.u32 %v2789, 4294901760
          %2791 = vmatpush1.msra.mxu0 %v2790
          %2792 = vmatprep.subr.mxu0 0.0
          %v2793 = vand.u32 %v2572, 4294901760
          %v2794 = vsub.f32 %v2572, %v2793
          %v2795 = vand.u32 %v2794, 4294901760
          %v2796 = vsub.f32 %v2794, %v2795
          %v2797 = vand.u32 %v2796, 4294901760
          %2798 = vmatpush1.msra.mxu0 %v2797
          %2799 = vmatprep.subr.mxu0 0.0
          %v2800 = vand.u32 %v2571, 4294901760
          %v2801 = vsub.f32 %v2571, %v2800
          %v2802 = vand.u32 %v2801, 4294901760
          %v2803 = vsub.f32 %v2801, %v2802
          %v2804 = vand.u32 %v2803, 4294901760
          %2805 = vmatpush1.msra.mxu0 %v2804
          %2806 = vmatprep.subr.mxu0 0.0
          %v2807 = vand.u32 %v2570, 4294901760
          %v2808 = vsub.f32 %v2570, %v2807
          %v2809 = vand.u32 %v2808, 4294901760
          %v2810 = vsub.f32 %v2808, %v2809
          %v2811 = vand.u32 %v2810, 4294901760
          %2812 = vmatpush1.msra.mxu0 %v2811
          %2813 = vmatprep.subr.mxu0 0.0
          %v2814 = vand.u32 %v2569, 4294901760
          %v2815 = vsub.f32 %v2569, %v2814
          %v2816 = vand.u32 %v2815, 4294901760
          %v2817 = vsub.f32 %v2815, %v2816
          %v2818 = vand.u32 %v2817, 4294901760
          %2819 = vmatpush1.msra.mxu0 %v2818
          %2820 = vmatprep.subr.mxu0 0.0
          %v2821 = vand.u32 %v2568, 4294901760
          %v2822 = vsub.f32 %v2568, %v2821
          %v2823 = vand.u32 %v2822, 4294901760
          %v2824 = vsub.f32 %v2822, %v2823
          %v2825 = vand.u32 %v2824, 4294901760
          %2826 = vmatpush1.msra.mxu0 %v2825
          %2827 = vmatprep.subr.mxu0 0.0
          %2828 = vmatpush2.msra.mxu0 0.0
          %2829 = vmatprep.subr.mxu0 0.0
          %2830 = vmatpush2.msra.mxu0 0.0
          %2831 = vmatprep.subr.mxu0 0.0
          %2832 = vmatpush2.msra.mxu0 0.0
          %2833 = vmatprep.subr.mxu0 0.0
          %2834 = vmatpush2.msra.mxu0 0.0
          %2835 = vmatprep.subr.mxu0 0.0
          %2836 = vmatpush2.msra.mxu0 0.0
          %2837 = vmatprep.subr.mxu0 0.0
          %2838 = vmatpush2.msra.mxu0 0.0
          %2839 = vmatprep.subr.mxu0 0.0
          %2840 = vmatpush2.msra.mxu0 0.0
          %2841 = vmatprep.subr.mxu0 0.0
          %2842 = vmatpush2.msra.mxu0 0.0
          %2843 = vmatprep.subr.mxu0 0.0
          %2844 = vmatpush2.msra.mxu0 0.0
          %2845 = vmatprep.subr.mxu0 0.0
          %2846 = vmatpush2.msra.mxu0 0.0
          %2847 = vmatprep.subr.mxu0 0.0
          %2848 = vmatpush2.msra.mxu0 0.0
          %2849 = vmatprep.subr.mxu0 0.0
          %2850 = vmatpush2.msra.mxu0 0.0
          %2851 = vmatprep.subr.mxu0 0.0
          %2852 = vmatpush2.msra.mxu0 0.0
          %2853 = vmatprep.subr.mxu0 0.0
          %2854 = vmatpush2.msra.mxu0 0.0
          %2855 = vmatprep.subr.mxu0 0.0
          %2856 = vmatpush2.msra.mxu0 0.0
          %2857 = vmatprep.subr.mxu0 0.0
          %2858 = vmatpush2.msra.mxu0 0.0
          %2859 = vmatprep.mubr.f32.mxu0 0.0
          %v2860 = vand.u32 %v313, 4294901760
          %2861 = vmatmul.mubr.f32.gmra.mxu0 %v2860
          %v2862 = vpop.f32.mrf.mxu0
          %v2863 = vadd.f32 %v2672, %v2862
          %v2864 = vpop.f32.mrf.mxu0
          %2865 = vmatprep.mubr.f32.mxu0 0.0
          %v2866 = vand.u32 %v314, 4294901760
          %2867 = vmatmul.mubr.f32.gmra.mxu0 %v2866
          %v2868 = vpop.f32.mrf.mxu0
          %v2869 = vadd.f32 %v2682, %v2868
          %v2870 = vpop.f32.mrf.mxu0
          %2871 = vmatprep.mubr.f32.mxu0 0.0
          %v2872 = vand.u32 %v315, 4294901760
          %2873 = vmatmul.mubr.f32.gmra.mxu0 %v2872
          %v2874 = vpop.f32.mrf.mxu0
          %v2875 = vadd.f32 %v2692, %v2874
          %v2876 = vpop.f32.mrf.mxu0
          %2877 = vmatprep.mubr.f32.mxu0 0.0
          %v2878 = vand.u32 %v316, 4294901760
          %2879 = vmatmul.mubr.f32.gmra.mxu0 %v2878
          %v2880 = vpop.f32.mrf.mxu0
          %v2881 = vadd.f32 %v2702, %v2880
          %v2882 = vpop.f32.mrf.mxu0
          %2883 = vmatprep.mubr.f32.mxu0 0.0
          %v2884 = vand.u32 %v317, 4294901760
          %2885 = vmatmul.mubr.f32.gmra.mxu0 %v2884
          %v2886 = vpop.f32.mrf.mxu0
          %v2887 = vadd.f32 %v2712, %v2886
          %v2888 = vpop.f32.mrf.mxu0
          %2889 = vdwg.mxu0
          %2890 = vmatprep.subr.mxu0 0.0
          %v2891 = vand.u32 %v2583, 4294901760
          %v2892 = vsub.f32 %v2583, %v2891
          %2893 = vmatpush1.msra.mxu0 %v2892
          %2894 = vmatprep.subr.mxu0 0.0
          %v2895 = vand.u32 %v2582, 4294901760
          %v2896 = vsub.f32 %v2582, %v2895
          %2897 = vmatpush1.msra.mxu0 %v2896
          %2898 = vmatprep.subr.mxu0 0.0
          %v2899 = vand.u32 %v2581, 4294901760
          %v2900 = vsub.f32 %v2581, %v2899
          %2901 = vmatpush1.msra.mxu0 %v2900
          %2902 = vmatprep.subr.mxu0 0.0
          %v2903 = vand.u32 %v2580, 4294901760
          %v2904 = vsub.f32 %v2580, %v2903
          %2905 = vmatpush1.msra.mxu0 %v2904
          %2906 = vmatprep.subr.mxu0 0.0
          %v2907 = vand.u32 %v2579, 4294901760
          %v2908 = vsub.f32 %v2579, %v2907
          %2909 = vmatpush1.msra.mxu0 %v2908
          %2910 = vmatprep.subr.mxu0 0.0
          %v2911 = vand.u32 %v2578, 4294901760
          %v2912 = vsub.f32 %v2578, %v2911
          %2913 = vmatpush1.msra.mxu0 %v2912
          %2914 = vmatprep.subr.mxu0 0.0
          %v2915 = vand.u32 %v2577, 4294901760
          %v2916 = vsub.f32 %v2577, %v2915
          %2917 = vmatpush1.msra.mxu0 %v2916
          %2918 = vmatprep.subr.mxu0 0.0
          %v2919 = vand.u32 %v2576, 4294901760
          %v2920 = vsub.f32 %v2576, %v2919
          %2921 = vmatpush1.msra.mxu0 %v2920
          %2922 = vmatprep.subr.mxu0 0.0
          %v2923 = vand.u32 %v2575, 4294901760
          %v2924 = vsub.f32 %v2575, %v2923
          %2925 = vmatpush1.msra.mxu0 %v2924
          %2926 = vmatprep.subr.mxu0 0.0
          %v2927 = vand.u32 %v2574, 4294901760
          %v2928 = vsub.f32 %v2574, %v2927
          %2929 = vmatpush1.msra.mxu0 %v2928
          %2930 = vmatprep.subr.mxu0 0.0
          %v2931 = vand.u32 %v2573, 4294901760
          %v2932 = vsub.f32 %v2573, %v2931
          %2933 = vmatpush1.msra.mxu0 %v2932
          %2934 = vmatprep.subr.mxu0 0.0
          %v2935 = vand.u32 %v2572, 4294901760
          %v2936 = vsub.f32 %v2572, %v2935
          %2937 = vmatpush1.msra.mxu0 %v2936
          %2938 = vmatprep.subr.mxu0 0.0
          %v2939 = vand.u32 %v2571, 4294901760
          %v2940 = vsub.f32 %v2571, %v2939
          %2941 = vmatpush1.msra.mxu0 %v2940
          %2942 = vmatprep.subr.mxu0 0.0
          %v2943 = vand.u32 %v2570, 4294901760
          %v2944 = vsub.f32 %v2570, %v2943
          %2945 = vmatpush1.msra.mxu0 %v2944
          %2946 = vmatprep.subr.mxu0 0.0
          %v2947 = vand.u32 %v2569, 4294901760
          %v2948 = vsub.f32 %v2569, %v2947
          %2949 = vmatpush1.msra.mxu0 %v2948
          %2950 = vmatprep.subr.mxu0 0.0
          %v2951 = vand.u32 %v2568, 4294901760
          %v2952 = vsub.f32 %v2568, %v2951
          %2953 = vmatpush1.msra.mxu0 %v2952
          %2954 = vmatprep.subr.mxu0 0.0
          %2955 = vmatpush2.msra.mxu0 0.0
          %2956 = vmatprep.subr.mxu0 0.0
          %2957 = vmatpush2.msra.mxu0 0.0
          %2958 = vmatprep.subr.mxu0 0.0
          %2959 = vmatpush2.msra.mxu0 0.0
          %2960 = vmatprep.subr.mxu0 0.0
          %2961 = vmatpush2.msra.mxu0 0.0
          %2962 = vmatprep.subr.mxu0 0.0
          %2963 = vmatpush2.msra.mxu0 0.0
          %2964 = vmatprep.subr.mxu0 0.0
          %2965 = vmatpush2.msra.mxu0 0.0
          %2966 = vmatprep.subr.mxu0 0.0
          %2967 = vmatpush2.msra.mxu0 0.0
          %2968 = vmatprep.subr.mxu0 0.0
          %2969 = vmatpush2.msra.mxu0 0.0
          %2970 = vmatprep.subr.mxu0 0.0
          %2971 = vmatpush2.msra.mxu0 0.0
          %2972 = vmatprep.subr.mxu0 0.0
          %2973 = vmatpush2.msra.mxu0 0.0
          %2974 = vmatprep.subr.mxu0 0.0
          %2975 = vmatpush2.msra.mxu0 0.0
          %2976 = vmatprep.subr.mxu0 0.0
          %2977 = vmatpush2.msra.mxu0 0.0
          %2978 = vmatprep.subr.mxu0 0.0
          %2979 = vmatpush2.msra.mxu0 0.0
          %2980 = vmatprep.subr.mxu0 0.0
          %2981 = vmatpush2.msra.mxu0 0.0
          %2982 = vmatprep.subr.mxu0 0.0
          %2983 = vmatpush2.msra.mxu0 0.0
          %2984 = vmatprep.subr.mxu0 0.0
          %2985 = vmatpush2.msra.mxu0 0.0
          %2986 = vmatprep.mubr.f32.mxu0 0.0
          %v2987 = vand.u32 %v313, 4294901760
          %v2988 = vsub.f32 %v313, %v2987
          %2989 = vmatmul.mubr.f32.gmra.mxu0 %v2988
          %v2990 = vpop.f32.mrf.mxu0
          %v2991 = vadd.f32 %v2863, %v2990
          %v2992 = vpop.f32.mrf.mxu0
          %2993 = vmatprep.mubr.f32.mxu0 0.0
          %v2994 = vand.u32 %v314, 4294901760
          %v2995 = vsub.f32 %v314, %v2994
          %2996 = vmatmul.mubr.f32.gmra.mxu0 %v2995
          %v2997 = vpop.f32.mrf.mxu0
          %v2998 = vadd.f32 %v2869, %v2997
          %v2999 = vpop.f32.mrf.mxu0
          %3000 = vmatprep.mubr.f32.mxu0 0.0
          %v3001 = vand.u32 %v315, 4294901760
          %v3002 = vsub.f32 %v315, %v3001
          %3003 = vmatmul.mubr.f32.gmra.mxu0 %v3002
          %v3004 = vpop.f32.mrf.mxu0
          %v3005 = vadd.f32 %v2875, %v3004
          %v3006 = vpop.f32.mrf.mxu0
          %3007 = vmatprep.mubr.f32.mxu0 0.0
          %v3008 = vand.u32 %v316, 4294901760
          %v3009 = vsub.f32 %v316, %v3008
          %3010 = vmatmul.mubr.f32.gmra.mxu0 %v3009
          %v3011 = vpop.f32.mrf.mxu0
          %v3012 = vadd.f32 %v2881, %v3011
          %v3013 = vpop.f32.mrf.mxu0
          %3014 = vmatprep.mubr.f32.mxu0 0.0
          %v3015 = vand.u32 %v317, 4294901760
          %v3016 = vsub.f32 %v317, %v3015
          %3017 = vmatmul.mubr.f32.gmra.mxu0 %v3016
          %v3018 = vpop.f32.mrf.mxu0
          %v3019 = vadd.f32 %v2887, %v3018
          %v3020 = vpop.f32.mrf.mxu0
          %3021 = vdwg.mxu0
          %3022 = vmatprep.subr.mxu0 0.0
          %v3023 = vand.u32 %v2583, 4294901760
          %3024 = vmatpush1.msra.mxu0 %v3023
          %3025 = vmatprep.subr.mxu0 0.0
          %v3026 = vand.u32 %v2582, 4294901760
          %3027 = vmatpush1.msra.mxu0 %v3026
          %3028 = vmatprep.subr.mxu0 0.0
          %v3029 = vand.u32 %v2581, 4294901760
          %3030 = vmatpush1.msra.mxu0 %v3029
          %3031 = vmatprep.subr.mxu0 0.0
          %v3032 = vand.u32 %v2580, 4294901760
          %3033 = vmatpush1.msra.mxu0 %v3032
          %3034 = vmatprep.subr.mxu0 0.0
          %v3035 = vand.u32 %v2579, 4294901760
          %3036 = vmatpush1.msra.mxu0 %v3035
          %3037 = vmatprep.subr.mxu0 0.0
          %v3038 = vand.u32 %v2578, 4294901760
          %3039 = vmatpush1.msra.mxu0 %v3038
          %3040 = vmatprep.subr.mxu0 0.0
          %v3041 = vand.u32 %v2577, 4294901760
          %3042 = vmatpush1.msra.mxu0 %v3041
          %3043 = vmatprep.subr.mxu0 0.0
          %v3044 = vand.u32 %v2576, 4294901760
          %3045 = vmatpush1.msra.mxu0 %v3044
          %3046 = vmatprep.subr.mxu0 0.0
          %v3047 = vand.u32 %v2575, 4294901760
          %3048 = vmatpush1.msra.mxu0 %v3047
          %3049 = vmatprep.subr.mxu0 0.0
          %v3050 = vand.u32 %v2574, 4294901760
          %3051 = vmatpush1.msra.mxu0 %v3050
          %3052 = vmatprep.subr.mxu0 0.0
          %v3053 = vand.u32 %v2573, 4294901760
          %3054 = vmatpush1.msra.mxu0 %v3053
          %3055 = vmatprep.subr.mxu0 0.0
          %v3056 = vand.u32 %v2572, 4294901760
          %3057 = vmatpush1.msra.mxu0 %v3056
          %3058 = vmatprep.subr.mxu0 0.0
          %v3059 = vand.u32 %v2571, 4294901760
          %3060 = vmatpush1.msra.mxu0 %v3059
          %3061 = vmatprep.subr.mxu0 0.0
          %v3062 = vand.u32 %v2570, 4294901760
          %3063 = vmatpush1.msra.mxu0 %v3062
          %3064 = vmatprep.subr.mxu0 0.0
          %v3065 = vand.u32 %v2569, 4294901760
          %3066 = vmatpush1.msra.mxu0 %v3065
          %3067 = vmatprep.subr.mxu0 0.0
          %v3068 = vand.u32 %v2568, 4294901760
          %3069 = vmatpush1.msra.mxu0 %v3068
          %3070 = vmatprep.subr.mxu0 0.0
          %3071 = vmatpush2.msra.mxu0 0.0
          %3072 = vmatprep.subr.mxu0 0.0
          %3073 = vmatpush2.msra.mxu0 0.0
          %3074 = vmatprep.subr.mxu0 0.0
          %3075 = vmatpush2.msra.mxu0 0.0
          %3076 = vmatprep.subr.mxu0 0.0
          %3077 = vmatpush2.msra.mxu0 0.0
          %3078 = vmatprep.subr.mxu0 0.0
          %3079 = vmatpush2.msra.mxu0 0.0
          %3080 = vmatprep.subr.mxu0 0.0
          %3081 = vmatpush2.msra.mxu0 0.0
          %3082 = vmatprep.subr.mxu0 0.0
          %3083 = vmatpush2.msra.mxu0 0.0
          %3084 = vmatprep.subr.mxu0 0.0
          %3085 = vmatpush2.msra.mxu0 0.0
          %3086 = vmatprep.subr.mxu0 0.0
          %3087 = vmatpush2.msra.mxu0 0.0
          %3088 = vmatprep.subr.mxu0 0.0
          %3089 = vmatpush2.msra.mxu0 0.0
          %3090 = vmatprep.subr.mxu0 0.0
          %3091 = vmatpush2.msra.mxu0 0.0
          %3092 = vmatprep.subr.mxu0 0.0
          %3093 = vmatpush2.msra.mxu0 0.0
          %3094 = vmatprep.subr.mxu0 0.0
          %3095 = vmatpush2.msra.mxu0 0.0
          %3096 = vmatprep.subr.mxu0 0.0
          %3097 = vmatpush2.msra.mxu0 0.0
          %3098 = vmatprep.subr.mxu0 0.0
          %3099 = vmatpush2.msra.mxu0 0.0
          %3100 = vmatprep.subr.mxu0 0.0
          %3101 = vmatpush2.msra.mxu0 0.0
          %3102 = vmatprep.mubr.f32.mxu0 0.0
          %v3103 = vand.u32 %v313, 4294901760
          %v3104 = vsub.f32 %v313, %v3103
          %v3105 = vand.u32 %v3104, 4294901760
          %3106 = vmatmul.mubr.f32.gmra.mxu0 %v3105
          %v3107 = vpop.f32.mrf.mxu0
          %v3108 = vadd.f32 %v2991, %v3107
          %v3109 = vpop.f32.mrf.mxu0
          %3110 = vmatprep.mubr.f32.mxu0 0.0
          %v3111 = vand.u32 %v314, 4294901760
          %v3112 = vsub.f32 %v314, %v3111
          %v3113 = vand.u32 %v3112, 4294901760
          %3114 = vmatmul.mubr.f32.gmra.mxu0 %v3113
          %v3115 = vpop.f32.mrf.mxu0
          %v3116 = vadd.f32 %v2998, %v3115
          %v3117 = vpop.f32.mrf.mxu0
          %3118 = vmatprep.mubr.f32.mxu0 0.0
          %v3119 = vand.u32 %v315, 4294901760
          %v3120 = vsub.f32 %v315, %v3119
          %v3121 = vand.u32 %v3120, 4294901760
          %3122 = vmatmul.mubr.f32.gmra.mxu0 %v3121
          %v3123 = vpop.f32.mrf.mxu0
          %v3124 = vadd.f32 %v3005, %v3123
          %v3125 = vpop.f32.mrf.mxu0
          %3126 = vmatprep.mubr.f32.mxu0 0.0
          %v3127 = vand.u32 %v316, 4294901760
          %v3128 = vsub.f32 %v316, %v3127
          %v3129 = vand.u32 %v3128, 4294901760
          %3130 = vmatmul.mubr.f32.gmra.mxu0 %v3129
          %v3131 = vpop.f32.mrf.mxu0
          %v3132 = vadd.f32 %v3012, %v3131
          %v3133 = vpop.f32.mrf.mxu0
          %3134 = vmatprep.mubr.f32.mxu0 0.0
          %v3135 = vand.u32 %v317, 4294901760
          %v3136 = vsub.f32 %v317, %v3135
          %v3137 = vand.u32 %v3136, 4294901760
          %3138 = vmatmul.mubr.f32.gmra.mxu0 %v3137
          %v3139 = vpop.f32.mrf.mxu0
          %v3140 = vadd.f32 %v3019, %v3139
          %v3141 = vpop.f32.mrf.mxu0
          %3142 = vdwg.mxu0
          %3143 = vmatprep.subr.mxu0 0.0
          %v3144 = vand.u32 %v2583, 4294901760
          %v3145 = vsub.f32 %v2583, %v3144
          %v3146 = vand.u32 %v3145, 4294901760
          %3147 = vmatpush1.msra.mxu0 %v3146
          %3148 = vmatprep.subr.mxu0 0.0
          %v3149 = vand.u32 %v2582, 4294901760
          %v3150 = vsub.f32 %v2582, %v3149
          %v3151 = vand.u32 %v3150, 4294901760
          %3152 = vmatpush1.msra.mxu0 %v3151
          %3153 = vmatprep.subr.mxu0 0.0
          %v3154 = vand.u32 %v2581, 4294901760
          %v3155 = vsub.f32 %v2581, %v3154
          %v3156 = vand.u32 %v3155, 4294901760
          %3157 = vmatpush1.msra.mxu0 %v3156
          %3158 = vmatprep.subr.mxu0 0.0
          %v3159 = vand.u32 %v2580, 4294901760
          %v3160 = vsub.f32 %v2580, %v3159
          %v3161 = vand.u32 %v3160, 4294901760
          %3162 = vmatpush1.msra.mxu0 %v3161
          %3163 = vmatprep.subr.mxu0 0.0
          %v3164 = vand.u32 %v2579, 4294901760
          %v3165 = vsub.f32 %v2579, %v3164
          %v3166 = vand.u32 %v3165, 4294901760
          %3167 = vmatpush1.msra.mxu0 %v3166
          %3168 = vmatprep.subr.mxu0 0.0
          %v3169 = vand.u32 %v2578, 4294901760
          %v3170 = vsub.f32 %v2578, %v3169
          %v3171 = vand.u32 %v3170, 4294901760
          %3172 = vmatpush1.msra.mxu0 %v3171
          %3173 = vmatprep.subr.mxu0 0.0
          %v3174 = vand.u32 %v2577, 4294901760
          %v3175 = vsub.f32 %v2577, %v3174
          %v3176 = vand.u32 %v3175, 4294901760
          %3177 = vmatpush1.msra.mxu0 %v3176
          %3178 = vmatprep.subr.mxu0 0.0
          %v3179 = vand.u32 %v2576, 4294901760
          %v3180 = vsub.f32 %v2576, %v3179
          %v3181 = vand.u32 %v3180, 4294901760
          %3182 = vmatpush1.msra.mxu0 %v3181
          %3183 = vmatprep.subr.mxu0 0.0
          %v3184 = vand.u32 %v2575, 4294901760
          %v3185 = vsub.f32 %v2575, %v3184
          %v3186 = vand.u32 %v3185, 4294901760
          %3187 = vmatpush1.msra.mxu0 %v3186
          %3188 = vmatprep.subr.mxu0 0.0
          %v3189 = vand.u32 %v2574, 4294901760
          %v3190 = vsub.f32 %v2574, %v3189
          %v3191 = vand.u32 %v3190, 4294901760
          %3192 = vmatpush1.msra.mxu0 %v3191
          %3193 = vmatprep.subr.mxu0 0.0
          %v3194 = vand.u32 %v2573, 4294901760
          %v3195 = vsub.f32 %v2573, %v3194
          %v3196 = vand.u32 %v3195, 4294901760
          %3197 = vmatpush1.msra.mxu0 %v3196
          %3198 = vmatprep.subr.mxu0 0.0
          %v3199 = vand.u32 %v2572, 4294901760
          %v3200 = vsub.f32 %v2572, %v3199
          %v3201 = vand.u32 %v3200, 4294901760
          %3202 = vmatpush1.msra.mxu0 %v3201
          %3203 = vmatprep.subr.mxu0 0.0
          %v3204 = vand.u32 %v2571, 4294901760
          %v3205 = vsub.f32 %v2571, %v3204
          %v3206 = vand.u32 %v3205, 4294901760
          %3207 = vmatpush1.msra.mxu0 %v3206
          %3208 = vmatprep.subr.mxu0 0.0
          %v3209 = vand.u32 %v2570, 4294901760
          %v3210 = vsub.f32 %v2570, %v3209
          %v3211 = vand.u32 %v3210, 4294901760
          %3212 = vmatpush1.msra.mxu0 %v3211
          %3213 = vmatprep.subr.mxu0 0.0
          %v3214 = vand.u32 %v2569, 4294901760
          %v3215 = vsub.f32 %v2569, %v3214
          %v3216 = vand.u32 %v3215, 4294901760
          %3217 = vmatpush1.msra.mxu0 %v3216
          %3218 = vmatprep.subr.mxu0 0.0
          %v3219 = vand.u32 %v2568, 4294901760
          %v3220 = vsub.f32 %v2568, %v3219
          %v3221 = vand.u32 %v3220, 4294901760
          %3222 = vmatpush1.msra.mxu0 %v3221
          %3223 = vmatprep.subr.mxu0 0.0
          %3224 = vmatpush2.msra.mxu0 0.0
          %3225 = vmatprep.subr.mxu0 0.0
          %3226 = vmatpush2.msra.mxu0 0.0
          %3227 = vmatprep.subr.mxu0 0.0
          %3228 = vmatpush2.msra.mxu0 0.0
          %3229 = vmatprep.subr.mxu0 0.0
          %3230 = vmatpush2.msra.mxu0 0.0
          %3231 = vmatprep.subr.mxu0 0.0
          %3232 = vmatpush2.msra.mxu0 0.0
          %3233 = vmatprep.subr.mxu0 0.0
          %3234 = vmatpush2.msra.mxu0 0.0
          %3235 = vmatprep.subr.mxu0 0.0
          %3236 = vmatpush2.msra.mxu0 0.0
          %3237 = vmatprep.subr.mxu0 0.0
          %3238 = vmatpush2.msra.mxu0 0.0
          %3239 = vmatprep.subr.mxu0 0.0
          %3240 = vmatpush2.msra.mxu0 0.0
          %3241 = vmatprep.subr.mxu0 0.0
          %3242 = vmatpush2.msra.mxu0 0.0
          %3243 = vmatprep.subr.mxu0 0.0
          %3244 = vmatpush2.msra.mxu0 0.0
          %3245 = vmatprep.subr.mxu0 0.0
          %3246 = vmatpush2.msra.mxu0 0.0
          %3247 = vmatprep.subr.mxu0 0.0
          %3248 = vmatpush2.msra.mxu0 0.0
          %3249 = vmatprep.subr.mxu0 0.0
          %3250 = vmatpush2.msra.mxu0 0.0
          %3251 = vmatprep.subr.mxu0 0.0
          %3252 = vmatpush2.msra.mxu0 0.0
          %3253 = vmatprep.subr.mxu0 0.0
          %3254 = vmatpush2.msra.mxu0 0.0
          %3255 = vmatprep.mubr.f32.mxu0 0.0
          %v3256 = vand.u32 %v313, 4294901760
          %3257 = vmatmul.mubr.f32.gmra.mxu0 %v3256
          %v3258 = vpop.f32.mrf.mxu0
          %v3259 = vadd.f32 %v3108, %v3258
          %v3260 = vpop.f32.mrf.mxu0
          %3261 = vmatprep.mubr.f32.mxu0 0.0
          %v3262 = vand.u32 %v314, 4294901760
          %3263 = vmatmul.mubr.f32.gmra.mxu0 %v3262
          %v3264 = vpop.f32.mrf.mxu0
          %v3265 = vadd.f32 %v3116, %v3264
          %v3266 = vpop.f32.mrf.mxu0
          %3267 = vmatprep.mubr.f32.mxu0 0.0
          %v3268 = vand.u32 %v315, 4294901760
          %3269 = vmatmul.mubr.f32.gmra.mxu0 %v3268
          %v3270 = vpop.f32.mrf.mxu0
          %v3271 = vadd.f32 %v3124, %v3270
          %v3272 = vpop.f32.mrf.mxu0
          %3273 = vmatprep.mubr.f32.mxu0 0.0
          %v3274 = vand.u32 %v316, 4294901760
          %3275 = vmatmul.mubr.f32.gmra.mxu0 %v3274
          %v3276 = vpop.f32.mrf.mxu0
          %v3277 = vadd.f32 %v3132, %v3276
          %v3278 = vpop.f32.mrf.mxu0
          %3279 = vmatprep.mubr.f32.mxu0 0.0
          %v3280 = vand.u32 %v317, 4294901760
          %3281 = vmatmul.mubr.f32.gmra.mxu0 %v3280
          %v3282 = vpop.f32.mrf.mxu0
          %v3283 = vadd.f32 %v3140, %v3282
          %v3284 = vpop.f32.mrf.mxu0
          %3285 = vdwg.mxu0
          %3286 = vmatprep.subr.mxu0 0.0
          %v3287 = vand.u32 %v2583, 4294901760
          %3288 = vmatpush1.msra.mxu0 %v3287
          %3289 = vmatprep.subr.mxu0 0.0
          %v3290 = vand.u32 %v2582, 4294901760
          %3291 = vmatpush1.msra.mxu0 %v3290
          %3292 = vmatprep.subr.mxu0 0.0
          %v3293 = vand.u32 %v2581, 4294901760
          %3294 = vmatpush1.msra.mxu0 %v3293
          %3295 = vmatprep.subr.mxu0 0.0
          %v3296 = vand.u32 %v2580, 4294901760
          %3297 = vmatpush1.msra.mxu0 %v3296
          %3298 = vmatprep.subr.mxu0 0.0
          %v3299 = vand.u32 %v2579, 4294901760
          %3300 = vmatpush1.msra.mxu0 %v3299
          %3301 = vmatprep.subr.mxu0 0.0
          %v3302 = vand.u32 %v2578, 4294901760
          %3303 = vmatpush1.msra.mxu0 %v3302
          %3304 = vmatprep.subr.mxu0 0.0
          %v3305 = vand.u32 %v2577, 4294901760
          %3306 = vmatpush1.msra.mxu0 %v3305
          %3307 = vmatprep.subr.mxu0 0.0
          %v3308 = vand.u32 %v2576, 4294901760
          %3309 = vmatpush1.msra.mxu0 %v3308
          %3310 = vmatprep.subr.mxu0 0.0
          %v3311 = vand.u32 %v2575, 4294901760
          %3312 = vmatpush1.msra.mxu0 %v3311
          %3313 = vmatprep.subr.mxu0 0.0
          %v3314 = vand.u32 %v2574, 4294901760
          %3315 = vmatpush1.msra.mxu0 %v3314
          %3316 = vmatprep.subr.mxu0 0.0
          %v3317 = vand.u32 %v2573, 4294901760
          %3318 = vmatpush1.msra.mxu0 %v3317
          %3319 = vmatprep.subr.mxu0 0.0
          %v3320 = vand.u32 %v2572, 4294901760
          %3321 = vmatpush1.msra.mxu0 %v3320
          %3322 = vmatprep.subr.mxu0 0.0
          %v3323 = vand.u32 %v2571, 4294901760
          %3324 = vmatpush1.msra.mxu0 %v3323
          %3325 = vmatprep.subr.mxu0 0.0
          %v3326 = vand.u32 %v2570, 4294901760
          %3327 = vmatpush1.msra.mxu0 %v3326
          %3328 = vmatprep.subr.mxu0 0.0
          %v3329 = vand.u32 %v2569, 4294901760
          %3330 = vmatpush1.msra.mxu0 %v3329
          %3331 = vmatprep.subr.mxu0 0.0
          %v3332 = vand.u32 %v2568, 4294901760
          %3333 = vmatpush1.msra.mxu0 %v3332
          %3334 = vmatprep.subr.mxu0 0.0
          %3335 = vmatpush2.msra.mxu0 0.0
          %3336 = vmatprep.subr.mxu0 0.0
          %3337 = vmatpush2.msra.mxu0 0.0
          %3338 = vmatprep.subr.mxu0 0.0
          %3339 = vmatpush2.msra.mxu0 0.0
          %3340 = vmatprep.subr.mxu0 0.0
          %3341 = vmatpush2.msra.mxu0 0.0
          %3342 = vmatprep.subr.mxu0 0.0
          %3343 = vmatpush2.msra.mxu0 0.0
          %3344 = vmatprep.subr.mxu0 0.0
          %3345 = vmatpush2.msra.mxu0 0.0
          %3346 = vmatprep.subr.mxu0 0.0
          %3347 = vmatpush2.msra.mxu0 0.0
          %3348 = vmatprep.subr.mxu0 0.0
          %3349 = vmatpush2.msra.mxu0 0.0
          %3350 = vmatprep.subr.mxu0 0.0
          %3351 = vmatpush2.msra.mxu0 0.0
          %3352 = vmatprep.subr.mxu0 0.0
          %3353 = vmatpush2.msra.mxu0 0.0
          %3354 = vmatprep.subr.mxu0 0.0
          %3355 = vmatpush2.msra.mxu0 0.0
          %3356 = vmatprep.subr.mxu0 0.0
          %3357 = vmatpush2.msra.mxu0 0.0
          %3358 = vmatprep.subr.mxu0 0.0
          %3359 = vmatpush2.msra.mxu0 0.0
          %3360 = vmatprep.subr.mxu0 0.0
          %3361 = vmatpush2.msra.mxu0 0.0
          %3362 = vmatprep.subr.mxu0 0.0
          %3363 = vmatpush2.msra.mxu0 0.0
          %3364 = vmatprep.subr.mxu0 0.0
          %3365 = vmatpush2.msra.mxu0 0.0
          %3366 = vmatprep.mubr.f32.mxu0 0.0
          %v3367 = vand.u32 %v313, 4294901760
          %3368 = vmatmul.mubr.f32.gmra.mxu0 %v3367
          %v3369 = vpop.f32.mrf.mxu0
          %v3370 = vadd.f32 %v3259, %v3369
          %v3371 = vpop.f32.mrf.mxu0
          %3372 = vmatprep.mubr.f32.mxu0 0.0
          %v3373 = vand.u32 %v314, 4294901760
          %3374 = vmatmul.mubr.f32.gmra.mxu0 %v3373
          %v3375 = vpop.f32.mrf.mxu0
          %v3376 = vadd.f32 %v3265, %v3375
          %v3377 = vpop.f32.mrf.mxu0
          %3378 = vmatprep.mubr.f32.mxu0 0.0
          %v3379 = vand.u32 %v315, 4294901760
          %3380 = vmatmul.mubr.f32.gmra.mxu0 %v3379
          %v3381 = vpop.f32.mrf.mxu0
          %v3382 = vadd.f32 %v3271, %v3381
          %v3383 = vpop.f32.mrf.mxu0
          %3384 = vmatprep.mubr.f32.mxu0 0.0
          %v3385 = vand.u32 %v316, 4294901760
          %3386 = vmatmul.mubr.f32.gmra.mxu0 %v3385
          %v3387 = vpop.f32.mrf.mxu0
          %v3388 = vadd.f32 %v3277, %v3387
          %v3389 = vpop.f32.mrf.mxu0
          %3390 = vmatprep.mubr.f32.mxu0 0.0
          %v3391 = vand.u32 %v317, 4294901760
          %3392 = vmatmul.mubr.f32.gmra.mxu0 %v3391
          %v3393 = vpop.f32.mrf.mxu0
          %v3394 = vadd.f32 %v3283, %v3393
          %v3395 = vpop.f32.mrf.mxu0
          %3396 = vdwg.mxu0
          %v3397 = vsub.f32 %v3370, %v1540
          %v3398 = vsub.f32 %v3376, %v1546
          %v3399 = vsub.f32 %v3382, %v1552
          %v3400 = vand.u32 2147483647, %v3397
          %v3401 = vand.u32 2147483647, %v3398
          %v3402 = vand.u32 2147483647, %v3399
          %v3403 = vadd.f32 %v3400, %v3401
          %v3404 = vadd.f32 %v3403, %v3402
          %v3405 = vrot.slane %v3404, 4
          %v3406 = vadd.f32 %v3404, %v3405
          %v3407 = vrot.slane %v3406, 2
          %v3408 = vadd.f32 %v3406, %v3407
          %v3409 = vrot.slane %v3408, 1
          %v3410 = vadd.f32 %v3408, %v3409
          %vm3411 = vcmp.lt.f32.partialorder %v3410, 0.0021072102
          %v3412 = vsel %vm3411, 1, 0
          %v3413 = vcvt.s32.f32 %v3412
          %v3414 = vsub.f32 0.0, %v2535
          %v3415 = vmul.f32 %v3414, 1.442695
          %v3416 = vpow.pop %v3415
          %v3417 = vmul.f32 %v3416, %v3413
          %v3418 = vmul.f32 %v3417, %v3388
          %v3419 = vmul.f32 %v3417, %v3394
          %v3420 = vadd.f32 %v2496, %v3418
          %v3421 = vadd.f32 %v2497, %v3419
          %v3422 = vadd.f32 %v2498, %v3417
          %v3423 = vsel %vm2536, 1e+30, %v2499
          %v3424 = vsel %vm2537, 1e+30, %v2500
          %v3425 = vsel %vm2538, 1e+30, %v2501
          %v3426 = vsel %vm2539, 1e+30, %v2502
          %v3427 = vsel %vm2540, 1e+30, %v2503
          %v3428 = vsel %vm2541, 1e+30, %v2504
          %v3429 = vsel %vm2542, 1e+30, %v2505
          %v3430 = vsel %vm2543, 1e+30, %v2506
          %v3431 = vsel %vm2544, 1e+30, %v2507
          %v3432 = vsel %vm2545, 1e+30, %v2508
          %v3433 = vsel %vm2546, 1e+30, %v2509
          %v3434 = vsel %vm2547, 1e+30, %v2510
          %v3435 = vsel %vm2548, 1e+30, %v2511
          %v3436 = vsel %vm2549, 1e+30, %v2512
          %v3437 = vsel %vm2550, 1e+30, %v2513
          %v3438 = vsel %vm2551, 1e+30, %v2514
          %v3439 = vmin.f32 %v3423, %v3427
          %v3440 = vmin.f32 %v3424, %v3428
          %v3441 = vmin.f32 %v3425, %v3429
          %v3442 = vmin.f32 %v3426, %v3430
          %v3443 = vmin.f32 %v3439, %v3431
          %v3444 = vmin.f32 %v3440, %v3432
          %v3445 = vmin.f32 %v3441, %v3433
          %v3446 = vmin.f32 %v3442, %v3434
          %v3447 = vmin.f32 %v3443, %v3435
          %v3448 = vmin.f32 %v3444, %v3436
          %v3449 = vmin.f32 %v3445, %v3437
          %v3450 = vmin.f32 %v3446, %v3438
          %v3451 = vmin.f32 %v3447, %v3448
          %v3452 = vmin.f32 %v3449, %v3450
          %v3453 = vmin.f32 %v3451, %v3452
          %v3454 = vrot.slane %v3453, 4
          %v3455 = vmin.f32 %v3453, %v3454
          %v3456 = vrot.slane %v3455, 2
          %v3457 = vmin.f32 %v3455, %v3456
          %v3458 = vrot.slane %v3457, 1
          %v3459 = vmin.f32 %v3457, %v3458
          %vm3460 = vcmp.eq.f32.partialorder %v3423, %v3459
          %vm3461 = vcmp.eq.f32.partialorder %v3424, %v3459
          %vm3462 = vcmp.eq.f32.partialorder %v3425, %v3459
          %vm3463 = vcmp.eq.f32.partialorder %v3426, %v3459
          %vm3464 = vcmp.eq.f32.partialorder %v3427, %v3459
          %vm3465 = vcmp.eq.f32.partialorder %v3428, %v3459
          %vm3466 = vcmp.eq.f32.partialorder %v3429, %v3459
          %vm3467 = vcmp.eq.f32.partialorder %v3430, %v3459
          %vm3468 = vcmp.eq.f32.partialorder %v3431, %v3459
          %vm3469 = vcmp.eq.f32.partialorder %v3432, %v3459
          %vm3470 = vcmp.eq.f32.partialorder %v3433, %v3459
          %vm3471 = vcmp.eq.f32.partialorder %v3434, %v3459
          %vm3472 = vcmp.eq.f32.partialorder %v3435, %v3459
          %vm3473 = vcmp.eq.f32.partialorder %v3436, %v3459
          %vm3474 = vcmp.eq.f32.partialorder %v3437, %v3459
          %vm3475 = vcmp.eq.f32.partialorder %v3438, %v3459
          %v3476 = vsel %vm3460, 1, 0
          %v3477 = vsel %vm3461, 1, 0
          %v3478 = vsel %vm3462, 1, 0
          %v3479 = vsel %vm3463, 1, 0
          %v3480 = vsel %vm3464, 1, 0
          %v3481 = vsel %vm3465, 1, 0
          %v3482 = vsel %vm3466, 1, 0
          %v3483 = vsel %vm3467, 1, 0
          %v3484 = vsel %vm3468, 1, 0
          %v3485 = vsel %vm3469, 1, 0
          %v3486 = vsel %vm3470, 1, 0
          %v3487 = vsel %vm3471, 1, 0
          %v3488 = vsel %vm3472, 1, 0
          %v3489 = vsel %vm3473, 1, 0
          %v3490 = vsel %vm3474, 1, 0
          %v3491 = vsel %vm3475, 1, 0
          %v3492 = vcvt.s32.f32 %v3476
          %v3493 = vcvt.s32.f32 %v3477
          %v3494 = vcvt.s32.f32 %v3478
          %v3495 = vcvt.s32.f32 %v3479
          %v3496 = vcvt.s32.f32 %v3480
          %v3497 = vcvt.s32.f32 %v3481
          %v3498 = vcvt.s32.f32 %v3482
          %v3499 = vcvt.s32.f32 %v3483
          %v3500 = vcvt.s32.f32 %v3484
          %v3501 = vcvt.s32.f32 %v3485
          %v3502 = vcvt.s32.f32 %v3486
          %v3503 = vcvt.s32.f32 %v3487
          %v3504 = vcvt.s32.f32 %v3488
          %v3505 = vcvt.s32.f32 %v3489
          %v3506 = vcvt.s32.f32 %v3490
          %v3507 = vcvt.s32.f32 %v3491
          %3508 = vmatprep.subr.mxu0 0.0
          %v3509 = vand.u32 %v3507, 4294901760
          %3510 = vmatpush1.msra.mxu0 %v3509
          %3511 = vmatprep.subr.mxu0 0.0
          %v3512 = vand.u32 %v3506, 4294901760
          %3513 = vmatpush1.msra.mxu0 %v3512
          %3514 = vmatprep.subr.mxu0 0.0
          %v3515 = vand.u32 %v3505, 4294901760
          %3516 = vmatpush1.msra.mxu0 %v3515
          %3517 = vmatprep.subr.mxu0 0.0
          %v3518 = vand.u32 %v3504, 4294901760
          %3519 = vmatpush1.msra.mxu0 %v3518
          %3520 = vmatprep.subr.mxu0 0.0
          %v3521 = vand.u32 %v3503, 4294901760
          %3522 = vmatpush1.msra.mxu0 %v3521
          %3523 = vmatprep.subr.mxu0 0.0
          %v3524 = vand.u32 %v3502, 4294901760
          %3525 = vmatpush1.msra.mxu0 %v3524
          %3526 = vmatprep.subr.mxu0 0.0
          %v3527 = vand.u32 %v3501, 4294901760
          %3528 = vmatpush1.msra.mxu0 %v3527
          %3529 = vmatprep.subr.mxu0 0.0
          %v3530 = vand.u32 %v3500, 4294901760
          %3531 = vmatpush1.msra.mxu0 %v3530
          %3532 = vmatprep.subr.mxu0 0.0
          %v3533 = vand.u32 %v3499, 4294901760
          %3534 = vmatpush1.msra.mxu0 %v3533
          %3535 = vmatprep.subr.mxu0 0.0
          %v3536 = vand.u32 %v3498, 4294901760
          %3537 = vmatpush1.msra.mxu0 %v3536
          %3538 = vmatprep.subr.mxu0 0.0
          %v3539 = vand.u32 %v3497, 4294901760
          %3540 = vmatpush1.msra.mxu0 %v3539
          %3541 = vmatprep.subr.mxu0 0.0
          %v3542 = vand.u32 %v3496, 4294901760
          %3543 = vmatpush1.msra.mxu0 %v3542
          %3544 = vmatprep.subr.mxu0 0.0
          %v3545 = vand.u32 %v3495, 4294901760
          %3546 = vmatpush1.msra.mxu0 %v3545
          %3547 = vmatprep.subr.mxu0 0.0
          %v3548 = vand.u32 %v3494, 4294901760
          %3549 = vmatpush1.msra.mxu0 %v3548
          %3550 = vmatprep.subr.mxu0 0.0
          %v3551 = vand.u32 %v3493, 4294901760
          %3552 = vmatpush1.msra.mxu0 %v3551
          %3553 = vmatprep.subr.mxu0 0.0
          %v3554 = vand.u32 %v3492, 4294901760
          %3555 = vmatpush1.msra.mxu0 %v3554
          %3556 = vmatprep.subr.mxu0 0.0
          %3557 = vmatpush2.msra.mxu0 0.0
          %3558 = vmatprep.subr.mxu0 0.0
          %3559 = vmatpush2.msra.mxu0 0.0
          %3560 = vmatprep.subr.mxu0 0.0
          %3561 = vmatpush2.msra.mxu0 0.0
          %3562 = vmatprep.subr.mxu0 0.0
          %3563 = vmatpush2.msra.mxu0 0.0
          %3564 = vmatprep.subr.mxu0 0.0
          %3565 = vmatpush2.msra.mxu0 0.0
          %3566 = vmatprep.subr.mxu0 0.0
          %3567 = vmatpush2.msra.mxu0 0.0
          %3568 = vmatprep.subr.mxu0 0.0
          %3569 = vmatpush2.msra.mxu0 0.0
          %3570 = vmatprep.subr.mxu0 0.0
          %3571 = vmatpush2.msra.mxu0 0.0
          %3572 = vmatprep.subr.mxu0 0.0
          %3573 = vmatpush2.msra.mxu0 0.0
          %3574 = vmatprep.subr.mxu0 0.0
          %3575 = vmatpush2.msra.mxu0 0.0
          %3576 = vmatprep.subr.mxu0 0.0
          %3577 = vmatpush2.msra.mxu0 0.0
          %3578 = vmatprep.subr.mxu0 0.0
          %3579 = vmatpush2.msra.mxu0 0.0
          %3580 = vmatprep.subr.mxu0 0.0
          %3581 = vmatpush2.msra.mxu0 0.0
          %3582 = vmatprep.subr.mxu0 0.0
          %3583 = vmatpush2.msra.mxu0 0.0
          %3584 = vmatprep.subr.mxu0 0.0
          %3585 = vmatpush2.msra.mxu0 0.0
          %3586 = vmatprep.subr.mxu0 0.0
          %3587 = vmatpush2.msra.mxu0 0.0
          %3588 = vmatprep.mubr.f32.mxu0 0.0
          %v3589 = vand.u32 %v313, 4294901760
          %v3590 = vsub.f32 %v313, %v3589
          %v3591 = vand.u32 %v3590, 4294901760
          %v3592 = vsub.f32 %v3590, %v3591
          %v3593 = vand.u32 %v3592, 4294901760
          %3594 = vmatmul.mubr.f32.gmra.mxu0 %v3593
          %v3595 = vpop.f32.mrf.mxu0
          %v3596 = vadd.f32 0.0, %v3595
          %v3597 = vpop.f32.mrf.mxu0
          %3598 = vmatprep.mubr.f32.mxu0 0.0
          %v3599 = vand.u32 %v314, 4294901760
          %v3600 = vsub.f32 %v314, %v3599
          %v3601 = vand.u32 %v3600, 4294901760
          %v3602 = vsub.f32 %v3600, %v3601
          %v3603 = vand.u32 %v3602, 4294901760
          %3604 = vmatmul.mubr.f32.gmra.mxu0 %v3603
          %v3605 = vpop.f32.mrf.mxu0
          %v3606 = vadd.f32 0.0, %v3605
          %v3607 = vpop.f32.mrf.mxu0
          %3608 = vmatprep.mubr.f32.mxu0 0.0
          %v3609 = vand.u32 %v315, 4294901760
          %v3610 = vsub.f32 %v315, %v3609
          %v3611 = vand.u32 %v3610, 4294901760
          %v3612 = vsub.f32 %v3610, %v3611
          %v3613 = vand.u32 %v3612, 4294901760
          %3614 = vmatmul.mubr.f32.gmra.mxu0 %v3613
          %v3615 = vpop.f32.mrf.mxu0
          %v3616 = vadd.f32 0.0, %v3615
          %v3617 = vpop.f32.mrf.mxu0
          %3618 = vmatprep.mubr.f32.mxu0 0.0
          %v3619 = vand.u32 %v316, 4294901760
          %v3620 = vsub.f32 %v316, %v3619
          %v3621 = vand.u32 %v3620, 4294901760
          %v3622 = vsub.f32 %v3620, %v3621
          %v3623 = vand.u32 %v3622, 4294901760
          %3624 = vmatmul.mubr.f32.gmra.mxu0 %v3623
          %v3625 = vpop.f32.mrf.mxu0
          %v3626 = vadd.f32 0.0, %v3625
          %v3627 = vpop.f32.mrf.mxu0
          %3628 = vmatprep.mubr.f32.mxu0 0.0
          %v3629 = vand.u32 %v317, 4294901760
          %v3630 = vsub.f32 %v317, %v3629
          %v3631 = vand.u32 %v3630, 4294901760
          %v3632 = vsub.f32 %v3630, %v3631
          %v3633 = vand.u32 %v3632, 4294901760
          %3634 = vmatmul.mubr.f32.gmra.mxu0 %v3633
          %v3635 = vpop.f32.mrf.mxu0
          %v3636 = vadd.f32 0.0, %v3635
          %v3637 = vpop.f32.mrf.mxu0
          %3638 = vdwg.mxu0
          %3639 = vmatprep.subr.mxu0 0.0
          %v3640 = vand.u32 %v3507, 4294901760
          %v3641 = vsub.f32 %v3507, %v3640
          %v3642 = vand.u32 %v3641, 4294901760
          %v3643 = vsub.f32 %v3641, %v3642
          %v3644 = vand.u32 %v3643, 4294901760
          %3645 = vmatpush1.msra.mxu0 %v3644
          %3646 = vmatprep.subr.mxu0 0.0
          %v3647 = vand.u32 %v3506, 4294901760
          %v3648 = vsub.f32 %v3506, %v3647
          %v3649 = vand.u32 %v3648, 4294901760
          %v3650 = vsub.f32 %v3648, %v3649
          %v3651 = vand.u32 %v3650, 4294901760
          %3652 = vmatpush1.msra.mxu0 %v3651
          %3653 = vmatprep.subr.mxu0 0.0
          %v3654 = vand.u32 %v3505, 4294901760
          %v3655 = vsub.f32 %v3505, %v3654
          %v3656 = vand.u32 %v3655, 4294901760
          %v3657 = vsub.f32 %v3655, %v3656
          %v3658 = vand.u32 %v3657, 4294901760
          %3659 = vmatpush1.msra.mxu0 %v3658
          %3660 = vmatprep.subr.mxu0 0.0
          %v3661 = vand.u32 %v3504, 4294901760
          %v3662 = vsub.f32 %v3504, %v3661
          %v3663 = vand.u32 %v3662, 4294901760
          %v3664 = vsub.f32 %v3662, %v3663
          %v3665 = vand.u32 %v3664, 4294901760
          %3666 = vmatpush1.msra.mxu0 %v3665
          %3667 = vmatprep.subr.mxu0 0.0
          %v3668 = vand.u32 %v3503, 4294901760
          %v3669 = vsub.f32 %v3503, %v3668
          %v3670 = vand.u32 %v3669, 4294901760
          %v3671 = vsub.f32 %v3669, %v3670
          %v3672 = vand.u32 %v3671, 4294901760
          %3673 = vmatpush1.msra.mxu0 %v3672
          %3674 = vmatprep.subr.mxu0 0.0
          %v3675 = vand.u32 %v3502, 4294901760
          %v3676 = vsub.f32 %v3502, %v3675
          %v3677 = vand.u32 %v3676, 4294901760
          %v3678 = vsub.f32 %v3676, %v3677
          %v3679 = vand.u32 %v3678, 4294901760
          %3680 = vmatpush1.msra.mxu0 %v3679
          %3681 = vmatprep.subr.mxu0 0.0
          %v3682 = vand.u32 %v3501, 4294901760
          %v3683 = vsub.f32 %v3501, %v3682
          %v3684 = vand.u32 %v3683, 4294901760
          %v3685 = vsub.f32 %v3683, %v3684
          %v3686 = vand.u32 %v3685, 4294901760
          %3687 = vmatpush1.msra.mxu0 %v3686
          %3688 = vmatprep.subr.mxu0 0.0
          %v3689 = vand.u32 %v3500, 4294901760
          %v3690 = vsub.f32 %v3500, %v3689
          %v3691 = vand.u32 %v3690, 4294901760
          %v3692 = vsub.f32 %v3690, %v3691
          %v3693 = vand.u32 %v3692, 4294901760
          %3694 = vmatpush1.msra.mxu0 %v3693
          %3695 = vmatprep.subr.mxu0 0.0
          %v3696 = vand.u32 %v3499, 4294901760
          %v3697 = vsub.f32 %v3499, %v3696
          %v3698 = vand.u32 %v3697, 4294901760
          %v3699 = vsub.f32 %v3697, %v3698
          %v3700 = vand.u32 %v3699, 4294901760
          %3701 = vmatpush1.msra.mxu0 %v3700
          %3702 = vmatprep.subr.mxu0 0.0
          %v3703 = vand.u32 %v3498, 4294901760
          %v3704 = vsub.f32 %v3498, %v3703
          %v3705 = vand.u32 %v3704, 4294901760
          %v3706 = vsub.f32 %v3704, %v3705
          %v3707 = vand.u32 %v3706, 4294901760
          %3708 = vmatpush1.msra.mxu0 %v3707
          %3709 = vmatprep.subr.mxu0 0.0
          %v3710 = vand.u32 %v3497, 4294901760
          %v3711 = vsub.f32 %v3497, %v3710
          %v3712 = vand.u32 %v3711, 4294901760
          %v3713 = vsub.f32 %v3711, %v3712
          %v3714 = vand.u32 %v3713, 4294901760
          %3715 = vmatpush1.msra.mxu0 %v3714
          %3716 = vmatprep.subr.mxu0 0.0
          %v3717 = vand.u32 %v3496, 4294901760
          %v3718 = vsub.f32 %v3496, %v3717
          %v3719 = vand.u32 %v3718, 4294901760
          %v3720 = vsub.f32 %v3718, %v3719
          %v3721 = vand.u32 %v3720, 4294901760
          %3722 = vmatpush1.msra.mxu0 %v3721
          %3723 = vmatprep.subr.mxu0 0.0
          %v3724 = vand.u32 %v3495, 4294901760
          %v3725 = vsub.f32 %v3495, %v3724
          %v3726 = vand.u32 %v3725, 4294901760
          %v3727 = vsub.f32 %v3725, %v3726
          %v3728 = vand.u32 %v3727, 4294901760
          %3729 = vmatpush1.msra.mxu0 %v3728
          %3730 = vmatprep.subr.mxu0 0.0
          %v3731 = vand.u32 %v3494, 4294901760
          %v3732 = vsub.f32 %v3494, %v3731
          %v3733 = vand.u32 %v3732, 4294901760
          %v3734 = vsub.f32 %v3732, %v3733
          %v3735 = vand.u32 %v3734, 4294901760
          %3736 = vmatpush1.msra.mxu0 %v3735
          %3737 = vmatprep.subr.mxu0 0.0
          %v3738 = vand.u32 %v3493, 4294901760
          %v3739 = vsub.f32 %v3493, %v3738
          %v3740 = vand.u32 %v3739, 4294901760
          %v3741 = vsub.f32 %v3739, %v3740
          %v3742 = vand.u32 %v3741, 4294901760
          %3743 = vmatpush1.msra.mxu0 %v3742
          %3744 = vmatprep.subr.mxu0 0.0
          %v3745 = vand.u32 %v3492, 4294901760
          %v3746 = vsub.f32 %v3492, %v3745
          %v3747 = vand.u32 %v3746, 4294901760
          %v3748 = vsub.f32 %v3746, %v3747
          %v3749 = vand.u32 %v3748, 4294901760
          %3750 = vmatpush1.msra.mxu0 %v3749
          %3751 = vmatprep.subr.mxu0 0.0
          %3752 = vmatpush2.msra.mxu0 0.0
          %3753 = vmatprep.subr.mxu0 0.0
          %3754 = vmatpush2.msra.mxu0 0.0
          %3755 = vmatprep.subr.mxu0 0.0
          %3756 = vmatpush2.msra.mxu0 0.0
          %3757 = vmatprep.subr.mxu0 0.0
          %3758 = vmatpush2.msra.mxu0 0.0
          %3759 = vmatprep.subr.mxu0 0.0
          %3760 = vmatpush2.msra.mxu0 0.0
          %3761 = vmatprep.subr.mxu0 0.0
          %3762 = vmatpush2.msra.mxu0 0.0
          %3763 = vmatprep.subr.mxu0 0.0
          %3764 = vmatpush2.msra.mxu0 0.0
          %3765 = vmatprep.subr.mxu0 0.0
          %3766 = vmatpush2.msra.mxu0 0.0
          %3767 = vmatprep.subr.mxu0 0.0
          %3768 = vmatpush2.msra.mxu0 0.0
          %3769 = vmatprep.subr.mxu0 0.0
          %3770 = vmatpush2.msra.mxu0 0.0
          %3771 = vmatprep.subr.mxu0 0.0
          %3772 = vmatpush2.msra.mxu0 0.0
          %3773 = vmatprep.subr.mxu0 0.0
          %3774 = vmatpush2.msra.mxu0 0.0
          %3775 = vmatprep.subr.mxu0 0.0
          %3776 = vmatpush2.msra.mxu0 0.0
          %3777 = vmatprep.subr.mxu0 0.0
          %3778 = vmatpush2.msra.mxu0 0.0
          %3779 = vmatprep.subr.mxu0 0.0
          %3780 = vmatpush2.msra.mxu0 0.0
          %3781 = vmatprep.subr.mxu0 0.0
          %3782 = vmatpush2.msra.mxu0 0.0
          %3783 = vmatprep.mubr.f32.mxu0 0.0
          %v3784 = vand.u32 %v313, 4294901760
          %3785 = vmatmul.mubr.f32.gmra.mxu0 %v3784
          %v3786 = vpop.f32.mrf.mxu0
          %v3787 = vadd.f32 %v3596, %v3786
          %v3788 = vpop.f32.mrf.mxu0
          %3789 = vmatprep.mubr.f32.mxu0 0.0
          %v3790 = vand.u32 %v314, 4294901760
          %3791 = vmatmul.mubr.f32.gmra.mxu0 %v3790
          %v3792 = vpop.f32.mrf.mxu0
          %v3793 = vadd.f32 %v3606, %v3792
          %v3794 = vpop.f32.mrf.mxu0
          %3795 = vmatprep.mubr.f32.mxu0 0.0
          %v3796 = vand.u32 %v315, 4294901760
          %3797 = vmatmul.mubr.f32.gmra.mxu0 %v3796
          %v3798 = vpop.f32.mrf.mxu0
          %v3799 = vadd.f32 %v3616, %v3798
          %v3800 = vpop.f32.mrf.mxu0
          %3801 = vmatprep.mubr.f32.mxu0 0.0
          %v3802 = vand.u32 %v316, 4294901760
          %3803 = vmatmul.mubr.f32.gmra.mxu0 %v3802
          %v3804 = vpop.f32.mrf.mxu0
          %v3805 = vadd.f32 %v3626, %v3804
          %v3806 = vpop.f32.mrf.mxu0
          %3807 = vmatprep.mubr.f32.mxu0 0.0
          %v3808 = vand.u32 %v317, 4294901760
          %3809 = vmatmul.mubr.f32.gmra.mxu0 %v3808
          %v3810 = vpop.f32.mrf.mxu0
          %v3811 = vadd.f32 %v3636, %v3810
          %v3812 = vpop.f32.mrf.mxu0
          %3813 = vdwg.mxu0
          %3814 = vmatprep.subr.mxu0 0.0
          %v3815 = vand.u32 %v3507, 4294901760
          %v3816 = vsub.f32 %v3507, %v3815
          %3817 = vmatpush1.msra.mxu0 %v3816
          %3818 = vmatprep.subr.mxu0 0.0
          %v3819 = vand.u32 %v3506, 4294901760
          %v3820 = vsub.f32 %v3506, %v3819
          %3821 = vmatpush1.msra.mxu0 %v3820
          %3822 = vmatprep.subr.mxu0 0.0
          %v3823 = vand.u32 %v3505, 4294901760
          %v3824 = vsub.f32 %v3505, %v3823
          %3825 = vmatpush1.msra.mxu0 %v3824
          %3826 = vmatprep.subr.mxu0 0.0
          %v3827 = vand.u32 %v3504, 4294901760
          %v3828 = vsub.f32 %v3504, %v3827
          %3829 = vmatpush1.msra.mxu0 %v3828
          %3830 = vmatprep.subr.mxu0 0.0
          %v3831 = vand.u32 %v3503, 4294901760
          %v3832 = vsub.f32 %v3503, %v3831
          %3833 = vmatpush1.msra.mxu0 %v3832
          %3834 = vmatprep.subr.mxu0 0.0
          %v3835 = vand.u32 %v3502, 4294901760
          %v3836 = vsub.f32 %v3502, %v3835
          %3837 = vmatpush1.msra.mxu0 %v3836
          %3838 = vmatprep.subr.mxu0 0.0
          %v3839 = vand.u32 %v3501, 4294901760
          %v3840 = vsub.f32 %v3501, %v3839
          %3841 = vmatpush1.msra.mxu0 %v3840
          %3842 = vmatprep.subr.mxu0 0.0
          %v3843 = vand.u32 %v3500, 4294901760
          %v3844 = vsub.f32 %v3500, %v3843
          %3845 = vmatpush1.msra.mxu0 %v3844
          %3846 = vmatprep.subr.mxu0 0.0
          %v3847 = vand.u32 %v3499, 4294901760
          %v3848 = vsub.f32 %v3499, %v3847
          %3849 = vmatpush1.msra.mxu0 %v3848
          %3850 = vmatprep.subr.mxu0 0.0
          %v3851 = vand.u32 %v3498, 4294901760
          %v3852 = vsub.f32 %v3498, %v3851
          %3853 = vmatpush1.msra.mxu0 %v3852
          %3854 = vmatprep.subr.mxu0 0.0
          %v3855 = vand.u32 %v3497, 4294901760
          %v3856 = vsub.f32 %v3497, %v3855
          %3857 = vmatpush1.msra.mxu0 %v3856
          %3858 = vmatprep.subr.mxu0 0.0
          %v3859 = vand.u32 %v3496, 4294901760
          %v3860 = vsub.f32 %v3496, %v3859
          %3861 = vmatpush1.msra.mxu0 %v3860
          %3862 = vmatprep.subr.mxu0 0.0
          %v3863 = vand.u32 %v3495, 4294901760
          %v3864 = vsub.f32 %v3495, %v3863
          %3865 = vmatpush1.msra.mxu0 %v3864
          %3866 = vmatprep.subr.mxu0 0.0
          %v3867 = vand.u32 %v3494, 4294901760
          %v3868 = vsub.f32 %v3494, %v3867
          %3869 = vmatpush1.msra.mxu0 %v3868
          %3870 = vmatprep.subr.mxu0 0.0
          %v3871 = vand.u32 %v3493, 4294901760
          %v3872 = vsub.f32 %v3493, %v3871
          %3873 = vmatpush1.msra.mxu0 %v3872
          %3874 = vmatprep.subr.mxu0 0.0
          %v3875 = vand.u32 %v3492, 4294901760
          %v3876 = vsub.f32 %v3492, %v3875
          %3877 = vmatpush1.msra.mxu0 %v3876
          %3878 = vmatprep.subr.mxu0 0.0
          %3879 = vmatpush2.msra.mxu0 0.0
          %3880 = vmatprep.subr.mxu0 0.0
          %3881 = vmatpush2.msra.mxu0 0.0
          %3882 = vmatprep.subr.mxu0 0.0
          %3883 = vmatpush2.msra.mxu0 0.0
          %3884 = vmatprep.subr.mxu0 0.0
          %3885 = vmatpush2.msra.mxu0 0.0
          %3886 = vmatprep.subr.mxu0 0.0
          %3887 = vmatpush2.msra.mxu0 0.0
          %3888 = vmatprep.subr.mxu0 0.0
          %3889 = vmatpush2.msra.mxu0 0.0
          %3890 = vmatprep.subr.mxu0 0.0
          %3891 = vmatpush2.msra.mxu0 0.0
          %3892 = vmatprep.subr.mxu0 0.0
          %3893 = vmatpush2.msra.mxu0 0.0
          %3894 = vmatprep.subr.mxu0 0.0
          %3895 = vmatpush2.msra.mxu0 0.0
          %3896 = vmatprep.subr.mxu0 0.0
          %3897 = vmatpush2.msra.mxu0 0.0
          %3898 = vmatprep.subr.mxu0 0.0
          %3899 = vmatpush2.msra.mxu0 0.0
          %3900 = vmatprep.subr.mxu0 0.0
          %3901 = vmatpush2.msra.mxu0 0.0
          %3902 = vmatprep.subr.mxu0 0.0
          %3903 = vmatpush2.msra.mxu0 0.0
          %3904 = vmatprep.subr.mxu0 0.0
          %3905 = vmatpush2.msra.mxu0 0.0
          %3906 = vmatprep.subr.mxu0 0.0
          %3907 = vmatpush2.msra.mxu0 0.0
          %3908 = vmatprep.subr.mxu0 0.0
          %3909 = vmatpush2.msra.mxu0 0.0
          %3910 = vmatprep.mubr.f32.mxu0 0.0
          %v3911 = vand.u32 %v313, 4294901760
          %v3912 = vsub.f32 %v313, %v3911
          %3913 = vmatmul.mubr.f32.gmra.mxu0 %v3912
          %v3914 = vpop.f32.mrf.mxu0
          %v3915 = vadd.f32 %v3787, %v3914
          %v3916 = vpop.f32.mrf.mxu0
          %3917 = vmatprep.mubr.f32.mxu0 0.0
          %v3918 = vand.u32 %v314, 4294901760
          %v3919 = vsub.f32 %v314, %v3918
          %3920 = vmatmul.mubr.f32.gmra.mxu0 %v3919
          %v3921 = vpop.f32.mrf.mxu0
          %v3922 = vadd.f32 %v3793, %v3921
          %v3923 = vpop.f32.mrf.mxu0
          %3924 = vmatprep.mubr.f32.mxu0 0.0
          %v3925 = vand.u32 %v315, 4294901760
          %v3926 = vsub.f32 %v315, %v3925
          %3927 = vmatmul.mubr.f32.gmra.mxu0 %v3926
          %v3928 = vpop.f32.mrf.mxu0
          %v3929 = vadd.f32 %v3799, %v3928
          %v3930 = vpop.f32.mrf.mxu0
          %3931 = vmatprep.mubr.f32.mxu0 0.0
          %v3932 = vand.u32 %v316, 4294901760
          %v3933 = vsub.f32 %v316, %v3932
          %3934 = vmatmul.mubr.f32.gmra.mxu0 %v3933
          %v3935 = vpop.f32.mrf.mxu0
          %v3936 = vadd.f32 %v3805, %v3935
          %v3937 = vpop.f32.mrf.mxu0
          %3938 = vmatprep.mubr.f32.mxu0 0.0
          %v3939 = vand.u32 %v317, 4294901760
          %v3940 = vsub.f32 %v317, %v3939
          %3941 = vmatmul.mubr.f32.gmra.mxu0 %v3940
          %v3942 = vpop.f32.mrf.mxu0
          %v3943 = vadd.f32 %v3811, %v3942
          %v3944 = vpop.f32.mrf.mxu0
          %3945 = vdwg.mxu0
          %3946 = vmatprep.subr.mxu0 0.0
          %v3947 = vand.u32 %v3507, 4294901760
          %3948 = vmatpush1.msra.mxu0 %v3947
          %3949 = vmatprep.subr.mxu0 0.0
          %v3950 = vand.u32 %v3506, 4294901760
          %3951 = vmatpush1.msra.mxu0 %v3950
          %3952 = vmatprep.subr.mxu0 0.0
          %v3953 = vand.u32 %v3505, 4294901760
          %3954 = vmatpush1.msra.mxu0 %v3953
          %3955 = vmatprep.subr.mxu0 0.0
          %v3956 = vand.u32 %v3504, 4294901760
          %3957 = vmatpush1.msra.mxu0 %v3956
          %3958 = vmatprep.subr.mxu0 0.0
          %v3959 = vand.u32 %v3503, 4294901760
          %3960 = vmatpush1.msra.mxu0 %v3959
          %3961 = vmatprep.subr.mxu0 0.0
          %v3962 = vand.u32 %v3502, 4294901760
          %3963 = vmatpush1.msra.mxu0 %v3962
          %3964 = vmatprep.subr.mxu0 0.0
          %v3965 = vand.u32 %v3501, 4294901760
          %3966 = vmatpush1.msra.mxu0 %v3965
          %3967 = vmatprep.subr.mxu0 0.0
          %v3968 = vand.u32 %v3500, 4294901760
          %3969 = vmatpush1.msra.mxu0 %v3968
          %3970 = vmatprep.subr.mxu0 0.0
          %v3971 = vand.u32 %v3499, 4294901760
          %3972 = vmatpush1.msra.mxu0 %v3971
          %3973 = vmatprep.subr.mxu0 0.0
          %v3974 = vand.u32 %v3498, 4294901760
          %3975 = vmatpush1.msra.mxu0 %v3974
          %3976 = vmatprep.subr.mxu0 0.0
          %v3977 = vand.u32 %v3497, 4294901760
          %3978 = vmatpush1.msra.mxu0 %v3977
          %3979 = vmatprep.subr.mxu0 0.0
          %v3980 = vand.u32 %v3496, 4294901760
          %3981 = vmatpush1.msra.mxu0 %v3980
          %3982 = vmatprep.subr.mxu0 0.0
          %v3983 = vand.u32 %v3495, 4294901760
          %3984 = vmatpush1.msra.mxu0 %v3983
          %3985 = vmatprep.subr.mxu0 0.0
          %v3986 = vand.u32 %v3494, 4294901760
          %3987 = vmatpush1.msra.mxu0 %v3986
          %3988 = vmatprep.subr.mxu0 0.0
          %v3989 = vand.u32 %v3493, 4294901760
          %3990 = vmatpush1.msra.mxu0 %v3989
          %3991 = vmatprep.subr.mxu0 0.0
          %v3992 = vand.u32 %v3492, 4294901760
          %3993 = vmatpush1.msra.mxu0 %v3992
          %3994 = vmatprep.subr.mxu0 0.0
          %3995 = vmatpush2.msra.mxu0 0.0
          %3996 = vmatprep.subr.mxu0 0.0
          %3997 = vmatpush2.msra.mxu0 0.0
          %3998 = vmatprep.subr.mxu0 0.0
          %3999 = vmatpush2.msra.mxu0 0.0
          %4000 = vmatprep.subr.mxu0 0.0
          %4001 = vmatpush2.msra.mxu0 0.0
          %4002 = vmatprep.subr.mxu0 0.0
          %4003 = vmatpush2.msra.mxu0 0.0
          %4004 = vmatprep.subr.mxu0 0.0
          %4005 = vmatpush2.msra.mxu0 0.0
          %4006 = vmatprep.subr.mxu0 0.0
          %4007 = vmatpush2.msra.mxu0 0.0
          %4008 = vmatprep.subr.mxu0 0.0
          %4009 = vmatpush2.msra.mxu0 0.0
          %4010 = vmatprep.subr.mxu0 0.0
          %4011 = vmatpush2.msra.mxu0 0.0
          %4012 = vmatprep.subr.mxu0 0.0
          %4013 = vmatpush2.msra.mxu0 0.0
          %4014 = vmatprep.subr.mxu0 0.0
          %4015 = vmatpush2.msra.mxu0 0.0
          %4016 = vmatprep.subr.mxu0 0.0
          %4017 = vmatpush2.msra.mxu0 0.0
          %4018 = vmatprep.subr.mxu0 0.0
          %4019 = vmatpush2.msra.mxu0 0.0
          %4020 = vmatprep.subr.mxu0 0.0
          %4021 = vmatpush2.msra.mxu0 0.0
          %4022 = vmatprep.subr.mxu0 0.0
          %4023 = vmatpush2.msra.mxu0 0.0
          %4024 = vmatprep.subr.mxu0 0.0
          %4025 = vmatpush2.msra.mxu0 0.0
          %4026 = vmatprep.mubr.f32.mxu0 0.0
          %v4027 = vand.u32 %v313, 4294901760
          %v4028 = vsub.f32 %v313, %v4027
          %v4029 = vand.u32 %v4028, 4294901760
          %4030 = vmatmul.mubr.f32.gmra.mxu0 %v4029
          %v4031 = vpop.f32.mrf.mxu0
          %v4032 = vadd.f32 %v3915, %v4031
          %v4033 = vpop.f32.mrf.mxu0
          %4034 = vmatprep.mubr.f32.mxu0 0.0
          %v4035 = vand.u32 %v314, 4294901760
          %v4036 = vsub.f32 %v314, %v4035
          %v4037 = vand.u32 %v4036, 4294901760
          %4038 = vmatmul.mubr.f32.gmra.mxu0 %v4037
          %v4039 = vpop.f32.mrf.mxu0
          %v4040 = vadd.f32 %v3922, %v4039
          %v4041 = vpop.f32.mrf.mxu0
          %4042 = vmatprep.mubr.f32.mxu0 0.0
          %v4043 = vand.u32 %v315, 4294901760
          %v4044 = vsub.f32 %v315, %v4043
          %v4045 = vand.u32 %v4044, 4294901760
          %4046 = vmatmul.mubr.f32.gmra.mxu0 %v4045
          %v4047 = vpop.f32.mrf.mxu0
          %v4048 = vadd.f32 %v3929, %v4047
          %v4049 = vpop.f32.mrf.mxu0
          %4050 = vmatprep.mubr.f32.mxu0 0.0
          %v4051 = vand.u32 %v316, 4294901760
          %v4052 = vsub.f32 %v316, %v4051
          %v4053 = vand.u32 %v4052, 4294901760
          %4054 = vmatmul.mubr.f32.gmra.mxu0 %v4053
          %v4055 = vpop.f32.mrf.mxu0
          %v4056 = vadd.f32 %v3936, %v4055
          %v4057 = vpop.f32.mrf.mxu0
          %4058 = vmatprep.mubr.f32.mxu0 0.0
          %v4059 = vand.u32 %v317, 4294901760
          %v4060 = vsub.f32 %v317, %v4059
          %v4061 = vand.u32 %v4060, 4294901760
          %4062 = vmatmul.mubr.f32.gmra.mxu0 %v4061
          %v4063 = vpop.f32.mrf.mxu0
          %v4064 = vadd.f32 %v3943, %v4063
          %v4065 = vpop.f32.mrf.mxu0
          %4066 = vdwg.mxu0
          %4067 = vmatprep.subr.mxu0 0.0
          %v4068 = vand.u32 %v3507, 4294901760
          %v4069 = vsub.f32 %v3507, %v4068
          %v4070 = vand.u32 %v4069, 4294901760
          %4071 = vmatpush1.msra.mxu0 %v4070
          %4072 = vmatprep.subr.mxu0 0.0
          %v4073 = vand.u32 %v3506, 4294901760
          %v4074 = vsub.f32 %v3506, %v4073
          %v4075 = vand.u32 %v4074, 4294901760
          %4076 = vmatpush1.msra.mxu0 %v4075
          %4077 = vmatprep.subr.mxu0 0.0
          %v4078 = vand.u32 %v3505, 4294901760
          %v4079 = vsub.f32 %v3505, %v4078
          %v4080 = vand.u32 %v4079, 4294901760
          %4081 = vmatpush1.msra.mxu0 %v4080
          %4082 = vmatprep.subr.mxu0 0.0
          %v4083 = vand.u32 %v3504, 4294901760
          %v4084 = vsub.f32 %v3504, %v4083
          %v4085 = vand.u32 %v4084, 4294901760
          %4086 = vmatpush1.msra.mxu0 %v4085
          %4087 = vmatprep.subr.mxu0 0.0
          %v4088 = vand.u32 %v3503, 4294901760
          %v4089 = vsub.f32 %v3503, %v4088
          %v4090 = vand.u32 %v4089, 4294901760
          %4091 = vmatpush1.msra.mxu0 %v4090
          %4092 = vmatprep.subr.mxu0 0.0
          %v4093 = vand.u32 %v3502, 4294901760
          %v4094 = vsub.f32 %v3502, %v4093
          %v4095 = vand.u32 %v4094, 4294901760
          %4096 = vmatpush1.msra.mxu0 %v4095
          %4097 = vmatprep.subr.mxu0 0.0
          %v4098 = vand.u32 %v3501, 4294901760
          %v4099 = vsub.f32 %v3501, %v4098
          %v4100 = vand.u32 %v4099, 4294901760
          %4101 = vmatpush1.msra.mxu0 %v4100
          %4102 = vmatprep.subr.mxu0 0.0
          %v4103 = vand.u32 %v3500, 4294901760
          %v4104 = vsub.f32 %v3500, %v4103
          %v4105 = vand.u32 %v4104, 4294901760
          %4106 = vmatpush1.msra.mxu0 %v4105
          %4107 = vmatprep.subr.mxu0 0.0
          %v4108 = vand.u32 %v3499, 4294901760
          %v4109 = vsub.f32 %v3499, %v4108
          %v4110 = vand.u32 %v4109, 4294901760
          %4111 = vmatpush1.msra.mxu0 %v4110
          %4112 = vmatprep.subr.mxu0 0.0
          %v4113 = vand.u32 %v3498, 4294901760
          %v4114 = vsub.f32 %v3498, %v4113
          %v4115 = vand.u32 %v4114, 4294901760
          %4116 = vmatpush1.msra.mxu0 %v4115
          %4117 = vmatprep.subr.mxu0 0.0
          %v4118 = vand.u32 %v3497, 4294901760
          %v4119 = vsub.f32 %v3497, %v4118
          %v4120 = vand.u32 %v4119, 4294901760
          %4121 = vmatpush1.msra.mxu0 %v4120
          %4122 = vmatprep.subr.mxu0 0.0
          %v4123 = vand.u32 %v3496, 4294901760
          %v4124 = vsub.f32 %v3496, %v4123
          %v4125 = vand.u32 %v4124, 4294901760
          %4126 = vmatpush1.msra.mxu0 %v4125
          %4127 = vmatprep.subr.mxu0 0.0
          %v4128 = vand.u32 %v3495, 4294901760
          %v4129 = vsub.f32 %v3495, %v4128
          %v4130 = vand.u32 %v4129, 4294901760
          %4131 = vmatpush1.msra.mxu0 %v4130
          %4132 = vmatprep.subr.mxu0 0.0
          %v4133 = vand.u32 %v3494, 4294901760
          %v4134 = vsub.f32 %v3494, %v4133
          %v4135 = vand.u32 %v4134, 4294901760
          %4136 = vmatpush1.msra.mxu0 %v4135
          %4137 = vmatprep.subr.mxu0 0.0
          %v4138 = vand.u32 %v3493, 4294901760
          %v4139 = vsub.f32 %v3493, %v4138
          %v4140 = vand.u32 %v4139, 4294901760
          %4141 = vmatpush1.msra.mxu0 %v4140
          %4142 = vmatprep.subr.mxu0 0.0
          %v4143 = vand.u32 %v3492, 4294901760
          %v4144 = vsub.f32 %v3492, %v4143
          %v4145 = vand.u32 %v4144, 4294901760
          %4146 = vmatpush1.msra.mxu0 %v4145
          %4147 = vmatprep.subr.mxu0 0.0
          %4148 = vmatpush2.msra.mxu0 0.0
          %4149 = vmatprep.subr.mxu0 0.0
          %4150 = vmatpush2.msra.mxu0 0.0
          %4151 = vmatprep.subr.mxu0 0.0
          %4152 = vmatpush2.msra.mxu0 0.0
          %4153 = vmatprep.subr.mxu0 0.0
          %4154 = vmatpush2.msra.mxu0 0.0
          %4155 = vmatprep.subr.mxu0 0.0
          %4156 = vmatpush2.msra.mxu0 0.0
          %4157 = vmatprep.subr.mxu0 0.0
          %4158 = vmatpush2.msra.mxu0 0.0
          %4159 = vmatprep.subr.mxu0 0.0
          %4160 = vmatpush2.msra.mxu0 0.0
          %4161 = vmatprep.subr.mxu0 0.0
          %4162 = vmatpush2.msra.mxu0 0.0
          %4163 = vmatprep.subr.mxu0 0.0
          %4164 = vmatpush2.msra.mxu0 0.0
          %4165 = vmatprep.subr.mxu0 0.0
          %4166 = vmatpush2.msra.mxu0 0.0
          %4167 = vmatprep.subr.mxu0 0.0
          %4168 = vmatpush2.msra.mxu0 0.0
          %4169 = vmatprep.subr.mxu0 0.0
          %4170 = vmatpush2.msra.mxu0 0.0
          %4171 = vmatprep.subr.mxu0 0.0
          %4172 = vmatpush2.msra.mxu0 0.0
          %4173 = vmatprep.subr.mxu0 0.0
          %4174 = vmatpush2.msra.mxu0 0.0
          %4175 = vmatprep.subr.mxu0 0.0
          %4176 = vmatpush2.msra.mxu0 0.0
          %4177 = vmatprep.subr.mxu0 0.0
          %4178 = vmatpush2.msra.mxu0 0.0
          %4179 = vmatprep.mubr.f32.mxu0 0.0
          %v4180 = vand.u32 %v313, 4294901760
          %4181 = vmatmul.mubr.f32.gmra.mxu0 %v4180
          %v4182 = vpop.f32.mrf.mxu0
          %v4183 = vadd.f32 %v4032, %v4182
          %v4184 = vpop.f32.mrf.mxu0
          %4185 = vmatprep.mubr.f32.mxu0 0.0
          %v4186 = vand.u32 %v314, 4294901760
          %4187 = vmatmul.mubr.f32.gmra.mxu0 %v4186
          %v4188 = vpop.f32.mrf.mxu0
          %v4189 = vadd.f32 %v4040, %v4188
          %v4190 = vpop.f32.mrf.mxu0
          %4191 = vmatprep.mubr.f32.mxu0 0.0
          %v4192 = vand.u32 %v315, 4294901760
          %4193 = vmatmul.mubr.f32.gmra.mxu0 %v4192
          %v4194 = vpop.f32.mrf.mxu0
          %v4195 = vadd.f32 %v4048, %v4194
          %v4196 = vpop.f32.mrf.mxu0
          %4197 = vmatprep.mubr.f32.mxu0 0.0
          %v4198 = vand.u32 %v316, 4294901760
          %4199 = vmatmul.mubr.f32.gmra.mxu0 %v4198
          %v4200 = vpop.f32.mrf.mxu0
          %v4201 = vadd.f32 %v4056, %v4200
          %v4202 = vpop.f32.mrf.mxu0
          %4203 = vmatprep.mubr.f32.mxu0 0.0
          %v4204 = vand.u32 %v317, 4294901760
          %4205 = vmatmul.mubr.f32.gmra.mxu0 %v4204
          %v4206 = vpop.f32.mrf.mxu0
          %v4207 = vadd.f32 %v4064, %v4206
          %v4208 = vpop.f32.mrf.mxu0
          %4209 = vdwg.mxu0
          %4210 = vmatprep.subr.mxu0 0.0
          %v4211 = vand.u32 %v3507, 4294901760
          %4212 = vmatpush1.msra.mxu0 %v4211
          %4213 = vmatprep.subr.mxu0 0.0
          %v4214 = vand.u32 %v3506, 4294901760
          %4215 = vmatpush1.msra.mxu0 %v4214
          %4216 = vmatprep.subr.mxu0 0.0
          %v4217 = vand.u32 %v3505, 4294901760
          %4218 = vmatpush1.msra.mxu0 %v4217
          %4219 = vmatprep.subr.mxu0 0.0
          %v4220 = vand.u32 %v3504, 4294901760
          %4221 = vmatpush1.msra.mxu0 %v4220
          %4222 = vmatprep.subr.mxu0 0.0
          %v4223 = vand.u32 %v3503, 4294901760
          %4224 = vmatpush1.msra.mxu0 %v4223
          %4225 = vmatprep.subr.mxu0 0.0
          %v4226 = vand.u32 %v3502, 4294901760
          %4227 = vmatpush1.msra.mxu0 %v4226
          %4228 = vmatprep.subr.mxu0 0.0
          %v4229 = vand.u32 %v3501, 4294901760
          %4230 = vmatpush1.msra.mxu0 %v4229
          %4231 = vmatprep.subr.mxu0 0.0
          %v4232 = vand.u32 %v3500, 4294901760
          %4233 = vmatpush1.msra.mxu0 %v4232
          %4234 = vmatprep.subr.mxu0 0.0
          %v4235 = vand.u32 %v3499, 4294901760
          %4236 = vmatpush1.msra.mxu0 %v4235
          %4237 = vmatprep.subr.mxu0 0.0
          %v4238 = vand.u32 %v3498, 4294901760
          %4239 = vmatpush1.msra.mxu0 %v4238
          %4240 = vmatprep.subr.mxu0 0.0
          %v4241 = vand.u32 %v3497, 4294901760
          %4242 = vmatpush1.msra.mxu0 %v4241
          %4243 = vmatprep.subr.mxu0 0.0
          %v4244 = vand.u32 %v3496, 4294901760
          %4245 = vmatpush1.msra.mxu0 %v4244
          %4246 = vmatprep.subr.mxu0 0.0
          %v4247 = vand.u32 %v3495, 4294901760
          %4248 = vmatpush1.msra.mxu0 %v4247
          %4249 = vmatprep.subr.mxu0 0.0
          %v4250 = vand.u32 %v3494, 4294901760
          %4251 = vmatpush1.msra.mxu0 %v4250
          %4252 = vmatprep.subr.mxu0 0.0
          %v4253 = vand.u32 %v3493, 4294901760
          %4254 = vmatpush1.msra.mxu0 %v4253
          %4255 = vmatprep.subr.mxu0 0.0
          %v4256 = vand.u32 %v3492, 4294901760
          %4257 = vmatpush1.msra.mxu0 %v4256
          %4258 = vmatprep.subr.mxu0 0.0
          %4259 = vmatpush2.msra.mxu0 0.0
          %4260 = vmatprep.subr.mxu0 0.0
          %4261 = vmatpush2.msra.mxu0 0.0
          %4262 = vmatprep.subr.mxu0 0.0
          %4263 = vmatpush2.msra.mxu0 0.0
          %4264 = vmatprep.subr.mxu0 0.0
          %4265 = vmatpush2.msra.mxu0 0.0
          %4266 = vmatprep.subr.mxu0 0.0
          %4267 = vmatpush2.msra.mxu0 0.0
          %4268 = vmatprep.subr.mxu0 0.0
          %4269 = vmatpush2.msra.mxu0 0.0
          %4270 = vmatprep.subr.mxu0 0.0
          %4271 = vmatpush2.msra.mxu0 0.0
          %4272 = vmatprep.subr.mxu0 0.0
          %4273 = vmatpush2.msra.mxu0 0.0
          %4274 = vmatprep.subr.mxu0 0.0
          %4275 = vmatpush2.msra.mxu0 0.0
          %4276 = vmatprep.subr.mxu0 0.0
          %4277 = vmatpush2.msra.mxu0 0.0
          %4278 = vmatprep.subr.mxu0 0.0
          %4279 = vmatpush2.msra.mxu0 0.0
          %4280 = vmatprep.subr.mxu0 0.0
          %4281 = vmatpush2.msra.mxu0 0.0
          %4282 = vmatprep.subr.mxu0 0.0
          %4283 = vmatpush2.msra.mxu0 0.0
          %4284 = vmatprep.subr.mxu0 0.0
          %4285 = vmatpush2.msra.mxu0 0.0
          %4286 = vmatprep.subr.mxu0 0.0
          %4287 = vmatpush2.msra.mxu0 0.0
          %4288 = vmatprep.subr.mxu0 0.0
          %4289 = vmatpush2.msra.mxu0 0.0
          %4290 = vmatprep.mubr.f32.mxu0 0.0
          %v4291 = vand.u32 %v313, 4294901760
          %4292 = vmatmul.mubr.f32.gmra.mxu0 %v4291
          %v4293 = vpop.f32.mrf.mxu0
          %v4294 = vadd.f32 %v4183, %v4293
          %v4295 = vpop.f32.mrf.mxu0
          %4296 = vmatprep.mubr.f32.mxu0 0.0
          %v4297 = vand.u32 %v314, 4294901760
          %4298 = vmatmul.mubr.f32.gmra.mxu0 %v4297
          %v4299 = vpop.f32.mrf.mxu0
          %v4300 = vadd.f32 %v4189, %v4299
          %v4301 = vpop.f32.mrf.mxu0
          %4302 = vmatprep.mubr.f32.mxu0 0.0
          %v4303 = vand.u32 %v315, 4294901760
          %4304 = vmatmul.mubr.f32.gmra.mxu0 %v4303
          %v4305 = vpop.f32.mrf.mxu0
          %v4306 = vadd.f32 %v4195, %v4305
          %v4307 = vpop.f32.mrf.mxu0
          %4308 = vmatprep.mubr.f32.mxu0 0.0
          %v4309 = vand.u32 %v316, 4294901760
          %4310 = vmatmul.mubr.f32.gmra.mxu0 %v4309
          %v4311 = vpop.f32.mrf.mxu0
          %v4312 = vadd.f32 %v4201, %v4311
          %v4313 = vpop.f32.mrf.mxu0
          %4314 = vmatprep.mubr.f32.mxu0 0.0
          %v4315 = vand.u32 %v317, 4294901760
          %4316 = vmatmul.mubr.f32.gmra.mxu0 %v4315
          %v4317 = vpop.f32.mrf.mxu0
          %v4318 = vadd.f32 %v4207, %v4317
          %v4319 = vpop.f32.mrf.mxu0
          %4320 = vdwg.mxu0
          %v4321 = vsub.f32 %v4294, %v1540
          %v4322 = vsub.f32 %v4300, %v1546
          %v4323 = vsub.f32 %v4306, %v1552
          %v4324 = vand.u32 2147483647, %v4321
          %v4325 = vand.u32 2147483647, %v4322
          %v4326 = vand.u32 2147483647, %v4323
          %v4327 = vadd.f32 %v4324, %v4325
          %v4328 = vadd.f32 %v4327, %v4326
          %v4329 = vrot.slane %v4328, 4
          %v4330 = vadd.f32 %v4328, %v4329
          %v4331 = vrot.slane %v4330, 2
          %v4332 = vadd.f32 %v4330, %v4331
          %v4333 = vrot.slane %v4332, 1
          %v4334 = vadd.f32 %v4332, %v4333
          %vm4335 = vcmp.lt.f32.partialorder %v4334, 0.0021072102
          %v4336 = vsel %vm4335, 1, 0
          %v4337 = vcvt.s32.f32 %v4336
          %v4338 = vsub.f32 0.0, %v3459
          %v4339 = vmul.f32 %v4338, 1.442695
          %v4340 = vpow.pop %v4339
          %v4341 = vmul.f32 %v4340, %v4337
          %v4342 = vmul.f32 %v4341, %v4312
          %v4343 = vmul.f32 %v4341, %v4318
          %v4344 = vadd.f32 %v3420, %v4342
          %v4345 = vadd.f32 %v3421, %v4343
          %v4346 = vadd.f32 %v3422, %v4341
          %v4347 = vsel %vm3460, 1e+30, %v3423
          %v4348 = vsel %vm3461, 1e+30, %v3424
          %v4349 = vsel %vm3462, 1e+30, %v3425
          %v4350 = vsel %vm3463, 1e+30, %v3426
          %v4351 = vsel %vm3464, 1e+30, %v3427
          %v4352 = vsel %vm3465, 1e+30, %v3428
          %v4353 = vsel %vm3466, 1e+30, %v3429
          %v4354 = vsel %vm3467, 1e+30, %v3430
          %v4355 = vsel %vm3468, 1e+30, %v3431
          %v4356 = vsel %vm3469, 1e+30, %v3432
          %v4357 = vsel %vm3470, 1e+30, %v3433
          %v4358 = vsel %vm3471, 1e+30, %v3434
          %v4359 = vsel %vm3472, 1e+30, %v3435
          %v4360 = vsel %vm3473, 1e+30, %v3436
          %v4361 = vsel %vm3474, 1e+30, %v3437
          %v4362 = vsel %vm3475, 1e+30, %v3438
          %v4363 = vmin.f32 %v4347, %v4351
          %v4364 = vmin.f32 %v4348, %v4352
          %v4365 = vmin.f32 %v4349, %v4353
          %v4366 = vmin.f32 %v4350, %v4354
          %v4367 = vmin.f32 %v4363, %v4355
          %v4368 = vmin.f32 %v4364, %v4356
          %v4369 = vmin.f32 %v4365, %v4357
          %v4370 = vmin.f32 %v4366, %v4358
          %v4371 = vmin.f32 %v4367, %v4359
          %v4372 = vmin.f32 %v4368, %v4360
          %v4373 = vmin.f32 %v4369, %v4361
          %v4374 = vmin.f32 %v4370, %v4362
          %v4375 = vmin.f32 %v4371, %v4372
          %v4376 = vmin.f32 %v4373, %v4374
          %v4377 = vmin.f32 %v4375, %v4376
          %v4378 = vrot.slane %v4377, 4
          %v4379 = vmin.f32 %v4377, %v4378
          %v4380 = vrot.slane %v4379, 2
          %v4381 = vmin.f32 %v4379, %v4380
          %v4382 = vrot.slane %v4381, 1
          %v4383 = vmin.f32 %v4381, %v4382
          %vm4384 = vcmp.eq.f32.partialorder %v4347, %v4383
          %vm4385 = vcmp.eq.f32.partialorder %v4348, %v4383
          %vm4386 = vcmp.eq.f32.partialorder %v4349, %v4383
          %vm4387 = vcmp.eq.f32.partialorder %v4350, %v4383
          %vm4388 = vcmp.eq.f32.partialorder %v4351, %v4383
          %vm4389 = vcmp.eq.f32.partialorder %v4352, %v4383
          %vm4390 = vcmp.eq.f32.partialorder %v4353, %v4383
          %vm4391 = vcmp.eq.f32.partialorder %v4354, %v4383
          %vm4392 = vcmp.eq.f32.partialorder %v4355, %v4383
          %vm4393 = vcmp.eq.f32.partialorder %v4356, %v4383
          %vm4394 = vcmp.eq.f32.partialorder %v4357, %v4383
          %vm4395 = vcmp.eq.f32.partialorder %v4358, %v4383
          %vm4396 = vcmp.eq.f32.partialorder %v4359, %v4383
          %vm4397 = vcmp.eq.f32.partialorder %v4360, %v4383
          %vm4398 = vcmp.eq.f32.partialorder %v4361, %v4383
          %vm4399 = vcmp.eq.f32.partialorder %v4362, %v4383
          %v4400 = vsel %vm4384, 1, 0
          %v4401 = vsel %vm4385, 1, 0
          %v4402 = vsel %vm4386, 1, 0
          %v4403 = vsel %vm4387, 1, 0
          %v4404 = vsel %vm4388, 1, 0
          %v4405 = vsel %vm4389, 1, 0
          %v4406 = vsel %vm4390, 1, 0
          %v4407 = vsel %vm4391, 1, 0
          %v4408 = vsel %vm4392, 1, 0
          %v4409 = vsel %vm4393, 1, 0
          %v4410 = vsel %vm4394, 1, 0
          %v4411 = vsel %vm4395, 1, 0
          %v4412 = vsel %vm4396, 1, 0
          %v4413 = vsel %vm4397, 1, 0
          %v4414 = vsel %vm4398, 1, 0
          %v4415 = vsel %vm4399, 1, 0
          %v4416 = vcvt.s32.f32 %v4400
          %v4417 = vcvt.s32.f32 %v4401
          %v4418 = vcvt.s32.f32 %v4402
          %v4419 = vcvt.s32.f32 %v4403
          %v4420 = vcvt.s32.f32 %v4404
          %v4421 = vcvt.s32.f32 %v4405
          %v4422 = vcvt.s32.f32 %v4406
          %v4423 = vcvt.s32.f32 %v4407
          %v4424 = vcvt.s32.f32 %v4408
          %v4425 = vcvt.s32.f32 %v4409
          %v4426 = vcvt.s32.f32 %v4410
          %v4427 = vcvt.s32.f32 %v4411
          %v4428 = vcvt.s32.f32 %v4412
          %v4429 = vcvt.s32.f32 %v4413
          %v4430 = vcvt.s32.f32 %v4414
          %v4431 = vcvt.s32.f32 %v4415
          %4432 = vmatprep.subr.mxu0 0.0
          %v4433 = vand.u32 %v4431, 4294901760
          %4434 = vmatpush1.msra.mxu0 %v4433
          %4435 = vmatprep.subr.mxu0 0.0
          %v4436 = vand.u32 %v4430, 4294901760
          %4437 = vmatpush1.msra.mxu0 %v4436
          %4438 = vmatprep.subr.mxu0 0.0
          %v4439 = vand.u32 %v4429, 4294901760
          %4440 = vmatpush1.msra.mxu0 %v4439
          %4441 = vmatprep.subr.mxu0 0.0
          %v4442 = vand.u32 %v4428, 4294901760
          %4443 = vmatpush1.msra.mxu0 %v4442
          %4444 = vmatprep.subr.mxu0 0.0
          %v4445 = vand.u32 %v4427, 4294901760
          %4446 = vmatpush1.msra.mxu0 %v4445
          %4447 = vmatprep.subr.mxu0 0.0
          %v4448 = vand.u32 %v4426, 4294901760
          %4449 = vmatpush1.msra.mxu0 %v4448
          %4450 = vmatprep.subr.mxu0 0.0
          %v4451 = vand.u32 %v4425, 4294901760
          %4452 = vmatpush1.msra.mxu0 %v4451
          %4453 = vmatprep.subr.mxu0 0.0
          %v4454 = vand.u32 %v4424, 4294901760
          %4455 = vmatpush1.msra.mxu0 %v4454
          %4456 = vmatprep.subr.mxu0 0.0
          %v4457 = vand.u32 %v4423, 4294901760
          %4458 = vmatpush1.msra.mxu0 %v4457
          %4459 = vmatprep.subr.mxu0 0.0
          %v4460 = vand.u32 %v4422, 4294901760
          %4461 = vmatpush1.msra.mxu0 %v4460
          %4462 = vmatprep.subr.mxu0 0.0
          %v4463 = vand.u32 %v4421, 4294901760
          %4464 = vmatpush1.msra.mxu0 %v4463
          %4465 = vmatprep.subr.mxu0 0.0
          %v4466 = vand.u32 %v4420, 4294901760
          %4467 = vmatpush1.msra.mxu0 %v4466
          %4468 = vmatprep.subr.mxu0 0.0
          %v4469 = vand.u32 %v4419, 4294901760
          %4470 = vmatpush1.msra.mxu0 %v4469
          %4471 = vmatprep.subr.mxu0 0.0
          %v4472 = vand.u32 %v4418, 4294901760
          %4473 = vmatpush1.msra.mxu0 %v4472
          %4474 = vmatprep.subr.mxu0 0.0
          %v4475 = vand.u32 %v4417, 4294901760
          %4476 = vmatpush1.msra.mxu0 %v4475
          %4477 = vmatprep.subr.mxu0 0.0
          %v4478 = vand.u32 %v4416, 4294901760
          %4479 = vmatpush1.msra.mxu0 %v4478
          %4480 = vmatprep.subr.mxu0 0.0
          %4481 = vmatpush2.msra.mxu0 0.0
          %4482 = vmatprep.subr.mxu0 0.0
          %4483 = vmatpush2.msra.mxu0 0.0
          %4484 = vmatprep.subr.mxu0 0.0
          %4485 = vmatpush2.msra.mxu0 0.0
          %4486 = vmatprep.subr.mxu0 0.0
          %4487 = vmatpush2.msra.mxu0 0.0
          %4488 = vmatprep.subr.mxu0 0.0
          %4489 = vmatpush2.msra.mxu0 0.0
          %4490 = vmatprep.subr.mxu0 0.0
          %4491 = vmatpush2.msra.mxu0 0.0
          %4492 = vmatprep.subr.mxu0 0.0
          %4493 = vmatpush2.msra.mxu0 0.0
          %4494 = vmatprep.subr.mxu0 0.0
          %4495 = vmatpush2.msra.mxu0 0.0
          %4496 = vmatprep.subr.mxu0 0.0
          %4497 = vmatpush2.msra.mxu0 0.0
          %4498 = vmatprep.subr.mxu0 0.0
          %4499 = vmatpush2.msra.mxu0 0.0
          %4500 = vmatprep.subr.mxu0 0.0
          %4501 = vmatpush2.msra.mxu0 0.0
          %4502 = vmatprep.subr.mxu0 0.0
          %4503 = vmatpush2.msra.mxu0 0.0
          %4504 = vmatprep.subr.mxu0 0.0
          %4505 = vmatpush2.msra.mxu0 0.0
          %4506 = vmatprep.subr.mxu0 0.0
          %4507 = vmatpush2.msra.mxu0 0.0
          %4508 = vmatprep.subr.mxu0 0.0
          %4509 = vmatpush2.msra.mxu0 0.0
          %4510 = vmatprep.subr.mxu0 0.0
          %4511 = vmatpush2.msra.mxu0 0.0
          %4512 = vmatprep.mubr.f32.mxu0 0.0
          %v4513 = vand.u32 %v313, 4294901760
          %v4514 = vsub.f32 %v313, %v4513
          %v4515 = vand.u32 %v4514, 4294901760
          %v4516 = vsub.f32 %v4514, %v4515
          %v4517 = vand.u32 %v4516, 4294901760
          %4518 = vmatmul.mubr.f32.gmra.mxu0 %v4517
          %v4519 = vpop.f32.mrf.mxu0
          %v4520 = vadd.f32 0.0, %v4519
          %v4521 = vpop.f32.mrf.mxu0
          %4522 = vmatprep.mubr.f32.mxu0 0.0
          %v4523 = vand.u32 %v314, 4294901760
          %v4524 = vsub.f32 %v314, %v4523
          %v4525 = vand.u32 %v4524, 4294901760
          %v4526 = vsub.f32 %v4524, %v4525
          %v4527 = vand.u32 %v4526, 4294901760
          %4528 = vmatmul.mubr.f32.gmra.mxu0 %v4527
          %v4529 = vpop.f32.mrf.mxu0
          %v4530 = vadd.f32 0.0, %v4529
          %v4531 = vpop.f32.mrf.mxu0
          %4532 = vmatprep.mubr.f32.mxu0 0.0
          %v4533 = vand.u32 %v315, 4294901760
          %v4534 = vsub.f32 %v315, %v4533
          %v4535 = vand.u32 %v4534, 4294901760
          %v4536 = vsub.f32 %v4534, %v4535
          %v4537 = vand.u32 %v4536, 4294901760
          %4538 = vmatmul.mubr.f32.gmra.mxu0 %v4537
          %v4539 = vpop.f32.mrf.mxu0
          %v4540 = vadd.f32 0.0, %v4539
          %v4541 = vpop.f32.mrf.mxu0
          %4542 = vmatprep.mubr.f32.mxu0 0.0
          %v4543 = vand.u32 %v316, 4294901760
          %v4544 = vsub.f32 %v316, %v4543
          %v4545 = vand.u32 %v4544, 4294901760
          %v4546 = vsub.f32 %v4544, %v4545
          %v4547 = vand.u32 %v4546, 4294901760
          %4548 = vmatmul.mubr.f32.gmra.mxu0 %v4547
          %v4549 = vpop.f32.mrf.mxu0
          %v4550 = vadd.f32 0.0, %v4549
          %v4551 = vpop.f32.mrf.mxu0
          %4552 = vmatprep.mubr.f32.mxu0 0.0
          %v4553 = vand.u32 %v317, 4294901760
          %v4554 = vsub.f32 %v317, %v4553
          %v4555 = vand.u32 %v4554, 4294901760
          %v4556 = vsub.f32 %v4554, %v4555
          %v4557 = vand.u32 %v4556, 4294901760
          %4558 = vmatmul.mubr.f32.gmra.mxu0 %v4557
          %v4559 = vpop.f32.mrf.mxu0
          %v4560 = vadd.f32 0.0, %v4559
          %v4561 = vpop.f32.mrf.mxu0
          %4562 = vdwg.mxu0
          %4563 = vmatprep.subr.mxu0 0.0
          %v4564 = vand.u32 %v4431, 4294901760
          %v4565 = vsub.f32 %v4431, %v4564
          %v4566 = vand.u32 %v4565, 4294901760
          %v4567 = vsub.f32 %v4565, %v4566
          %v4568 = vand.u32 %v4567, 4294901760
          %4569 = vmatpush1.msra.mxu0 %v4568
          %4570 = vmatprep.subr.mxu0 0.0
          %v4571 = vand.u32 %v4430, 4294901760
          %v4572 = vsub.f32 %v4430, %v4571
          %v4573 = vand.u32 %v4572, 4294901760
          %v4574 = vsub.f32 %v4572, %v4573
          %v4575 = vand.u32 %v4574, 4294901760
          %4576 = vmatpush1.msra.mxu0 %v4575
          %4577 = vmatprep.subr.mxu0 0.0
          %v4578 = vand.u32 %v4429, 4294901760
          %v4579 = vsub.f32 %v4429, %v4578
          %v4580 = vand.u32 %v4579, 4294901760
          %v4581 = vsub.f32 %v4579, %v4580
          %v4582 = vand.u32 %v4581, 4294901760
          %4583 = vmatpush1.msra.mxu0 %v4582
          %4584 = vmatprep.subr.mxu0 0.0
          %v4585 = vand.u32 %v4428, 4294901760
          %v4586 = vsub.f32 %v4428, %v4585
          %v4587 = vand.u32 %v4586, 4294901760
          %v4588 = vsub.f32 %v4586, %v4587
          %v4589 = vand.u32 %v4588, 4294901760
          %4590 = vmatpush1.msra.mxu0 %v4589
          %4591 = vmatprep.subr.mxu0 0.0
          %v4592 = vand.u32 %v4427, 4294901760
          %v4593 = vsub.f32 %v4427, %v4592
          %v4594 = vand.u32 %v4593, 4294901760
          %v4595 = vsub.f32 %v4593, %v4594
          %v4596 = vand.u32 %v4595, 4294901760
          %4597 = vmatpush1.msra.mxu0 %v4596
          %4598 = vmatprep.subr.mxu0 0.0
          %v4599 = vand.u32 %v4426, 4294901760
          %v4600 = vsub.f32 %v4426, %v4599
          %v4601 = vand.u32 %v4600, 4294901760
          %v4602 = vsub.f32 %v4600, %v4601
          %v4603 = vand.u32 %v4602, 4294901760
          %4604 = vmatpush1.msra.mxu0 %v4603
          %4605 = vmatprep.subr.mxu0 0.0
          %v4606 = vand.u32 %v4425, 4294901760
          %v4607 = vsub.f32 %v4425, %v4606
          %v4608 = vand.u32 %v4607, 4294901760
          %v4609 = vsub.f32 %v4607, %v4608
          %v4610 = vand.u32 %v4609, 4294901760
          %4611 = vmatpush1.msra.mxu0 %v4610
          %4612 = vmatprep.subr.mxu0 0.0
          %v4613 = vand.u32 %v4424, 4294901760
          %v4614 = vsub.f32 %v4424, %v4613
          %v4615 = vand.u32 %v4614, 4294901760
          %v4616 = vsub.f32 %v4614, %v4615
          %v4617 = vand.u32 %v4616, 4294901760
          %4618 = vmatpush1.msra.mxu0 %v4617
          %4619 = vmatprep.subr.mxu0 0.0
          %v4620 = vand.u32 %v4423, 4294901760
          %v4621 = vsub.f32 %v4423, %v4620
          %v4622 = vand.u32 %v4621, 4294901760
          %v4623 = vsub.f32 %v4621, %v4622
          %v4624 = vand.u32 %v4623, 4294901760
          %4625 = vmatpush1.msra.mxu0 %v4624
          %4626 = vmatprep.subr.mxu0 0.0
          %v4627 = vand.u32 %v4422, 4294901760
          %v4628 = vsub.f32 %v4422, %v4627
          %v4629 = vand.u32 %v4628, 4294901760
          %v4630 = vsub.f32 %v4628, %v4629
          %v4631 = vand.u32 %v4630, 4294901760
          %4632 = vmatpush1.msra.mxu0 %v4631
          %4633 = vmatprep.subr.mxu0 0.0
          %v4634 = vand.u32 %v4421, 4294901760
          %v4635 = vsub.f32 %v4421, %v4634
          %v4636 = vand.u32 %v4635, 4294901760
          %v4637 = vsub.f32 %v4635, %v4636
          %v4638 = vand.u32 %v4637, 4294901760
          %4639 = vmatpush1.msra.mxu0 %v4638
          %4640 = vmatprep.subr.mxu0 0.0
          %v4641 = vand.u32 %v4420, 4294901760
          %v4642 = vsub.f32 %v4420, %v4641
          %v4643 = vand.u32 %v4642, 4294901760
          %v4644 = vsub.f32 %v4642, %v4643
          %v4645 = vand.u32 %v4644, 4294901760
          %4646 = vmatpush1.msra.mxu0 %v4645
          %4647 = vmatprep.subr.mxu0 0.0
          %v4648 = vand.u32 %v4419, 4294901760
          %v4649 = vsub.f32 %v4419, %v4648
          %v4650 = vand.u32 %v4649, 4294901760
          %v4651 = vsub.f32 %v4649, %v4650
          %v4652 = vand.u32 %v4651, 4294901760
          %4653 = vmatpush1.msra.mxu0 %v4652
          %4654 = vmatprep.subr.mxu0 0.0
          %v4655 = vand.u32 %v4418, 4294901760
          %v4656 = vsub.f32 %v4418, %v4655
          %v4657 = vand.u32 %v4656, 4294901760
          %v4658 = vsub.f32 %v4656, %v4657
          %v4659 = vand.u32 %v4658, 4294901760
          %4660 = vmatpush1.msra.mxu0 %v4659
          %4661 = vmatprep.subr.mxu0 0.0
          %v4662 = vand.u32 %v4417, 4294901760
          %v4663 = vsub.f32 %v4417, %v4662
          %v4664 = vand.u32 %v4663, 4294901760
          %v4665 = vsub.f32 %v4663, %v4664
          %v4666 = vand.u32 %v4665, 4294901760
          %4667 = vmatpush1.msra.mxu0 %v4666
          %4668 = vmatprep.subr.mxu0 0.0
          %v4669 = vand.u32 %v4416, 4294901760
          %v4670 = vsub.f32 %v4416, %v4669
          %v4671 = vand.u32 %v4670, 4294901760
          %v4672 = vsub.f32 %v4670, %v4671
          %v4673 = vand.u32 %v4672, 4294901760
          %4674 = vmatpush1.msra.mxu0 %v4673
          %4675 = vmatprep.subr.mxu0 0.0
          %4676 = vmatpush2.msra.mxu0 0.0
          %4677 = vmatprep.subr.mxu0 0.0
          %4678 = vmatpush2.msra.mxu0 0.0
          %4679 = vmatprep.subr.mxu0 0.0
          %4680 = vmatpush2.msra.mxu0 0.0
          %4681 = vmatprep.subr.mxu0 0.0
          %4682 = vmatpush2.msra.mxu0 0.0
          %4683 = vmatprep.subr.mxu0 0.0
          %4684 = vmatpush2.msra.mxu0 0.0
          %4685 = vmatprep.subr.mxu0 0.0
          %4686 = vmatpush2.msra.mxu0 0.0
          %4687 = vmatprep.subr.mxu0 0.0
          %4688 = vmatpush2.msra.mxu0 0.0
          %4689 = vmatprep.subr.mxu0 0.0
          %4690 = vmatpush2.msra.mxu0 0.0
          %4691 = vmatprep.subr.mxu0 0.0
          %4692 = vmatpush2.msra.mxu0 0.0
          %4693 = vmatprep.subr.mxu0 0.0
          %4694 = vmatpush2.msra.mxu0 0.0
          %4695 = vmatprep.subr.mxu0 0.0
          %4696 = vmatpush2.msra.mxu0 0.0
          %4697 = vmatprep.subr.mxu0 0.0
          %4698 = vmatpush2.msra.mxu0 0.0
          %4699 = vmatprep.subr.mxu0 0.0
          %4700 = vmatpush2.msra.mxu0 0.0
          %4701 = vmatprep.subr.mxu0 0.0
          %4702 = vmatpush2.msra.mxu0 0.0
          %4703 = vmatprep.subr.mxu0 0.0
          %4704 = vmatpush2.msra.mxu0 0.0
          %4705 = vmatprep.subr.mxu0 0.0
          %4706 = vmatpush2.msra.mxu0 0.0
          %4707 = vmatprep.mubr.f32.mxu0 0.0
          %v4708 = vand.u32 %v313, 4294901760
          %4709 = vmatmul.mubr.f32.gmra.mxu0 %v4708
          %v4710 = vpop.f32.mrf.mxu0
          %v4711 = vadd.f32 %v4520, %v4710
          %v4712 = vpop.f32.mrf.mxu0
          %4713 = vmatprep.mubr.f32.mxu0 0.0
          %v4714 = vand.u32 %v314, 4294901760
          %4715 = vmatmul.mubr.f32.gmra.mxu0 %v4714
          %v4716 = vpop.f32.mrf.mxu0
          %v4717 = vadd.f32 %v4530, %v4716
          %v4718 = vpop.f32.mrf.mxu0
          %4719 = vmatprep.mubr.f32.mxu0 0.0
          %v4720 = vand.u32 %v315, 4294901760
          %4721 = vmatmul.mubr.f32.gmra.mxu0 %v4720
          %v4722 = vpop.f32.mrf.mxu0
          %v4723 = vadd.f32 %v4540, %v4722
          %v4724 = vpop.f32.mrf.mxu0
          %4725 = vmatprep.mubr.f32.mxu0 0.0
          %v4726 = vand.u32 %v316, 4294901760
          %4727 = vmatmul.mubr.f32.gmra.mxu0 %v4726
          %v4728 = vpop.f32.mrf.mxu0
          %v4729 = vadd.f32 %v4550, %v4728
          %v4730 = vpop.f32.mrf.mxu0
          %4731 = vmatprep.mubr.f32.mxu0 0.0
          %v4732 = vand.u32 %v317, 4294901760
          %4733 = vmatmul.mubr.f32.gmra.mxu0 %v4732
          %v4734 = vpop.f32.mrf.mxu0
          %v4735 = vadd.f32 %v4560, %v4734
          %v4736 = vpop.f32.mrf.mxu0
          %4737 = vdwg.mxu0
          %4738 = vmatprep.subr.mxu0 0.0
          %v4739 = vand.u32 %v4431, 4294901760
          %v4740 = vsub.f32 %v4431, %v4739
          %4741 = vmatpush1.msra.mxu0 %v4740
          %4742 = vmatprep.subr.mxu0 0.0
          %v4743 = vand.u32 %v4430, 4294901760
          %v4744 = vsub.f32 %v4430, %v4743
          %4745 = vmatpush1.msra.mxu0 %v4744
          %4746 = vmatprep.subr.mxu0 0.0
          %v4747 = vand.u32 %v4429, 4294901760
          %v4748 = vsub.f32 %v4429, %v4747
          %4749 = vmatpush1.msra.mxu0 %v4748
          %4750 = vmatprep.subr.mxu0 0.0
          %v4751 = vand.u32 %v4428, 4294901760
          %v4752 = vsub.f32 %v4428, %v4751
          %4753 = vmatpush1.msra.mxu0 %v4752
          %4754 = vmatprep.subr.mxu0 0.0
          %v4755 = vand.u32 %v4427, 4294901760
          %v4756 = vsub.f32 %v4427, %v4755
          %4757 = vmatpush1.msra.mxu0 %v4756
          %4758 = vmatprep.subr.mxu0 0.0
          %v4759 = vand.u32 %v4426, 4294901760
          %v4760 = vsub.f32 %v4426, %v4759
          %4761 = vmatpush1.msra.mxu0 %v4760
          %4762 = vmatprep.subr.mxu0 0.0
          %v4763 = vand.u32 %v4425, 4294901760
          %v4764 = vsub.f32 %v4425, %v4763
          %4765 = vmatpush1.msra.mxu0 %v4764
          %4766 = vmatprep.subr.mxu0 0.0
          %v4767 = vand.u32 %v4424, 4294901760
          %v4768 = vsub.f32 %v4424, %v4767
          %4769 = vmatpush1.msra.mxu0 %v4768
          %4770 = vmatprep.subr.mxu0 0.0
          %v4771 = vand.u32 %v4423, 4294901760
          %v4772 = vsub.f32 %v4423, %v4771
          %4773 = vmatpush1.msra.mxu0 %v4772
          %4774 = vmatprep.subr.mxu0 0.0
          %v4775 = vand.u32 %v4422, 4294901760
          %v4776 = vsub.f32 %v4422, %v4775
          %4777 = vmatpush1.msra.mxu0 %v4776
          %4778 = vmatprep.subr.mxu0 0.0
          %v4779 = vand.u32 %v4421, 4294901760
          %v4780 = vsub.f32 %v4421, %v4779
          %4781 = vmatpush1.msra.mxu0 %v4780
          %4782 = vmatprep.subr.mxu0 0.0
          %v4783 = vand.u32 %v4420, 4294901760
          %v4784 = vsub.f32 %v4420, %v4783
          %4785 = vmatpush1.msra.mxu0 %v4784
          %4786 = vmatprep.subr.mxu0 0.0
          %v4787 = vand.u32 %v4419, 4294901760
          %v4788 = vsub.f32 %v4419, %v4787
          %4789 = vmatpush1.msra.mxu0 %v4788
          %4790 = vmatprep.subr.mxu0 0.0
          %v4791 = vand.u32 %v4418, 4294901760
          %v4792 = vsub.f32 %v4418, %v4791
          %4793 = vmatpush1.msra.mxu0 %v4792
          %4794 = vmatprep.subr.mxu0 0.0
          %v4795 = vand.u32 %v4417, 4294901760
          %v4796 = vsub.f32 %v4417, %v4795
          %4797 = vmatpush1.msra.mxu0 %v4796
          %4798 = vmatprep.subr.mxu0 0.0
          %v4799 = vand.u32 %v4416, 4294901760
          %v4800 = vsub.f32 %v4416, %v4799
          %4801 = vmatpush1.msra.mxu0 %v4800
          %4802 = vmatprep.subr.mxu0 0.0
          %4803 = vmatpush2.msra.mxu0 0.0
          %4804 = vmatprep.subr.mxu0 0.0
          %4805 = vmatpush2.msra.mxu0 0.0
          %4806 = vmatprep.subr.mxu0 0.0
          %4807 = vmatpush2.msra.mxu0 0.0
          %4808 = vmatprep.subr.mxu0 0.0
          %4809 = vmatpush2.msra.mxu0 0.0
          %4810 = vmatprep.subr.mxu0 0.0
          %4811 = vmatpush2.msra.mxu0 0.0
          %4812 = vmatprep.subr.mxu0 0.0
          %4813 = vmatpush2.msra.mxu0 0.0
          %4814 = vmatprep.subr.mxu0 0.0
          %4815 = vmatpush2.msra.mxu0 0.0
          %4816 = vmatprep.subr.mxu0 0.0
          %4817 = vmatpush2.msra.mxu0 0.0
          %4818 = vmatprep.subr.mxu0 0.0
          %4819 = vmatpush2.msra.mxu0 0.0
          %4820 = vmatprep.subr.mxu0 0.0
          %4821 = vmatpush2.msra.mxu0 0.0
          %4822 = vmatprep.subr.mxu0 0.0
          %4823 = vmatpush2.msra.mxu0 0.0
          %4824 = vmatprep.subr.mxu0 0.0
          %4825 = vmatpush2.msra.mxu0 0.0
          %4826 = vmatprep.subr.mxu0 0.0
          %4827 = vmatpush2.msra.mxu0 0.0
          %4828 = vmatprep.subr.mxu0 0.0
          %4829 = vmatpush2.msra.mxu0 0.0
          %4830 = vmatprep.subr.mxu0 0.0
          %4831 = vmatpush2.msra.mxu0 0.0
          %4832 = vmatprep.subr.mxu0 0.0
          %4833 = vmatpush2.msra.mxu0 0.0
          %4834 = vmatprep.mubr.f32.mxu0 0.0
          %v4835 = vand.u32 %v313, 4294901760
          %v4836 = vsub.f32 %v313, %v4835
          %4837 = vmatmul.mubr.f32.gmra.mxu0 %v4836
          %v4838 = vpop.f32.mrf.mxu0
          %v4839 = vadd.f32 %v4711, %v4838
          %v4840 = vpop.f32.mrf.mxu0
          %4841 = vmatprep.mubr.f32.mxu0 0.0
          %v4842 = vand.u32 %v314, 4294901760
          %v4843 = vsub.f32 %v314, %v4842
          %4844 = vmatmul.mubr.f32.gmra.mxu0 %v4843
          %v4845 = vpop.f32.mrf.mxu0
          %v4846 = vadd.f32 %v4717, %v4845
          %v4847 = vpop.f32.mrf.mxu0
          %4848 = vmatprep.mubr.f32.mxu0 0.0
          %v4849 = vand.u32 %v315, 4294901760
          %v4850 = vsub.f32 %v315, %v4849
          %4851 = vmatmul.mubr.f32.gmra.mxu0 %v4850
          %v4852 = vpop.f32.mrf.mxu0
          %v4853 = vadd.f32 %v4723, %v4852
          %v4854 = vpop.f32.mrf.mxu0
          %4855 = vmatprep.mubr.f32.mxu0 0.0
          %v4856 = vand.u32 %v316, 4294901760
          %v4857 = vsub.f32 %v316, %v4856
          %4858 = vmatmul.mubr.f32.gmra.mxu0 %v4857
          %v4859 = vpop.f32.mrf.mxu0
          %v4860 = vadd.f32 %v4729, %v4859
          %v4861 = vpop.f32.mrf.mxu0
          %4862 = vmatprep.mubr.f32.mxu0 0.0
          %v4863 = vand.u32 %v317, 4294901760
          %v4864 = vsub.f32 %v317, %v4863
          %4865 = vmatmul.mubr.f32.gmra.mxu0 %v4864
          %v4866 = vpop.f32.mrf.mxu0
          %v4867 = vadd.f32 %v4735, %v4866
          %v4868 = vpop.f32.mrf.mxu0
          %4869 = vdwg.mxu0
          %4870 = vmatprep.subr.mxu0 0.0
          %v4871 = vand.u32 %v4431, 4294901760
          %4872 = vmatpush1.msra.mxu0 %v4871
          %4873 = vmatprep.subr.mxu0 0.0
          %v4874 = vand.u32 %v4430, 4294901760
          %4875 = vmatpush1.msra.mxu0 %v4874
          %4876 = vmatprep.subr.mxu0 0.0
          %v4877 = vand.u32 %v4429, 4294901760
          %4878 = vmatpush1.msra.mxu0 %v4877
          %4879 = vmatprep.subr.mxu0 0.0
          %v4880 = vand.u32 %v4428, 4294901760
          %4881 = vmatpush1.msra.mxu0 %v4880
          %4882 = vmatprep.subr.mxu0 0.0
          %v4883 = vand.u32 %v4427, 4294901760
          %4884 = vmatpush1.msra.mxu0 %v4883
          %4885 = vmatprep.subr.mxu0 0.0
          %v4886 = vand.u32 %v4426, 4294901760
          %4887 = vmatpush1.msra.mxu0 %v4886
          %4888 = vmatprep.subr.mxu0 0.0
          %v4889 = vand.u32 %v4425, 4294901760
          %4890 = vmatpush1.msra.mxu0 %v4889
          %4891 = vmatprep.subr.mxu0 0.0
          %v4892 = vand.u32 %v4424, 4294901760
          %4893 = vmatpush1.msra.mxu0 %v4892
          %4894 = vmatprep.subr.mxu0 0.0
          %v4895 = vand.u32 %v4423, 4294901760
          %4896 = vmatpush1.msra.mxu0 %v4895
          %4897 = vmatprep.subr.mxu0 0.0
          %v4898 = vand.u32 %v4422, 4294901760
          %4899 = vmatpush1.msra.mxu0 %v4898
          %4900 = vmatprep.subr.mxu0 0.0
          %v4901 = vand.u32 %v4421, 4294901760
          %4902 = vmatpush1.msra.mxu0 %v4901
          %4903 = vmatprep.subr.mxu0 0.0
          %v4904 = vand.u32 %v4420, 4294901760
          %4905 = vmatpush1.msra.mxu0 %v4904
          %4906 = vmatprep.subr.mxu0 0.0
          %v4907 = vand.u32 %v4419, 4294901760
          %4908 = vmatpush1.msra.mxu0 %v4907
          %4909 = vmatprep.subr.mxu0 0.0
          %v4910 = vand.u32 %v4418, 4294901760
          %4911 = vmatpush1.msra.mxu0 %v4910
          %4912 = vmatprep.subr.mxu0 0.0
          %v4913 = vand.u32 %v4417, 4294901760
          %4914 = vmatpush1.msra.mxu0 %v4913
          %4915 = vmatprep.subr.mxu0 0.0
          %v4916 = vand.u32 %v4416, 4294901760
          %4917 = vmatpush1.msra.mxu0 %v4916
          %4918 = vmatprep.subr.mxu0 0.0
          %4919 = vmatpush2.msra.mxu0 0.0
          %4920 = vmatprep.subr.mxu0 0.0
          %4921 = vmatpush2.msra.mxu0 0.0
          %4922 = vmatprep.subr.mxu0 0.0
          %4923 = vmatpush2.msra.mxu0 0.0
          %4924 = vmatprep.subr.mxu0 0.0
          %4925 = vmatpush2.msra.mxu0 0.0
          %4926 = vmatprep.subr.mxu0 0.0
          %4927 = vmatpush2.msra.mxu0 0.0
          %4928 = vmatprep.subr.mxu0 0.0
          %4929 = vmatpush2.msra.mxu0 0.0
          %4930 = vmatprep.subr.mxu0 0.0
          %4931 = vmatpush2.msra.mxu0 0.0
          %4932 = vmatprep.subr.mxu0 0.0
          %4933 = vmatpush2.msra.mxu0 0.0
          %4934 = vmatprep.subr.mxu0 0.0
          %4935 = vmatpush2.msra.mxu0 0.0
          %4936 = vmatprep.subr.mxu0 0.0
          %4937 = vmatpush2.msra.mxu0 0.0
          %4938 = vmatprep.subr.mxu0 0.0
          %4939 = vmatpush2.msra.mxu0 0.0
          %4940 = vmatprep.subr.mxu0 0.0
          %4941 = vmatpush2.msra.mxu0 0.0
          %4942 = vmatprep.subr.mxu0 0.0
          %4943 = vmatpush2.msra.mxu0 0.0
          %4944 = vmatprep.subr.mxu0 0.0
          %4945 = vmatpush2.msra.mxu0 0.0
          %4946 = vmatprep.subr.mxu0 0.0
          %4947 = vmatpush2.msra.mxu0 0.0
          %4948 = vmatprep.subr.mxu0 0.0
          %4949 = vmatpush2.msra.mxu0 0.0
          %4950 = vmatprep.mubr.f32.mxu0 0.0
          %v4951 = vand.u32 %v313, 4294901760
          %v4952 = vsub.f32 %v313, %v4951
          %v4953 = vand.u32 %v4952, 4294901760
          %4954 = vmatmul.mubr.f32.gmra.mxu0 %v4953
          %v4955 = vpop.f32.mrf.mxu0
          %v4956 = vadd.f32 %v4839, %v4955
          %v4957 = vpop.f32.mrf.mxu0
          %4958 = vmatprep.mubr.f32.mxu0 0.0
          %v4959 = vand.u32 %v314, 4294901760
          %v4960 = vsub.f32 %v314, %v4959
          %v4961 = vand.u32 %v4960, 4294901760
          %4962 = vmatmul.mubr.f32.gmra.mxu0 %v4961
          %v4963 = vpop.f32.mrf.mxu0
          %v4964 = vadd.f32 %v4846, %v4963
          %v4965 = vpop.f32.mrf.mxu0
          %4966 = vmatprep.mubr.f32.mxu0 0.0
          %v4967 = vand.u32 %v315, 4294901760
          %v4968 = vsub.f32 %v315, %v4967
          %v4969 = vand.u32 %v4968, 4294901760
          %4970 = vmatmul.mubr.f32.gmra.mxu0 %v4969
          %v4971 = vpop.f32.mrf.mxu0
          %v4972 = vadd.f32 %v4853, %v4971
          %v4973 = vpop.f32.mrf.mxu0
          %4974 = vmatprep.mubr.f32.mxu0 0.0
          %v4975 = vand.u32 %v316, 4294901760
          %v4976 = vsub.f32 %v316, %v4975
          %v4977 = vand.u32 %v4976, 4294901760
          %4978 = vmatmul.mubr.f32.gmra.mxu0 %v4977
          %v4979 = vpop.f32.mrf.mxu0
          %v4980 = vadd.f32 %v4860, %v4979
          %v4981 = vpop.f32.mrf.mxu0
          %4982 = vmatprep.mubr.f32.mxu0 0.0
          %v4983 = vand.u32 %v317, 4294901760
          %v4984 = vsub.f32 %v317, %v4983
          %v4985 = vand.u32 %v4984, 4294901760
          %4986 = vmatmul.mubr.f32.gmra.mxu0 %v4985
          %v4987 = vpop.f32.mrf.mxu0
          %v4988 = vadd.f32 %v4867, %v4987
          %v4989 = vpop.f32.mrf.mxu0
          %4990 = vdwg.mxu0
          %4991 = vmatprep.subr.mxu0 0.0
          %v4992 = vand.u32 %v4431, 4294901760
          %v4993 = vsub.f32 %v4431, %v4992
          %v4994 = vand.u32 %v4993, 4294901760
          %4995 = vmatpush1.msra.mxu0 %v4994
          %4996 = vmatprep.subr.mxu0 0.0
          %v4997 = vand.u32 %v4430, 4294901760
          %v4998 = vsub.f32 %v4430, %v4997
          %v4999 = vand.u32 %v4998, 4294901760
          %5000 = vmatpush1.msra.mxu0 %v4999
          %5001 = vmatprep.subr.mxu0 0.0
          %v5002 = vand.u32 %v4429, 4294901760
          %v5003 = vsub.f32 %v4429, %v5002
          %v5004 = vand.u32 %v5003, 4294901760
          %5005 = vmatpush1.msra.mxu0 %v5004
          %5006 = vmatprep.subr.mxu0 0.0
          %v5007 = vand.u32 %v4428, 4294901760
          %v5008 = vsub.f32 %v4428, %v5007
          %v5009 = vand.u32 %v5008, 4294901760
          %5010 = vmatpush1.msra.mxu0 %v5009
          %5011 = vmatprep.subr.mxu0 0.0
          %v5012 = vand.u32 %v4427, 4294901760
          %v5013 = vsub.f32 %v4427, %v5012
          %v5014 = vand.u32 %v5013, 4294901760
          %5015 = vmatpush1.msra.mxu0 %v5014
          %5016 = vmatprep.subr.mxu0 0.0
          %v5017 = vand.u32 %v4426, 4294901760
          %v5018 = vsub.f32 %v4426, %v5017
          %v5019 = vand.u32 %v5018, 4294901760
          %5020 = vmatpush1.msra.mxu0 %v5019
          %5021 = vmatprep.subr.mxu0 0.0
          %v5022 = vand.u32 %v4425, 4294901760
          %v5023 = vsub.f32 %v4425, %v5022
          %v5024 = vand.u32 %v5023, 4294901760
          %5025 = vmatpush1.msra.mxu0 %v5024
          %5026 = vmatprep.subr.mxu0 0.0
          %v5027 = vand.u32 %v4424, 4294901760
          %v5028 = vsub.f32 %v4424, %v5027
          %v5029 = vand.u32 %v5028, 4294901760
          %5030 = vmatpush1.msra.mxu0 %v5029
          %5031 = vmatprep.subr.mxu0 0.0
          %v5032 = vand.u32 %v4423, 4294901760
          %v5033 = vsub.f32 %v4423, %v5032
          %v5034 = vand.u32 %v5033, 4294901760
          %5035 = vmatpush1.msra.mxu0 %v5034
          %5036 = vmatprep.subr.mxu0 0.0
          %v5037 = vand.u32 %v4422, 4294901760
          %v5038 = vsub.f32 %v4422, %v5037
          %v5039 = vand.u32 %v5038, 4294901760
          %5040 = vmatpush1.msra.mxu0 %v5039
          %5041 = vmatprep.subr.mxu0 0.0
          %v5042 = vand.u32 %v4421, 4294901760
          %v5043 = vsub.f32 %v4421, %v5042
          %v5044 = vand.u32 %v5043, 4294901760
          %5045 = vmatpush1.msra.mxu0 %v5044
          %5046 = vmatprep.subr.mxu0 0.0
          %v5047 = vand.u32 %v4420, 4294901760
          %v5048 = vsub.f32 %v4420, %v5047
          %v5049 = vand.u32 %v5048, 4294901760
          %5050 = vmatpush1.msra.mxu0 %v5049
          %5051 = vmatprep.subr.mxu0 0.0
          %v5052 = vand.u32 %v4419, 4294901760
          %v5053 = vsub.f32 %v4419, %v5052
          %v5054 = vand.u32 %v5053, 4294901760
          %5055 = vmatpush1.msra.mxu0 %v5054
          %5056 = vmatprep.subr.mxu0 0.0
          %v5057 = vand.u32 %v4418, 4294901760
          %v5058 = vsub.f32 %v4418, %v5057
          %v5059 = vand.u32 %v5058, 4294901760
          %5060 = vmatpush1.msra.mxu0 %v5059
          %5061 = vmatprep.subr.mxu0 0.0
          %v5062 = vand.u32 %v4417, 4294901760
          %v5063 = vsub.f32 %v4417, %v5062
          %v5064 = vand.u32 %v5063, 4294901760
          %5065 = vmatpush1.msra.mxu0 %v5064
          %5066 = vmatprep.subr.mxu0 0.0
          %v5067 = vand.u32 %v4416, 4294901760
          %v5068 = vsub.f32 %v4416, %v5067
          %v5069 = vand.u32 %v5068, 4294901760
          %5070 = vmatpush1.msra.mxu0 %v5069
          %5071 = vmatprep.subr.mxu0 0.0
          %5072 = vmatpush2.msra.mxu0 0.0
          %5073 = vmatprep.subr.mxu0 0.0
          %5074 = vmatpush2.msra.mxu0 0.0
          %5075 = vmatprep.subr.mxu0 0.0
          %5076 = vmatpush2.msra.mxu0 0.0
          %5077 = vmatprep.subr.mxu0 0.0
          %5078 = vmatpush2.msra.mxu0 0.0
          %5079 = vmatprep.subr.mxu0 0.0
          %5080 = vmatpush2.msra.mxu0 0.0
          %5081 = vmatprep.subr.mxu0 0.0
          %5082 = vmatpush2.msra.mxu0 0.0
          %5083 = vmatprep.subr.mxu0 0.0
          %5084 = vmatpush2.msra.mxu0 0.0
          %5085 = vmatprep.subr.mxu0 0.0
          %5086 = vmatpush2.msra.mxu0 0.0
          %5087 = vmatprep.subr.mxu0 0.0
          %5088 = vmatpush2.msra.mxu0 0.0
          %5089 = vmatprep.subr.mxu0 0.0
          %5090 = vmatpush2.msra.mxu0 0.0
          %5091 = vmatprep.subr.mxu0 0.0
          %5092 = vmatpush2.msra.mxu0 0.0
          %5093 = vmatprep.subr.mxu0 0.0
          %5094 = vmatpush2.msra.mxu0 0.0
          %5095 = vmatprep.subr.mxu0 0.0
          %5096 = vmatpush2.msra.mxu0 0.0
          %5097 = vmatprep.subr.mxu0 0.0
          %5098 = vmatpush2.msra.mxu0 0.0
          %5099 = vmatprep.subr.mxu0 0.0
          %5100 = vmatpush2.msra.mxu0 0.0
          %5101 = vmatprep.subr.mxu0 0.0
          %5102 = vmatpush2.msra.mxu0 0.0
          %5103 = vmatprep.mubr.f32.mxu0 0.0
          %v5104 = vand.u32 %v313, 4294901760
          %5105 = vmatmul.mubr.f32.gmra.mxu0 %v5104
          %v5106 = vpop.f32.mrf.mxu0
          %v5107 = vadd.f32 %v4956, %v5106
          %v5108 = vpop.f32.mrf.mxu0
          %5109 = vmatprep.mubr.f32.mxu0 0.0
          %v5110 = vand.u32 %v314, 4294901760
          %5111 = vmatmul.mubr.f32.gmra.mxu0 %v5110
          %v5112 = vpop.f32.mrf.mxu0
          %v5113 = vadd.f32 %v4964, %v5112
          %v5114 = vpop.f32.mrf.mxu0
          %5115 = vmatprep.mubr.f32.mxu0 0.0
          %v5116 = vand.u32 %v315, 4294901760
          %5117 = vmatmul.mubr.f32.gmra.mxu0 %v5116
          %v5118 = vpop.f32.mrf.mxu0
          %v5119 = vadd.f32 %v4972, %v5118
          %v5120 = vpop.f32.mrf.mxu0
          %5121 = vmatprep.mubr.f32.mxu0 0.0
          %v5122 = vand.u32 %v316, 4294901760
          %5123 = vmatmul.mubr.f32.gmra.mxu0 %v5122
          %v5124 = vpop.f32.mrf.mxu0
          %v5125 = vadd.f32 %v4980, %v5124
          %v5126 = vpop.f32.mrf.mxu0
          %5127 = vmatprep.mubr.f32.mxu0 0.0
          %v5128 = vand.u32 %v317, 4294901760
          %5129 = vmatmul.mubr.f32.gmra.mxu0 %v5128
          %v5130 = vpop.f32.mrf.mxu0
          %v5131 = vadd.f32 %v4988, %v5130
          %v5132 = vpop.f32.mrf.mxu0
          %5133 = vdwg.mxu0
          %5134 = vmatprep.subr.mxu0 0.0
          %v5135 = vand.u32 %v4431, 4294901760
          %5136 = vmatpush1.msra.mxu0 %v5135
          %5137 = vmatprep.subr.mxu0 0.0
          %v5138 = vand.u32 %v4430, 4294901760
          %5139 = vmatpush1.msra.mxu0 %v5138
          %5140 = vmatprep.subr.mxu0 0.0
          %v5141 = vand.u32 %v4429, 4294901760
          %5142 = vmatpush1.msra.mxu0 %v5141
          %5143 = vmatprep.subr.mxu0 0.0
          %v5144 = vand.u32 %v4428, 4294901760
          %5145 = vmatpush1.msra.mxu0 %v5144
          %5146 = vmatprep.subr.mxu0 0.0
          %v5147 = vand.u32 %v4427, 4294901760
          %5148 = vmatpush1.msra.mxu0 %v5147
          %5149 = vmatprep.subr.mxu0 0.0
          %v5150 = vand.u32 %v4426, 4294901760
          %5151 = vmatpush1.msra.mxu0 %v5150
          %5152 = vmatprep.subr.mxu0 0.0
          %v5153 = vand.u32 %v4425, 4294901760
          %5154 = vmatpush1.msra.mxu0 %v5153
          %5155 = vmatprep.subr.mxu0 0.0
          %v5156 = vand.u32 %v4424, 4294901760
          %5157 = vmatpush1.msra.mxu0 %v5156
          %5158 = vmatprep.subr.mxu0 0.0
          %v5159 = vand.u32 %v4423, 4294901760
          %5160 = vmatpush1.msra.mxu0 %v5159
          %5161 = vmatprep.subr.mxu0 0.0
          %v5162 = vand.u32 %v4422, 4294901760
          %5163 = vmatpush1.msra.mxu0 %v5162
          %5164 = vmatprep.subr.mxu0 0.0
          %v5165 = vand.u32 %v4421, 4294901760
          %5166 = vmatpush1.msra.mxu0 %v5165
          %5167 = vmatprep.subr.mxu0 0.0
          %v5168 = vand.u32 %v4420, 4294901760
          %5169 = vmatpush1.msra.mxu0 %v5168
          %5170 = vmatprep.subr.mxu0 0.0
          %v5171 = vand.u32 %v4419, 4294901760
          %5172 = vmatpush1.msra.mxu0 %v5171
          %5173 = vmatprep.subr.mxu0 0.0
          %v5174 = vand.u32 %v4418, 4294901760
          %5175 = vmatpush1.msra.mxu0 %v5174
          %5176 = vmatprep.subr.mxu0 0.0
          %v5177 = vand.u32 %v4417, 4294901760
          %5178 = vmatpush1.msra.mxu0 %v5177
          %5179 = vmatprep.subr.mxu0 0.0
          %v5180 = vand.u32 %v4416, 4294901760
          %5181 = vmatpush1.msra.mxu0 %v5180
          %5182 = vmatprep.subr.mxu0 0.0
          %5183 = vmatpush2.msra.mxu0 0.0
          %5184 = vmatprep.subr.mxu0 0.0
          %5185 = vmatpush2.msra.mxu0 0.0
          %5186 = vmatprep.subr.mxu0 0.0
          %5187 = vmatpush2.msra.mxu0 0.0
          %5188 = vmatprep.subr.mxu0 0.0
          %5189 = vmatpush2.msra.mxu0 0.0
          %5190 = vmatprep.subr.mxu0 0.0
          %5191 = vmatpush2.msra.mxu0 0.0
          %5192 = vmatprep.subr.mxu0 0.0
          %5193 = vmatpush2.msra.mxu0 0.0
          %5194 = vmatprep.subr.mxu0 0.0
          %5195 = vmatpush2.msra.mxu0 0.0
          %5196 = vmatprep.subr.mxu0 0.0
          %5197 = vmatpush2.msra.mxu0 0.0
          %5198 = vmatprep.subr.mxu0 0.0
          %5199 = vmatpush2.msra.mxu0 0.0
          %5200 = vmatprep.subr.mxu0 0.0
          %5201 = vmatpush2.msra.mxu0 0.0
          %5202 = vmatprep.subr.mxu0 0.0
          %5203 = vmatpush2.msra.mxu0 0.0
          %5204 = vmatprep.subr.mxu0 0.0
          %5205 = vmatpush2.msra.mxu0 0.0
          %5206 = vmatprep.subr.mxu0 0.0
          %5207 = vmatpush2.msra.mxu0 0.0
          %5208 = vmatprep.subr.mxu0 0.0
          %5209 = vmatpush2.msra.mxu0 0.0
          %5210 = vmatprep.subr.mxu0 0.0
          %5211 = vmatpush2.msra.mxu0 0.0
          %5212 = vmatprep.subr.mxu0 0.0
          %5213 = vmatpush2.msra.mxu0 0.0
          %5214 = vmatprep.mubr.f32.mxu0 0.0
          %v5215 = vand.u32 %v313, 4294901760
          %5216 = vmatmul.mubr.f32.gmra.mxu0 %v5215
          %v5217 = vpop.f32.mrf.mxu0
          %v5218 = vadd.f32 %v5107, %v5217
          %v5219 = vpop.f32.mrf.mxu0
          %5220 = vmatprep.mubr.f32.mxu0 0.0
          %v5221 = vand.u32 %v314, 4294901760
          %5222 = vmatmul.mubr.f32.gmra.mxu0 %v5221
          %v5223 = vpop.f32.mrf.mxu0
          %v5224 = vadd.f32 %v5113, %v5223
          %v5225 = vpop.f32.mrf.mxu0
          %5226 = vmatprep.mubr.f32.mxu0 0.0
          %v5227 = vand.u32 %v315, 4294901760
          %5228 = vmatmul.mubr.f32.gmra.mxu0 %v5227
          %v5229 = vpop.f32.mrf.mxu0
          %v5230 = vadd.f32 %v5119, %v5229
          %v5231 = vpop.f32.mrf.mxu0
          %5232 = vmatprep.mubr.f32.mxu0 0.0
          %v5233 = vand.u32 %v316, 4294901760
          %5234 = vmatmul.mubr.f32.gmra.mxu0 %v5233
          %v5235 = vpop.f32.mrf.mxu0
          %v5236 = vadd.f32 %v5125, %v5235
          %v5237 = vpop.f32.mrf.mxu0
          %5238 = vmatprep.mubr.f32.mxu0 0.0
          %v5239 = vand.u32 %v317, 4294901760
          %5240 = vmatmul.mubr.f32.gmra.mxu0 %v5239
          %v5241 = vpop.f32.mrf.mxu0
          %v5242 = vadd.f32 %v5131, %v5241
          %v5243 = vpop.f32.mrf.mxu0
          %5244 = vdwg.mxu0
          %v5245 = vsub.f32 %v5218, %v1540
          %v5246 = vsub.f32 %v5224, %v1546
          %v5247 = vsub.f32 %v5230, %v1552
          %v5248 = vand.u32 2147483647, %v5245
          %v5249 = vand.u32 2147483647, %v5246
          %v5250 = vand.u32 2147483647, %v5247
          %v5251 = vadd.f32 %v5248, %v5249
          %v5252 = vadd.f32 %v5251, %v5250
          %v5253 = vrot.slane %v5252, 4
          %v5254 = vadd.f32 %v5252, %v5253
          %v5255 = vrot.slane %v5254, 2
          %v5256 = vadd.f32 %v5254, %v5255
          %v5257 = vrot.slane %v5256, 1
          %v5258 = vadd.f32 %v5256, %v5257
          %vm5259 = vcmp.lt.f32.partialorder %v5258, 0.0021072102
          %v5260 = vsel %vm5259, 1, 0
          %v5261 = vcvt.s32.f32 %v5260
          %v5262 = vsub.f32 0.0, %v4383
          %v5263 = vmul.f32 %v5262, 1.442695
          %v5264 = vpow.pop %v5263
          %v5265 = vmul.f32 %v5264, %v5261
          %v5266 = vmul.f32 %v5265, %v5236
          %v5267 = vmul.f32 %v5265, %v5242
          %v5268 = vadd.f32 %v4344, %v5266
          %v5269 = vadd.f32 %v4345, %v5267
          %v5270 = vadd.f32 %v4346, %v5265
          %v5271 = vsel %vm4384, 1e+30, %v4347
          %v5272 = vsel %vm4385, 1e+30, %v4348
          %v5273 = vsel %vm4386, 1e+30, %v4349
          %v5274 = vsel %vm4387, 1e+30, %v4350
          %v5275 = vsel %vm4388, 1e+30, %v4351
          %v5276 = vsel %vm4389, 1e+30, %v4352
          %v5277 = vsel %vm4390, 1e+30, %v4353
          %v5278 = vsel %vm4391, 1e+30, %v4354
          %v5279 = vsel %vm4392, 1e+30, %v4355
          %v5280 = vsel %vm4393, 1e+30, %v4356
          %v5281 = vsel %vm4394, 1e+30, %v4357
          %v5282 = vsel %vm4395, 1e+30, %v4358
          %v5283 = vsel %vm4396, 1e+30, %v4359
          %v5284 = vsel %vm4397, 1e+30, %v4360
          %v5285 = vsel %vm4398, 1e+30, %v4361
          %v5286 = vsel %vm4399, 1e+30, %v4362
          %v5287 = vmin.f32 %v5271, %v5275
          %v5288 = vmin.f32 %v5272, %v5276
          %v5289 = vmin.f32 %v5273, %v5277
          %v5290 = vmin.f32 %v5274, %v5278
          %v5291 = vmin.f32 %v5287, %v5279
          %v5292 = vmin.f32 %v5288, %v5280
          %v5293 = vmin.f32 %v5289, %v5281
          %v5294 = vmin.f32 %v5290, %v5282
          %v5295 = vmin.f32 %v5291, %v5283
          %v5296 = vmin.f32 %v5292, %v5284
          %v5297 = vmin.f32 %v5293, %v5285
          %v5298 = vmin.f32 %v5294, %v5286
          %v5299 = vmin.f32 %v5295, %v5296
          %v5300 = vmin.f32 %v5297, %v5298
          %v5301 = vmin.f32 %v5299, %v5300
          %v5302 = vrot.slane %v5301, 4
          %v5303 = vmin.f32 %v5301, %v5302
          %v5304 = vrot.slane %v5303, 2
          %v5305 = vmin.f32 %v5303, %v5304
          %v5306 = vrot.slane %v5305, 1
          %v5307 = vmin.f32 %v5305, %v5306
          %vm5308 = vcmp.eq.f32.partialorder %v5271, %v5307
          %vm5309 = vcmp.eq.f32.partialorder %v5272, %v5307
          %vm5310 = vcmp.eq.f32.partialorder %v5273, %v5307
          %vm5311 = vcmp.eq.f32.partialorder %v5274, %v5307
          %vm5312 = vcmp.eq.f32.partialorder %v5275, %v5307
          %vm5313 = vcmp.eq.f32.partialorder %v5276, %v5307
          %vm5314 = vcmp.eq.f32.partialorder %v5277, %v5307
          %vm5315 = vcmp.eq.f32.partialorder %v5278, %v5307
          %vm5316 = vcmp.eq.f32.partialorder %v5279, %v5307
          %vm5317 = vcmp.eq.f32.partialorder %v5280, %v5307
          %vm5318 = vcmp.eq.f32.partialorder %v5281, %v5307
          %vm5319 = vcmp.eq.f32.partialorder %v5282, %v5307
          %vm5320 = vcmp.eq.f32.partialorder %v5283, %v5307
          %vm5321 = vcmp.eq.f32.partialorder %v5284, %v5307
          %vm5322 = vcmp.eq.f32.partialorder %v5285, %v5307
          %vm5323 = vcmp.eq.f32.partialorder %v5286, %v5307
          %v5324 = vsel %vm5308, 1, 0
          %v5325 = vsel %vm5309, 1, 0
          %v5326 = vsel %vm5310, 1, 0
          %v5327 = vsel %vm5311, 1, 0
          %v5328 = vsel %vm5312, 1, 0
          %v5329 = vsel %vm5313, 1, 0
          %v5330 = vsel %vm5314, 1, 0
          %v5331 = vsel %vm5315, 1, 0
          %v5332 = vsel %vm5316, 1, 0
          %v5333 = vsel %vm5317, 1, 0
          %v5334 = vsel %vm5318, 1, 0
          %v5335 = vsel %vm5319, 1, 0
          %v5336 = vsel %vm5320, 1, 0
          %v5337 = vsel %vm5321, 1, 0
          %v5338 = vsel %vm5322, 1, 0
          %v5339 = vsel %vm5323, 1, 0
          %v5340 = vcvt.s32.f32 %v5324
          %v5341 = vcvt.s32.f32 %v5325
          %v5342 = vcvt.s32.f32 %v5326
          %v5343 = vcvt.s32.f32 %v5327
          %v5344 = vcvt.s32.f32 %v5328
          %v5345 = vcvt.s32.f32 %v5329
          %v5346 = vcvt.s32.f32 %v5330
          %v5347 = vcvt.s32.f32 %v5331
          %v5348 = vcvt.s32.f32 %v5332
          %v5349 = vcvt.s32.f32 %v5333
          %v5350 = vcvt.s32.f32 %v5334
          %v5351 = vcvt.s32.f32 %v5335
          %v5352 = vcvt.s32.f32 %v5336
          %v5353 = vcvt.s32.f32 %v5337
          %v5354 = vcvt.s32.f32 %v5338
          %v5355 = vcvt.s32.f32 %v5339
          %5356 = vmatprep.subr.mxu0 0.0
          %v5357 = vand.u32 %v5355, 4294901760
          %5358 = vmatpush1.msra.mxu0 %v5357
          %5359 = vmatprep.subr.mxu0 0.0
          %v5360 = vand.u32 %v5354, 4294901760
          %5361 = vmatpush1.msra.mxu0 %v5360
          %5362 = vmatprep.subr.mxu0 0.0
          %v5363 = vand.u32 %v5353, 4294901760
          %5364 = vmatpush1.msra.mxu0 %v5363
          %5365 = vmatprep.subr.mxu0 0.0
          %v5366 = vand.u32 %v5352, 4294901760
          %5367 = vmatpush1.msra.mxu0 %v5366
          %5368 = vmatprep.subr.mxu0 0.0
          %v5369 = vand.u32 %v5351, 4294901760
          %5370 = vmatpush1.msra.mxu0 %v5369
          %5371 = vmatprep.subr.mxu0 0.0
          %v5372 = vand.u32 %v5350, 4294901760
          %5373 = vmatpush1.msra.mxu0 %v5372
          %5374 = vmatprep.subr.mxu0 0.0
          %v5375 = vand.u32 %v5349, 4294901760
          %5376 = vmatpush1.msra.mxu0 %v5375
          %5377 = vmatprep.subr.mxu0 0.0
          %v5378 = vand.u32 %v5348, 4294901760
          %5379 = vmatpush1.msra.mxu0 %v5378
          %5380 = vmatprep.subr.mxu0 0.0
          %v5381 = vand.u32 %v5347, 4294901760
          %5382 = vmatpush1.msra.mxu0 %v5381
          %5383 = vmatprep.subr.mxu0 0.0
          %v5384 = vand.u32 %v5346, 4294901760
          %5385 = vmatpush1.msra.mxu0 %v5384
          %5386 = vmatprep.subr.mxu0 0.0
          %v5387 = vand.u32 %v5345, 4294901760
          %5388 = vmatpush1.msra.mxu0 %v5387
          %5389 = vmatprep.subr.mxu0 0.0
          %v5390 = vand.u32 %v5344, 4294901760
          %5391 = vmatpush1.msra.mxu0 %v5390
          %5392 = vmatprep.subr.mxu0 0.0
          %v5393 = vand.u32 %v5343, 4294901760
          %5394 = vmatpush1.msra.mxu0 %v5393
          %5395 = vmatprep.subr.mxu0 0.0
          %v5396 = vand.u32 %v5342, 4294901760
          %5397 = vmatpush1.msra.mxu0 %v5396
          %5398 = vmatprep.subr.mxu0 0.0
          %v5399 = vand.u32 %v5341, 4294901760
          %5400 = vmatpush1.msra.mxu0 %v5399
          %5401 = vmatprep.subr.mxu0 0.0
          %v5402 = vand.u32 %v5340, 4294901760
          %5403 = vmatpush1.msra.mxu0 %v5402
          %5404 = vmatprep.subr.mxu0 0.0
          %5405 = vmatpush2.msra.mxu0 0.0
          %5406 = vmatprep.subr.mxu0 0.0
          %5407 = vmatpush2.msra.mxu0 0.0
          %5408 = vmatprep.subr.mxu0 0.0
          %5409 = vmatpush2.msra.mxu0 0.0
          %5410 = vmatprep.subr.mxu0 0.0
          %5411 = vmatpush2.msra.mxu0 0.0
          %5412 = vmatprep.subr.mxu0 0.0
          %5413 = vmatpush2.msra.mxu0 0.0
          %5414 = vmatprep.subr.mxu0 0.0
          %5415 = vmatpush2.msra.mxu0 0.0
          %5416 = vmatprep.subr.mxu0 0.0
          %5417 = vmatpush2.msra.mxu0 0.0
          %5418 = vmatprep.subr.mxu0 0.0
          %5419 = vmatpush2.msra.mxu0 0.0
          %5420 = vmatprep.subr.mxu0 0.0
          %5421 = vmatpush2.msra.mxu0 0.0
          %5422 = vmatprep.subr.mxu0 0.0
          %5423 = vmatpush2.msra.mxu0 0.0
          %5424 = vmatprep.subr.mxu0 0.0
          %5425 = vmatpush2.msra.mxu0 0.0
          %5426 = vmatprep.subr.mxu0 0.0
          %5427 = vmatpush2.msra.mxu0 0.0
          %5428 = vmatprep.subr.mxu0 0.0
          %5429 = vmatpush2.msra.mxu0 0.0
          %5430 = vmatprep.subr.mxu0 0.0
          %5431 = vmatpush2.msra.mxu0 0.0
          %5432 = vmatprep.subr.mxu0 0.0
          %5433 = vmatpush2.msra.mxu0 0.0
          %5434 = vmatprep.subr.mxu0 0.0
          %5435 = vmatpush2.msra.mxu0 0.0
          %5436 = vmatprep.mubr.f32.mxu0 0.0
          %v5437 = vand.u32 %v313, 4294901760
          %v5438 = vsub.f32 %v313, %v5437
          %v5439 = vand.u32 %v5438, 4294901760
          %v5440 = vsub.f32 %v5438, %v5439
          %v5441 = vand.u32 %v5440, 4294901760
          %5442 = vmatmul.mubr.f32.gmra.mxu0 %v5441
          %v5443 = vpop.f32.mrf.mxu0
          %v5444 = vadd.f32 0.0, %v5443
          %v5445 = vpop.f32.mrf.mxu0
          %5446 = vmatprep.mubr.f32.mxu0 0.0
          %v5447 = vand.u32 %v314, 4294901760
          %v5448 = vsub.f32 %v314, %v5447
          %v5449 = vand.u32 %v5448, 4294901760
          %v5450 = vsub.f32 %v5448, %v5449
          %v5451 = vand.u32 %v5450, 4294901760
          %5452 = vmatmul.mubr.f32.gmra.mxu0 %v5451
          %v5453 = vpop.f32.mrf.mxu0
          %v5454 = vadd.f32 0.0, %v5453
          %v5455 = vpop.f32.mrf.mxu0
          %5456 = vmatprep.mubr.f32.mxu0 0.0
          %v5457 = vand.u32 %v315, 4294901760
          %v5458 = vsub.f32 %v315, %v5457
          %v5459 = vand.u32 %v5458, 4294901760
          %v5460 = vsub.f32 %v5458, %v5459
          %v5461 = vand.u32 %v5460, 4294901760
          %5462 = vmatmul.mubr.f32.gmra.mxu0 %v5461
          %v5463 = vpop.f32.mrf.mxu0
          %v5464 = vadd.f32 0.0, %v5463
          %v5465 = vpop.f32.mrf.mxu0
          %5466 = vmatprep.mubr.f32.mxu0 0.0
          %v5467 = vand.u32 %v316, 4294901760
          %v5468 = vsub.f32 %v316, %v5467
          %v5469 = vand.u32 %v5468, 4294901760
          %v5470 = vsub.f32 %v5468, %v5469
          %v5471 = vand.u32 %v5470, 4294901760
          %5472 = vmatmul.mubr.f32.gmra.mxu0 %v5471
          %v5473 = vpop.f32.mrf.mxu0
          %v5474 = vadd.f32 0.0, %v5473
          %v5475 = vpop.f32.mrf.mxu0
          %5476 = vmatprep.mubr.f32.mxu0 0.0
          %v5477 = vand.u32 %v317, 4294901760
          %v5478 = vsub.f32 %v317, %v5477
          %v5479 = vand.u32 %v5478, 4294901760
          %v5480 = vsub.f32 %v5478, %v5479
          %v5481 = vand.u32 %v5480, 4294901760
          %5482 = vmatmul.mubr.f32.gmra.mxu0 %v5481
          %v5483 = vpop.f32.mrf.mxu0
          %v5484 = vadd.f32 0.0, %v5483
          %v5485 = vpop.f32.mrf.mxu0
          %5486 = vdwg.mxu0
          %5487 = vmatprep.subr.mxu0 0.0
          %v5488 = vand.u32 %v5355, 4294901760
          %v5489 = vsub.f32 %v5355, %v5488
          %v5490 = vand.u32 %v5489, 4294901760
          %v5491 = vsub.f32 %v5489, %v5490
          %v5492 = vand.u32 %v5491, 4294901760
          %5493 = vmatpush1.msra.mxu0 %v5492
          %5494 = vmatprep.subr.mxu0 0.0
          %v5495 = vand.u32 %v5354, 4294901760
          %v5496 = vsub.f32 %v5354, %v5495
          %v5497 = vand.u32 %v5496, 4294901760
          %v5498 = vsub.f32 %v5496, %v5497
          %v5499 = vand.u32 %v5498, 4294901760
          %5500 = vmatpush1.msra.mxu0 %v5499
          %5501 = vmatprep.subr.mxu0 0.0
          %v5502 = vand.u32 %v5353, 4294901760
          %v5503 = vsub.f32 %v5353, %v5502
          %v5504 = vand.u32 %v5503, 4294901760
          %v5505 = vsub.f32 %v5503, %v5504
          %v5506 = vand.u32 %v5505, 4294901760
          %5507 = vmatpush1.msra.mxu0 %v5506
          %5508 = vmatprep.subr.mxu0 0.0
          %v5509 = vand.u32 %v5352, 4294901760
          %v5510 = vsub.f32 %v5352, %v5509
          %v5511 = vand.u32 %v5510, 4294901760
          %v5512 = vsub.f32 %v5510, %v5511
          %v5513 = vand.u32 %v5512, 4294901760
          %5514 = vmatpush1.msra.mxu0 %v5513
          %5515 = vmatprep.subr.mxu0 0.0
          %v5516 = vand.u32 %v5351, 4294901760
          %v5517 = vsub.f32 %v5351, %v5516
          %v5518 = vand.u32 %v5517, 4294901760
          %v5519 = vsub.f32 %v5517, %v5518
          %v5520 = vand.u32 %v5519, 4294901760
          %5521 = vmatpush1.msra.mxu0 %v5520
          %5522 = vmatprep.subr.mxu0 0.0
          %v5523 = vand.u32 %v5350, 4294901760
          %v5524 = vsub.f32 %v5350, %v5523
          %v5525 = vand.u32 %v5524, 4294901760
          %v5526 = vsub.f32 %v5524, %v5525
          %v5527 = vand.u32 %v5526, 4294901760
          %5528 = vmatpush1.msra.mxu0 %v5527
          %5529 = vmatprep.subr.mxu0 0.0
          %v5530 = vand.u32 %v5349, 4294901760
          %v5531 = vsub.f32 %v5349, %v5530
          %v5532 = vand.u32 %v5531, 4294901760
          %v5533 = vsub.f32 %v5531, %v5532
          %v5534 = vand.u32 %v5533, 4294901760
          %5535 = vmatpush1.msra.mxu0 %v5534
          %5536 = vmatprep.subr.mxu0 0.0
          %v5537 = vand.u32 %v5348, 4294901760
          %v5538 = vsub.f32 %v5348, %v5537
          %v5539 = vand.u32 %v5538, 4294901760
          %v5540 = vsub.f32 %v5538, %v5539
          %v5541 = vand.u32 %v5540, 4294901760
          %5542 = vmatpush1.msra.mxu0 %v5541
          %5543 = vmatprep.subr.mxu0 0.0
          %v5544 = vand.u32 %v5347, 4294901760
          %v5545 = vsub.f32 %v5347, %v5544
          %v5546 = vand.u32 %v5545, 4294901760
          %v5547 = vsub.f32 %v5545, %v5546
          %v5548 = vand.u32 %v5547, 4294901760
          %5549 = vmatpush1.msra.mxu0 %v5548
          %5550 = vmatprep.subr.mxu0 0.0
          %v5551 = vand.u32 %v5346, 4294901760
          %v5552 = vsub.f32 %v5346, %v5551
          %v5553 = vand.u32 %v5552, 4294901760
          %v5554 = vsub.f32 %v5552, %v5553
          %v5555 = vand.u32 %v5554, 4294901760
          %5556 = vmatpush1.msra.mxu0 %v5555
          %5557 = vmatprep.subr.mxu0 0.0
          %v5558 = vand.u32 %v5345, 4294901760
          %v5559 = vsub.f32 %v5345, %v5558
          %v5560 = vand.u32 %v5559, 4294901760
          %v5561 = vsub.f32 %v5559, %v5560
          %v5562 = vand.u32 %v5561, 4294901760
          %5563 = vmatpush1.msra.mxu0 %v5562
          %5564 = vmatprep.subr.mxu0 0.0
          %v5565 = vand.u32 %v5344, 4294901760
          %v5566 = vsub.f32 %v5344, %v5565
          %v5567 = vand.u32 %v5566, 4294901760
          %v5568 = vsub.f32 %v5566, %v5567
          %v5569 = vand.u32 %v5568, 4294901760
          %5570 = vmatpush1.msra.mxu0 %v5569
          %5571 = vmatprep.subr.mxu0 0.0
          %v5572 = vand.u32 %v5343, 4294901760
          %v5573 = vsub.f32 %v5343, %v5572
          %v5574 = vand.u32 %v5573, 4294901760
          %v5575 = vsub.f32 %v5573, %v5574
          %v5576 = vand.u32 %v5575, 4294901760
          %5577 = vmatpush1.msra.mxu0 %v5576
          %5578 = vmatprep.subr.mxu0 0.0
          %v5579 = vand.u32 %v5342, 4294901760
          %v5580 = vsub.f32 %v5342, %v5579
          %v5581 = vand.u32 %v5580, 4294901760
          %v5582 = vsub.f32 %v5580, %v5581
          %v5583 = vand.u32 %v5582, 4294901760
          %5584 = vmatpush1.msra.mxu0 %v5583
          %5585 = vmatprep.subr.mxu0 0.0
          %v5586 = vand.u32 %v5341, 4294901760
          %v5587 = vsub.f32 %v5341, %v5586
          %v5588 = vand.u32 %v5587, 4294901760
          %v5589 = vsub.f32 %v5587, %v5588
          %v5590 = vand.u32 %v5589, 4294901760
          %5591 = vmatpush1.msra.mxu0 %v5590
          %5592 = vmatprep.subr.mxu0 0.0
          %v5593 = vand.u32 %v5340, 4294901760
          %v5594 = vsub.f32 %v5340, %v5593
          %v5595 = vand.u32 %v5594, 4294901760
          %v5596 = vsub.f32 %v5594, %v5595
          %v5597 = vand.u32 %v5596, 4294901760
          %5598 = vmatpush1.msra.mxu0 %v5597
          %5599 = vmatprep.subr.mxu0 0.0
          %5600 = vmatpush2.msra.mxu0 0.0
          %5601 = vmatprep.subr.mxu0 0.0
          %5602 = vmatpush2.msra.mxu0 0.0
          %5603 = vmatprep.subr.mxu0 0.0
          %5604 = vmatpush2.msra.mxu0 0.0
          %5605 = vmatprep.subr.mxu0 0.0
          %5606 = vmatpush2.msra.mxu0 0.0
          %5607 = vmatprep.subr.mxu0 0.0
          %5608 = vmatpush2.msra.mxu0 0.0
          %5609 = vmatprep.subr.mxu0 0.0
          %5610 = vmatpush2.msra.mxu0 0.0
          %5611 = vmatprep.subr.mxu0 0.0
          %5612 = vmatpush2.msra.mxu0 0.0
          %5613 = vmatprep.subr.mxu0 0.0
          %5614 = vmatpush2.msra.mxu0 0.0
          %5615 = vmatprep.subr.mxu0 0.0
          %5616 = vmatpush2.msra.mxu0 0.0
          %5617 = vmatprep.subr.mxu0 0.0
          %5618 = vmatpush2.msra.mxu0 0.0
          %5619 = vmatprep.subr.mxu0 0.0
          %5620 = vmatpush2.msra.mxu0 0.0
          %5621 = vmatprep.subr.mxu0 0.0
          %5622 = vmatpush2.msra.mxu0 0.0
          %5623 = vmatprep.subr.mxu0 0.0
          %5624 = vmatpush2.msra.mxu0 0.0
          %5625 = vmatprep.subr.mxu0 0.0
          %5626 = vmatpush2.msra.mxu0 0.0
          %5627 = vmatprep.subr.mxu0 0.0
          %5628 = vmatpush2.msra.mxu0 0.0
          %5629 = vmatprep.subr.mxu0 0.0
          %5630 = vmatpush2.msra.mxu0 0.0
          %5631 = vmatprep.mubr.f32.mxu0 0.0
          %v5632 = vand.u32 %v313, 4294901760
          %5633 = vmatmul.mubr.f32.gmra.mxu0 %v5632
          %v5634 = vpop.f32.mrf.mxu0
          %v5635 = vadd.f32 %v5444, %v5634
          %v5636 = vpop.f32.mrf.mxu0
          %5637 = vmatprep.mubr.f32.mxu0 0.0
          %v5638 = vand.u32 %v314, 4294901760
          %5639 = vmatmul.mubr.f32.gmra.mxu0 %v5638
          %v5640 = vpop.f32.mrf.mxu0
          %v5641 = vadd.f32 %v5454, %v5640
          %v5642 = vpop.f32.mrf.mxu0
          %5643 = vmatprep.mubr.f32.mxu0 0.0
          %v5644 = vand.u32 %v315, 4294901760
          %5645 = vmatmul.mubr.f32.gmra.mxu0 %v5644
          %v5646 = vpop.f32.mrf.mxu0
          %v5647 = vadd.f32 %v5464, %v5646
          %v5648 = vpop.f32.mrf.mxu0
          %5649 = vmatprep.mubr.f32.mxu0 0.0
          %v5650 = vand.u32 %v316, 4294901760
          %5651 = vmatmul.mubr.f32.gmra.mxu0 %v5650
          %v5652 = vpop.f32.mrf.mxu0
          %v5653 = vadd.f32 %v5474, %v5652
          %v5654 = vpop.f32.mrf.mxu0
          %5655 = vmatprep.mubr.f32.mxu0 0.0
          %v5656 = vand.u32 %v317, 4294901760
          %5657 = vmatmul.mubr.f32.gmra.mxu0 %v5656
          %v5658 = vpop.f32.mrf.mxu0
          %v5659 = vadd.f32 %v5484, %v5658
          %v5660 = vpop.f32.mrf.mxu0
          %5661 = vdwg.mxu0
          %5662 = vmatprep.subr.mxu0 0.0
          %v5663 = vand.u32 %v5355, 4294901760
          %v5664 = vsub.f32 %v5355, %v5663
          %5665 = vmatpush1.msra.mxu0 %v5664
          %5666 = vmatprep.subr.mxu0 0.0
          %v5667 = vand.u32 %v5354, 4294901760
          %v5668 = vsub.f32 %v5354, %v5667
          %5669 = vmatpush1.msra.mxu0 %v5668
          %5670 = vmatprep.subr.mxu0 0.0
          %v5671 = vand.u32 %v5353, 4294901760
          %v5672 = vsub.f32 %v5353, %v5671
          %5673 = vmatpush1.msra.mxu0 %v5672
          %5674 = vmatprep.subr.mxu0 0.0
          %v5675 = vand.u32 %v5352, 4294901760
          %v5676 = vsub.f32 %v5352, %v5675
          %5677 = vmatpush1.msra.mxu0 %v5676
          %5678 = vmatprep.subr.mxu0 0.0
          %v5679 = vand.u32 %v5351, 4294901760
          %v5680 = vsub.f32 %v5351, %v5679
          %5681 = vmatpush1.msra.mxu0 %v5680
          %5682 = vmatprep.subr.mxu0 0.0
          %v5683 = vand.u32 %v5350, 4294901760
          %v5684 = vsub.f32 %v5350, %v5683
          %5685 = vmatpush1.msra.mxu0 %v5684
          %5686 = vmatprep.subr.mxu0 0.0
          %v5687 = vand.u32 %v5349, 4294901760
          %v5688 = vsub.f32 %v5349, %v5687
          %5689 = vmatpush1.msra.mxu0 %v5688
          %5690 = vmatprep.subr.mxu0 0.0
          %v5691 = vand.u32 %v5348, 4294901760
          %v5692 = vsub.f32 %v5348, %v5691
          %5693 = vmatpush1.msra.mxu0 %v5692
          %5694 = vmatprep.subr.mxu0 0.0
          %v5695 = vand.u32 %v5347, 4294901760
          %v5696 = vsub.f32 %v5347, %v5695
          %5697 = vmatpush1.msra.mxu0 %v5696
          %5698 = vmatprep.subr.mxu0 0.0
          %v5699 = vand.u32 %v5346, 4294901760
          %v5700 = vsub.f32 %v5346, %v5699
          %5701 = vmatpush1.msra.mxu0 %v5700
          %5702 = vmatprep.subr.mxu0 0.0
          %v5703 = vand.u32 %v5345, 4294901760
          %v5704 = vsub.f32 %v5345, %v5703
          %5705 = vmatpush1.msra.mxu0 %v5704
          %5706 = vmatprep.subr.mxu0 0.0
          %v5707 = vand.u32 %v5344, 4294901760
          %v5708 = vsub.f32 %v5344, %v5707
          %5709 = vmatpush1.msra.mxu0 %v5708
          %5710 = vmatprep.subr.mxu0 0.0
          %v5711 = vand.u32 %v5343, 4294901760
          %v5712 = vsub.f32 %v5343, %v5711
          %5713 = vmatpush1.msra.mxu0 %v5712
          %5714 = vmatprep.subr.mxu0 0.0
          %v5715 = vand.u32 %v5342, 4294901760
          %v5716 = vsub.f32 %v5342, %v5715
          %5717 = vmatpush1.msra.mxu0 %v5716
          %5718 = vmatprep.subr.mxu0 0.0
          %v5719 = vand.u32 %v5341, 4294901760
          %v5720 = vsub.f32 %v5341, %v5719
          %5721 = vmatpush1.msra.mxu0 %v5720
          %5722 = vmatprep.subr.mxu0 0.0
          %v5723 = vand.u32 %v5340, 4294901760
          %v5724 = vsub.f32 %v5340, %v5723
          %5725 = vmatpush1.msra.mxu0 %v5724
          %5726 = vmatprep.subr.mxu0 0.0
          %5727 = vmatpush2.msra.mxu0 0.0
          %5728 = vmatprep.subr.mxu0 0.0
          %5729 = vmatpush2.msra.mxu0 0.0
          %5730 = vmatprep.subr.mxu0 0.0
          %5731 = vmatpush2.msra.mxu0 0.0
          %5732 = vmatprep.subr.mxu0 0.0
          %5733 = vmatpush2.msra.mxu0 0.0
          %5734 = vmatprep.subr.mxu0 0.0
          %5735 = vmatpush2.msra.mxu0 0.0
          %5736 = vmatprep.subr.mxu0 0.0
          %5737 = vmatpush2.msra.mxu0 0.0
          %5738 = vmatprep.subr.mxu0 0.0
          %5739 = vmatpush2.msra.mxu0 0.0
          %5740 = vmatprep.subr.mxu0 0.0
          %5741 = vmatpush2.msra.mxu0 0.0
          %5742 = vmatprep.subr.mxu0 0.0
          %5743 = vmatpush2.msra.mxu0 0.0
          %5744 = vmatprep.subr.mxu0 0.0
          %5745 = vmatpush2.msra.mxu0 0.0
          %5746 = vmatprep.subr.mxu0 0.0
          %5747 = vmatpush2.msra.mxu0 0.0
          %5748 = vmatprep.subr.mxu0 0.0
          %5749 = vmatpush2.msra.mxu0 0.0
          %5750 = vmatprep.subr.mxu0 0.0
          %5751 = vmatpush2.msra.mxu0 0.0
          %5752 = vmatprep.subr.mxu0 0.0
          %5753 = vmatpush2.msra.mxu0 0.0
          %5754 = vmatprep.subr.mxu0 0.0
          %5755 = vmatpush2.msra.mxu0 0.0
          %5756 = vmatprep.subr.mxu0 0.0
          %5757 = vmatpush2.msra.mxu0 0.0
          %5758 = vmatprep.mubr.f32.mxu0 0.0
          %v5759 = vand.u32 %v313, 4294901760
          %v5760 = vsub.f32 %v313, %v5759
          %5761 = vmatmul.mubr.f32.gmra.mxu0 %v5760
          %v5762 = vpop.f32.mrf.mxu0
          %v5763 = vadd.f32 %v5635, %v5762
          %v5764 = vpop.f32.mrf.mxu0
          %5765 = vmatprep.mubr.f32.mxu0 0.0
          %v5766 = vand.u32 %v314, 4294901760
          %v5767 = vsub.f32 %v314, %v5766
          %5768 = vmatmul.mubr.f32.gmra.mxu0 %v5767
          %v5769 = vpop.f32.mrf.mxu0
          %v5770 = vadd.f32 %v5641, %v5769
          %v5771 = vpop.f32.mrf.mxu0
          %5772 = vmatprep.mubr.f32.mxu0 0.0
          %v5773 = vand.u32 %v315, 4294901760
          %v5774 = vsub.f32 %v315, %v5773
          %5775 = vmatmul.mubr.f32.gmra.mxu0 %v5774
          %v5776 = vpop.f32.mrf.mxu0
          %v5777 = vadd.f32 %v5647, %v5776
          %v5778 = vpop.f32.mrf.mxu0
          %5779 = vmatprep.mubr.f32.mxu0 0.0
          %v5780 = vand.u32 %v316, 4294901760
          %v5781 = vsub.f32 %v316, %v5780
          %5782 = vmatmul.mubr.f32.gmra.mxu0 %v5781
          %v5783 = vpop.f32.mrf.mxu0
          %v5784 = vadd.f32 %v5653, %v5783
          %v5785 = vpop.f32.mrf.mxu0
          %5786 = vmatprep.mubr.f32.mxu0 0.0
          %v5787 = vand.u32 %v317, 4294901760
          %v5788 = vsub.f32 %v317, %v5787
          %5789 = vmatmul.mubr.f32.gmra.mxu0 %v5788
          %v5790 = vpop.f32.mrf.mxu0
          %v5791 = vadd.f32 %v5659, %v5790
          %v5792 = vpop.f32.mrf.mxu0
          %5793 = vdwg.mxu0
          %5794 = vmatprep.subr.mxu0 0.0
          %v5795 = vand.u32 %v5355, 4294901760
          %5796 = vmatpush1.msra.mxu0 %v5795
          %5797 = vmatprep.subr.mxu0 0.0
          %v5798 = vand.u32 %v5354, 4294901760
          %5799 = vmatpush1.msra.mxu0 %v5798
          %5800 = vmatprep.subr.mxu0 0.0
          %v5801 = vand.u32 %v5353, 4294901760
          %5802 = vmatpush1.msra.mxu0 %v5801
          %5803 = vmatprep.subr.mxu0 0.0
          %v5804 = vand.u32 %v5352, 4294901760
          %5805 = vmatpush1.msra.mxu0 %v5804
          %5806 = vmatprep.subr.mxu0 0.0
          %v5807 = vand.u32 %v5351, 4294901760
          %5808 = vmatpush1.msra.mxu0 %v5807
          %5809 = vmatprep.subr.mxu0 0.0
          %v5810 = vand.u32 %v5350, 4294901760
          %5811 = vmatpush1.msra.mxu0 %v5810
          %5812 = vmatprep.subr.mxu0 0.0
          %v5813 = vand.u32 %v5349, 4294901760
          %5814 = vmatpush1.msra.mxu0 %v5813
          %5815 = vmatprep.subr.mxu0 0.0
          %v5816 = vand.u32 %v5348, 4294901760
          %5817 = vmatpush1.msra.mxu0 %v5816
          %5818 = vmatprep.subr.mxu0 0.0
          %v5819 = vand.u32 %v5347, 4294901760
          %5820 = vmatpush1.msra.mxu0 %v5819
          %5821 = vmatprep.subr.mxu0 0.0
          %v5822 = vand.u32 %v5346, 4294901760
          %5823 = vmatpush1.msra.mxu0 %v5822
          %5824 = vmatprep.subr.mxu0 0.0
          %v5825 = vand.u32 %v5345, 4294901760
          %5826 = vmatpush1.msra.mxu0 %v5825
          %5827 = vmatprep.subr.mxu0 0.0
          %v5828 = vand.u32 %v5344, 4294901760
          %5829 = vmatpush1.msra.mxu0 %v5828
          %5830 = vmatprep.subr.mxu0 0.0
          %v5831 = vand.u32 %v5343, 4294901760
          %5832 = vmatpush1.msra.mxu0 %v5831
          %5833 = vmatprep.subr.mxu0 0.0
          %v5834 = vand.u32 %v5342, 4294901760
          %5835 = vmatpush1.msra.mxu0 %v5834
          %5836 = vmatprep.subr.mxu0 0.0
          %v5837 = vand.u32 %v5341, 4294901760
          %5838 = vmatpush1.msra.mxu0 %v5837
          %5839 = vmatprep.subr.mxu0 0.0
          %v5840 = vand.u32 %v5340, 4294901760
          %5841 = vmatpush1.msra.mxu0 %v5840
          %5842 = vmatprep.subr.mxu0 0.0
          %5843 = vmatpush2.msra.mxu0 0.0
          %5844 = vmatprep.subr.mxu0 0.0
          %5845 = vmatpush2.msra.mxu0 0.0
          %5846 = vmatprep.subr.mxu0 0.0
          %5847 = vmatpush2.msra.mxu0 0.0
          %5848 = vmatprep.subr.mxu0 0.0
          %5849 = vmatpush2.msra.mxu0 0.0
          %5850 = vmatprep.subr.mxu0 0.0
          %5851 = vmatpush2.msra.mxu0 0.0
          %5852 = vmatprep.subr.mxu0 0.0
          %5853 = vmatpush2.msra.mxu0 0.0
          %5854 = vmatprep.subr.mxu0 0.0
          %5855 = vmatpush2.msra.mxu0 0.0
          %5856 = vmatprep.subr.mxu0 0.0
          %5857 = vmatpush2.msra.mxu0 0.0
          %5858 = vmatprep.subr.mxu0 0.0
          %5859 = vmatpush2.msra.mxu0 0.0
          %5860 = vmatprep.subr.mxu0 0.0
          %5861 = vmatpush2.msra.mxu0 0.0
          %5862 = vmatprep.subr.mxu0 0.0
          %5863 = vmatpush2.msra.mxu0 0.0
          %5864 = vmatprep.subr.mxu0 0.0
          %5865 = vmatpush2.msra.mxu0 0.0
          %5866 = vmatprep.subr.mxu0 0.0
          %5867 = vmatpush2.msra.mxu0 0.0
          %5868 = vmatprep.subr.mxu0 0.0
          %5869 = vmatpush2.msra.mxu0 0.0
          %5870 = vmatprep.subr.mxu0 0.0
          %5871 = vmatpush2.msra.mxu0 0.0
          %5872 = vmatprep.subr.mxu0 0.0
          %5873 = vmatpush2.msra.mxu0 0.0
          %5874 = vmatprep.mubr.f32.mxu0 0.0
          %v5875 = vand.u32 %v313, 4294901760
          %v5876 = vsub.f32 %v313, %v5875
          %v5877 = vand.u32 %v5876, 4294901760
          %5878 = vmatmul.mubr.f32.gmra.mxu0 %v5877
          %v5879 = vpop.f32.mrf.mxu0
          %v5880 = vadd.f32 %v5763, %v5879
          %v5881 = vpop.f32.mrf.mxu0
          %5882 = vmatprep.mubr.f32.mxu0 0.0
          %v5883 = vand.u32 %v314, 4294901760
          %v5884 = vsub.f32 %v314, %v5883
          %v5885 = vand.u32 %v5884, 4294901760
          %5886 = vmatmul.mubr.f32.gmra.mxu0 %v5885
          %v5887 = vpop.f32.mrf.mxu0
          %v5888 = vadd.f32 %v5770, %v5887
          %v5889 = vpop.f32.mrf.mxu0
          %5890 = vmatprep.mubr.f32.mxu0 0.0
          %v5891 = vand.u32 %v315, 4294901760
          %v5892 = vsub.f32 %v315, %v5891
          %v5893 = vand.u32 %v5892, 4294901760
          %5894 = vmatmul.mubr.f32.gmra.mxu0 %v5893
          %v5895 = vpop.f32.mrf.mxu0
          %v5896 = vadd.f32 %v5777, %v5895
          %v5897 = vpop.f32.mrf.mxu0
          %5898 = vmatprep.mubr.f32.mxu0 0.0
          %v5899 = vand.u32 %v316, 4294901760
          %v5900 = vsub.f32 %v316, %v5899
          %v5901 = vand.u32 %v5900, 4294901760
          %5902 = vmatmul.mubr.f32.gmra.mxu0 %v5901
          %v5903 = vpop.f32.mrf.mxu0
          %v5904 = vadd.f32 %v5784, %v5903
          %v5905 = vpop.f32.mrf.mxu0
          %5906 = vmatprep.mubr.f32.mxu0 0.0
          %v5907 = vand.u32 %v317, 4294901760
          %v5908 = vsub.f32 %v317, %v5907
          %v5909 = vand.u32 %v5908, 4294901760
          %5910 = vmatmul.mubr.f32.gmra.mxu0 %v5909
          %v5911 = vpop.f32.mrf.mxu0
          %v5912 = vadd.f32 %v5791, %v5911
          %v5913 = vpop.f32.mrf.mxu0
          %5914 = vdwg.mxu0
          %5915 = vmatprep.subr.mxu0 0.0
          %v5916 = vand.u32 %v5355, 4294901760
          %v5917 = vsub.f32 %v5355, %v5916
          %v5918 = vand.u32 %v5917, 4294901760
          %5919 = vmatpush1.msra.mxu0 %v5918
          %5920 = vmatprep.subr.mxu0 0.0
          %v5921 = vand.u32 %v5354, 4294901760
          %v5922 = vsub.f32 %v5354, %v5921
          %v5923 = vand.u32 %v5922, 4294901760
          %5924 = vmatpush1.msra.mxu0 %v5923
          %5925 = vmatprep.subr.mxu0 0.0
          %v5926 = vand.u32 %v5353, 4294901760
          %v5927 = vsub.f32 %v5353, %v5926
          %v5928 = vand.u32 %v5927, 4294901760
          %5929 = vmatpush1.msra.mxu0 %v5928
          %5930 = vmatprep.subr.mxu0 0.0
          %v5931 = vand.u32 %v5352, 4294901760
          %v5932 = vsub.f32 %v5352, %v5931
          %v5933 = vand.u32 %v5932, 4294901760
          %5934 = vmatpush1.msra.mxu0 %v5933
          %5935 = vmatprep.subr.mxu0 0.0
          %v5936 = vand.u32 %v5351, 4294901760
          %v5937 = vsub.f32 %v5351, %v5936
          %v5938 = vand.u32 %v5937, 4294901760
          %5939 = vmatpush1.msra.mxu0 %v5938
          %5940 = vmatprep.subr.mxu0 0.0
          %v5941 = vand.u32 %v5350, 4294901760
          %v5942 = vsub.f32 %v5350, %v5941
          %v5943 = vand.u32 %v5942, 4294901760
          %5944 = vmatpush1.msra.mxu0 %v5943
          %5945 = vmatprep.subr.mxu0 0.0
          %v5946 = vand.u32 %v5349, 4294901760
          %v5947 = vsub.f32 %v5349, %v5946
          %v5948 = vand.u32 %v5947, 4294901760
          %5949 = vmatpush1.msra.mxu0 %v5948
          %5950 = vmatprep.subr.mxu0 0.0
          %v5951 = vand.u32 %v5348, 4294901760
          %v5952 = vsub.f32 %v5348, %v5951
          %v5953 = vand.u32 %v5952, 4294901760
          %5954 = vmatpush1.msra.mxu0 %v5953
          %5955 = vmatprep.subr.mxu0 0.0
          %v5956 = vand.u32 %v5347, 4294901760
          %v5957 = vsub.f32 %v5347, %v5956
          %v5958 = vand.u32 %v5957, 4294901760
          %5959 = vmatpush1.msra.mxu0 %v5958
          %5960 = vmatprep.subr.mxu0 0.0
          %v5961 = vand.u32 %v5346, 4294901760
          %v5962 = vsub.f32 %v5346, %v5961
          %v5963 = vand.u32 %v5962, 4294901760
          %5964 = vmatpush1.msra.mxu0 %v5963
          %5965 = vmatprep.subr.mxu0 0.0
          %v5966 = vand.u32 %v5345, 4294901760
          %v5967 = vsub.f32 %v5345, %v5966
          %v5968 = vand.u32 %v5967, 4294901760
          %5969 = vmatpush1.msra.mxu0 %v5968
          %5970 = vmatprep.subr.mxu0 0.0
          %v5971 = vand.u32 %v5344, 4294901760
          %v5972 = vsub.f32 %v5344, %v5971
          %v5973 = vand.u32 %v5972, 4294901760
          %5974 = vmatpush1.msra.mxu0 %v5973
          %5975 = vmatprep.subr.mxu0 0.0
          %v5976 = vand.u32 %v5343, 4294901760
          %v5977 = vsub.f32 %v5343, %v5976
          %v5978 = vand.u32 %v5977, 4294901760
          %5979 = vmatpush1.msra.mxu0 %v5978
          %5980 = vmatprep.subr.mxu0 0.0
          %v5981 = vand.u32 %v5342, 4294901760
          %v5982 = vsub.f32 %v5342, %v5981
          %v5983 = vand.u32 %v5982, 4294901760
          %5984 = vmatpush1.msra.mxu0 %v5983
          %5985 = vmatprep.subr.mxu0 0.0
          %v5986 = vand.u32 %v5341, 4294901760
          %v5987 = vsub.f32 %v5341, %v5986
          %v5988 = vand.u32 %v5987, 4294901760
          %5989 = vmatpush1.msra.mxu0 %v5988
          %5990 = vmatprep.subr.mxu0 0.0
          %v5991 = vand.u32 %v5340, 4294901760
          %v5992 = vsub.f32 %v5340, %v5991
          %v5993 = vand.u32 %v5992, 4294901760
          %5994 = vmatpush1.msra.mxu0 %v5993
          %5995 = vmatprep.subr.mxu0 0.0
          %5996 = vmatpush2.msra.mxu0 0.0
          %5997 = vmatprep.subr.mxu0 0.0
          %5998 = vmatpush2.msra.mxu0 0.0
          %5999 = vmatprep.subr.mxu0 0.0
          %6000 = vmatpush2.msra.mxu0 0.0
          %6001 = vmatprep.subr.mxu0 0.0
          %6002 = vmatpush2.msra.mxu0 0.0
          %6003 = vmatprep.subr.mxu0 0.0
          %6004 = vmatpush2.msra.mxu0 0.0
          %6005 = vmatprep.subr.mxu0 0.0
          %6006 = vmatpush2.msra.mxu0 0.0
          %6007 = vmatprep.subr.mxu0 0.0
          %6008 = vmatpush2.msra.mxu0 0.0
          %6009 = vmatprep.subr.mxu0 0.0
          %6010 = vmatpush2.msra.mxu0 0.0
          %6011 = vmatprep.subr.mxu0 0.0
          %6012 = vmatpush2.msra.mxu0 0.0
          %6013 = vmatprep.subr.mxu0 0.0
          %6014 = vmatpush2.msra.mxu0 0.0
          %6015 = vmatprep.subr.mxu0 0.0
          %6016 = vmatpush2.msra.mxu0 0.0
          %6017 = vmatprep.subr.mxu0 0.0
          %6018 = vmatpush2.msra.mxu0 0.0
          %6019 = vmatprep.subr.mxu0 0.0
          %6020 = vmatpush2.msra.mxu0 0.0
          %6021 = vmatprep.subr.mxu0 0.0
          %6022 = vmatpush2.msra.mxu0 0.0
          %6023 = vmatprep.subr.mxu0 0.0
          %6024 = vmatpush2.msra.mxu0 0.0
          %6025 = vmatprep.subr.mxu0 0.0
          %6026 = vmatpush2.msra.mxu0 0.0
          %6027 = vmatprep.mubr.f32.mxu0 0.0
          %v6028 = vand.u32 %v313, 4294901760
          %6029 = vmatmul.mubr.f32.gmra.mxu0 %v6028
          %v6030 = vpop.f32.mrf.mxu0
          %v6031 = vadd.f32 %v5880, %v6030
          %v6032 = vpop.f32.mrf.mxu0
          %6033 = vmatprep.mubr.f32.mxu0 0.0
          %v6034 = vand.u32 %v314, 4294901760
          %6035 = vmatmul.mubr.f32.gmra.mxu0 %v6034
          %v6036 = vpop.f32.mrf.mxu0
          %v6037 = vadd.f32 %v5888, %v6036
          %v6038 = vpop.f32.mrf.mxu0
          %6039 = vmatprep.mubr.f32.mxu0 0.0
          %v6040 = vand.u32 %v315, 4294901760
          %6041 = vmatmul.mubr.f32.gmra.mxu0 %v6040
          %v6042 = vpop.f32.mrf.mxu0
          %v6043 = vadd.f32 %v5896, %v6042
          %v6044 = vpop.f32.mrf.mxu0
          %6045 = vmatprep.mubr.f32.mxu0 0.0
          %v6046 = vand.u32 %v316, 4294901760
          %6047 = vmatmul.mubr.f32.gmra.mxu0 %v6046
          %v6048 = vpop.f32.mrf.mxu0
          %v6049 = vadd.f32 %v5904, %v6048
          %v6050 = vpop.f32.mrf.mxu0
          %6051 = vmatprep.mubr.f32.mxu0 0.0
          %v6052 = vand.u32 %v317, 4294901760
          %6053 = vmatmul.mubr.f32.gmra.mxu0 %v6052
          %v6054 = vpop.f32.mrf.mxu0
          %v6055 = vadd.f32 %v5912, %v6054
          %v6056 = vpop.f32.mrf.mxu0
          %6057 = vdwg.mxu0
          %6058 = vmatprep.subr.mxu0 0.0
          %v6059 = vand.u32 %v5355, 4294901760
          %6060 = vmatpush1.msra.mxu0 %v6059
          %6061 = vmatprep.subr.mxu0 0.0
          %v6062 = vand.u32 %v5354, 4294901760
          %6063 = vmatpush1.msra.mxu0 %v6062
          %6064 = vmatprep.subr.mxu0 0.0
          %v6065 = vand.u32 %v5353, 4294901760
          %6066 = vmatpush1.msra.mxu0 %v6065
          %6067 = vmatprep.subr.mxu0 0.0
          %v6068 = vand.u32 %v5352, 4294901760
          %6069 = vmatpush1.msra.mxu0 %v6068
          %6070 = vmatprep.subr.mxu0 0.0
          %v6071 = vand.u32 %v5351, 4294901760
          %6072 = vmatpush1.msra.mxu0 %v6071
          %6073 = vmatprep.subr.mxu0 0.0
          %v6074 = vand.u32 %v5350, 4294901760
          %6075 = vmatpush1.msra.mxu0 %v6074
          %6076 = vmatprep.subr.mxu0 0.0
          %v6077 = vand.u32 %v5349, 4294901760
          %6078 = vmatpush1.msra.mxu0 %v6077
          %6079 = vmatprep.subr.mxu0 0.0
          %v6080 = vand.u32 %v5348, 4294901760
          %6081 = vmatpush1.msra.mxu0 %v6080
          %6082 = vmatprep.subr.mxu0 0.0
          %v6083 = vand.u32 %v5347, 4294901760
          %6084 = vmatpush1.msra.mxu0 %v6083
          %6085 = vmatprep.subr.mxu0 0.0
          %v6086 = vand.u32 %v5346, 4294901760
          %6087 = vmatpush1.msra.mxu0 %v6086
          %6088 = vmatprep.subr.mxu0 0.0
          %v6089 = vand.u32 %v5345, 4294901760
          %6090 = vmatpush1.msra.mxu0 %v6089
          %6091 = vmatprep.subr.mxu0 0.0
          %v6092 = vand.u32 %v5344, 4294901760
          %6093 = vmatpush1.msra.mxu0 %v6092
          %6094 = vmatprep.subr.mxu0 0.0
          %v6095 = vand.u32 %v5343, 4294901760
          %6096 = vmatpush1.msra.mxu0 %v6095
          %6097 = vmatprep.subr.mxu0 0.0
          %v6098 = vand.u32 %v5342, 4294901760
          %6099 = vmatpush1.msra.mxu0 %v6098
          %6100 = vmatprep.subr.mxu0 0.0
          %v6101 = vand.u32 %v5341, 4294901760
          %6102 = vmatpush1.msra.mxu0 %v6101
          %6103 = vmatprep.subr.mxu0 0.0
          %v6104 = vand.u32 %v5340, 4294901760
          %6105 = vmatpush1.msra.mxu0 %v6104
          %6106 = vmatprep.subr.mxu0 0.0
          %6107 = vmatpush2.msra.mxu0 0.0
          %6108 = vmatprep.subr.mxu0 0.0
          %6109 = vmatpush2.msra.mxu0 0.0
          %6110 = vmatprep.subr.mxu0 0.0
          %6111 = vmatpush2.msra.mxu0 0.0
          %6112 = vmatprep.subr.mxu0 0.0
          %6113 = vmatpush2.msra.mxu0 0.0
          %6114 = vmatprep.subr.mxu0 0.0
          %6115 = vmatpush2.msra.mxu0 0.0
          %6116 = vmatprep.subr.mxu0 0.0
          %6117 = vmatpush2.msra.mxu0 0.0
          %6118 = vmatprep.subr.mxu0 0.0
          %6119 = vmatpush2.msra.mxu0 0.0
          %6120 = vmatprep.subr.mxu0 0.0
          %6121 = vmatpush2.msra.mxu0 0.0
          %6122 = vmatprep.subr.mxu0 0.0
          %6123 = vmatpush2.msra.mxu0 0.0
          %6124 = vmatprep.subr.mxu0 0.0
          %6125 = vmatpush2.msra.mxu0 0.0
          %6126 = vmatprep.subr.mxu0 0.0
          %6127 = vmatpush2.msra.mxu0 0.0
          %6128 = vmatprep.subr.mxu0 0.0
          %6129 = vmatpush2.msra.mxu0 0.0
          %6130 = vmatprep.subr.mxu0 0.0
          %6131 = vmatpush2.msra.mxu0 0.0
          %6132 = vmatprep.subr.mxu0 0.0
          %6133 = vmatpush2.msra.mxu0 0.0
          %6134 = vmatprep.subr.mxu0 0.0
          %6135 = vmatpush2.msra.mxu0 0.0
          %6136 = vmatprep.subr.mxu0 0.0
          %6137 = vmatpush2.msra.mxu0 0.0
          %6138 = vmatprep.mubr.f32.mxu0 0.0
          %v6139 = vand.u32 %v313, 4294901760
          %6140 = vmatmul.mubr.f32.gmra.mxu0 %v6139
          %v6141 = vpop.f32.mrf.mxu0
          %v6142 = vadd.f32 %v6031, %v6141
          %v6143 = vpop.f32.mrf.mxu0
          %6144 = vmatprep.mubr.f32.mxu0 0.0
          %v6145 = vand.u32 %v314, 4294901760
          %6146 = vmatmul.mubr.f32.gmra.mxu0 %v6145
          %v6147 = vpop.f32.mrf.mxu0
          %v6148 = vadd.f32 %v6037, %v6147
          %v6149 = vpop.f32.mrf.mxu0
          %6150 = vmatprep.mubr.f32.mxu0 0.0
          %v6151 = vand.u32 %v315, 4294901760
          %6152 = vmatmul.mubr.f32.gmra.mxu0 %v6151
          %v6153 = vpop.f32.mrf.mxu0
          %v6154 = vadd.f32 %v6043, %v6153
          %v6155 = vpop.f32.mrf.mxu0
          %6156 = vmatprep.mubr.f32.mxu0 0.0
          %v6157 = vand.u32 %v316, 4294901760
          %6158 = vmatmul.mubr.f32.gmra.mxu0 %v6157
          %v6159 = vpop.f32.mrf.mxu0
          %v6160 = vadd.f32 %v6049, %v6159
          %v6161 = vpop.f32.mrf.mxu0
          %6162 = vmatprep.mubr.f32.mxu0 0.0
          %v6163 = vand.u32 %v317, 4294901760
          %6164 = vmatmul.mubr.f32.gmra.mxu0 %v6163
          %v6165 = vpop.f32.mrf.mxu0
          %v6166 = vadd.f32 %v6055, %v6165
          %v6167 = vpop.f32.mrf.mxu0
          %6168 = vdwg.mxu0
          %v6169 = vsub.f32 %v6142, %v1540
          %v6170 = vsub.f32 %v6148, %v1546
          %v6171 = vsub.f32 %v6154, %v1552
          %v6172 = vand.u32 2147483647, %v6169
          %v6173 = vand.u32 2147483647, %v6170
          %v6174 = vand.u32 2147483647, %v6171
          %v6175 = vadd.f32 %v6172, %v6173
          %v6176 = vadd.f32 %v6175, %v6174
          %v6177 = vrot.slane %v6176, 4
          %v6178 = vadd.f32 %v6176, %v6177
          %v6179 = vrot.slane %v6178, 2
          %v6180 = vadd.f32 %v6178, %v6179
          %v6181 = vrot.slane %v6180, 1
          %v6182 = vadd.f32 %v6180, %v6181
          %vm6183 = vcmp.lt.f32.partialorder %v6182, 0.0021072102
          %v6184 = vsel %vm6183, 1, 0
          %v6185 = vcvt.s32.f32 %v6184
          %v6186 = vsub.f32 0.0, %v5307
          %v6187 = vmul.f32 %v6186, 1.442695
          %v6188 = vpow.pop %v6187
          %v6189 = vmul.f32 %v6188, %v6185
          %v6190 = vmul.f32 %v6189, %v6160
          %v6191 = vmul.f32 %v6189, %v6166
          %v6192 = vadd.f32 %v5268, %v6190
          %v6193 = vadd.f32 %v5269, %v6191
          %v6194 = vadd.f32 %v5270, %v6189
          %v6195 = vrcp.pop %v6194
          %v6196 = vmul.f32 1.0, %v6195
          %v6197 = vmul.f32 %v6192, %v6196
          %v6198 = vmul.f32 %v6193, %v6196
          %v6199 = vmul.f32 %v6197, %v334
          %v6200 = vmul.f32 %v6197, %v336
          %v6202 = vrot.slane %v6200, 1
          %v6204 = vadd.f32 %v6199, %v6202
          %v6205 = vmul.f32 %v6197, %v332
          %v6207 = vrot.slane %v6205, 2
          %v6209 = vadd.f32 %v6204, %v6207
          %v6211 = vrot.slane %v6197, 3
          %v6213 = vadd.f32 %v6209, %v6211
          %s6214 = smul.addr %s325, 4
          %s6215 = scalar_lea.vmem %s289, %s6214
          %6216 = vst [vmem:[%s6215] sm:$0x1] %v6213
          %v6218 = vlaneseq
          %v6219 = vshrl.u32 %v6218, 7
          %v6220 = vsub.s32 0, %v6219
          %v6221 = vrot.slane %v334, %v6220
          %v6223 = vmul.f32 %v6197, %v6221
          %v6225 = vlaneseq
          %v6226 = vshrl.u32 %v6225, 7
          %v6227 = vsub.s32 1, %v6226
          %v6228 = vrot.slane %v336, %v6227
          %v6230 = vmul.f32 %v6197, %v6228
          %v6232 = vrot.slane %v6230, 1
          %v6234 = vadd.f32 %v6223, %v6232
          %v6236 = vlaneseq
          %v6237 = vshrl.u32 %v6236, 7
          %v6238 = vsub.s32 2, %v6237
          %v6239 = vrot.slane %v332, %v6238
          %v6241 = vmul.f32 %v6197, %v6239
          %v6243 = vrot.slane %v6241, 2
          %v6245 = vadd.f32 %v6234, %v6243
          %v6246 = vadd.f32 %v6245, %v6211
          %v6248 = vcombine.high %v6246, %v6246
          %6250 = vst [vmem:[%s6215 + $0x1] sm:$0x1] %v6248
          %v6251 = vmul.f32 %v6198, %v334
          %v6252 = vmul.f32 %v6198, %v336
          %v6254 = vrot.slane %v6252, 1
          %v6256 = vadd.f32 %v6251, %v6254
          %v6257 = vmul.f32 %v6198, %v332
          %v6259 = vrot.slane %v6257, 2
          %v6261 = vadd.f32 %v6256, %v6259
          %v6263 = vrot.slane %v6198, 3
          %v6265 = vadd.f32 %v6261, %v6263
          %6266 = vst [vmem:[%s6215 + $0x2] sm:$0x1] %v6265
        $region45: #{tpu_custom_call.1} parent=35 // loop_footer
          %s323 = sadd.s32 1, %s319
        $region46: #{tpu_custom_call.1} parent=35 // loop_footer_branch
          %318 = sbr.rel target = $region42
        $region47: #{tpu_custom_call.1} parent=35 // loop_exit
          _
        %s6267 = smul.u32 2, %s21
        %p6268 = scmp.lt.s32.totalorder %s20, 1
        %s6269 = scalar_select %p6268, %s20, 1
        %p6270 = scmp.lt.s32.totalorder %s6267, 3
        %s6271 = scalar_select %p6270, %s6267, 3
        %s6272 = smul.addr %s6269, 4
        %s6273 = sadd.s32 %s6271, %s6272
        %s6274 = smul.addr %s6273, 4
        %s6275 = scalar_lea.vmem %s4, %s6274
        // Predicated region
        $region48: #{tpu_custom_call.1} parent=35 // pred_check
          %p6276 = pneg %p149
        $region49: #{tpu_custom_call.1} parent=35 // pred_check_branch
          %6278 = sbr.rel (%p6276) target = $region51
        $region50: #{tpu_custom_call.1} parent=35 // pred_region
          %s6279 = smul.u32 2, %s21
        $region51: #{tpu_custom_call.1} parent=35 // pred_fallthru
          _
      $region36: #{tpu_custom_call.1} parent=5 // pred_fallthru
        _
      %p6280 = scmp.le.s32.totalorder 2, %s11
      // Predicated region
      $region52: #{tpu_custom_call.1} parent=5 // pred_check
        %p6281 = pneg %p6280
      $region53: #{tpu_custom_call.1} parent=5 // pred_check_branch
        %6283 = sbr.rel (%p6281) target = $region55
      $region54: #{tpu_custom_call.1} parent=5 // pred_region
        %s6284 = ssub.s32 %s11, 2
        // Predicated region
        $region56: #{tpu_custom_call.1} parent=54 // pred_check
          %p6285 = pneg %p155
        $region57: #{tpu_custom_call.1} parent=54 // pred_check_branch
          %6287 = sbr.rel (%p6285) target = $region59
        $region58: #{tpu_custom_call.1} parent=54 // pred_region
          %s6288 = smul.u32 2, %s23
          %p6289 = scmp.lt.s32.totalorder %s22, 1
          %s6290 = scalar_select %p6289, %s22, 1
          %p6291 = scmp.lt.s32.totalorder %s6288, 3
          %s6292 = scalar_select %p6291, %s6288, 3
          %s6293 = smul.addr %s6290, 4
          %s6294 = sadd.s32 %s6292, %s6293
          %s6295 = smul.addr %s6294, 4
          %s6296 = scalar_lea.vmem %s4, %s6295
        $region59: #{tpu_custom_call.1} parent=54 // pred_fallthru
          _
      $region55: #{tpu_custom_call.1} parent=5 // pred_fallthru
        _
    $region6: #{tpu_custom_call.1} parent=1 // loop_footer
      %s15 = sadd.s32 1, %s11
    $region7: #{tpu_custom_call.1} parent=1 // loop_footer_branch
      %10 = sbr.rel target = $region3
    $region8: #{tpu_custom_call.1} parent=1 // loop_exit
      _
    %6297 = vsyncpa [#allocation3], 1
    %s6298 = scalar_lea.sflag [#allocation3], 1
    %6299 = vsyncpa %s6298, 1

</llo_original>
